<compile_context>
chip_gen: v7x
topology: tpu7x:2x2x1
jax: 0.10.0
libtpu: 0.0.40
codegen_flags: <defaults>
</compile_context>

<pallas_src>
import jax
import jax.numpy as jnp
from jax import lax
from jax.experimental import pallas as pl
from jax.experimental.pallas import tpu as pltpu

_LANE = 128
_SUBLANE = 8
_CHUNK = 512            # chunk width over the 2048-wide hidden dim (layers 3/4)


def _round_up(n, m):
    return ((n + m - 1) // m) * m


def _mlp_kernel(x_ref,
                w1_ref, b1_ref,
                w2_ref, b2_ref,
                w3_ref, b3_ref,
                w4_ref, b4_ref,
                o_ref,
                acc_ref):
    # ---- layers 1 & 2: full-width dots, f32 accumulation, ReLU fused w/ bf16 cast
    h = jnp.dot(x_ref[...], w1_ref[...],
                preferred_element_type=jnp.float32) + b1_ref[...]
    h = jnp.maximum(h, 0.0).astype(jnp.bfloat16)

    h = jnp.dot(h, w2_ref[...],
                preferred_element_type=jnp.float32) + b2_ref[...]
    h2 = jnp.maximum(h, 0.0).astype(jnp.bfloat16)

    # ---- layers 3 & 4 fused, chunked over the wide (2048) hidden dim so the
    # (tile, 2048) f32 intermediate never exists.  Accumulate into f32 scratch.
    d_hidden = w3_ref.shape[1]
    chunk = _CHUNK if (d_hidden % _CHUNK == 0) else d_hidden
    n_chunks = d_hidden // chunk

    acc_ref[...] = jnp.zeros_like(acc_ref)

    def body(c, carry):
        off = pl.multiple_of(c * chunk, chunk)
        h3 = jnp.dot(h2, w3_ref[:, pl.ds(off, chunk)],
                     preferred_element_type=jnp.float32)
        h3 = h3 + b3_ref[:, pl.ds(off, chunk)]
        h3 = jnp.maximum(h3, 0.0).astype(jnp.bfloat16)       # exact: relu∘round
        acc_ref[...] += jnp.dot(h3, w4_ref[pl.ds(off, chunk), :],
                                preferred_element_type=jnp.float32)
        return carry

    lax.fori_loop(0, n_chunks, body, 0, unroll=True)

    # Final bias add in f32, then one lane-dense store.
    o_ref[...] = (acc_ref[...] + b4_ref[...]).astype(o_ref.dtype)


def encoder_forward(x, params, *, feature_dim=None, tile_m=256):
    """x: (batch, input_dim) float.  params: list of (W_padded_bf16, b_padded_f32).

    Returns (batch, feature_dim) float32, matching the PyTorch Encoder forward
    (up to bf16 rounding of weights/activations).
    """
    (w1, b1), (w2, b2), (w3, b3), (w4, b4) = params
    batch, input_dim = x.shape
    d_in_p = w1.shape[0]
    d_out_p = w4.shape[1]
    if feature_dim is None:
        feature_dim = d_out_p

    # Batch tiling:
    #  * large batches : fixed MXU-friendly tile_m tiles
    #  * >16 rows      : split into 2 tiles so both v7x TensorCores get work
    #  * tiny batches  : one sublane-padded tile (no divisibility assert)
    if batch > tile_m:
        tile = tile_m
        batch_p = _round_up(batch, tile)
    elif batch > 16:
        tile = _round_up(pl.cdiv(batch, 2), _SUBLANE)
        batch_p = 2 * tile
    else:
        tile = _round_up(max(batch, 1), _SUBLANE)
        batch_p = tile
    grid = (batch_p // tile,)

    # Single fused pad (batch rows + K lanes) + bf16 cast.
    x_p = jnp.pad(x.astype(jnp.bfloat16),
                  ((0, batch_p - batch), (0, d_in_p - input_dim)))

    def run(single_buffer_weights):
        def const_spec(arr):
            nd = arr.ndim
            idx = lambda i, _nd=nd: (0,) * _nd
            if single_buffer_weights:
                # Constant index_map across the grid -> one resident buffer.
                return pl.BlockSpec(arr.shape, idx, pipeline_mode=pl.Buffered(1))
            return pl.BlockSpec(arr.shape, idx)

        return pl.pallas_call(
            _mlp_kernel,
            out_shape=jax.ShapeDtypeStruct((batch_p, d_out_p), jnp.float32),
            grid_spec=pltpu.PrefetchScalarGridSpec(
                num_scalar_prefetch=0,
                grid=grid,
                in_specs=[
                    pl.BlockSpec((tile, d_in_p), lambda i: (i, 0)),
                    const_spec(w1), const_spec(b1),
                    const_spec(w2), const_spec(b2),
                    const_spec(w3), const_spec(b3),
                    const_spec(w4), const_spec(b4),
                ],
                out_specs=pl.BlockSpec((tile, d_out_p), lambda i: (i, 0)),
                scratch_shapes=[pltpu.VMEM((tile, d_out_p), jnp.float32)],
            ),
            compiler_params=pltpu.CompilerParams(
                dimension_semantics=("parallel",),
                vmem_limit_bytes=48 << 20,   # headroom on v7x's 64 MiB VMEM
            ),
        )(x_p, w1, b1, w2, b2, w3, b3, w4, b4)

    try:
        out_p = run(single_buffer_weights=True)
    except Exception:
        # pipeline_mode=pl.Buffered(1) unsupported on this jax version ->
        # fall back to default double-buffering (correctness unchanged).
        out_p = run(single_buffer_weights=False)

    return out_p[:batch, :feature_dim]


def init_params(key, input_dim, feature_dim):
    """PyTorch-Linear-style init, then zero-pad every dim to a multiple of 128.

    Weights stored pre-transposed as (in, out) in bf16; biases as (1, out) f32.
    Zero padding keeps the math identical to the unpadded network.
    """
    dims = [(input_dim, 500), (500, 500), (500, 2000), (2000, feature_dim)]
    params = []
    for fan_in, fan_out in dims:
        key, kw, kb = jax.random.split(key, 3)
        bound = 1.0 / jnp.sqrt(fan_in)   # PyTorch nn.Linear default uniform bound
        w = jax.random.uniform(kw, (fan_in, fan_out), jnp.float32, -bound, bound)
        b = jax.random.uniform(kb, (fan_out,), jnp.float32, -bound, bound)
        pi = _round_up(fan_in, _LANE)
        po = _round_up(fan_out, _LANE)
        w_p = jnp.zeros((pi, po), jnp.float32).at[:fan_in, :fan_out].set(w)
        b_p = jnp.zeros((1, po), jnp.float32).at[0, :fan_out].set(b)
        params.append((w_p.astype(jnp.bfloat16), b_p))
    return params


def encoder_reference(x, params, feature_dim):
    """Pure-JAX f32 reference using the same (padded, bf16-rounded) weights."""
    d_in_p = params[0][0].shape[0]
    h = jnp.zeros((x.shape[0], d_in_p), jnp.float32)
    h = h.at[:, :x.shape[1]].set(x.astype(jnp.float32))
    for i, (w, b) in enumerate(params):
        h = h @ w.astype(jnp.float32) + b
        if i < len(params) - 1:
            h = jnp.maximum(h, 0.0)
    return h[:, :feature_dim]


if __name__ == "__main__":
    key = jax.random.PRNGKey(0)
    k_params, k_x1, k_x2 = jax.random.split(key, 3)

    input_dim, feature_dim = 32, 16
    params = init_params(k_params, input_dim, feature_dim)

    # Small batch (single grid step).
    batch = 16
    x = jax.random.normal(k_x1, (batch, input_dim), jnp.float32)
    out = jax.block_until_ready(encoder_forward(x, params, feature_dim=feature_dim))
    ref = encoder_reference(x, params, feature_dim)
    assert out.shape == (batch, feature_dim)
    # bf16 activations in the kernel -> relaxed tolerance vs f32 reference.
    assert jnp.allclose(out, ref, atol=2e-2, rtol=2e-2), "mismatch (batch=16)"

    # Mid-size, non-multiple batch (exercises the 2-tile grid + row padding).
    batch2 = 40
    x2 = jax.random.normal(k_x2, (batch2, input_dim), jnp.float32)
    out2 = jax.block_until_ready(encoder_forward(x2, params, feature_dim=feature_dim))
    ref2 = encoder_reference(x2, params, feature_dim)
    assert out2.shape == (batch2, feature_dim)
    assert jnp.allclose(out2, ref2, atol=2e-2, rtol=2e-2), "mismatch (batch=40)"

    print("KERNEL_OK")
</pallas_src>

<mosaic_0001>
module attributes {stable_mosaic.version = 11 : i64} {
  func.func @_mlp_kernel(%arg0: i32, %arg1: memref<16x128xbf16, #tpu.memory_space<vmem>>, %arg2: memref<128x512xbf16, #tpu.memory_space<vmem>>, %arg3: memref<1x512xf32, #tpu.memory_space<vmem>>, %arg4: memref<512x512xbf16, #tpu.memory_space<vmem>>, %arg5: memref<1x512xf32, #tpu.memory_space<vmem>>, %arg6: memref<512x2048xbf16, #tpu.memory_space<vmem>>, %arg7: memref<1x2048xf32, #tpu.memory_space<vmem>>, %arg8: memref<2048x128xbf16, #tpu.memory_space<vmem>>, %arg9: memref<1x128xf32, #tpu.memory_space<vmem>>, %arg10: memref<16x128xf32, #tpu.memory_space<vmem>>, %arg11: memref<16x128xf32, #tpu.memory_space<vmem>>) attributes {dimension_semantics = [#tpu.dimension_semantics<parallel>], iteration_bounds = array<i64: 1>, scalar_prefetch = 0 : i64, scratch_operands = 1 : i64, tpu.core_type = #tpu.core_type<tc>, window_params = [{transform_indices = @transform_0, window_bounds = array<i64: 16, 128>}, {pipeline_mode = #tpu.pipeline_mode<synchronous>, transform_indices = @transform_1, window_bounds = array<i64: 128, 512>}, {pipeline_mode = #tpu.pipeline_mode<synchronous>, transform_indices = @transform_2, window_bounds = array<i64: 1, 512>}, {pipeline_mode = #tpu.pipeline_mode<synchronous>, transform_indices = @transform_3, window_bounds = array<i64: 512, 512>}, {pipeline_mode = #tpu.pipeline_mode<synchronous>, transform_indices = @transform_4, window_bounds = array<i64: 1, 512>}, {pipeline_mode = #tpu.pipeline_mode<synchronous>, transform_indices = @transform_5, window_bounds = array<i64: 512, 2048>}, {pipeline_mode = #tpu.pipeline_mode<synchronous>, transform_indices = @transform_6, window_bounds = array<i64: 1, 2048>}, {pipeline_mode = #tpu.pipeline_mode<synchronous>, transform_indices = @transform_7, window_bounds = array<i64: 2048, 128>}, {pipeline_mode = #tpu.pipeline_mode<synchronous>, transform_indices = @transform_8, window_bounds = array<i64: 1, 128>}, {transform_indices = @transform_9, window_bounds = array<i64: 16, 128>}]} {
    %c0 = arith.constant 0 : index
    %c0_0 = arith.constant 0 : index
    %0 = vector.load %arg1[%c0, %c0_0] : memref<16x128xbf16, #tpu.memory_space<vmem>>, vector<16x128xbf16>
    %c0_1 = arith.constant 0 : index
    %c0_2 = arith.constant 0 : index
    %1 = vector.load %arg2[%c0_1, %c0_2] : memref<128x512xbf16, #tpu.memory_space<vmem>>, vector<128x512xbf16>
    %cst = arith.constant dense<0.000000e+00> : vector<16x512xf32>
    %2 = tpu.matmul %0, %1, %cst {dimension_numbers = #tpu.dot_dimension_numbers<[1], [0], [0], [1], [0, 0, 1, 1], [], []>} : vector<16x128xbf16>, vector<128x512xbf16>, vector<16x512xf32> -> vector<16x512xf32>
    %c0_3 = arith.constant 0 : index
    %c0_4 = arith.constant 0 : index
    %3 = vector.load %arg3[%c0_3, %c0_4] : memref<1x512xf32, #tpu.memory_space<vmem>>, vector<1x512xf32>
    %4 = vector.broadcast %3 : vector<1x512xf32> to vector<16x512xf32>
    %5 = arith.addf %2, %4 : vector<16x512xf32>
    %cst_5 = arith.constant 0.000000e+00 : f32
    %6 = vector.broadcast %cst_5 : f32 to vector<16x512xf32>
    %7 = arith.maximumf %5, %6 : vector<16x512xf32>
    %8 = arith.truncf %7 : vector<16x512xf32> to vector<16x512xbf16>
    %c0_6 = arith.constant 0 : index
    %c0_7 = arith.constant 0 : index
    %9 = vector.load %arg4[%c0_6, %c0_7] : memref<512x512xbf16, #tpu.memory_space<vmem>>, vector<512x512xbf16>
    %cst_8 = arith.constant dense<0.000000e+00> : vector<16x512xf32>
    %10 = tpu.matmul %8, %9, %cst_8 {dimension_numbers = #tpu.dot_dimension_numbers<[1], [0], [0], [1], [0, 0, 1, 1], [], []>} : vector<16x512xbf16>, vector<512x512xbf16>, vector<16x512xf32> -> vector<16x512xf32>
    %c0_9 = arith.constant 0 : index
    %c0_10 = arith.constant 0 : index
    %11 = vector.load %arg5[%c0_9, %c0_10] : memref<1x512xf32, #tpu.memory_space<vmem>>, vector<1x512xf32>
    %12 = vector.broadcast %11 : vector<1x512xf32> to vector<16x512xf32>
    %13 = arith.addf %10, %12 : vector<16x512xf32>
    %cst_11 = arith.constant 0.000000e+00 : f32
    %14 = vector.broadcast %cst_11 : f32 to vector<16x512xf32>
    %15 = arith.maximumf %13, %14 : vector<16x512xf32>
    %16 = arith.truncf %15 : vector<16x512xf32> to vector<16x512xbf16>
    %cst_12 = arith.constant 0.000000e+00 : f32
    %17 = vector.broadcast %cst_12 : f32 to vector<16x128xf32>
    %c0_13 = arith.constant 0 : index
    %c0_14 = arith.constant 0 : index
    %18 = vector.load %arg11[%c0_13, %c0_14] : memref<16x128xf32, #tpu.memory_space<vmem>>, vector<16x128xf32>
    tpu.vector_store %arg11[%c0_13, %c0_14], %17 {strides = array<i32>} : memref<16x128xf32, #tpu.memory_space<vmem>>, vector<16x128xf32>,
    %c0_i32 = arith.constant 0 : i32
    %c512_i32 = arith.constant 512 : i32
    %19 = arith.muli %c0_i32, %c512_i32 : i32
    %20 = tpu.assume_multiple %19, 512 : i32
    %c0_15 = arith.constant 0 : index
    %21 = arith.index_cast %20 : i32 to index
    %22 = vector.load %arg6[%c0_15, %21] : memref<512x2048xbf16, #tpu.memory_space<vmem>>, vector<512x512xbf16>
    %cst_16 = arith.constant dense<0.000000e+00> : vector<16x512xf32>
    %23 = tpu.matmul %16, %22, %cst_16 {dimension_numbers = #tpu.dot_dimension_numbers<[1], [0], [0], [1], [0, 0, 1, 1], [], []>} : vector<16x512xbf16>, vector<512x512xbf16>, vector<16x512xf32> -> vector<16x512xf32>
    %c0_17 = arith.constant 0 : index
    %24 = arith.index_cast %20 : i32 to index
    %25 = vector.load %arg7[%c0_17, %24] : memref<1x2048xf32, #tpu.memory_space<vmem>>, vector<1x512xf32>
    %26 = vector.broadcast %25 : vector<1x512xf32> to vector<16x512xf32>
    %27 = arith.addf %23, %26 : vector<16x512xf32>
    %cst_18 = arith.constant 0.000000e+00 : f32
    %28 = vector.broadcast %cst_18 : f32 to vector<16x512xf32>
    %29 = arith.maximumf %27, %28 : vector<16x512xf32>
    %30 = arith.truncf %29 : vector<16x512xf32> to vector<16x512xbf16>
    %c0_19 = arith.constant 0 : index
    %c0_20 = arith.constant 0 : index
    %31 = vector.load %arg11[%c0_19, %c0_20] : memref<16x128xf32, #tpu.memory_space<vmem>>, vector<16x128xf32>
    %32 = arith.index_cast %20 : i32 to index
    %c0_21 = arith.constant 0 : index
    %33 = vector.load %arg8[%32, %c0_21] : memref<2048x128xbf16, #tpu.memory_space<vmem>>, vector<512x128xbf16>
    %cst_22 = arith.constant dense<0.000000e+00> : vector<16x128xf32>
    %34 = tpu.matmul %30, %33, %cst_22 {dimension_numbers = #tpu.dot_dimension_numbers<[1], [0], [0], [1], [0, 0, 1, 1], [], []>} : vector<16x512xbf16>, vector<512x128xbf16>, vector<16x128xf32> -> vector<16x128xf32>
    %35 = arith.addf %31, %34 : vector<16x128xf32>
    %c0_23 = arith.constant 0 : index
    %c0_24 = arith.constant 0 : index
    %36 = vector.load %arg11[%c0_23, %c0_24] : memref<16x128xf32, #tpu.memory_space<vmem>>, vector<16x128xf32>
    tpu.vector_store %arg11[%c0_23, %c0_24], %35 {strides = array<i32>} : memref<16x128xf32, #tpu.memory_space<vmem>>, vector<16x128xf32>,
    %c1_i32 = arith.constant 1 : i32
    %c512_i32_25 = arith.constant 512 : i32
    %37 = arith.muli %c1_i32, %c512_i32_25 : i32
    %38 = tpu.assume_multiple %37, 512 : i32
    %c0_26 = arith.constant 0 : index
    %39 = arith.index_cast %38 : i32 to index
    %40 = vector.load %arg6[%c0_26, %39] : memref<512x2048xbf16, #tpu.memory_space<vmem>>, vector<512x512xbf16>
    %cst_27 = arith.constant dense<0.000000e+00> : vector<16x512xf32>
    %41 = tpu.matmul %16, %40, %cst_27 {dimension_numbers = #tpu.dot_dimension_numbers<[1], [0], [0], [1], [0, 0, 1, 1], [], []>} : vector<16x512xbf16>, vector<512x512xbf16>, vector<16x512xf32> -> vector<16x512xf32>
    %c0_28 = arith.constant 0 : index
    %42 = arith.index_cast %38 : i32 to index
    %43 = vector.load %arg7[%c0_28, %42] : memref<1x2048xf32, #tpu.memory_space<vmem>>, vector<1x512xf32>
    %44 = vector.broadcast %43 : vector<1x512xf32> to vector<16x512xf32>
    %45 = arith.addf %41, %44 : vector<16x512xf32>
    %cst_29 = arith.constant 0.000000e+00 : f32
    %46 = vector.broadcast %cst_29 : f32 to vector<16x512xf32>
    %47 = arith.maximumf %45, %46 : vector<16x512xf32>
    %48 = arith.truncf %47 : vector<16x512xf32> to vector<16x512xbf16>
    %c0_30 = arith.constant 0 : index
    %c0_31 = arith.constant 0 : index
    %49 = vector.load %arg11[%c0_30, %c0_31] : memref<16x128xf32, #tpu.memory_space<vmem>>, vector<16x128xf32>
    %50 = arith.index_cast %38 : i32 to index
    %c0_32 = arith.constant 0 : index
    %51 = vector.load %arg8[%50, %c0_32] : memref<2048x128xbf16, #tpu.memory_space<vmem>>, vector<512x128xbf16>
    %cst_33 = arith.constant dense<0.000000e+00> : vector<16x128xf32>
    %52 = tpu.matmul %48, %51, %cst_33 {dimension_numbers = #tpu.dot_dimension_numbers<[1], [0], [0], [1], [0, 0, 1, 1], [], []>} : vector<16x512xbf16>, vector<512x128xbf16>, vector<16x128xf32> -> vector<16x128xf32>
    %53 = arith.addf %49, %52 : vector<16x128xf32>
    %c0_34 = arith.constant 0 : index
    %c0_35 = arith.constant 0 : index
    %54 = vector.load %arg11[%c0_34, %c0_35] : memref<16x128xf32, #tpu.memory_space<vmem>>, vector<16x128xf32>
    tpu.vector_store %arg11[%c0_34, %c0_35], %53 {strides = array<i32>} : memref<16x128xf32, #tpu.memory_space<vmem>>, vector<16x128xf32>,
    %c2_i32 = arith.constant 2 : i32
    %c512_i32_36 = arith.constant 512 : i32
    %55 = arith.muli %c2_i32, %c512_i32_36 : i32
    %56 = tpu.assume_multiple %55, 512 : i32
    %c0_37 = arith.constant 0 : index
    %57 = arith.index_cast %56 : i32 to index
    %58 = vector.load %arg6[%c0_37, %57] : memref<512x2048xbf16, #tpu.memory_space<vmem>>, vector<512x512xbf16>
    %cst_38 = arith.constant dense<0.000000e+00> : vector<16x512xf32>
    %59 = tpu.matmul %16, %58, %cst_38 {dimension_numbers = #tpu.dot_dimension_numbers<[1], [0], [0], [1], [0, 0, 1, 1], [], []>} : vector<16x512xbf16>, vector<512x512xbf16>, vector<16x512xf32> -> vector<16x512xf32>
    %c0_39 = arith.constant 0 : index
    %60 = arith.index_cast %56 : i32 to index
    %61 = vector.load %arg7[%c0_39, %60] : memref<1x2048xf32, #tpu.memory_space<vmem>>, vector<1x512xf32>
    %62 = vector.broadcast %61 : vector<1x512xf32> to vector<16x512xf32>
    %63 = arith.addf %59, %62 : vector<16x512xf32>
    %cst_40 = arith.constant 0.000000e+00 : f32
    %64 = vector.broadcast %cst_40 : f32 to vector<16x512xf32>
    %65 = arith.maximumf %63, %64 : vector<16x512xf32>
    %66 = arith.truncf %65 : vector<16x512xf32> to vector<16x512xbf16>
    %c0_41 = arith.constant 0 : index
    %c0_42 = arith.constant 0 : index
    %67 = vector.load %arg11[%c0_41, %c0_42] : memref<16x128xf32, #tpu.memory_space<vmem>>, vector<16x128xf32>
    %68 = arith.index_cast %56 : i32 to index
    %c0_43 = arith.constant 0 : index
    %69 = vector.load %arg8[%68, %c0_43] : memref<2048x128xbf16, #tpu.memory_space<vmem>>, vector<512x128xbf16>
    %cst_44 = arith.constant dense<0.000000e+00> : vector<16x128xf32>
    %70 = tpu.matmul %66, %69, %cst_44 {dimension_numbers = #tpu.dot_dimension_numbers<[1], [0], [0], [1], [0, 0, 1, 1], [], []>} : vector<16x512xbf16>, vector<512x128xbf16>, vector<16x128xf32> -> vector<16x128xf32>
    %71 = arith.addf %67, %70 : vector<16x128xf32>
    %c0_45 = arith.constant 0 : index
    %c0_46 = arith.constant 0 : index
    %72 = vector.load %arg11[%c0_45, %c0_46] : memref<16x128xf32, #tpu.memory_space<vmem>>, vector<16x128xf32>
    tpu.vector_store %arg11[%c0_45, %c0_46], %71 {strides = array<i32>} : memref<16x128xf32, #tpu.memory_space<vmem>>, vector<16x128xf32>,
    %c3_i32 = arith.constant 3 : i32
    %c512_i32_47 = arith.constant 512 : i32
    %73 = arith.muli %c3_i32, %c512_i32_47 : i32
    %74 = tpu.assume_multiple %73, 512 : i32
    %c0_48 = arith.constant 0 : index
    %75 = arith.index_cast %74 : i32 to index
    %76 = vector.load %arg6[%c0_48, %75] : memref<512x2048xbf16, #tpu.memory_space<vmem>>, vector<512x512xbf16>
    %cst_49 = arith.constant dense<0.000000e+00> : vector<16x512xf32>
    %77 = tpu.matmul %16, %76, %cst_49 {dimension_numbers = #tpu.dot_dimension_numbers<[1], [0], [0], [1], [0, 0, 1, 1], [], []>} : vector<16x512xbf16>, vector<512x512xbf16>, vector<16x512xf32> -> vector<16x512xf32>
    %c0_50 = arith.constant 0 : index
    %78 = arith.index_cast %74 : i32 to index
    %79 = vector.load %arg7[%c0_50, %78] : memref<1x2048xf32, #tpu.memory_space<vmem>>, vector<1x512xf32>
    %80 = vector.broadcast %79 : vector<1x512xf32> to vector<16x512xf32>
    %81 = arith.addf %77, %80 : vector<16x512xf32>
    %cst_51 = arith.constant 0.000000e+00 : f32
    %82 = vector.broadcast %cst_51 : f32 to vector<16x512xf32>
    %83 = arith.maximumf %81, %82 : vector<16x512xf32>
    %84 = arith.truncf %83 : vector<16x512xf32> to vector<16x512xbf16>
    %c0_52 = arith.constant 0 : index
    %c0_53 = arith.constant 0 : index
    %85 = vector.load %arg11[%c0_52, %c0_53] : memref<16x128xf32, #tpu.memory_space<vmem>>, vector<16x128xf32>
    %86 = arith.index_cast %74 : i32 to index
    %c0_54 = arith.constant 0 : index
    %87 = vector.load %arg8[%86, %c0_54] : memref<2048x128xbf16, #tpu.memory_space<vmem>>, vector<512x128xbf16>
    %cst_55 = arith.constant dense<0.000000e+00> : vector<16x128xf32>
    %88 = tpu.matmul %84, %87, %cst_55 {dimension_numbers = #tpu.dot_dimension_numbers<[1], [0], [0], [1], [0, 0, 1, 1], [], []>} : vector<16x512xbf16>, vector<512x128xbf16>, vector<16x128xf32> -> vector<16x128xf32>
    %89 = arith.addf %85, %88 : vector<16x128xf32>
    %c0_56 = arith.constant 0 : index
    %c0_57 = arith.constant 0 : index
    %90 = vector.load %arg11[%c0_56, %c0_57] : memref<16x128xf32, #tpu.memory_space<vmem>>, vector<16x128xf32>
    tpu.vector_store %arg11[%c0_56, %c0_57], %89 {strides = array<i32>} : memref<16x128xf32, #tpu.memory_space<vmem>>, vector<16x128xf32>,
    %c4_i32 = arith.constant 4 : i32
    %c0_58 = arith.constant 0 : index
    %c0_59 = arith.constant 0 : index
    %91 = vector.load %arg11[%c0_58, %c0_59] : memref<16x128xf32, #tpu.memory_space<vmem>>, vector<16x128xf32>
    %c0_60 = arith.constant 0 : index
    %c0_61 = arith.constant 0 : index
    %92 = vector.load %arg9[%c0_60, %c0_61] : memref<1x128xf32, #tpu.memory_space<vmem>>, vector<1x128xf32>
    %93 = vector.broadcast %92 : vector<1x128xf32> to vector<16x128xf32>
    %94 = arith.addf %91, %93 : vector<16x128xf32>
    %c0_62 = arith.constant 0 : index
    %c0_63 = arith.constant 0 : index
    %95 = vector.load %arg10[%c0_62, %c0_63] : memref<16x128xf32, #tpu.memory_space<vmem>>, vector<16x128xf32>
    tpu.vector_store %arg10[%c0_62, %c0_63], %94 {strides = array<i32>} : memref<16x128xf32, #tpu.memory_space<vmem>>, vector<16x128xf32>,
    return
  }
  func.func @transform_0(%arg0: i32) -> (i32, i32) {
    %c0_i32 = arith.constant 0 : i32
    %c0_i32_0 = arith.constant 0 : i32
    return %arg0, %c0_i32 : i32, i32
  }
  func.func @transform_1(%arg0: i32) -> (i32, i32) {
    %c0_i32 = arith.constant 0 : i32
    %c0_i32_0 = arith.constant 0 : i32
    %c0_i32_1 = arith.constant 0 : i32
    return %c0_i32, %c0_i32_0 : i32, i32
  }
  func.func @transform_2(%arg0: i32) -> (i32, i32) {
    %c0_i32 = arith.constant 0 : i32
    %c0_i32_0 = arith.constant 0 : i32
    %c0_i32_1 = arith.constant 0 : i32
    return %c0_i32, %c0_i32_0 : i32, i32
  }
  func.func @transform_3(%arg0: i32) -> (i32, i32) {
    %c0_i32 = arith.constant 0 : i32
    %c0_i32_0 = arith.constant 0 : i32
    %c0_i32_1 = arith.constant 0 : i32
    return %c0_i32, %c0_i32_0 : i32, i32
  }
  func.func @transform_4(%arg0: i32) -> (i32, i32) {
    %c0_i32 = arith.constant 0 : i32
    %c0_i32_0 = arith.constant 0 : i32
    %c0_i32_1 = arith.constant 0 : i32
    return %c0_i32, %c0_i32_0 : i32, i32
  }
  func.func @transform_5(%arg0: i32) -> (i32, i32) {
    %c0_i32 = arith.constant 0 : i32
    %c0_i32_0 = arith.constant 0 : i32
    %c0_i32_1 = arith.constant 0 : i32
    return %c0_i32, %c0_i32_0 : i32, i32
  }
  func.func @transform_6(%arg0: i32) -> (i32, i32) {
    %c0_i32 = arith.constant 0 : i32
    %c0_i32_0 = arith.constant 0 : i32
    %c0_i32_1 = arith.constant 0 : i32
    return %c0_i32, %c0_i32_0 : i32, i32
  }
  func.func @transform_7(%arg0: i32) -> (i32, i32) {
    %c0_i32 = arith.constant 0 : i32
    %c0_i32_0 = arith.constant 0 : i32
    %c0_i32_1 = arith.constant 0 : i32
    return %c0_i32, %c0_i32_0 : i32, i32
  }
  func.func @transform_8(%arg0: i32) -> (i32, i32) {
    %c0_i32 = arith.constant 0 : i32
    %c0_i32_0 = arith.constant 0 : i32
    %c0_i32_1 = arith.constant 0 : i32
    return %c0_i32, %c0_i32_0 : i32, i32
  }
  func.func @transform_9(%arg0: i32) -> (i32, i32) {
    %c0_i32 = arith.constant 0 : i32
    %c0_i32_0 = arith.constant 0 : i32
    return %arg0, %c0_i32 : i32, i32
  }
}

module attributes {stable_mosaic.version = 11 : i64} {
  func.func @_mlp_kernel(%arg0: i32, %arg1: memref<16x128xbf16, #tpu.memory_space<vmem>>, %arg2: memref<128x512xbf16, #tpu.memory_space<vmem>>, %arg3: memref<1x512xf32, #tpu.memory_space<vmem>>, %arg4: memref<512x512xbf16, #tpu.memory_space<vmem>>, %arg5: memref<1x512xf32, #tpu.memory_space<vmem>>, %arg6: memref<512x2048xbf16, #tpu.memory_space<vmem>>, %arg7: memref<1x2048xf32, #tpu.memory_space<vmem>>, %arg8: memref<2048x128xbf16, #tpu.memory_space<vmem>>, %arg9: memref<1x128xf32, #tpu.memory_space<vmem>>, %arg10: memref<16x128xf32, #tpu.memory_space<vmem>>, %arg11: memref<16x128xf32, #tpu.memory_space<vmem>>) attributes {dimension_semantics = [#tpu.dimension_semantics<parallel>], iteration_bounds = array<i64: 1>, scalar_prefetch = 0 : i64, scratch_operands = 1 : i64, tpu.core_type = #tpu.core_type<tc>, window_params = [{transform_indices = @transform_0, window_bounds = array<i64: 16, 128>}, {pipeline_mode = #tpu.pipeline_mode<synchronous>, transform_indices = @transform_1, window_bounds = array<i64: 128, 512>}, {pipeline_mode = #tpu.pipeline_mode<synchronous>, transform_indices = @transform_2, window_bounds = array<i64: 1, 512>}, {pipeline_mode = #tpu.pipeline_mode<synchronous>, transform_indices = @transform_3, window_bounds = array<i64: 512, 512>}, {pipeline_mode = #tpu.pipeline_mode<synchronous>, transform_indices = @transform_4, window_bounds = array<i64: 1, 512>}, {pipeline_mode = #tpu.pipeline_mode<synchronous>, transform_indices = @transform_5, window_bounds = array<i64: 512, 2048>}, {pipeline_mode = #tpu.pipeline_mode<synchronous>, transform_indices = @transform_6, window_bounds = array<i64: 1, 2048>}, {pipeline_mode = #tpu.pipeline_mode<synchronous>, transform_indices = @transform_7, window_bounds = array<i64: 2048, 128>}, {pipeline_mode = #tpu.pipeline_mode<synchronous>, transform_indices = @transform_8, window_bounds = array<i64: 1, 128>}, {transform_indices = @transform_9, window_bounds = array<i64: 16, 128>}]} {
    %c0 = arith.constant 0 : index
    %c0_0 = arith.constant 0 : index
    %0 = vector.load %arg1[%c0, %c0_0] : memref<16x128xbf16, #tpu.memory_space<vmem>>, vector<16x128xbf16>
    %c0_1 = arith.constant 0 : index
    %c0_2 = arith.constant 0 : index
    %1 = vector.load %arg2[%c0_1, %c0_2] : memref<128x512xbf16, #tpu.memory_space<vmem>>, vector<128x512xbf16>
    %cst = arith.constant dense<0.000000e+00> : vector<16x512xf32>
    %2 = tpu.matmul %0, %1, %cst {dimension_numbers = #tpu.dot_dimension_numbers<[1], [0], [0], [1], [0, 0, 1, 1], [], []>} : vector<16x128xbf16>, vector<128x512xbf16>, vector<16x512xf32> -> vector<16x512xf32>
    %c0_3 = arith.constant 0 : index
    %c0_4 = arith.constant 0 : index
    %3 = vector.load %arg3[%c0_3, %c0_4] : memref<1x512xf32, #tpu.memory_space<vmem>>, vector<1x512xf32>
    %4 = vector.broadcast %3 : vector<1x512xf32> to vector<16x512xf32>
    %5 = arith.addf %2, %4 : vector<16x512xf32>
    %cst_5 = arith.constant 0.000000e+00 : f32
    %6 = vector.broadcast %cst_5 : f32 to vector<16x512xf32>
    %7 = arith.maximumf %5, %6 : vector<16x512xf32>
    %8 = arith.truncf %7 : vector<16x512xf32> to vector<16x512xbf16>
    %c0_6 = arith.constant 0 : index
    %c0_7 = arith.constant 0 : index
    %9 = vector.load %arg4[%c0_6, %c0_7] : memref<512x512xbf16, #tpu.memory_space<vmem>>, vector<512x512xbf16>
    %cst_8 = arith.constant dense<0.000000e+00> : vector<16x512xf32>
    %10 = tpu.matmul %8, %9, %cst_8 {dimension_numbers = #tpu.dot_dimension_numbers<[1], [0], [0], [1], [0, 0, 1, 1], [], []>} : vector<16x512xbf16>, vector<512x512xbf16>, vector<16x512xf32> -> vector<16x512xf32>
    %c0_9 = arith.constant 0 : index
    %c0_10 = arith.constant 0 : index
    %11 = vector.load %arg5[%c0_9, %c0_10] : memref<1x512xf32, #tpu.memory_space<vmem>>, vector<1x512xf32>
    %12 = vector.broadcast %11 : vector<1x512xf32> to vector<16x512xf32>
    %13 = arith.addf %10, %12 : vector<16x512xf32>
    %cst_11 = arith.constant 0.000000e+00 : f32
    %14 = vector.broadcast %cst_11 : f32 to vector<16x512xf32>
    %15 = arith.maximumf %13, %14 : vector<16x512xf32>
    %16 = arith.truncf %15 : vector<16x512xf32> to vector<16x512xbf16>
    %cst_12 = arith.constant 0.000000e+00 : f32
    %17 = vector.broadcast %cst_12 : f32 to vector<16x128xf32>
    %c0_13 = arith.constant 0 : index
    %c0_14 = arith.constant 0 : index
    %18 = vector.load %arg11[%c0_13, %c0_14] : memref<16x128xf32, #tpu.memory_space<vmem>>, vector<16x128xf32>
    tpu.vector_store %arg11[%c0_13, %c0_14], %17 {strides = array<i32>} : memref<16x128xf32, #tpu.memory_space<vmem>>, vector<16x128xf32>,
    %c0_i32 = arith.constant 0 : i32
    %c512_i32 = arith.constant 512 : i32
    %19 = arith.muli %c0_i32, %c512_i32 : i32
    %20 = tpu.assume_multiple %19, 512 : i32
    %c0_15 = arith.constant 0 : index
    %21 = arith.index_cast %20 : i32 to index
    %22 = vector.load %arg6[%c0_15, %21] : memref<512x2048xbf16, #tpu.memory_space<vmem>>, vector<512x512xbf16>
    %cst_16 = arith.constant dense<0.000000e+00> : vector<16x512xf32>
    %23 = tpu.matmul %16, %22, %cst_16 {dimension_numbers = #tpu.dot_dimension_numbers<[1], [0], [0], [1], [0, 0, 1, 1], [], []>} : vector<16x512xbf16>, vector<512x512xbf16>, vector<16x512xf32> -> vector<16x512xf32>
    %c0_17 = arith.constant 0 : index
    %24 = arith.index_cast %20 : i32 to index
    %25 = vector.load %arg7[%c0_17, %24] : memref<1x2048xf32, #tpu.memory_space<vmem>>, vector<1x512xf32>
    %26 = vector.broadcast %25 : vector<1x512xf32> to vector<16x512xf32>
    %27 = arith.addf %23, %26 : vector<16x512xf32>
    %cst_18 = arith.constant 0.000000e+00 : f32
    %28 = vector.broadcast %cst_18 : f32 to vector<16x512xf32>
    %29 = arith.maximumf %27, %28 : vector<16x512xf32>
    %30 = arith.truncf %29 : vector<16x512xf32> to vector<16x512xbf16>
    %c0_19 = arith.constant 0 : index
    %c0_20 = arith.constant 0 : index
    %31 = vector.load %arg11[%c0_19, %c0_20] : memref<16x128xf32, #tpu.memory_space<vmem>>, vector<16x128xf32>
    %32 = arith.index_cast %20 : i32 to index
    %c0_21 = arith.constant 0 : index
    %33 = vector.load %arg8[%32, %c0_21] : memref<2048x128xbf16, #tpu.memory_space<vmem>>, vector<512x128xbf16>
    %cst_22 = arith.constant dense<0.000000e+00> : vector<16x128xf32>
    %34 = tpu.matmul %30, %33, %cst_22 {dimension_numbers = #tpu.dot_dimension_numbers<[1], [0], [0], [1], [0, 0, 1, 1], [], []>} : vector<16x512xbf16>, vector<512x128xbf16>, vector<16x128xf32> -> vector<16x128xf32>
    %35 = arith.addf %31, %34 : vector<16x128xf32>
    %c0_23 = arith.constant 0 : index
    %c0_24 = arith.constant 0 : index
    %36 = vector.load %arg11[%c0_23, %c0_24] : memref<16x128xf32, #tpu.memory_space<vmem>>, vector<16x128xf32>
    tpu.vector_store %arg11[%c0_23, %c0_24], %35 {strides = array<i32>} : memref<16x128xf32, #tpu.memory_space<vmem>>, vector<16x128xf32>,
    %c1_i32 = arith.constant 1 : i32
    %c512_i32_25 = arith.constant 512 : i32
    %37 = arith.muli %c1_i32, %c512_i32_25 : i32
    %38 = tpu.assume_multiple %37, 512 : i32
    %c0_26 = arith.constant 0 : index
    %39 = arith.index_cast %38 : i32 to index
    %40 = vector.load %arg6[%c0_26, %39] : memref<512x2048xbf16, #tpu.memory_space<vmem>>, vector<512x512xbf16>
    %cst_27 = arith.constant dense<0.000000e+00> : vector<16x512xf32>
    %41 = tpu.matmul %16, %40, %cst_27 {dimension_numbers = #tpu.dot_dimension_numbers<[1], [0], [0], [1], [0, 0, 1, 1], [], []>} : vector<16x512xbf16>, vector<512x512xbf16>, vector<16x512xf32> -> vector<16x512xf32>
    %c0_28 = arith.constant 0 : index
    %42 = arith.index_cast %38 : i32 to index
    %43 = vector.load %arg7[%c0_28, %42] : memref<1x2048xf32, #tpu.memory_space<vmem>>, vector<1x512xf32>
    %44 = vector.broadcast %43 : vector<1x512xf32> to vector<16x512xf32>
    %45 = arith.addf %41, %44 : vector<16x512xf32>
    %cst_29 = arith.constant 0.000000e+00 : f32
    %46 = vector.broadcast %cst_29 : f32 to vector<16x512xf32>
    %47 = arith.maximumf %45, %46 : vector<16x512xf32>
    %48 = arith.truncf %47 : vector<16x512xf32> to vector<16x512xbf16>
    %c0_30 = arith.constant 0 : index
    %c0_31 = arith.constant 0 : index
    %49 = vector.load %arg11[%c0_30, %c0_31] : memref<16x128xf32, #tpu.memory_space<vmem>>, vector<16x128xf32>
    %50 = arith.index_cast %38 : i32 to index
    %c0_32 = arith.constant 0 : index
    %51 = vector.load %arg8[%50, %c0_32] : memref<2048x128xbf16, #tpu.memory_space<vmem>>, vector<512x128xbf16>
    %cst_33 = arith.constant dense<0.000000e+00> : vector<16x128xf32>
    %52 = tpu.matmul %48, %51, %cst_33 {dimension_numbers = #tpu.dot_dimension_numbers<[1], [0], [0], [1], [0, 0, 1, 1], [], []>} : vector<16x512xbf16>, vector<512x128xbf16>, vector<16x128xf32> -> vector<16x128xf32>
    %53 = arith.addf %49, %52 : vector<16x128xf32>
    %c0_34 = arith.constant 0 : index
    %c0_35 = arith.constant 0 : index
    %54 = vector.load %arg11[%c0_34, %c0_35] : memref<16x128xf32, #tpu.memory_space<vmem>>, vector<16x128xf32>
    tpu.vector_store %arg11[%c0_34, %c0_35], %53 {strides = array<i32>} : memref<16x128xf32, #tpu.memory_space<vmem>>, vector<16x128xf32>,
    %c2_i32 = arith.constant 2 : i32
    %c512_i32_36 = arith.constant 512 : i32
    %55 = arith.muli %c2_i32, %c512_i32_36 : i32
    %56 = tpu.assume_multiple %55, 512 : i32
    %c0_37 = arith.constant 0 : index
    %57 = arith.index_cast %56 : i32 to index
    %58 = vector.load %arg6[%c0_37, %57] : memref<512x2048xbf16, #tpu.memory_space<vmem>>, vector<512x512xbf16>
    %cst_38 = arith.constant dense<0.000000e+00> : vector<16x512xf32>
    %59 = tpu.matmul %16, %58, %cst_38 {dimension_numbers = #tpu.dot_dimension_numbers<[1], [0], [0], [1], [0, 0, 1, 1], [], []>} : vector<16x512xbf16>, vector<512x512xbf16>, vector<16x512xf32> -> vector<16x512xf32>
    %c0_39 = arith.constant 0 : index
    %60 = arith.index_cast %56 : i32 to index
    %61 = vector.load %arg7[%c0_39, %60] : memref<1x2048xf32, #tpu.memory_space<vmem>>, vector<1x512xf32>
    %62 = vector.broadcast %61 : vector<1x512xf32> to vector<16x512xf32>
    %63 = arith.addf %59, %62 : vector<16x512xf32>
    %cst_40 = arith.constant 0.000000e+00 : f32
    %64 = vector.broadcast %cst_40 : f32 to vector<16x512xf32>
    %65 = arith.maximumf %63, %64 : vector<16x512xf32>
    %66 = arith.truncf %65 : vector<16x512xf32> to vector<16x512xbf16>
    %c0_41 = arith.constant 0 : index
    %c0_42 = arith.constant 0 : index
    %67 = vector.load %arg11[%c0_41, %c0_42] : memref<16x128xf32, #tpu.memory_space<vmem>>, vector<16x128xf32>
    %68 = arith.index_cast %56 : i32 to index
    %c0_43 = arith.constant 0 : index
    %69 = vector.load %arg8[%68, %c0_43] : memref<2048x128xbf16, #tpu.memory_space<vmem>>, vector<512x128xbf16>
    %cst_44 = arith.constant dense<0.000000e+00> : vector<16x128xf32>
    %70 = tpu.matmul %66, %69, %cst_44 {dimension_numbers = #tpu.dot_dimension_numbers<[1], [0], [0], [1], [0, 0, 1, 1], [], []>} : vector<16x512xbf16>, vector<512x128xbf16>, vector<16x128xf32> -> vector<16x128xf32>
    %71 = arith.addf %67, %70 : vector<16x128xf32>
    %c0_45 = arith.constant 0 : index
    %c0_46 = arith.constant 0 : index
    %72 = vector.load %arg11[%c0_45, %c0_46] : memref<16x128xf32, #tpu.memory_space<vmem>>, vector<16x128xf32>
    tpu.vector_store %arg11[%c0_45, %c0_46], %71 {strides = array<i32>} : memref<16x128xf32, #tpu.memory_space<vmem>>, vector<16x128xf32>,
    %c3_i32 = arith.constant 3 : i32
    %c512_i32_47 = arith.constant 512 : i32
    %73 = arith.muli %c3_i32, %c512_i32_47 : i32
    %74 = tpu.assume_multiple %73, 512 : i32
    %c0_48 = arith.constant 0 : index
    %75 = arith.index_cast %74 : i32 to index
    %76 = vector.load %arg6[%c0_48, %75] : memref<512x2048xbf16, #tpu.memory_space<vmem>>, vector<512x512xbf16>
    %cst_49 = arith.constant dense<0.000000e+00> : vector<16x512xf32>
    %77 = tpu.matmul %16, %76, %cst_49 {dimension_numbers = #tpu.dot_dimension_numbers<[1], [0], [0], [1], [0, 0, 1, 1], [], []>} : vector<16x512xbf16>, vector<512x512xbf16>, vector<16x512xf32> -> vector<16x512xf32>
    %c0_50 = arith.constant 0 : index
    %78 = arith.index_cast %74 : i32 to index
    %79 = vector.load %arg7[%c0_50, %78] : memref<1x2048xf32, #tpu.memory_space<vmem>>, vector<1x512xf32>
    %80 = vector.broadcast %79 : vector<1x512xf32> to vector<16x512xf32>
    %81 = arith.addf %77, %80 : vector<16x512xf32>
    %cst_51 = arith.constant 0.000000e+00 : f32
    %82 = vector.broadcast %cst_51 : f32 to vector<16x512xf32>
    %83 = arith.maximumf %81, %82 : vector<16x512xf32>
    %84 = arith.truncf %83 : vector<16x512xf32> to vector<16x512xbf16>
    %c0_52 = arith.constant 0 : index
    %c0_53 = arith.constant 0 : index
    %85 = vector.load %arg11[%c0_52, %c0_53] : memref<16x128xf32, #tpu.memory_space<vmem>>, vector<16x128xf32>
    %86 = arith.index_cast %74 : i32 to index
    %c0_54 = arith.constant 0 : index
    %87 = vector.load %arg8[%86, %c0_54] : memref<2048x128xbf16, #tpu.memory_space<vmem>>, vector<512x128xbf16>
    %cst_55 = arith.constant dense<0.000000e+00> : vector<16x128xf32>
    %88 = tpu.matmul %84, %87, %cst_55 {dimension_numbers = #tpu.dot_dimension_numbers<[1], [0], [0], [1], [0, 0, 1, 1], [], []>} : vector<16x512xbf16>, vector<512x128xbf16>, vector<16x128xf32> -> vector<16x128xf32>
    %89 = arith.addf %85, %88 : vector<16x128xf32>
    %c0_56 = arith.constant 0 : index
    %c0_57 = arith.constant 0 : index
    %90 = vector.load %arg11[%c0_56, %c0_57] : memref<16x128xf32, #tpu.memory_space<vmem>>, vector<16x128xf32>
    tpu.vector_store %arg11[%c0_56, %c0_57], %89 {strides = array<i32>} : memref<16x128xf32, #tpu.memory_space<vmem>>, vector<16x128xf32>,
    %c4_i32 = arith.constant 4 : i32
    %c0_58 = arith.constant 0 : index
    %c0_59 = arith.constant 0 : index
    %91 = vector.load %arg11[%c0_58, %c0_59] : memref<16x128xf32, #tpu.memory_space<vmem>>, vector<16x128xf32>
    %c0_60 = arith.constant 0 : index
    %c0_61 = arith.constant 0 : index
    %92 = vector.load %arg9[%c0_60, %c0_61] : memref<1x128xf32, #tpu.memory_space<vmem>>, vector<1x128xf32>
    %93 = vector.broadcast %92 : vector<1x128xf32> to vector<16x128xf32>
    %94 = arith.addf %91, %93 : vector<16x128xf32>
    %c0_62 = arith.constant 0 : index
    %c0_63 = arith.constant 0 : index
    %95 = vector.load %arg10[%c0_62, %c0_63] : memref<16x128xf32, #tpu.memory_space<vmem>>, vector<16x128xf32>
    tpu.vector_store %arg10[%c0_62, %c0_63], %94 {strides = array<i32>} : memref<16x128xf32, #tpu.memory_space<vmem>>, vector<16x128xf32>,
    return
  }
  func.func @transform_0(%arg0: i32) -> (i32, i32) {
    %c0_i32 = arith.constant 0 : i32
    %c0_i32_0 = arith.constant 0 : i32
    return %arg0, %c0_i32 : i32, i32
  }
  func.func @transform_1(%arg0: i32) -> (i32, i32) {
    %c0_i32 = arith.constant 0 : i32
    %c0_i32_0 = arith.constant 0 : i32
    %c0_i32_1 = arith.constant 0 : i32
    return %c0_i32, %c0_i32_0 : i32, i32
  }
  func.func @transform_2(%arg0: i32) -> (i32, i32) {
    %c0_i32 = arith.constant 0 : i32
    %c0_i32_0 = arith.constant 0 : i32
    %c0_i32_1 = arith.constant 0 : i32
    return %c0_i32, %c0_i32_0 : i32, i32
  }
  func.func @transform_3(%arg0: i32) -> (i32, i32) {
    %c0_i32 = arith.constant 0 : i32
    %c0_i32_0 = arith.constant 0 : i32
    %c0_i32_1 = arith.constant 0 : i32
    return %c0_i32, %c0_i32_0 : i32, i32
  }
  func.func @transform_4(%arg0: i32) -> (i32, i32) {
    %c0_i32 = arith.constant 0 : i32
    %c0_i32_0 = arith.constant 0 : i32
    %c0_i32_1 = arith.constant 0 : i32
    return %c0_i32, %c0_i32_0 : i32, i32
  }
  func.func @transform_5(%arg0: i32) -> (i32, i32) {
    %c0_i32 = arith.constant 0 : i32
    %c0_i32_0 = arith.constant 0 : i32
    %c0_i32_1 = arith.constant 0 : i32
    return %c0_i32, %c0_i32_0 : i32, i32
  }
  func.func @transform_6(%arg0: i32) -> (i32, i32) {
    %c0_i32 = arith.constant 0 : i32
    %c0_i32_0 = arith.constant 0 : i32
    %c0_i32_1 = arith.constant 0 : i32
    return %c0_i32, %c0_i32_0 : i32, i32
  }
  func.func @transform_7(%arg0: i32) -> (i32, i32) {
    %c0_i32 = arith.constant 0 : i32
    %c0_i32_0 = arith.constant 0 : i32
    %c0_i32_1 = arith.constant 0 : i32
    return %c0_i32, %c0_i32_0 : i32, i32
  }
  func.func @transform_8(%arg0: i32) -> (i32, i32) {
    %c0_i32 = arith.constant 0 : i32
    %c0_i32_0 = arith.constant 0 : i32
    %c0_i32_1 = arith.constant 0 : i32
    return %c0_i32, %c0_i32_0 : i32, i32
  }
  func.func @transform_9(%arg0: i32) -> (i32, i32) {
    %c0_i32 = arith.constant 0 : i32
    %c0_i32_0 = arith.constant 0 : i32
    return %arg0, %c0_i32 : i32, i32
  }
}

</mosaic_0001>

<llo_original>
// kernel: tpu_custom_call.1
$region0: #{tpu_custom_call.1}
  #allocation0 [shape = 'u32[]', space=smem, size = 0x4, offset = 0x4, fixed_abs, tag = 'smem constant byte address 0x4 - core index']
  #allocation1 [shape = 'u32[144,128]{1,0:T(1,128)}', space=vmem, size = 0x12000, scoped, tag = 'internal scratch']
  #allocation2 [shape = 'f32[16,128]{1,0:T(8,128)}', space=vmem, size = 0x2000, scoped, tag = 'scratch operand']
  %s0 = inlined_call_operand.hbm [shape: bf16[16,128], index: 0, kind: input, shape index: {}]
  %s1 = inlined_call_operand.hbm [shape: bf16[128,512], index: 1, kind: input, shape index: {}]
  %s2 = inlined_call_operand.hbm [shape: f32[1,512], index: 2, kind: input, shape index: {}]
  %s3 = inlined_call_operand.hbm [shape: bf16[512,512], index: 3, kind: input, shape index: {}]
  %s4 = inlined_call_operand.hbm [shape: f32[1,512], index: 4, kind: input, shape index: {}]
  %s5 = inlined_call_operand.hbm [shape: bf16[512,2048], index: 5, kind: input, shape index: {}]
  %s6 = inlined_call_operand.hbm [shape: f32[1,2048], index: 6, kind: input, shape index: {}]
  %s7 = inlined_call_operand.hbm [shape: bf16[2048,128], index: 7, kind: input, shape index: {}]
  %s8 = inlined_call_operand.hbm [shape: f32[1,128], index: 8, kind: input, shape index: {}]
  %s9 = inlined_call_operand.hbm [shape: f32[16,128], index: 9, kind: output, shape index: {}]
  %s10 = sld [smem:[#allocation0]]
  $region82: #{tpu_custom_call.1} parent=0
    _
  %s12 = ssub.s32 1, %s10
  %s13 = scalar_select 0, %s12, %s10
  $region1: #{tpu_custom_call.1} parent=0
    #allocation3 [shape = 'u8[4096]{0}', space=vmem, size = 0x1000, scoped, tag = 'input window, operand 0, single buffered']
    #allocation4 [shape = 's32[1]{0}', space=sflag, size = 0x4, scoped, tag = 'scoped memory for tpu_custom_call.1']
    #allocation5 [shape = 's32[1]{0}', space=sflag, size = 0x4, scoped, tag = 'scoped memory for tpu_custom_call.1']
    #allocation6 [shape = 'u8[131072]{0}', space=vmem, size = 0x20000, scoped, tag = 'input window, operand 1, single buffered']
    #allocation7 [shape = 's32[1]{0}', space=sflag, size = 0x4, scoped, tag = 'scoped memory for tpu_custom_call.1']
    #allocation8 [shape = 'u8[2048]{0}', space=vmem, size = 0x800, scoped, tag = 'input window, operand 2, single buffered']
    #allocation9 [shape = 'u8[524288]{0}', space=vmem, size = 0x80000, scoped, tag = 'input window, operand 3, single buffered']
    #allocation10 [shape = 's32[1]{0}', space=sflag, size = 0x4, scoped, tag = 'scoped memory for tpu_custom_call.1']
    #allocation11 [shape = 'u8[2048]{0}', space=vmem, size = 0x800, scoped, tag = 'input window, operand 4, single buffered']
    #allocation12 [shape = 'u8[2097152]{0}', space=vmem, size = 0x200000, scoped, tag = 'input window, operand 5, single buffered']
    #allocation13 [shape = 's32[1]{0}', space=sflag, size = 0x4, scoped, tag = 'scoped memory for tpu_custom_call.1']
    #allocation14 [shape = 'u8[8192]{0}', space=vmem, size = 0x2000, scoped, tag = 'input window, operand 6, single buffered']
    #allocation15 [shape = 'u8[524288]{0}', space=vmem, size = 0x80000, scoped, tag = 'input window, operand 7, single buffered']
    #allocation16 [shape = 's32[1]{0}', space=sflag, size = 0x4, scoped, tag = 'scoped memory for tpu_custom_call.1']
    #allocation17 [shape = 'u8[512]{0}', space=vmem, size = 0x400, scoped, tag = 'input window, operand 8, single buffered']
    #allocation18 [shape = 'u8[8192]{0}', space=vmem, size = 0x2000, scoped, tag = 'output window, operand 0, single buffered']
    %14 = vsyncpa [#allocation4], 0
    %15 = vsyncpa [#allocation7], 0
    %16 = vsyncpa [#allocation10], 0
    %17 = vsyncpa [#allocation13], 0
    %18 = vsyncpa [#allocation16], 0
    %19 = vsyncpa [#allocation5], 0
    // Predicated region
    $region2: #{tpu_custom_call.1} parent=1 // pred_check
      _
    $region3: #{tpu_custom_call.1} parent=1 // pred_check_branch
      %21 = sbr.rel (0) target = $region5
    $region4: #{tpu_custom_call.1} parent=1 // pred_region
      %s23 = ssub.s32 128, 128
      %24 = vsyncadd [#allocation4], %s23
      %s25 = sshll.u32 [#allocation3], 4
      %s26 = int_to_ptr.vmem [resolvable:$true] %s25
      %31 = dma.hbm_to_vmem [thread:$0]  %s0, 128, %s26, [#allocation4], 64, 64, 4
    $region5: #{tpu_custom_call.1} parent=1 // pred_fallthru
      _
    // Predicated region
    $region6: #{tpu_custom_call.1} parent=1 // pred_check
      _
    $region7: #{tpu_custom_call.1} parent=1 // pred_check_branch
      %33 = sbr.rel (0) target = $region9
    $region8: #{tpu_custom_call.1} parent=1 // pred_region
      %s35 = ssub.s32 4096, 4096
      %36 = vsyncadd [#allocation7], %s35
      %s37 = sshll.u32 [#allocation6], 4
      %s38 = int_to_ptr.vmem [resolvable:$true] %s37
      %43 = dma.hbm_to_vmem [thread:$0]  %s1, 4096, %s38, [#allocation7], 256, 256, 16
    $region9: #{tpu_custom_call.1} parent=1 // pred_fallthru
      _
    // Predicated region
    $region10: #{tpu_custom_call.1} parent=1 // pred_check
      _
    $region11: #{tpu_custom_call.1} parent=1 // pred_check_branch
      %45 = sbr.rel (0) target = $region13
    $region12: #{tpu_custom_call.1} parent=1 // pred_region
      %s47 = ssub.s32 64, 64
      %48 = vsyncadd [#allocation7], %s47
      %s50 = sshll.u32 [#allocation8], 4
      %s51 = int_to_ptr.vmem [resolvable:$true] %s50
      %53 = dma.hbm_to_vmem [thread:$0]  %s2, 64, %s51, [#allocation7]
    $region13: #{tpu_custom_call.1} parent=1 // pred_fallthru
      _
    // Predicated region
    $region14: #{tpu_custom_call.1} parent=1 // pred_check
      _
    $region15: #{tpu_custom_call.1} parent=1 // pred_check_branch
      %55 = sbr.rel (0) target = $region17
    $region16: #{tpu_custom_call.1} parent=1 // pred_region
      %s57 = ssub.s32 16384, 16384
      %58 = vsyncadd [#allocation10], %s57
      %s59 = sshll.u32 [#allocation9], 4
      %s60 = int_to_ptr.vmem [resolvable:$true] %s59
      %65 = dma.hbm_to_vmem [thread:$0]  %s3, 16384, %s60, [#allocation10], 256, 256, 16
    $region17: #{tpu_custom_call.1} parent=1 // pred_fallthru
      _
    // Predicated region
    $region18: #{tpu_custom_call.1} parent=1 // pred_check
      _
    $region19: #{tpu_custom_call.1} parent=1 // pred_check_branch
      %67 = sbr.rel (0) target = $region21
    $region20: #{tpu_custom_call.1} parent=1 // pred_region
      %s69 = ssub.s32 64, 64
      %70 = vsyncadd [#allocation10], %s69
      %s72 = sshll.u32 [#allocation11], 4
      %s73 = int_to_ptr.vmem [resolvable:$true] %s72
      %75 = dma.hbm_to_vmem [thread:$0]  %s4, 64, %s73, [#allocation10]
    $region21: #{tpu_custom_call.1} parent=1 // pred_fallthru
      _
    // Predicated region
    $region22: #{tpu_custom_call.1} parent=1 // pred_check
      _
    $region23: #{tpu_custom_call.1} parent=1 // pred_check_branch
      %77 = sbr.rel (0) target = $region25
    $region24: #{tpu_custom_call.1} parent=1 // pred_region
      %s79 = ssub.s32 65536, 65536
      %80 = vsyncadd [#allocation13], %s79
      %s81 = sshll.u32 [#allocation12], 4
      %s82 = int_to_ptr.vmem [resolvable:$true] %s81
      %87 = dma.hbm_to_vmem [thread:$0]  %s5, 65536, %s82, [#allocation13], 1024, 1024, 64
    $region25: #{tpu_custom_call.1} parent=1 // pred_fallthru
      _
    // Predicated region
    $region26: #{tpu_custom_call.1} parent=1 // pred_check
      _
    $region27: #{tpu_custom_call.1} parent=1 // pred_check_branch
      %89 = sbr.rel (0) target = $region29
    $region28: #{tpu_custom_call.1} parent=1 // pred_region
      %s91 = ssub.s32 256, 256
      %92 = vsyncadd [#allocation13], %s91
      %s94 = sshll.u32 [#allocation14], 4
      %s95 = int_to_ptr.vmem [resolvable:$true] %s94
      %97 = dma.hbm_to_vmem [thread:$0]  %s6, 256, %s95, [#allocation13]
    $region29: #{tpu_custom_call.1} parent=1 // pred_fallthru
      _
    // Predicated region
    $region30: #{tpu_custom_call.1} parent=1 // pred_check
      _
    $region31: #{tpu_custom_call.1} parent=1 // pred_check_branch
      %99 = sbr.rel (0) target = $region33
    $region32: #{tpu_custom_call.1} parent=1 // pred_region
      %s101 = ssub.s32 16384, 16384
      %102 = vsyncadd [#allocation16], %s101
      %s103 = sshll.u32 [#allocation15], 4
      %s104 = int_to_ptr.vmem [resolvable:$true] %s103
      %109 = dma.hbm_to_vmem [thread:$0]  %s7, 16384, %s104, [#allocation16], 64, 64, 4
    $region33: #{tpu_custom_call.1} parent=1 // pred_fallthru
      _
    // Predicated region
    $region34: #{tpu_custom_call.1} parent=1 // pred_check
      _
    $region35: #{tpu_custom_call.1} parent=1 // pred_check_branch
      %111 = sbr.rel (0) target = $region37
    $region36: #{tpu_custom_call.1} parent=1 // pred_region
      %s113 = ssub.s32 16, 16
      %114 = vsyncadd [#allocation16], %s113
      %s116 = sshll.u32 [#allocation17], 4
      %s117 = int_to_ptr.vmem [resolvable:$true] %s116
      %119 = dma.hbm_to_vmem [thread:$0]  %s8, 16, %s117, [#allocation16]
    $region37: #{tpu_custom_call.1} parent=1 // pred_fallthru
      _
    // Predicated region
    $region38: #{tpu_custom_call.1} parent=1 // pred_check
      _
    $region39: #{tpu_custom_call.1} parent=1 // pred_check_branch
      %121 = sbr.rel (0) target = $region41
    $region40: #{tpu_custom_call.1} parent=1 // pred_region
      %122 = dma.done [#allocation4], 128
    $region41: #{tpu_custom_call.1} parent=1 // pred_fallthru
      _
    // Predicated region
    $region42: #{tpu_custom_call.1} parent=1 // pred_check
      _
    $region43: #{tpu_custom_call.1} parent=1 // pred_check_branch
      %124 = sbr.rel (0) target = $region45
    $region44: #{tpu_custom_call.1} parent=1 // pred_region
      %125 = dma.done [#allocation7], 4096
    $region45: #{tpu_custom_call.1} parent=1 // pred_fallthru
      _
    // Predicated region
    $region46: #{tpu_custom_call.1} parent=1 // pred_check
      _
    $region47: #{tpu_custom_call.1} parent=1 // pred_check_branch
      %127 = sbr.rel (0) target = $region49
    $region48: #{tpu_custom_call.1} parent=1 // pred_region
      %128 = dma.done [#allocation7], 64
    $region49: #{tpu_custom_call.1} parent=1 // pred_fallthru
      _
    // Predicated region
    $region50: #{tpu_custom_call.1} parent=1 // pred_check
      _
    $region51: #{tpu_custom_call.1} parent=1 // pred_check_branch
      %130 = sbr.rel (0) target = $region53
    $region52: #{tpu_custom_call.1} parent=1 // pred_region
      %131 = dma.done [#allocation10], 16384
    $region53: #{tpu_custom_call.1} parent=1 // pred_fallthru
      _
    // Predicated region
    $region54: #{tpu_custom_call.1} parent=1 // pred_check
      _
    $region55: #{tpu_custom_call.1} parent=1 // pred_check_branch
      %133 = sbr.rel (0) target = $region57
    $region56: #{tpu_custom_call.1} parent=1 // pred_region
      %134 = dma.done [#allocation10], 64
    $region57: #{tpu_custom_call.1} parent=1 // pred_fallthru
      _
    // Predicated region
    $region58: #{tpu_custom_call.1} parent=1 // pred_check
      _
    $region59: #{tpu_custom_call.1} parent=1 // pred_check_branch
      %136 = sbr.rel (0) target = $region61
    $region60: #{tpu_custom_call.1} parent=1 // pred_region
      %137 = dma.done [#allocation13], 65536
    $region61: #{tpu_custom_call.1} parent=1 // pred_fallthru
      _
    // Predicated region
    $region62: #{tpu_custom_call.1} parent=1 // pred_check
      _
    $region63: #{tpu_custom_call.1} parent=1 // pred_check_branch
      %139 = sbr.rel (0) target = $region65
    $region64: #{tpu_custom_call.1} parent=1 // pred_region
      %140 = dma.done [#allocation13], 256
    $region65: #{tpu_custom_call.1} parent=1 // pred_fallthru
      _
    // Predicated region
    $region66: #{tpu_custom_call.1} parent=1 // pred_check
      _
    $region67: #{tpu_custom_call.1} parent=1 // pred_check_branch
      %142 = sbr.rel (0) target = $region69
    $region68: #{tpu_custom_call.1} parent=1 // pred_region
      %143 = dma.done [#allocation16], 16384
    $region69: #{tpu_custom_call.1} parent=1 // pred_fallthru
      _
    // Predicated region
    $region70: #{tpu_custom_call.1} parent=1 // pred_check
      _
    $region71: #{tpu_custom_call.1} parent=1 // pred_check_branch
      %145 = sbr.rel (0) target = $region73
    $region72: #{tpu_custom_call.1} parent=1 // pred_region
      %146 = dma.done [#allocation16], 16
    $region73: #{tpu_custom_call.1} parent=1 // pred_fallthru
      _
    %v148 = vld [vmem:[#allocation3] sm:$0xf]
    %v149 = vld [vmem:[#allocation3 + $0x4] sm:$0xf]
    %v150 = vld [vmem:[#allocation6] sm:$0xff]
    %v151 = vld [vmem:[#allocation6 + $0x8] sm:$0xff]
    %v152 = vld [vmem:[#allocation6 + $0x10] sm:$0xff]
    %v153 = vld [vmem:[#allocation6 + $0x18] sm:$0xff]
    %v154 = vld [vmem:[#allocation6 + $0x20] sm:$0xff]
    %v155 = vld [vmem:[#allocation6 + $0x28] sm:$0xff]
    %v156 = vld [vmem:[#allocation6 + $0x30] sm:$0xff]
    %v157 = vld [vmem:[#allocation6 + $0x38] sm:$0xff]
    %v158 = vld [vmem:[#allocation6 + $0x40] sm:$0xff]
    %v159 = vld [vmem:[#allocation6 + $0x48] sm:$0xff]
    %v160 = vld [vmem:[#allocation6 + $0x50] sm:$0xff]
    %v161 = vld [vmem:[#allocation6 + $0x58] sm:$0xff]
    %v162 = vld [vmem:[#allocation6 + $0x60] sm:$0xff]
    %v163 = vld [vmem:[#allocation6 + $0x68] sm:$0xff]
    %v164 = vld [vmem:[#allocation6 + $0x70] sm:$0xff]
    %v165 = vld [vmem:[#allocation6 + $0x78] sm:$0xff]
    %v166 = vld [vmem:[#allocation6 + $0x80] sm:$0xff]
    %v167 = vld [vmem:[#allocation6 + $0x88] sm:$0xff]
    %v168 = vld [vmem:[#allocation6 + $0x90] sm:$0xff]
    %v169 = vld [vmem:[#allocation6 + $0x98] sm:$0xff]
    %v170 = vld [vmem:[#allocation6 + $0xa0] sm:$0xff]
    %v171 = vld [vmem:[#allocation6 + $0xa8] sm:$0xff]
    %v172 = vld [vmem:[#allocation6 + $0xb0] sm:$0xff]
    %v173 = vld [vmem:[#allocation6 + $0xb8] sm:$0xff]
    %v174 = vld [vmem:[#allocation6 + $0xc0] sm:$0xff]
    %v175 = vld [vmem:[#allocation6 + $0xc8] sm:$0xff]
    %v176 = vld [vmem:[#allocation6 + $0xd0] sm:$0xff]
    %v177 = vld [vmem:[#allocation6 + $0xd8] sm:$0xff]
    %v178 = vld [vmem:[#allocation6 + $0xe0] sm:$0xff]
    %v179 = vld [vmem:[#allocation6 + $0xe8] sm:$0xff]
    %v180 = vld [vmem:[#allocation6 + $0xf0] sm:$0xff]
    %v181 = vld [vmem:[#allocation6 + $0xf8] sm:$0xff]
    %v182 = vld [vmem:[#allocation8] sm:$0xf]
    %v184 = vlaneseq
    %v185 = vshrl.u32 %v184, 7
    %v186 = vsub.s32 0, %v185
    %v187 = vrot.slane %v182, %v186
    %v188 = vlaneseq
    %v189 = vshrl.u32 %v188, 7
    %v190 = vsub.s32 1, %v189
    %v191 = vrot.slane %v182, %v190
    %v192 = vlaneseq
    %v193 = vshrl.u32 %v192, 7
    %v194 = vsub.s32 2, %v193
    %v195 = vrot.slane %v182, %v194
    %v196 = vlaneseq
    %v197 = vshrl.u32 %v196, 7
    %v198 = vsub.s32 3, %v197
    %v199 = vrot.slane %v182, %v198
    %v206 = vunpack.c.l.b16 %v148
    %v207 = vunpack.c.l.b16 %v149
    %v208 = vpack.c.b16 %v207, %v206
    %v242 = vunpack.c.l.b16 %v150
    %v243 = vunpack.c.h.b16 %v150
    %v244 = vunpack.c.l.b16 %v151
    %v245 = vunpack.c.h.b16 %v151
    %v246 = vunpack.c.l.b16 %v152
    %v247 = vunpack.c.h.b16 %v152
    %v248 = vunpack.c.l.b16 %v153
    %v249 = vunpack.c.h.b16 %v153
    %v250 = vunpack.c.l.b16 %v154
    %v251 = vunpack.c.h.b16 %v154
    %v252 = vunpack.c.l.b16 %v155
    %v253 = vunpack.c.h.b16 %v155
    %v254 = vunpack.c.l.b16 %v156
    %v255 = vunpack.c.h.b16 %v156
    %v256 = vunpack.c.l.b16 %v157
    %v257 = vunpack.c.h.b16 %v157
    %v258 = vunpack.c.l.b16 %v158
    %v259 = vunpack.c.h.b16 %v158
    %v260 = vunpack.c.l.b16 %v159
    %v261 = vunpack.c.h.b16 %v159
    %v262 = vunpack.c.l.b16 %v160
    %v263 = vunpack.c.h.b16 %v160
    %v264 = vunpack.c.l.b16 %v161
    %v265 = vunpack.c.h.b16 %v161
    %v266 = vunpack.c.l.b16 %v162
    %v267 = vunpack.c.h.b16 %v162
    %v268 = vunpack.c.l.b16 %v163
    %v269 = vunpack.c.h.b16 %v163
    %v270 = vunpack.c.l.b16 %v164
    %v271 = vunpack.c.h.b16 %v164
    %v272 = vunpack.c.l.b16 %v165
    %v273 = vunpack.c.h.b16 %v165
    %v274 = vunpack.c.l.b16 %v166
    %v275 = vunpack.c.h.b16 %v166
    %v276 = vunpack.c.l.b16 %v167
    %v277 = vunpack.c.h.b16 %v167
    %v278 = vunpack.c.l.b16 %v168
    %v279 = vunpack.c.h.b16 %v168
    %v280 = vunpack.c.l.b16 %v169
    %v281 = vunpack.c.h.b16 %v169
    %v282 = vunpack.c.l.b16 %v170
    %v283 = vunpack.c.h.b16 %v170
    %v284 = vunpack.c.l.b16 %v171
    %v285 = vunpack.c.h.b16 %v171
    %v286 = vunpack.c.l.b16 %v172
    %v287 = vunpack.c.h.b16 %v172
    %v288 = vunpack.c.l.b16 %v173
    %v289 = vunpack.c.h.b16 %v173
    %v290 = vunpack.c.l.b16 %v174
    %v291 = vunpack.c.h.b16 %v174
    %v292 = vunpack.c.l.b16 %v175
    %v293 = vunpack.c.h.b16 %v175
    %v294 = vunpack.c.l.b16 %v176
    %v295 = vunpack.c.h.b16 %v176
    %v296 = vunpack.c.l.b16 %v177
    %v297 = vunpack.c.h.b16 %v177
    %v298 = vunpack.c.l.b16 %v178
    %v299 = vunpack.c.h.b16 %v178
    %v300 = vunpack.c.l.b16 %v179
    %v301 = vunpack.c.h.b16 %v179
    %v302 = vunpack.c.l.b16 %v180
    %v303 = vunpack.c.h.b16 %v180
    %v304 = vunpack.c.l.b16 %v181
    %v305 = vunpack.c.h.b16 %v181
    %v306 = vpack.c.b16 %v246, %v242
    %v307 = vpack.c.b16 %v247, %v243
    %v308 = vpack.c.b16 %v248, %v244
    %v309 = vpack.c.b16 %v249, %v245
    %v310 = vpack.c.b16 %v254, %v250
    %v311 = vpack.c.b16 %v255, %v251
    %v312 = vpack.c.b16 %v256, %v252
    %v313 = vpack.c.b16 %v257, %v253
    %v314 = vpack.c.b16 %v262, %v258
    %v315 = vpack.c.b16 %v263, %v259
    %v316 = vpack.c.b16 %v264, %v260
    %v317 = vpack.c.b16 %v265, %v261
    %v318 = vpack.c.b16 %v270, %v266
    %v319 = vpack.c.b16 %v271, %v267
    %v320 = vpack.c.b16 %v272, %v268
    %v321 = vpack.c.b16 %v273, %v269
    %v322 = vpack.c.b16 %v278, %v274
    %v323 = vpack.c.b16 %v279, %v275
    %v324 = vpack.c.b16 %v280, %v276
    %v325 = vpack.c.b16 %v281, %v277
    %v326 = vpack.c.b16 %v286, %v282
    %v327 = vpack.c.b16 %v287, %v283
    %v328 = vpack.c.b16 %v288, %v284
    %v329 = vpack.c.b16 %v289, %v285
    %v330 = vpack.c.b16 %v294, %v290
    %v331 = vpack.c.b16 %v295, %v291
    %v332 = vpack.c.b16 %v296, %v292
    %v333 = vpack.c.b16 %v297, %v293
    %v334 = vpack.c.b16 %v302, %v298
    %v335 = vpack.c.b16 %v303, %v299
    %v336 = vpack.c.b16 %v304, %v300
    %v337 = vpack.c.b16 %v305, %v301
    %370 = vmatprep.subr.bf16.mxu0 %v307
    %371 = vmatpush1.bf16.msra.mxu0 %v306
    %372 = vmatprep.subr.bf16.mxu0 %v311
    %373 = vmatpush1.bf16.msra.mxu0 %v310
    %374 = vmatprep.subr.bf16.mxu0 %v315
    %375 = vmatpush1.bf16.msra.mxu0 %v314
    %376 = vmatprep.subr.bf16.mxu0 %v319
    %377 = vmatpush1.bf16.msra.mxu0 %v318
    %378 = vmatprep.subr.bf16.mxu0 %v323
    %379 = vmatpush1.bf16.msra.mxu0 %v322
    %380 = vmatprep.subr.bf16.mxu0 %v327
    %381 = vmatpush1.bf16.msra.mxu0 %v326
    %382 = vmatprep.subr.bf16.mxu0 %v331
    %383 = vmatpush1.bf16.msra.mxu0 %v330
    %384 = vmatprep.subr.bf16.mxu0 %v335
    %385 = vmatpush1.bf16.msra.mxu0 %v334
    %386 = vmatprep.subr.bf16.mxu0 0
    %387 = vmatpush1.bf16.msra.mxu0 0
    %388 = vmatprep.subr.bf16.mxu0 0
    %389 = vmatpush1.bf16.msra.mxu0 0
    %390 = vmatprep.subr.bf16.mxu0 0
    %391 = vmatpush1.bf16.msra.mxu0 0
    %392 = vmatprep.subr.bf16.mxu0 0
    %393 = vmatpush1.bf16.msra.mxu0 0
    %394 = vmatprep.subr.bf16.mxu0 0
    %395 = vmatpush1.bf16.msra.mxu0 0
    %396 = vmatprep.subr.bf16.mxu0 0
    %397 = vmatpush1.bf16.msra.mxu0 0
    %398 = vmatprep.subr.bf16.mxu0 0
    %399 = vmatpush1.bf16.msra.mxu0 0
    %400 = vmatprep.subr.bf16.mxu0 0
    %401 = vmatpush1.bf16.msra.mxu0 0
    %402 = vmatprep.mubr.bf16.mxu0 0
    %403 = vmatmul.mubr.bf16.gmra.mrb[0].mxu0 %v208
    %v404 = vpop.f32.mrb[0].mxu0
    %v405 = vadd.f32 %v187, %v404
    %v406 = vpop.f32.mrb[0].mxu0
    %v407 = vadd.f32 %v191, %v406
    %v408 = vpop.f32.mrb[0].mxu0
    %v409 = vadd.f32 %v187, %v408
    %v410 = vpop.f32.mrb[0].mxu0
    %v411 = vadd.f32 %v191, %v410
    %412 = vdwg.mxu0
    %413 = vmatprep.subr.bf16.mxu0 %v309
    %414 = vmatpush1.bf16.msra.mxu0 %v308
    %415 = vmatprep.subr.bf16.mxu0 %v313
    %416 = vmatpush1.bf16.msra.mxu0 %v312
    %417 = vmatprep.subr.bf16.mxu0 %v317
    %418 = vmatpush1.bf16.msra.mxu0 %v316
    %419 = vmatprep.subr.bf16.mxu0 %v321
    %420 = vmatpush1.bf16.msra.mxu0 %v320
    %421 = vmatprep.subr.bf16.mxu0 %v325
    %422 = vmatpush1.bf16.msra.mxu0 %v324
    %423 = vmatprep.subr.bf16.mxu0 %v329
    %424 = vmatpush1.bf16.msra.mxu0 %v328
    %425 = vmatprep.subr.bf16.mxu0 %v333
    %426 = vmatpush1.bf16.msra.mxu0 %v332
    %427 = vmatprep.subr.bf16.mxu0 %v337
    %428 = vmatpush1.bf16.msra.mxu0 %v336
    %429 = vmatprep.subr.bf16.mxu0 0
    %430 = vmatpush1.bf16.msra.mxu0 0
    %431 = vmatprep.subr.bf16.mxu0 0
    %432 = vmatpush1.bf16.msra.mxu0 0
    %433 = vmatprep.subr.bf16.mxu0 0
    %434 = vmatpush1.bf16.msra.mxu0 0
    %435 = vmatprep.subr.bf16.mxu0 0
    %436 = vmatpush1.bf16.msra.mxu0 0
    %437 = vmatprep.subr.bf16.mxu0 0
    %438 = vmatpush1.bf16.msra.mxu0 0
    %439 = vmatprep.subr.bf16.mxu0 0
    %440 = vmatpush1.bf16.msra.mxu0 0
    %441 = vmatprep.subr.bf16.mxu0 0
    %442 = vmatpush1.bf16.msra.mxu0 0
    %443 = vmatprep.subr.bf16.mxu0 0
    %444 = vmatpush1.bf16.msra.mxu0 0
    %445 = vmatprep.mubr.bf16.mxu0 0
    %446 = vmatmul.mubr.bf16.gmra.mrb[0].mxu0 %v208
    %v447 = vpop.f32.mrb[0].mxu0
    %v448 = vadd.f32 %v195, %v447
    %v449 = vpop.f32.mrb[0].mxu0
    %v450 = vadd.f32 %v199, %v449
    %v451 = vpop.f32.mrb[0].mxu0
    %v452 = vadd.f32 %v195, %v451
    %v453 = vpop.f32.mrb[0].mxu0
    %v454 = vadd.f32 %v199, %v453
    %455 = vdwg.mxu0
    %v456 = vmax.f32 %v405, 0.0
    %v457 = vmax.f32 %v407, 0.0
    %v458 = vmax.f32 %v448, 0.0
    %v459 = vmax.f32 %v450, 0.0
    %v460 = vmax.f32 %v409, 0.0
    %v461 = vmax.f32 %v411, 0.0
    %v462 = vmax.f32 %v452, 0.0
    %v463 = vmax.f32 %v454, 0.0
    %v464 = vpack.c.bf16 %v460, %v456
    %v465 = vpack.c.bf16 %v461, %v457
    %v466 = vpack.c.bf16 %v462, %v458
    %v467 = vpack.c.bf16 %v463, %v459
    %v468 = vld [vmem:[#allocation9] sm:$0xff]
    %v469 = vld [vmem:[#allocation9 + $0x8] sm:$0xff]
    %v470 = vld [vmem:[#allocation9 + $0x10] sm:$0xff]
    %v471 = vld [vmem:[#allocation9 + $0x18] sm:$0xff]
    %v472 = vld [vmem:[#allocation9 + $0x20] sm:$0xff]
    %v473 = vld [vmem:[#allocation9 + $0x28] sm:$0xff]
    %v474 = vld [vmem:[#allocation9 + $0x30] sm:$0xff]
    %v475 = vld [vmem:[#allocation9 + $0x38] sm:$0xff]
    %v476 = vld [vmem:[#allocation9 + $0x40] sm:$0xff]
    %v477 = vld [vmem:[#allocation9 + $0x48] sm:$0xff]
    %v478 = vld [vmem:[#allocation9 + $0x50] sm:$0xff]
    %v479 = vld [vmem:[#allocation9 + $0x58] sm:$0xff]
    %v480 = vld [vmem:[#allocation9 + $0x60] sm:$0xff]
    %v481 = vld [vmem:[#allocation9 + $0x68] sm:$0xff]
    %v482 = vld [vmem:[#allocation9 + $0x70] sm:$0xff]
    %v483 = vld [vmem:[#allocation9 + $0x78] sm:$0xff]
    %v484 = vld [vmem:[#allocation9 + $0x80] sm:$0xff]
    %v485 = vld [vmem:[#allocation9 + $0x88] sm:$0xff]
    %v486 = vld [vmem:[#allocation9 + $0x90] sm:$0xff]
    %v487 = vld [vmem:[#allocation9 + $0x98] sm:$0xff]
    %v488 = vld [vmem:[#allocation9 + $0xa0] sm:$0xff]
    %v489 = vld [vmem:[#allocation9 + $0xa8] sm:$0xff]
    %v490 = vld [vmem:[#allocation9 + $0xb0] sm:$0xff]
    %v491 = vld [vmem:[#allocation9 + $0xb8] sm:$0xff]
    %v492 = vld [vmem:[#allocation9 + $0xc0] sm:$0xff]
    %v493 = vld [vmem:[#allocation9 + $0xc8] sm:$0xff]
    %v494 = vld [vmem:[#allocation9 + $0xd0] sm:$0xff]
    %v495 = vld [vmem:[#allocation9 + $0xd8] sm:$0xff]
    %v496 = vld [vmem:[#allocation9 + $0xe0] sm:$0xff]
    %v497 = vld [vmem:[#allocation9 + $0xe8] sm:$0xff]
    %v498 = vld [vmem:[#allocation9 + $0xf0] sm:$0xff]
    %v499 = vld [vmem:[#allocation9 + $0xf8] sm:$0xff]
    %v500 = vld [vmem:[#allocation9 + $0x100] sm:$0xff]
    %v501 = vld [vmem:[#allocation9 + $0x108] sm:$0xff]
    %v502 = vld [vmem:[#allocation9 + $0x110] sm:$0xff]
    %v503 = vld [vmem:[#allocation9 + $0x118] sm:$0xff]
    %v504 = vld [vmem:[#allocation9 + $0x120] sm:$0xff]
    %v505 = vld [vmem:[#allocation9 + $0x128] sm:$0xff]
    %v506 = vld [vmem:[#allocation9 + $0x130] sm:$0xff]
    %v507 = vld [vmem:[#allocation9 + $0x138] sm:$0xff]
    %v508 = vld [vmem:[#allocation9 + $0x140] sm:$0xff]
    %v509 = vld [vmem:[#allocation9 + $0x148] sm:$0xff]
    %v510 = vld [vmem:[#allocation9 + $0x150] sm:$0xff]
    %v511 = vld [vmem:[#allocation9 + $0x158] sm:$0xff]
    %v512 = vld [vmem:[#allocation9 + $0x160] sm:$0xff]
    %v513 = vld [vmem:[#allocation9 + $0x168] sm:$0xff]
    %v514 = vld [vmem:[#allocation9 + $0x170] sm:$0xff]
    %v515 = vld [vmem:[#allocation9 + $0x178] sm:$0xff]
    %v516 = vld [vmem:[#allocation9 + $0x180] sm:$0xff]
    %v517 = vld [vmem:[#allocation9 + $0x188] sm:$0xff]
    %v518 = vld [vmem:[#allocation9 + $0x190] sm:$0xff]
    %v519 = vld [vmem:[#allocation9 + $0x198] sm:$0xff]
    %v520 = vld [vmem:[#allocation9 + $0x1a0] sm:$0xff]
    %v521 = vld [vmem:[#allocation9 + $0x1a8] sm:$0xff]
    %v522 = vld [vmem:[#allocation9 + $0x1b0] sm:$0xff]
    %v523 = vld [vmem:[#allocation9 + $0x1b8] sm:$0xff]
    %v524 = vld [vmem:[#allocation9 + $0x1c0] sm:$0xff]
    %v525 = vld [vmem:[#allocation9 + $0x1c8] sm:$0xff]
    %v526 = vld [vmem:[#allocation9 + $0x1d0] sm:$0xff]
    %v527 = vld [vmem:[#allocation9 + $0x1d8] sm:$0xff]
    %v528 = vld [vmem:[#allocation9 + $0x1e0] sm:$0xff]
    %v529 = vld [vmem:[#allocation9 + $0x1e8] sm:$0xff]
    %v530 = vld [vmem:[#allocation9 + $0x1f0] sm:$0xff]
    %v531 = vld [vmem:[#allocation9 + $0x1f8] sm:$0xff]
    %v532 = vld [vmem:[#allocation9 + $0x200] sm:$0xff]
    %v533 = vld [vmem:[#allocation9 + $0x208] sm:$0xff]
    %v534 = vld [vmem:[#allocation9 + $0x210] sm:$0xff]
    %v535 = vld [vmem:[#allocation9 + $0x218] sm:$0xff]
    %v536 = vld [vmem:[#allocation9 + $0x220] sm:$0xff]
    %v537 = vld [vmem:[#allocation9 + $0x228] sm:$0xff]
    %v538 = vld [vmem:[#allocation9 + $0x230] sm:$0xff]
    %v539 = vld [vmem:[#allocation9 + $0x238] sm:$0xff]
    %v540 = vld [vmem:[#allocation9 + $0x240] sm:$0xff]
    %v541 = vld [vmem:[#allocation9 + $0x248] sm:$0xff]
    %v542 = vld [vmem:[#allocation9 + $0x250] sm:$0xff]
    %v543 = vld [vmem:[#allocation9 + $0x258] sm:$0xff]
    %v544 = vld [vmem:[#allocation9 + $0x260] sm:$0xff]
    %v545 = vld [vmem:[#allocation9 + $0x268] sm:$0xff]
    %v546 = vld [vmem:[#allocation9 + $0x270] sm:$0xff]
    %v547 = vld [vmem:[#allocation9 + $0x278] sm:$0xff]
    %v548 = vld [vmem:[#allocation9 + $0x280] sm:$0xff]
    %v549 = vld [vmem:[#allocation9 + $0x288] sm:$0xff]
    %v550 = vld [vmem:[#allocation9 + $0x290] sm:$0xff]
    %v551 = vld [vmem:[#allocation9 + $0x298] sm:$0xff]
    %v552 = vld [vmem:[#allocation9 + $0x2a0] sm:$0xff]
    %v553 = vld [vmem:[#allocation9 + $0x2a8] sm:$0xff]
    %v554 = vld [vmem:[#allocation9 + $0x2b0] sm:$0xff]
    %v555 = vld [vmem:[#allocation9 + $0x2b8] sm:$0xff]
    %v556 = vld [vmem:[#allocation9 + $0x2c0] sm:$0xff]
    %v557 = vld [vmem:[#allocation9 + $0x2c8] sm:$0xff]
    %v558 = vld [vmem:[#allocation9 + $0x2d0] sm:$0xff]
    %v559 = vld [vmem:[#allocation9 + $0x2d8] sm:$0xff]
    %v560 = vld [vmem:[#allocation9 + $0x2e0] sm:$0xff]
    %v561 = vld [vmem:[#allocation9 + $0x2e8] sm:$0xff]
    %v562 = vld [vmem:[#allocation9 + $0x2f0] sm:$0xff]
    %v563 = vld [vmem:[#allocation9 + $0x2f8] sm:$0xff]
    %v564 = vld [vmem:[#allocation9 + $0x300] sm:$0xff]
    %v565 = vld [vmem:[#allocation9 + $0x308] sm:$0xff]
    %v566 = vld [vmem:[#allocation9 + $0x310] sm:$0xff]
    %v567 = vld [vmem:[#allocation9 + $0x318] sm:$0xff]
    %v568 = vld [vmem:[#allocation9 + $0x320] sm:$0xff]
    %v569 = vld [vmem:[#allocation9 + $0x328] sm:$0xff]
    %v570 = vld [vmem:[#allocation9 + $0x330] sm:$0xff]
    %v571 = vld [vmem:[#allocation9 + $0x338] sm:$0xff]
    %v572 = vld [vmem:[#allocation9 + $0x340] sm:$0xff]
    %v573 = vld [vmem:[#allocation9 + $0x348] sm:$0xff]
    %v574 = vld [vmem:[#allocation9 + $0x350] sm:$0xff]
    %v575 = vld [vmem:[#allocation9 + $0x358] sm:$0xff]
    %v576 = vld [vmem:[#allocation9 + $0x360] sm:$0xff]
    %v577 = vld [vmem:[#allocation9 + $0x368] sm:$0xff]
    %v578 = vld [vmem:[#allocation9 + $0x370] sm:$0xff]
    %v579 = vld [vmem:[#allocation9 + $0x378] sm:$0xff]
    %v580 = vld [vmem:[#allocation9 + $0x380] sm:$0xff]
    %v581 = vld [vmem:[#allocation9 + $0x388] sm:$0xff]
    %v582 = vld [vmem:[#allocation9 + $0x390] sm:$0xff]
    %v583 = vld [vmem:[#allocation9 + $0x398] sm:$0xff]
    %v584 = vld [vmem:[#allocation9 + $0x3a0] sm:$0xff]
    %v585 = vld [vmem:[#allocation9 + $0x3a8] sm:$0xff]
    %v586 = vld [vmem:[#allocation9 + $0x3b0] sm:$0xff]
    %v587 = vld [vmem:[#allocation9 + $0x3b8] sm:$0xff]
    %v588 = vld [vmem:[#allocation9 + $0x3c0] sm:$0xff]
    %v589 = vld [vmem:[#allocation9 + $0x3c8] sm:$0xff]
    %v590 = vld [vmem:[#allocation9 + $0x3d0] sm:$0xff]
    %v591 = vld [vmem:[#allocation9 + $0x3d8] sm:$0xff]
    %v592 = vld [vmem:[#allocation9 + $0x3e0] sm:$0xff]
    %v593 = vld [vmem:[#allocation9 + $0x3e8] sm:$0xff]
    %v594 = vld [vmem:[#allocation9 + $0x3f0] sm:$0xff]
    %v595 = vld [vmem:[#allocation9 + $0x3f8] sm:$0xff]
    %v596 = vld [vmem:[#allocation11] sm:$0xf]
    %v598 = vlaneseq
    %v599 = vshrl.u32 %v598, 7
    %v600 = vsub.s32 0, %v599
    %v601 = vrot.slane %v596, %v600
    %v602 = vlaneseq
    %v603 = vshrl.u32 %v602, 7
    %v604 = vsub.s32 1, %v603
    %v605 = vrot.slane %v596, %v604
    %v606 = vlaneseq
    %v607 = vshrl.u32 %v606, 7
    %v608 = vsub.s32 2, %v607
    %v609 = vrot.slane %v596, %v608
    %v610 = vlaneseq
    %v611 = vshrl.u32 %v610, 7
    %v612 = vsub.s32 3, %v611
    %v613 = vrot.slane %v596, %v612
    %v746 = vunpack.c.l.b16 %v468
    %v747 = vunpack.c.h.b16 %v468
    %v748 = vunpack.c.l.b16 %v469
    %v749 = vunpack.c.h.b16 %v469
    %v750 = vunpack.c.l.b16 %v470
    %v751 = vunpack.c.h.b16 %v470
    %v752 = vunpack.c.l.b16 %v471
    %v753 = vunpack.c.h.b16 %v471
    %v754 = vunpack.c.l.b16 %v472
    %v755 = vunpack.c.h.b16 %v472
    %v756 = vunpack.c.l.b16 %v473
    %v757 = vunpack.c.h.b16 %v473
    %v758 = vunpack.c.l.b16 %v474
    %v759 = vunpack.c.h.b16 %v474
    %v760 = vunpack.c.l.b16 %v475
    %v761 = vunpack.c.h.b16 %v475
    %v762 = vunpack.c.l.b16 %v476
    %v763 = vunpack.c.h.b16 %v476
    %v764 = vunpack.c.l.b16 %v477
    %v765 = vunpack.c.h.b16 %v477
    %v766 = vunpack.c.l.b16 %v478
    %v767 = vunpack.c.h.b16 %v478
    %v768 = vunpack.c.l.b16 %v479
    %v769 = vunpack.c.h.b16 %v479
    %v770 = vunpack.c.l.b16 %v480
    %v771 = vunpack.c.h.b16 %v480
    %v772 = vunpack.c.l.b16 %v481
    %v773 = vunpack.c.h.b16 %v481
    %v774 = vunpack.c.l.b16 %v482
    %v775 = vunpack.c.h.b16 %v482
    %v776 = vunpack.c.l.b16 %v483
    %v777 = vunpack.c.h.b16 %v483
    %v778 = vunpack.c.l.b16 %v484
    %v779 = vunpack.c.h.b16 %v484
    %v780 = vunpack.c.l.b16 %v485
    %v781 = vunpack.c.h.b16 %v485
    %v782 = vunpack.c.l.b16 %v486
    %v783 = vunpack.c.h.b16 %v486
    %v784 = vunpack.c.l.b16 %v487
    %v785 = vunpack.c.h.b16 %v487
    %v786 = vunpack.c.l.b16 %v488
    %v787 = vunpack.c.h.b16 %v488
    %v788 = vunpack.c.l.b16 %v489
    %v789 = vunpack.c.h.b16 %v489
    %v790 = vunpack.c.l.b16 %v490
    %v791 = vunpack.c.h.b16 %v490
    %v792 = vunpack.c.l.b16 %v491
    %v793 = vunpack.c.h.b16 %v491
    %v794 = vunpack.c.l.b16 %v492
    %v795 = vunpack.c.h.b16 %v492
    %v796 = vunpack.c.l.b16 %v493
    %v797 = vunpack.c.h.b16 %v493
    %v798 = vunpack.c.l.b16 %v494
    %v799 = vunpack.c.h.b16 %v494
    %v800 = vunpack.c.l.b16 %v495
    %v801 = vunpack.c.h.b16 %v495
    %v802 = vunpack.c.l.b16 %v496
    %v803 = vunpack.c.h.b16 %v496
    %v804 = vunpack.c.l.b16 %v497
    %v805 = vunpack.c.h.b16 %v497
    %v806 = vunpack.c.l.b16 %v498
    %v807 = vunpack.c.h.b16 %v498
    %v808 = vunpack.c.l.b16 %v499
    %v809 = vunpack.c.h.b16 %v499
    %v810 = vunpack.c.l.b16 %v500
    %v811 = vunpack.c.h.b16 %v500
    %v812 = vunpack.c.l.b16 %v501
    %v813 = vunpack.c.h.b16 %v501
    %v814 = vunpack.c.l.b16 %v502
    %v815 = vunpack.c.h.b16 %v502
    %v816 = vunpack.c.l.b16 %v503
    %v817 = vunpack.c.h.b16 %v503
    %v818 = vunpack.c.l.b16 %v504
    %v819 = vunpack.c.h.b16 %v504
    %v820 = vunpack.c.l.b16 %v505
    %v821 = vunpack.c.h.b16 %v505
    %v822 = vunpack.c.l.b16 %v506
    %v823 = vunpack.c.h.b16 %v506
    %v824 = vunpack.c.l.b16 %v507
    %v825 = vunpack.c.h.b16 %v507
    %v826 = vunpack.c.l.b16 %v508
    %v827 = vunpack.c.h.b16 %v508
    %v828 = vunpack.c.l.b16 %v509
    %v829 = vunpack.c.h.b16 %v509
    %v830 = vunpack.c.l.b16 %v510
    %v831 = vunpack.c.h.b16 %v510
    %v832 = vunpack.c.l.b16 %v511
    %v833 = vunpack.c.h.b16 %v511
    %v834 = vunpack.c.l.b16 %v512
    %v835 = vunpack.c.h.b16 %v512
    %v836 = vunpack.c.l.b16 %v513
    %v837 = vunpack.c.h.b16 %v513
    %v838 = vunpack.c.l.b16 %v514
    %v839 = vunpack.c.h.b16 %v514
    %v840 = vunpack.c.l.b16 %v515
    %v841 = vunpack.c.h.b16 %v515
    %v842 = vunpack.c.l.b16 %v516
    %v843 = vunpack.c.h.b16 %v516
    %v844 = vunpack.c.l.b16 %v517
    %v845 = vunpack.c.h.b16 %v517
    %v846 = vunpack.c.l.b16 %v518
    %v847 = vunpack.c.h.b16 %v518
    %v848 = vunpack.c.l.b16 %v519
    %v849 = vunpack.c.h.b16 %v519
    %v850 = vunpack.c.l.b16 %v520
    %v851 = vunpack.c.h.b16 %v520
    %v852 = vunpack.c.l.b16 %v521
    %v853 = vunpack.c.h.b16 %v521
    %v854 = vunpack.c.l.b16 %v522
    %v855 = vunpack.c.h.b16 %v522
    %v856 = vunpack.c.l.b16 %v523
    %v857 = vunpack.c.h.b16 %v523
    %v858 = vunpack.c.l.b16 %v524
    %v859 = vunpack.c.h.b16 %v524
    %v860 = vunpack.c.l.b16 %v525
    %v861 = vunpack.c.h.b16 %v525
    %v862 = vunpack.c.l.b16 %v526
    %v863 = vunpack.c.h.b16 %v526
    %v864 = vunpack.c.l.b16 %v527
    %v865 = vunpack.c.h.b16 %v527
    %v866 = vunpack.c.l.b16 %v528
    %v867 = vunpack.c.h.b16 %v528
    %v868 = vunpack.c.l.b16 %v529
    %v869 = vunpack.c.h.b16 %v529
    %v870 = vunpack.c.l.b16 %v530
    %v871 = vunpack.c.h.b16 %v530
    %v872 = vunpack.c.l.b16 %v531
    %v873 = vunpack.c.h.b16 %v531
    %v874 = vunpack.c.l.b16 %v532
    %v875 = vunpack.c.h.b16 %v532
    %v876 = vunpack.c.l.b16 %v533
    %v877 = vunpack.c.h.b16 %v533
    %v878 = vunpack.c.l.b16 %v534
    %v879 = vunpack.c.h.b16 %v534
    %v880 = vunpack.c.l.b16 %v535
    %v881 = vunpack.c.h.b16 %v535
    %v882 = vunpack.c.l.b16 %v536
    %v883 = vunpack.c.h.b16 %v536
    %v884 = vunpack.c.l.b16 %v537
    %v885 = vunpack.c.h.b16 %v537
    %v886 = vunpack.c.l.b16 %v538
    %v887 = vunpack.c.h.b16 %v538
    %v888 = vunpack.c.l.b16 %v539
    %v889 = vunpack.c.h.b16 %v539
    %v890 = vunpack.c.l.b16 %v540
    %v891 = vunpack.c.h.b16 %v540
    %v892 = vunpack.c.l.b16 %v541
    %v893 = vunpack.c.h.b16 %v541
    %v894 = vunpack.c.l.b16 %v542
    %v895 = vunpack.c.h.b16 %v542
    %v896 = vunpack.c.l.b16 %v543
    %v897 = vunpack.c.h.b16 %v543
    %v898 = vunpack.c.l.b16 %v544
    %v899 = vunpack.c.h.b16 %v544
    %v900 = vunpack.c.l.b16 %v545
    %v901 = vunpack.c.h.b16 %v545
    %v902 = vunpack.c.l.b16 %v546
    %v903 = vunpack.c.h.b16 %v546
    %v904 = vunpack.c.l.b16 %v547
    %v905 = vunpack.c.h.b16 %v547
    %v906 = vunpack.c.l.b16 %v548
    %v907 = vunpack.c.h.b16 %v548
    %v908 = vunpack.c.l.b16 %v549
    %v909 = vunpack.c.h.b16 %v549
    %v910 = vunpack.c.l.b16 %v550
    %v911 = vunpack.c.h.b16 %v550
    %v912 = vunpack.c.l.b16 %v551
    %v913 = vunpack.c.h.b16 %v551
    %v914 = vunpack.c.l.b16 %v552
    %v915 = vunpack.c.h.b16 %v552
    %v916 = vunpack.c.l.b16 %v553
    %v917 = vunpack.c.h.b16 %v553
    %v918 = vunpack.c.l.b16 %v554
    %v919 = vunpack.c.h.b16 %v554
    %v920 = vunpack.c.l.b16 %v555
    %v921 = vunpack.c.h.b16 %v555
    %v922 = vunpack.c.l.b16 %v556
    %v923 = vunpack.c.h.b16 %v556
    %v924 = vunpack.c.l.b16 %v557
    %v925 = vunpack.c.h.b16 %v557
    %v926 = vunpack.c.l.b16 %v558
    %v927 = vunpack.c.h.b16 %v558
    %v928 = vunpack.c.l.b16 %v559
    %v929 = vunpack.c.h.b16 %v559
    %v930 = vunpack.c.l.b16 %v560
    %v931 = vunpack.c.h.b16 %v560
    %v932 = vunpack.c.l.b16 %v561
    %v933 = vunpack.c.h.b16 %v561
    %v934 = vunpack.c.l.b16 %v562
    %v935 = vunpack.c.h.b16 %v562
    %v936 = vunpack.c.l.b16 %v563
    %v937 = vunpack.c.h.b16 %v563
    %v938 = vunpack.c.l.b16 %v564
    %v939 = vunpack.c.h.b16 %v564
    %v940 = vunpack.c.l.b16 %v565
    %v941 = vunpack.c.h.b16 %v565
    %v942 = vunpack.c.l.b16 %v566
    %v943 = vunpack.c.h.b16 %v566
    %v944 = vunpack.c.l.b16 %v567
    %v945 = vunpack.c.h.b16 %v567
    %v946 = vunpack.c.l.b16 %v568
    %v947 = vunpack.c.h.b16 %v568
    %v948 = vunpack.c.l.b16 %v569
    %v949 = vunpack.c.h.b16 %v569
    %v950 = vunpack.c.l.b16 %v570
    %v951 = vunpack.c.h.b16 %v570
    %v952 = vunpack.c.l.b16 %v571
    %v953 = vunpack.c.h.b16 %v571
    %v954 = vunpack.c.l.b16 %v572
    %v955 = vunpack.c.h.b16 %v572
    %v956 = vunpack.c.l.b16 %v573
    %v957 = vunpack.c.h.b16 %v573
    %v958 = vunpack.c.l.b16 %v574
    %v959 = vunpack.c.h.b16 %v574
    %v960 = vunpack.c.l.b16 %v575
    %v961 = vunpack.c.h.b16 %v575
    %v962 = vunpack.c.l.b16 %v576
    %v963 = vunpack.c.h.b16 %v576
    %v964 = vunpack.c.l.b16 %v577
    %v965 = vunpack.c.h.b16 %v577
    %v966 = vunpack.c.l.b16 %v578
    %v967 = vunpack.c.h.b16 %v578
    %v968 = vunpack.c.l.b16 %v579
    %v969 = vunpack.c.h.b16 %v579
    %v970 = vunpack.c.l.b16 %v580
    %v971 = vunpack.c.h.b16 %v580
    %v972 = vunpack.c.l.b16 %v581
    %v973 = vunpack.c.h.b16 %v581
    %v974 = vunpack.c.l.b16 %v582
    %v975 = vunpack.c.h.b16 %v582
    %v976 = vunpack.c.l.b16 %v583
    %v977 = vunpack.c.h.b16 %v583
    %v978 = vunpack.c.l.b16 %v584
    %v979 = vunpack.c.h.b16 %v584
    %v980 = vunpack.c.l.b16 %v585
    %v981 = vunpack.c.h.b16 %v585
    %v982 = vunpack.c.l.b16 %v586
    %v983 = vunpack.c.h.b16 %v586
    %v984 = vunpack.c.l.b16 %v587
    %v985 = vunpack.c.h.b16 %v587
    %v986 = vunpack.c.l.b16 %v588
    %v987 = vunpack.c.h.b16 %v588
    %v988 = vunpack.c.l.b16 %v589
    %v989 = vunpack.c.h.b16 %v589
    %v990 = vunpack.c.l.b16 %v590
    %v991 = vunpack.c.h.b16 %v590
    %v992 = vunpack.c.l.b16 %v591
    %v993 = vunpack.c.h.b16 %v591
    %v994 = vunpack.c.l.b16 %v592
    %v995 = vunpack.c.h.b16 %v592
    %v996 = vunpack.c.l.b16 %v593
    %v997 = vunpack.c.h.b16 %v593
    %v998 = vunpack.c.l.b16 %v594
    %v999 = vunpack.c.h.b16 %v594
    %v1000 = vunpack.c.l.b16 %v595
    %v1001 = vunpack.c.h.b16 %v595
    %v1002 = vpack.c.b16 %v750, %v746
    %v1003 = vpack.c.b16 %v751, %v747
    %v1004 = vpack.c.b16 %v752, %v748
    %v1005 = vpack.c.b16 %v753, %v749
    %v1006 = vpack.c.b16 %v758, %v754
    %v1007 = vpack.c.b16 %v759, %v755
    %v1008 = vpack.c.b16 %v760, %v756
    %v1009 = vpack.c.b16 %v761, %v757
    %v1010 = vpack.c.b16 %v766, %v762
    %v1011 = vpack.c.b16 %v767, %v763
    %v1012 = vpack.c.b16 %v768, %v764
    %v1013 = vpack.c.b16 %v769, %v765
    %v1014 = vpack.c.b16 %v774, %v770
    %v1015 = vpack.c.b16 %v775, %v771
    %v1016 = vpack.c.b16 %v776, %v772
    %v1017 = vpack.c.b16 %v777, %v773
    %v1018 = vpack.c.b16 %v782, %v778
    %v1019 = vpack.c.b16 %v783, %v779
    %v1020 = vpack.c.b16 %v784, %v780
    %v1021 = vpack.c.b16 %v785, %v781
    %v1022 = vpack.c.b16 %v790, %v786
    %v1023 = vpack.c.b16 %v791, %v787
    %v1024 = vpack.c.b16 %v792, %v788
    %v1025 = vpack.c.b16 %v793, %v789
    %v1026 = vpack.c.b16 %v798, %v794
    %v1027 = vpack.c.b16 %v799, %v795
    %v1028 = vpack.c.b16 %v800, %v796
    %v1029 = vpack.c.b16 %v801, %v797
    %v1030 = vpack.c.b16 %v806, %v802
    %v1031 = vpack.c.b16 %v807, %v803
    %v1032 = vpack.c.b16 %v808, %v804
    %v1033 = vpack.c.b16 %v809, %v805
    %v1034 = vpack.c.b16 %v814, %v810
    %v1035 = vpack.c.b16 %v815, %v811
    %v1036 = vpack.c.b16 %v816, %v812
    %v1037 = vpack.c.b16 %v817, %v813
    %v1038 = vpack.c.b16 %v822, %v818
    %v1039 = vpack.c.b16 %v823, %v819
    %v1040 = vpack.c.b16 %v824, %v820
    %v1041 = vpack.c.b16 %v825, %v821
    %v1042 = vpack.c.b16 %v830, %v826
    %v1043 = vpack.c.b16 %v831, %v827
    %v1044 = vpack.c.b16 %v832, %v828
    %v1045 = vpack.c.b16 %v833, %v829
    %v1046 = vpack.c.b16 %v838, %v834
    %v1047 = vpack.c.b16 %v839, %v835
    %v1048 = vpack.c.b16 %v840, %v836
    %v1049 = vpack.c.b16 %v841, %v837
    %v1050 = vpack.c.b16 %v846, %v842
    %v1051 = vpack.c.b16 %v847, %v843
    %v1052 = vpack.c.b16 %v848, %v844
    %v1053 = vpack.c.b16 %v849, %v845
    %v1054 = vpack.c.b16 %v854, %v850
    %v1055 = vpack.c.b16 %v855, %v851
    %v1056 = vpack.c.b16 %v856, %v852
    %v1057 = vpack.c.b16 %v857, %v853
    %v1058 = vpack.c.b16 %v862, %v858
    %v1059 = vpack.c.b16 %v863, %v859
    %v1060 = vpack.c.b16 %v864, %v860
    %v1061 = vpack.c.b16 %v865, %v861
    %v1062 = vpack.c.b16 %v870, %v866
    %v1063 = vpack.c.b16 %v871, %v867
    %v1064 = vpack.c.b16 %v872, %v868
    %v1065 = vpack.c.b16 %v873, %v869
    %v1066 = vpack.c.b16 %v878, %v874
    %v1067 = vpack.c.b16 %v879, %v875
    %v1068 = vpack.c.b16 %v880, %v876
    %v1069 = vpack.c.b16 %v881, %v877
    %v1070 = vpack.c.b16 %v886, %v882
    %v1071 = vpack.c.b16 %v887, %v883
    %v1072 = vpack.c.b16 %v888, %v884
    %v1073 = vpack.c.b16 %v889, %v885
    %v1074 = vpack.c.b16 %v894, %v890
    %v1075 = vpack.c.b16 %v895, %v891
    %v1076 = vpack.c.b16 %v896, %v892
    %v1077 = vpack.c.b16 %v897, %v893
    %v1078 = vpack.c.b16 %v902, %v898
    %v1079 = vpack.c.b16 %v903, %v899
    %v1080 = vpack.c.b16 %v904, %v900
    %v1081 = vpack.c.b16 %v905, %v901
    %v1082 = vpack.c.b16 %v910, %v906
    %v1083 = vpack.c.b16 %v911, %v907
    %v1084 = vpack.c.b16 %v912, %v908
    %v1085 = vpack.c.b16 %v913, %v909
    %v1086 = vpack.c.b16 %v918, %v914
    %v1087 = vpack.c.b16 %v919, %v915
    %v1088 = vpack.c.b16 %v920, %v916
    %v1089 = vpack.c.b16 %v921, %v917
    %v1090 = vpack.c.b16 %v926, %v922
    %v1091 = vpack.c.b16 %v927, %v923
    %v1092 = vpack.c.b16 %v928, %v924
    %v1093 = vpack.c.b16 %v929, %v925
    %v1094 = vpack.c.b16 %v934, %v930
    %v1095 = vpack.c.b16 %v935, %v931
    %v1096 = vpack.c.b16 %v936, %v932
    %v1097 = vpack.c.b16 %v937, %v933
    %v1098 = vpack.c.b16 %v942, %v938
    %v1099 = vpack.c.b16 %v943, %v939
    %v1100 = vpack.c.b16 %v944, %v940
    %v1101 = vpack.c.b16 %v945, %v941
    %v1102 = vpack.c.b16 %v950, %v946
    %v1103 = vpack.c.b16 %v951, %v947
    %v1104 = vpack.c.b16 %v952, %v948
    %v1105 = vpack.c.b16 %v953, %v949
    %v1106 = vpack.c.b16 %v958, %v954
    %v1107 = vpack.c.b16 %v959, %v955
    %v1108 = vpack.c.b16 %v960, %v956
    %v1109 = vpack.c.b16 %v961, %v957
    %v1110 = vpack.c.b16 %v966, %v962
    %v1111 = vpack.c.b16 %v967, %v963
    %v1112 = vpack.c.b16 %v968, %v964
    %v1113 = vpack.c.b16 %v969, %v965
    %v1114 = vpack.c.b16 %v974, %v970
    %v1115 = vpack.c.b16 %v975, %v971
    %v1116 = vpack.c.b16 %v976, %v972
    %v1117 = vpack.c.b16 %v977, %v973
    %v1118 = vpack.c.b16 %v982, %v978
    %v1119 = vpack.c.b16 %v983, %v979
    %v1120 = vpack.c.b16 %v984, %v980
    %v1121 = vpack.c.b16 %v985, %v981
    %v1122 = vpack.c.b16 %v990, %v986
    %v1123 = vpack.c.b16 %v991, %v987
    %v1124 = vpack.c.b16 %v992, %v988
    %v1125 = vpack.c.b16 %v993, %v989
    %v1126 = vpack.c.b16 %v998, %v994
    %v1127 = vpack.c.b16 %v999, %v995
    %v1128 = vpack.c.b16 %v1000, %v996
    %v1129 = vpack.c.b16 %v1001, %v997
    %1258 = vmatprep.subr.bf16.mxu0 %v1003
    %1259 = vmatpush1.bf16.msra.mxu0 %v1002
    %1260 = vmatprep.subr.bf16.mxu0 %v1007
    %1261 = vmatpush1.bf16.msra.mxu0 %v1006
    %1262 = vmatprep.subr.bf16.mxu0 %v1011
    %1263 = vmatpush1.bf16.msra.mxu0 %v1010
    %1264 = vmatprep.subr.bf16.mxu0 %v1015
    %1265 = vmatpush1.bf16.msra.mxu0 %v1014
    %1266 = vmatprep.subr.bf16.mxu0 %v1019
    %1267 = vmatpush1.bf16.msra.mxu0 %v1018
    %1268 = vmatprep.subr.bf16.mxu0 %v1023
    %1269 = vmatpush1.bf16.msra.mxu0 %v1022
    %1270 = vmatprep.subr.bf16.mxu0 %v1027
    %1271 = vmatpush1.bf16.msra.mxu0 %v1026
    %1272 = vmatprep.subr.bf16.mxu0 %v1031
    %1273 = vmatpush1.bf16.msra.mxu0 %v1030
    %1274 = vmatprep.subr.bf16.mxu0 %v1035
    %1275 = vmatpush1.bf16.msra.mxu0 %v1034
    %1276 = vmatprep.subr.bf16.mxu0 %v1039
    %1277 = vmatpush1.bf16.msra.mxu0 %v1038
    %1278 = vmatprep.subr.bf16.mxu0 %v1043
    %1279 = vmatpush1.bf16.msra.mxu0 %v1042
    %1280 = vmatprep.subr.bf16.mxu0 %v1047
    %1281 = vmatpush1.bf16.msra.mxu0 %v1046
    %1282 = vmatprep.subr.bf16.mxu0 %v1051
    %1283 = vmatpush1.bf16.msra.mxu0 %v1050
    %1284 = vmatprep.subr.bf16.mxu0 %v1055
    %1285 = vmatpush1.bf16.msra.mxu0 %v1054
    %1286 = vmatprep.subr.bf16.mxu0 %v1059
    %1287 = vmatpush1.bf16.msra.mxu0 %v1058
    %1288 = vmatprep.subr.bf16.mxu0 %v1063
    %1289 = vmatpush1.bf16.msra.mxu0 %v1062
    %1290 = vmatprep.mubr.bf16.mxu0 %v465
    %1291 = vmatmul.mubr.bf16.gmra.mrb[0].mxu0 %v464
    %v1292 = vpop.f32.mrb[0].mxu0
    %v1293 = vadd.f32 %v601, %v1292
    %v1294 = vpop.f32.mrb[0].mxu0
    %v1295 = vadd.f32 %v605, %v1294
    %v1296 = vpop.f32.mrb[0].mxu0
    %v1297 = vadd.f32 %v601, %v1296
    %v1298 = vpop.f32.mrb[0].mxu0
    %v1299 = vadd.f32 %v605, %v1298
    %1300 = vdwg.mxu0
    %1301 = vmatprep.subr.bf16.mxu0 %v1067
    %1302 = vmatpush1.bf16.msra.mxu0 %v1066
    %1303 = vmatprep.subr.bf16.mxu0 %v1071
    %1304 = vmatpush1.bf16.msra.mxu0 %v1070
    %1305 = vmatprep.subr.bf16.mxu0 %v1075
    %1306 = vmatpush1.bf16.msra.mxu0 %v1074
    %1307 = vmatprep.subr.bf16.mxu0 %v1079
    %1308 = vmatpush1.bf16.msra.mxu0 %v1078
    %1309 = vmatprep.subr.bf16.mxu0 %v1083
    %1310 = vmatpush1.bf16.msra.mxu0 %v1082
    %1311 = vmatprep.subr.bf16.mxu0 %v1087
    %1312 = vmatpush1.bf16.msra.mxu0 %v1086
    %1313 = vmatprep.subr.bf16.mxu0 %v1091
    %1314 = vmatpush1.bf16.msra.mxu0 %v1090
    %1315 = vmatprep.subr.bf16.mxu0 %v1095
    %1316 = vmatpush1.bf16.msra.mxu0 %v1094
    %1317 = vmatprep.subr.bf16.mxu0 %v1099
    %1318 = vmatpush1.bf16.msra.mxu0 %v1098
    %1319 = vmatprep.subr.bf16.mxu0 %v1103
    %1320 = vmatpush1.bf16.msra.mxu0 %v1102
    %1321 = vmatprep.subr.bf16.mxu0 %v1107
    %1322 = vmatpush1.bf16.msra.mxu0 %v1106
    %1323 = vmatprep.subr.bf16.mxu0 %v1111
    %1324 = vmatpush1.bf16.msra.mxu0 %v1110
    %1325 = vmatprep.subr.bf16.mxu0 %v1115
    %1326 = vmatpush1.bf16.msra.mxu0 %v1114
    %1327 = vmatprep.subr.bf16.mxu0 %v1119
    %1328 = vmatpush1.bf16.msra.mxu0 %v1118
    %1329 = vmatprep.subr.bf16.mxu0 %v1123
    %1330 = vmatpush1.bf16.msra.mxu0 %v1122
    %1331 = vmatprep.subr.bf16.mxu0 %v1127
    %1332 = vmatpush1.bf16.msra.mxu0 %v1126
    %1333 = vmatprep.mubr.bf16.mxu0 %v467
    %1334 = vmatmul.mubr.bf16.gmra.mrb[0].mxu0 %v466
    %v1335 = vpop.f32.mrb[0].mxu0
    %v1336 = vadd.f32 %v1293, %v1335
    %v1337 = vpop.f32.mrb[0].mxu0
    %v1338 = vadd.f32 %v1295, %v1337
    %v1339 = vpop.f32.mrb[0].mxu0
    %v1340 = vadd.f32 %v1297, %v1339
    %v1341 = vpop.f32.mrb[0].mxu0
    %v1342 = vadd.f32 %v1299, %v1341
    %1343 = vdwg.mxu0
    %1344 = vmatprep.subr.bf16.mxu0 %v1005
    %1345 = vmatpush1.bf16.msra.mxu0 %v1004
    %1346 = vmatprep.subr.bf16.mxu0 %v1009
    %1347 = vmatpush1.bf16.msra.mxu0 %v1008
    %1348 = vmatprep.subr.bf16.mxu0 %v1013
    %1349 = vmatpush1.bf16.msra.mxu0 %v1012
    %1350 = vmatprep.subr.bf16.mxu0 %v1017
    %1351 = vmatpush1.bf16.msra.mxu0 %v1016
    %1352 = vmatprep.subr.bf16.mxu0 %v1021
    %1353 = vmatpush1.bf16.msra.mxu0 %v1020
    %1354 = vmatprep.subr.bf16.mxu0 %v1025
    %1355 = vmatpush1.bf16.msra.mxu0 %v1024
    %1356 = vmatprep.subr.bf16.mxu0 %v1029
    %1357 = vmatpush1.bf16.msra.mxu0 %v1028
    %1358 = vmatprep.subr.bf16.mxu0 %v1033
    %1359 = vmatpush1.bf16.msra.mxu0 %v1032
    %1360 = vmatprep.subr.bf16.mxu0 %v1037
    %1361 = vmatpush1.bf16.msra.mxu0 %v1036
    %1362 = vmatprep.subr.bf16.mxu0 %v1041
    %1363 = vmatpush1.bf16.msra.mxu0 %v1040
    %1364 = vmatprep.subr.bf16.mxu0 %v1045
    %1365 = vmatpush1.bf16.msra.mxu0 %v1044
    %1366 = vmatprep.subr.bf16.mxu0 %v1049
    %1367 = vmatpush1.bf16.msra.mxu0 %v1048
    %1368 = vmatprep.subr.bf16.mxu0 %v1053
    %1369 = vmatpush1.bf16.msra.mxu0 %v1052
    %1370 = vmatprep.subr.bf16.mxu0 %v1057
    %1371 = vmatpush1.bf16.msra.mxu0 %v1056
    %1372 = vmatprep.subr.bf16.mxu0 %v1061
    %1373 = vmatpush1.bf16.msra.mxu0 %v1060
    %1374 = vmatprep.subr.bf16.mxu0 %v1065
    %1375 = vmatpush1.bf16.msra.mxu0 %v1064
    %1376 = vmatprep.mubr.bf16.mxu0 %v465
    %1377 = vmatmul.mubr.bf16.gmra.mrb[0].mxu0 %v464
    %v1378 = vpop.f32.mrb[0].mxu0
    %v1379 = vadd.f32 %v609, %v1378
    %v1380 = vpop.f32.mrb[0].mxu0
    %v1381 = vadd.f32 %v613, %v1380
    %v1382 = vpop.f32.mrb[0].mxu0
    %v1383 = vadd.f32 %v609, %v1382
    %v1384 = vpop.f32.mrb[0].mxu0
    %v1385 = vadd.f32 %v613, %v1384
    %1386 = vdwg.mxu0
    %1387 = vmatprep.subr.bf16.mxu0 %v1069
    %1388 = vmatpush1.bf16.msra.mxu0 %v1068
    %1389 = vmatprep.subr.bf16.mxu0 %v1073
    %1390 = vmatpush1.bf16.msra.mxu0 %v1072
    %1391 = vmatprep.subr.bf16.mxu0 %v1077
    %1392 = vmatpush1.bf16.msra.mxu0 %v1076
    %1393 = vmatprep.subr.bf16.mxu0 %v1081
    %1394 = vmatpush1.bf16.msra.mxu0 %v1080
    %1395 = vmatprep.subr.bf16.mxu0 %v1085
    %1396 = vmatpush1.bf16.msra.mxu0 %v1084
    %1397 = vmatprep.subr.bf16.mxu0 %v1089
    %1398 = vmatpush1.bf16.msra.mxu0 %v1088
    %1399 = vmatprep.subr.bf16.mxu0 %v1093
    %1400 = vmatpush1.bf16.msra.mxu0 %v1092
    %1401 = vmatprep.subr.bf16.mxu0 %v1097
    %1402 = vmatpush1.bf16.msra.mxu0 %v1096
    %1403 = vmatprep.subr.bf16.mxu0 %v1101
    %1404 = vmatpush1.bf16.msra.mxu0 %v1100
    %1405 = vmatprep.subr.bf16.mxu0 %v1105
    %1406 = vmatpush1.bf16.msra.mxu0 %v1104
    %1407 = vmatprep.subr.bf16.mxu0 %v1109
    %1408 = vmatpush1.bf16.msra.mxu0 %v1108
    %1409 = vmatprep.subr.bf16.mxu0 %v1113
    %1410 = vmatpush1.bf16.msra.mxu0 %v1112
    %1411 = vmatprep.subr.bf16.mxu0 %v1117
    %1412 = vmatpush1.bf16.msra.mxu0 %v1116
    %1413 = vmatprep.subr.bf16.mxu0 %v1121
    %1414 = vmatpush1.bf16.msra.mxu0 %v1120
    %1415 = vmatprep.subr.bf16.mxu0 %v1125
    %1416 = vmatpush1.bf16.msra.mxu0 %v1124
    %1417 = vmatprep.subr.bf16.mxu0 %v1129
    %1418 = vmatpush1.bf16.msra.mxu0 %v1128
    %1419 = vmatprep.mubr.bf16.mxu0 %v467
    %1420 = vmatmul.mubr.bf16.gmra.mrb[0].mxu0 %v466
    %v1421 = vpop.f32.mrb[0].mxu0
    %v1422 = vadd.f32 %v1379, %v1421
    %v1423 = vpop.f32.mrb[0].mxu0
    %v1424 = vadd.f32 %v1381, %v1423
    %v1425 = vpop.f32.mrb[0].mxu0
    %v1426 = vadd.f32 %v1383, %v1425
    %v1427 = vpop.f32.mrb[0].mxu0
    %v1428 = vadd.f32 %v1385, %v1427
    %1429 = vdwg.mxu0
    %v1430 = vmax.f32 %v1336, 0.0
    %v1431 = vmax.f32 %v1338, 0.0
    %v1432 = vmax.f32 %v1422, 0.0
    %v1433 = vmax.f32 %v1424, 0.0
    %v1434 = vmax.f32 %v1340, 0.0
    %v1435 = vmax.f32 %v1342, 0.0
    %v1436 = vmax.f32 %v1426, 0.0
    %v1437 = vmax.f32 %v1428, 0.0
    %v1438 = vpack.c.bf16 %v1434, %v1430
    %v1439 = vpack.c.bf16 %v1435, %v1431
    %v1440 = vpack.c.bf16 %v1436, %v1432
    %v1441 = vpack.c.bf16 %v1437, %v1433
    %1442 = vst [vmem:[#allocation2] sm:$0xff] 0.0
    %1443 = vst [vmem:[#allocation2 + $0x8] sm:$0xff] 0.0
    %v1444 = vld [vmem:[#allocation12] sm:$0xff]
    %v1445 = vld [vmem:[#allocation12 + $0x8] sm:$0xff]
    %v1446 = vld [vmem:[#allocation12 + $0x40] sm:$0xff]
    %v1447 = vld [vmem:[#allocation12 + $0x48] sm:$0xff]
    %v1448 = vld [vmem:[#allocation12 + $0x80] sm:$0xff]
    %v1449 = vld [vmem:[#allocation12 + $0x88] sm:$0xff]
    %v1450 = vld [vmem:[#allocation12 + $0xc0] sm:$0xff]
    %v1451 = vld [vmem:[#allocation12 + $0xc8] sm:$0xff]
    %v1452 = vld [vmem:[#allocation12 + $0x100] sm:$0xff]
    %v1453 = vld [vmem:[#allocation12 + $0x108] sm:$0xff]
    %v1454 = vld [vmem:[#allocation12 + $0x140] sm:$0xff]
    %v1455 = vld [vmem:[#allocation12 + $0x148] sm:$0xff]
    %v1456 = vld [vmem:[#allocation12 + $0x180] sm:$0xff]
    %v1457 = vld [vmem:[#allocation12 + $0x188] sm:$0xff]
    %v1458 = vld [vmem:[#allocation12 + $0x1c0] sm:$0xff]
    %v1459 = vld [vmem:[#allocation12 + $0x1c8] sm:$0xff]
    %v1460 = vld [vmem:[#allocation12 + $0x200] sm:$0xff]
    %v1461 = vld [vmem:[#allocation12 + $0x208] sm:$0xff]
    %v1462 = vld [vmem:[#allocation12 + $0x240] sm:$0xff]
    %v1463 = vld [vmem:[#allocation12 + $0x248] sm:$0xff]
    %v1464 = vld [vmem:[#allocation12 + $0x280] sm:$0xff]
    %v1465 = vld [vmem:[#allocation12 + $0x288] sm:$0xff]
    %v1466 = vld [vmem:[#allocation12 + $0x2c0] sm:$0xff]
    %v1467 = vld [vmem:[#allocation12 + $0x2c8] sm:$0xff]
    %v1468 = vld [vmem:[#allocation12 + $0x300] sm:$0xff]
    %v1469 = vld [vmem:[#allocation12 + $0x308] sm:$0xff]
    %v1470 = vld [vmem:[#allocation12 + $0x340] sm:$0xff]
    %v1471 = vld [vmem:[#allocation12 + $0x348] sm:$0xff]
    %v1472 = vld [vmem:[#allocation12 + $0x380] sm:$0xff]
    %v1473 = vld [vmem:[#allocation12 + $0x388] sm:$0xff]
    %v1474 = vld [vmem:[#allocation12 + $0x3c0] sm:$0xff]
    %v1475 = vld [vmem:[#allocation12 + $0x3c8] sm:$0xff]
    %v1476 = vld [vmem:[#allocation12 + $0x400] sm:$0xff]
    %v1477 = vld [vmem:[#allocation12 + $0x408] sm:$0xff]
    %v1478 = vld [vmem:[#allocation12 + $0x440] sm:$0xff]
    %v1479 = vld [vmem:[#allocation12 + $0x448] sm:$0xff]
    %v1480 = vld [vmem:[#allocation12 + $0x480] sm:$0xff]
    %v1481 = vld [vmem:[#allocation12 + $0x488] sm:$0xff]
    %v1482 = vld [vmem:[#allocation12 + $0x4c0] sm:$0xff]
    %v1483 = vld [vmem:[#allocation12 + $0x4c8] sm:$0xff]
    %v1484 = vld [vmem:[#allocation12 + $0x500] sm:$0xff]
    %v1485 = vld [vmem:[#allocation12 + $0x508] sm:$0xff]
    %v1486 = vld [vmem:[#allocation12 + $0x540] sm:$0xff]
    %v1487 = vld [vmem:[#allocation12 + $0x548] sm:$0xff]
    %v1488 = vld [vmem:[#allocation12 + $0x580] sm:$0xff]
    %v1489 = vld [vmem:[#allocation12 + $0x588] sm:$0xff]
    %v1490 = vld [vmem:[#allocation12 + $0x5c0] sm:$0xff]
    %v1491 = vld [vmem:[#allocation12 + $0x5c8] sm:$0xff]
    %v1492 = vld [vmem:[#allocation12 + $0x600] sm:$0xff]
    %v1493 = vld [vmem:[#allocation12 + $0x608] sm:$0xff]
    %v1494 = vld [vmem:[#allocation12 + $0x640] sm:$0xff]
    %v1495 = vld [vmem:[#allocation12 + $0x648] sm:$0xff]
    %v1496 = vld [vmem:[#allocation12 + $0x680] sm:$0xff]
    %v1497 = vld [vmem:[#allocation12 + $0x688] sm:$0xff]
    %v1498 = vld [vmem:[#allocation12 + $0x6c0] sm:$0xff]
    %v1499 = vld [vmem:[#allocation12 + $0x6c8] sm:$0xff]
    %v1500 = vld [vmem:[#allocation12 + $0x700] sm:$0xff]
    %v1501 = vld [vmem:[#allocation12 + $0x708] sm:$0xff]
    %v1502 = vld [vmem:[#allocation12 + $0x740] sm:$0xff]
    %v1503 = vld [vmem:[#allocation12 + $0x748] sm:$0xff]
    %v1504 = vld [vmem:[#allocation12 + $0x780] sm:$0xff]
    %v1505 = vld [vmem:[#allocation12 + $0x788] sm:$0xff]
    %v1506 = vld [vmem:[#allocation12 + $0x7c0] sm:$0xff]
    %v1507 = vld [vmem:[#allocation12 + $0x7c8] sm:$0xff]
    %v1508 = vld [vmem:[#allocation12 + $0x800] sm:$0xff]
    %v1509 = vld [vmem:[#allocation12 + $0x808] sm:$0xff]
    %v1510 = vld [vmem:[#allocation12 + $0x840] sm:$0xff]
    %v1511 = vld [vmem:[#allocation12 + $0x848] sm:$0xff]
    %v1512 = vld [vmem:[#allocation12 + $0x880] sm:$0xff]
    %v1513 = vld [vmem:[#allocation12 + $0x888] sm:$0xff]
    %v1514 = vld [vmem:[#allocation12 + $0x8c0] sm:$0xff]
    %v1515 = vld [vmem:[#allocation12 + $0x8c8] sm:$0xff]
    %v1516 = vld [vmem:[#allocation12 + $0x900] sm:$0xff]
    %v1517 = vld [vmem:[#allocation12 + $0x908] sm:$0xff]
    %v1518 = vld [vmem:[#allocation12 + $0x940] sm:$0xff]
    %v1519 = vld [vmem:[#allocation12 + $0x948] sm:$0xff]
    %v1520 = vld [vmem:[#allocation12 + $0x980] sm:$0xff]
    %v1521 = vld [vmem:[#allocation12 + $0x988] sm:$0xff]
    %v1522 = vld [vmem:[#allocation12 + $0x9c0] sm:$0xff]
    %v1523 = vld [vmem:[#allocation12 + $0x9c8] sm:$0xff]
    %v1524 = vld [vmem:[#allocation12 + $0xa00] sm:$0xff]
    %v1525 = vld [vmem:[#allocation12 + $0xa08] sm:$0xff]
    %v1526 = vld [vmem:[#allocation12 + $0xa40] sm:$0xff]
    %v1527 = vld [vmem:[#allocation12 + $0xa48] sm:$0xff]
    %v1528 = vld [vmem:[#allocation12 + $0xa80] sm:$0xff]
    %v1529 = vld [vmem:[#allocation12 + $0xa88] sm:$0xff]
    %v1530 = vld [vmem:[#allocation12 + $0xac0] sm:$0xff]
    %v1531 = vld [vmem:[#allocation12 + $0xac8] sm:$0xff]
    %v1532 = vld [vmem:[#allocation12 + $0xb00] sm:$0xff]
    %v1533 = vld [vmem:[#allocation12 + $0xb08] sm:$0xff]
    %v1534 = vld [vmem:[#allocation12 + $0xb40] sm:$0xff]
    %v1535 = vld [vmem:[#allocation12 + $0xb48] sm:$0xff]
    %v1536 = vld [vmem:[#allocation12 + $0xb80] sm:$0xff]
    %v1537 = vld [vmem:[#allocation12 + $0xb88] sm:$0xff]
    %v1538 = vld [vmem:[#allocation12 + $0xbc0] sm:$0xff]
    %v1539 = vld [vmem:[#allocation12 + $0xbc8] sm:$0xff]
    %v1540 = vld [vmem:[#allocation12 + $0xc00] sm:$0xff]
    %v1541 = vld [vmem:[#allocation12 + $0xc08] sm:$0xff]
    %v1542 = vld [vmem:[#allocation12 + $0xc40] sm:$0xff]
    %v1543 = vld [vmem:[#allocation12 + $0xc48] sm:$0xff]
    %v1544 = vld [vmem:[#allocation12 + $0xc80] sm:$0xff]
    %v1545 = vld [vmem:[#allocation12 + $0xc88] sm:$0xff]
    %v1546 = vld [vmem:[#allocation12 + $0xcc0] sm:$0xff]
    %v1547 = vld [vmem:[#allocation12 + $0xcc8] sm:$0xff]
    %v1548 = vld [vmem:[#allocation12 + $0xd00] sm:$0xff]
    %v1549 = vld [vmem:[#allocation12 + $0xd08] sm:$0xff]
    %v1550 = vld [vmem:[#allocation12 + $0xd40] sm:$0xff]
    %v1551 = vld [vmem:[#allocation12 + $0xd48] sm:$0xff]
    %v1552 = vld [vmem:[#allocation12 + $0xd80] sm:$0xff]
    %v1553 = vld [vmem:[#allocation12 + $0xd88] sm:$0xff]
    %v1554 = vld [vmem:[#allocation12 + $0xdc0] sm:$0xff]
    %v1555 = vld [vmem:[#allocation12 + $0xdc8] sm:$0xff]
    %v1556 = vld [vmem:[#allocation12 + $0xe00] sm:$0xff]
    %v1557 = vld [vmem:[#allocation12 + $0xe08] sm:$0xff]
    %v1558 = vld [vmem:[#allocation12 + $0xe40] sm:$0xff]
    %v1559 = vld [vmem:[#allocation12 + $0xe48] sm:$0xff]
    %v1560 = vld [vmem:[#allocation12 + $0xe80] sm:$0xff]
    %v1561 = vld [vmem:[#allocation12 + $0xe88] sm:$0xff]
    %v1562 = vld [vmem:[#allocation12 + $0xec0] sm:$0xff]
    %v1563 = vld [vmem:[#allocation12 + $0xec8] sm:$0xff]
    %v1564 = vld [vmem:[#allocation12 + $0xf00] sm:$0xff]
    %v1565 = vld [vmem:[#allocation12 + $0xf08] sm:$0xff]
    %v1566 = vld [vmem:[#allocation12 + $0xf40] sm:$0xff]
    %v1567 = vld [vmem:[#allocation12 + $0xf48] sm:$0xff]
    %v1568 = vld [vmem:[#allocation12 + $0xf80] sm:$0xff]
    %v1569 = vld [vmem:[#allocation12 + $0xf88] sm:$0xff]
    %v1570 = vld [vmem:[#allocation12 + $0xfc0] sm:$0xff]
    %v1571 = vld [vmem:[#allocation12 + $0xfc8] sm:$0xff]
    %v1572 = vld [vmem:[#allocation14] sm:$0xf]
    %v1574 = vlaneseq
    %v1575 = vshrl.u32 %v1574, 7
    %v1576 = vsub.s32 0, %v1575
    %v1577 = vrot.slane %v1572, %v1576
    %v1578 = vlaneseq
    %v1579 = vshrl.u32 %v1578, 7
    %v1580 = vsub.s32 1, %v1579
    %v1581 = vrot.slane %v1572, %v1580
    %v1582 = vlaneseq
    %v1583 = vshrl.u32 %v1582, 7
    %v1584 = vsub.s32 2, %v1583
    %v1585 = vrot.slane %v1572, %v1584
    %v1586 = vlaneseq
    %v1587 = vshrl.u32 %v1586, 7
    %v1588 = vsub.s32 3, %v1587
    %v1589 = vrot.slane %v1572, %v1588
    %v1722 = vunpack.c.l.b16 %v1444
    %v1723 = vunpack.c.h.b16 %v1444
    %v1724 = vunpack.c.l.b16 %v1445
    %v1725 = vunpack.c.h.b16 %v1445
    %v1726 = vunpack.c.l.b16 %v1446
    %v1727 = vunpack.c.h.b16 %v1446
    %v1728 = vunpack.c.l.b16 %v1447
    %v1729 = vunpack.c.h.b16 %v1447
    %v1730 = vunpack.c.l.b16 %v1448
    %v1731 = vunpack.c.h.b16 %v1448
    %v1732 = vunpack.c.l.b16 %v1449
    %v1733 = vunpack.c.h.b16 %v1449
    %v1734 = vunpack.c.l.b16 %v1450
    %v1735 = vunpack.c.h.b16 %v1450
    %v1736 = vunpack.c.l.b16 %v1451
    %v1737 = vunpack.c.h.b16 %v1451
    %v1738 = vunpack.c.l.b16 %v1452
    %v1739 = vunpack.c.h.b16 %v1452
    %v1740 = vunpack.c.l.b16 %v1453
    %v1741 = vunpack.c.h.b16 %v1453
    %v1742 = vunpack.c.l.b16 %v1454
    %v1743 = vunpack.c.h.b16 %v1454
    %v1744 = vunpack.c.l.b16 %v1455
    %v1745 = vunpack.c.h.b16 %v1455
    %v1746 = vunpack.c.l.b16 %v1456
    %v1747 = vunpack.c.h.b16 %v1456
    %v1748 = vunpack.c.l.b16 %v1457
    %v1749 = vunpack.c.h.b16 %v1457
    %v1750 = vunpack.c.l.b16 %v1458
    %v1751 = vunpack.c.h.b16 %v1458
    %v1752 = vunpack.c.l.b16 %v1459
    %v1753 = vunpack.c.h.b16 %v1459
    %v1754 = vunpack.c.l.b16 %v1460
    %v1755 = vunpack.c.h.b16 %v1460
    %v1756 = vunpack.c.l.b16 %v1461
    %v1757 = vunpack.c.h.b16 %v1461
    %v1758 = vunpack.c.l.b16 %v1462
    %v1759 = vunpack.c.h.b16 %v1462
    %v1760 = vunpack.c.l.b16 %v1463
    %v1761 = vunpack.c.h.b16 %v1463
    %v1762 = vunpack.c.l.b16 %v1464
    %v1763 = vunpack.c.h.b16 %v1464
    %v1764 = vunpack.c.l.b16 %v1465
    %v1765 = vunpack.c.h.b16 %v1465
    %v1766 = vunpack.c.l.b16 %v1466
    %v1767 = vunpack.c.h.b16 %v1466
    %v1768 = vunpack.c.l.b16 %v1467
    %v1769 = vunpack.c.h.b16 %v1467
    %v1770 = vunpack.c.l.b16 %v1468
    %v1771 = vunpack.c.h.b16 %v1468
    %v1772 = vunpack.c.l.b16 %v1469
    %v1773 = vunpack.c.h.b16 %v1469
    %v1774 = vunpack.c.l.b16 %v1470
    %v1775 = vunpack.c.h.b16 %v1470
    %v1776 = vunpack.c.l.b16 %v1471
    %v1777 = vunpack.c.h.b16 %v1471
    %v1778 = vunpack.c.l.b16 %v1472
    %v1779 = vunpack.c.h.b16 %v1472
    %v1780 = vunpack.c.l.b16 %v1473
    %v1781 = vunpack.c.h.b16 %v1473
    %v1782 = vunpack.c.l.b16 %v1474
    %v1783 = vunpack.c.h.b16 %v1474
    %v1784 = vunpack.c.l.b16 %v1475
    %v1785 = vunpack.c.h.b16 %v1475
    %v1786 = vunpack.c.l.b16 %v1476
    %v1787 = vunpack.c.h.b16 %v1476
    %v1788 = vunpack.c.l.b16 %v1477
    %v1789 = vunpack.c.h.b16 %v1477
    %v1790 = vunpack.c.l.b16 %v1478
    %v1791 = vunpack.c.h.b16 %v1478
    %v1792 = vunpack.c.l.b16 %v1479
    %v1793 = vunpack.c.h.b16 %v1479
    %v1794 = vunpack.c.l.b16 %v1480
    %v1795 = vunpack.c.h.b16 %v1480
    %v1796 = vunpack.c.l.b16 %v1481
    %v1797 = vunpack.c.h.b16 %v1481
    %v1798 = vunpack.c.l.b16 %v1482
    %v1799 = vunpack.c.h.b16 %v1482
    %v1800 = vunpack.c.l.b16 %v1483
    %v1801 = vunpack.c.h.b16 %v1483
    %v1802 = vunpack.c.l.b16 %v1484
    %v1803 = vunpack.c.h.b16 %v1484
    %v1804 = vunpack.c.l.b16 %v1485
    %v1805 = vunpack.c.h.b16 %v1485
    %v1806 = vunpack.c.l.b16 %v1486
    %v1807 = vunpack.c.h.b16 %v1486
    %v1808 = vunpack.c.l.b16 %v1487
    %v1809 = vunpack.c.h.b16 %v1487
    %v1810 = vunpack.c.l.b16 %v1488
    %v1811 = vunpack.c.h.b16 %v1488
    %v1812 = vunpack.c.l.b16 %v1489
    %v1813 = vunpack.c.h.b16 %v1489
    %v1814 = vunpack.c.l.b16 %v1490
    %v1815 = vunpack.c.h.b16 %v1490
    %v1816 = vunpack.c.l.b16 %v1491
    %v1817 = vunpack.c.h.b16 %v1491
    %v1818 = vunpack.c.l.b16 %v1492
    %v1819 = vunpack.c.h.b16 %v1492
    %v1820 = vunpack.c.l.b16 %v1493
    %v1821 = vunpack.c.h.b16 %v1493
    %v1822 = vunpack.c.l.b16 %v1494
    %v1823 = vunpack.c.h.b16 %v1494
    %v1824 = vunpack.c.l.b16 %v1495
    %v1825 = vunpack.c.h.b16 %v1495
    %v1826 = vunpack.c.l.b16 %v1496
    %v1827 = vunpack.c.h.b16 %v1496
    %v1828 = vunpack.c.l.b16 %v1497
    %v1829 = vunpack.c.h.b16 %v1497
    %v1830 = vunpack.c.l.b16 %v1498
    %v1831 = vunpack.c.h.b16 %v1498
    %v1832 = vunpack.c.l.b16 %v1499
    %v1833 = vunpack.c.h.b16 %v1499
    %v1834 = vunpack.c.l.b16 %v1500
    %v1835 = vunpack.c.h.b16 %v1500
    %v1836 = vunpack.c.l.b16 %v1501
    %v1837 = vunpack.c.h.b16 %v1501
    %v1838 = vunpack.c.l.b16 %v1502
    %v1839 = vunpack.c.h.b16 %v1502
    %v1840 = vunpack.c.l.b16 %v1503
    %v1841 = vunpack.c.h.b16 %v1503
    %v1842 = vunpack.c.l.b16 %v1504
    %v1843 = vunpack.c.h.b16 %v1504
    %v1844 = vunpack.c.l.b16 %v1505
    %v1845 = vunpack.c.h.b16 %v1505
    %v1846 = vunpack.c.l.b16 %v1506
    %v1847 = vunpack.c.h.b16 %v1506
    %v1848 = vunpack.c.l.b16 %v1507
    %v1849 = vunpack.c.h.b16 %v1507
    %v1850 = vunpack.c.l.b16 %v1508
    %v1851 = vunpack.c.h.b16 %v1508
    %v1852 = vunpack.c.l.b16 %v1509
    %v1853 = vunpack.c.h.b16 %v1509
    %v1854 = vunpack.c.l.b16 %v1510
    %v1855 = vunpack.c.h.b16 %v1510
    %v1856 = vunpack.c.l.b16 %v1511
    %v1857 = vunpack.c.h.b16 %v1511
    %v1858 = vunpack.c.l.b16 %v1512
    %v1859 = vunpack.c.h.b16 %v1512
    %v1860 = vunpack.c.l.b16 %v1513
    %v1861 = vunpack.c.h.b16 %v1513
    %v1862 = vunpack.c.l.b16 %v1514
    %v1863 = vunpack.c.h.b16 %v1514
    %v1864 = vunpack.c.l.b16 %v1515
    %v1865 = vunpack.c.h.b16 %v1515
    %v1866 = vunpack.c.l.b16 %v1516
    %v1867 = vunpack.c.h.b16 %v1516
    %v1868 = vunpack.c.l.b16 %v1517
    %v1869 = vunpack.c.h.b16 %v1517
    %v1870 = vunpack.c.l.b16 %v1518
    %v1871 = vunpack.c.h.b16 %v1518
    %v1872 = vunpack.c.l.b16 %v1519
    %v1873 = vunpack.c.h.b16 %v1519
    %v1874 = vunpack.c.l.b16 %v1520
    %v1875 = vunpack.c.h.b16 %v1520
    %v1876 = vunpack.c.l.b16 %v1521
    %v1877 = vunpack.c.h.b16 %v1521
    %v1878 = vunpack.c.l.b16 %v1522
    %v1879 = vunpack.c.h.b16 %v1522
    %v1880 = vunpack.c.l.b16 %v1523
    %v1881 = vunpack.c.h.b16 %v1523
    %v1882 = vunpack.c.l.b16 %v1524
    %v1883 = vunpack.c.h.b16 %v1524
    %v1884 = vunpack.c.l.b16 %v1525
    %v1885 = vunpack.c.h.b16 %v1525
    %v1886 = vunpack.c.l.b16 %v1526
    %v1887 = vunpack.c.h.b16 %v1526
    %v1888 = vunpack.c.l.b16 %v1527
    %v1889 = vunpack.c.h.b16 %v1527
    %v1890 = vunpack.c.l.b16 %v1528
    %v1891 = vunpack.c.h.b16 %v1528
    %v1892 = vunpack.c.l.b16 %v1529
    %v1893 = vunpack.c.h.b16 %v1529
    %v1894 = vunpack.c.l.b16 %v1530
    %v1895 = vunpack.c.h.b16 %v1530
    %v1896 = vunpack.c.l.b16 %v1531
    %v1897 = vunpack.c.h.b16 %v1531
    %v1898 = vunpack.c.l.b16 %v1532
    %v1899 = vunpack.c.h.b16 %v1532
    %v1900 = vunpack.c.l.b16 %v1533
    %v1901 = vunpack.c.h.b16 %v1533
    %v1902 = vunpack.c.l.b16 %v1534
    %v1903 = vunpack.c.h.b16 %v1534
    %v1904 = vunpack.c.l.b16 %v1535
    %v1905 = vunpack.c.h.b16 %v1535
    %v1906 = vunpack.c.l.b16 %v1536
    %v1907 = vunpack.c.h.b16 %v1536
    %v1908 = vunpack.c.l.b16 %v1537
    %v1909 = vunpack.c.h.b16 %v1537
    %v1910 = vunpack.c.l.b16 %v1538
    %v1911 = vunpack.c.h.b16 %v1538
    %v1912 = vunpack.c.l.b16 %v1539
    %v1913 = vunpack.c.h.b16 %v1539
    %v1914 = vunpack.c.l.b16 %v1540
    %v1915 = vunpack.c.h.b16 %v1540
    %v1916 = vunpack.c.l.b16 %v1541
    %v1917 = vunpack.c.h.b16 %v1541
    %v1918 = vunpack.c.l.b16 %v1542
    %v1919 = vunpack.c.h.b16 %v1542
    %v1920 = vunpack.c.l.b16 %v1543
    %v1921 = vunpack.c.h.b16 %v1543
    %v1922 = vunpack.c.l.b16 %v1544
    %v1923 = vunpack.c.h.b16 %v1544
    %v1924 = vunpack.c.l.b16 %v1545
    %v1925 = vunpack.c.h.b16 %v1545
    %v1926 = vunpack.c.l.b16 %v1546
    %v1927 = vunpack.c.h.b16 %v1546
    %v1928 = vunpack.c.l.b16 %v1547
    %v1929 = vunpack.c.h.b16 %v1547
    %v1930 = vunpack.c.l.b16 %v1548
    %v1931 = vunpack.c.h.b16 %v1548
    %v1932 = vunpack.c.l.b16 %v1549
    %v1933 = vunpack.c.h.b16 %v1549
    %v1934 = vunpack.c.l.b16 %v1550
    %v1935 = vunpack.c.h.b16 %v1550
    %v1936 = vunpack.c.l.b16 %v1551
    %v1937 = vunpack.c.h.b16 %v1551
    %v1938 = vunpack.c.l.b16 %v1552
    %v1939 = vunpack.c.h.b16 %v1552
    %v1940 = vunpack.c.l.b16 %v1553
    %v1941 = vunpack.c.h.b16 %v1553
    %v1942 = vunpack.c.l.b16 %v1554
    %v1943 = vunpack.c.h.b16 %v1554
    %v1944 = vunpack.c.l.b16 %v1555
    %v1945 = vunpack.c.h.b16 %v1555
    %v1946 = vunpack.c.l.b16 %v1556
    %v1947 = vunpack.c.h.b16 %v1556
    %v1948 = vunpack.c.l.b16 %v1557
    %v1949 = vunpack.c.h.b16 %v1557
    %v1950 = vunpack.c.l.b16 %v1558
    %v1951 = vunpack.c.h.b16 %v1558
    %v1952 = vunpack.c.l.b16 %v1559
    %v1953 = vunpack.c.h.b16 %v1559
    %v1954 = vunpack.c.l.b16 %v1560
    %v1955 = vunpack.c.h.b16 %v1560
    %v1956 = vunpack.c.l.b16 %v1561
    %v1957 = vunpack.c.h.b16 %v1561
    %v1958 = vunpack.c.l.b16 %v1562
    %v1959 = vunpack.c.h.b16 %v1562
    %v1960 = vunpack.c.l.b16 %v1563
    %v1961 = vunpack.c.h.b16 %v1563
    %v1962 = vunpack.c.l.b16 %v1564
    %v1963 = vunpack.c.h.b16 %v1564
    %v1964 = vunpack.c.l.b16 %v1565
    %v1965 = vunpack.c.h.b16 %v1565
    %v1966 = vunpack.c.l.b16 %v1566
    %v1967 = vunpack.c.h.b16 %v1566
    %v1968 = vunpack.c.l.b16 %v1567
    %v1969 = vunpack.c.h.b16 %v1567
    %v1970 = vunpack.c.l.b16 %v1568
    %v1971 = vunpack.c.h.b16 %v1568
    %v1972 = vunpack.c.l.b16 %v1569
    %v1973 = vunpack.c.h.b16 %v1569
    %v1974 = vunpack.c.l.b16 %v1570
    %v1975 = vunpack.c.h.b16 %v1570
    %v1976 = vunpack.c.l.b16 %v1571
    %v1977 = vunpack.c.h.b16 %v1571
    %v1978 = vpack.c.b16 %v1726, %v1722
    %v1979 = vpack.c.b16 %v1727, %v1723
    %v1980 = vpack.c.b16 %v1728, %v1724
    %v1981 = vpack.c.b16 %v1729, %v1725
    %v1982 = vpack.c.b16 %v1734, %v1730
    %v1983 = vpack.c.b16 %v1735, %v1731
    %v1984 = vpack.c.b16 %v1736, %v1732
    %v1985 = vpack.c.b16 %v1737, %v1733
    %v1986 = vpack.c.b16 %v1742, %v1738
    %v1987 = vpack.c.b16 %v1743, %v1739
    %v1988 = vpack.c.b16 %v1744, %v1740
    %v1989 = vpack.c.b16 %v1745, %v1741
    %v1990 = vpack.c.b16 %v1750, %v1746
    %v1991 = vpack.c.b16 %v1751, %v1747
    %v1992 = vpack.c.b16 %v1752, %v1748
    %v1993 = vpack.c.b16 %v1753, %v1749
    %v1994 = vpack.c.b16 %v1758, %v1754
    %v1995 = vpack.c.b16 %v1759, %v1755
    %v1996 = vpack.c.b16 %v1760, %v1756
    %v1997 = vpack.c.b16 %v1761, %v1757
    %v1998 = vpack.c.b16 %v1766, %v1762
    %v1999 = vpack.c.b16 %v1767, %v1763
    %v2000 = vpack.c.b16 %v1768, %v1764
    %v2001 = vpack.c.b16 %v1769, %v1765
    %v2002 = vpack.c.b16 %v1774, %v1770
    %v2003 = vpack.c.b16 %v1775, %v1771
    %v2004 = vpack.c.b16 %v1776, %v1772
    %v2005 = vpack.c.b16 %v1777, %v1773
    %v2006 = vpack.c.b16 %v1782, %v1778
    %v2007 = vpack.c.b16 %v1783, %v1779
    %v2008 = vpack.c.b16 %v1784, %v1780
    %v2009 = vpack.c.b16 %v1785, %v1781
    %v2010 = vpack.c.b16 %v1790, %v1786
    %v2011 = vpack.c.b16 %v1791, %v1787
    %v2012 = vpack.c.b16 %v1792, %v1788
    %v2013 = vpack.c.b16 %v1793, %v1789
    %v2014 = vpack.c.b16 %v1798, %v1794
    %v2015 = vpack.c.b16 %v1799, %v1795
    %v2016 = vpack.c.b16 %v1800, %v1796
    %v2017 = vpack.c.b16 %v1801, %v1797
    %v2018 = vpack.c.b16 %v1806, %v1802
    %v2019 = vpack.c.b16 %v1807, %v1803
    %v2020 = vpack.c.b16 %v1808, %v1804
    %v2021 = vpack.c.b16 %v1809, %v1805
    %v2022 = vpack.c.b16 %v1814, %v1810
    %v2023 = vpack.c.b16 %v1815, %v1811
    %v2024 = vpack.c.b16 %v1816, %v1812
    %v2025 = vpack.c.b16 %v1817, %v1813
    %v2026 = vpack.c.b16 %v1822, %v1818
    %v2027 = vpack.c.b16 %v1823, %v1819
    %v2028 = vpack.c.b16 %v1824, %v1820
    %v2029 = vpack.c.b16 %v1825, %v1821
    %v2030 = vpack.c.b16 %v1830, %v1826
    %v2031 = vpack.c.b16 %v1831, %v1827
    %v2032 = vpack.c.b16 %v1832, %v1828
    %v2033 = vpack.c.b16 %v1833, %v1829
    %v2034 = vpack.c.b16 %v1838, %v1834
    %v2035 = vpack.c.b16 %v1839, %v1835
    %v2036 = vpack.c.b16 %v1840, %v1836
    %v2037 = vpack.c.b16 %v1841, %v1837
    %v2038 = vpack.c.b16 %v1846, %v1842
    %v2039 = vpack.c.b16 %v1847, %v1843
    %v2040 = vpack.c.b16 %v1848, %v1844
    %v2041 = vpack.c.b16 %v1849, %v1845
    %v2042 = vpack.c.b16 %v1854, %v1850
    %v2043 = vpack.c.b16 %v1855, %v1851
    %v2044 = vpack.c.b16 %v1856, %v1852
    %v2045 = vpack.c.b16 %v1857, %v1853
    %v2046 = vpack.c.b16 %v1862, %v1858
    %v2047 = vpack.c.b16 %v1863, %v1859
    %v2048 = vpack.c.b16 %v1864, %v1860
    %v2049 = vpack.c.b16 %v1865, %v1861
    %v2050 = vpack.c.b16 %v1870, %v1866
    %v2051 = vpack.c.b16 %v1871, %v1867
    %v2052 = vpack.c.b16 %v1872, %v1868
    %v2053 = vpack.c.b16 %v1873, %v1869
    %v2054 = vpack.c.b16 %v1878, %v1874
    %v2055 = vpack.c.b16 %v1879, %v1875
    %v2056 = vpack.c.b16 %v1880, %v1876
    %v2057 = vpack.c.b16 %v1881, %v1877
    %v2058 = vpack.c.b16 %v1886, %v1882
    %v2059 = vpack.c.b16 %v1887, %v1883
    %v2060 = vpack.c.b16 %v1888, %v1884
    %v2061 = vpack.c.b16 %v1889, %v1885
    %v2062 = vpack.c.b16 %v1894, %v1890
    %v2063 = vpack.c.b16 %v1895, %v1891
    %v2064 = vpack.c.b16 %v1896, %v1892
    %v2065 = vpack.c.b16 %v1897, %v1893
    %v2066 = vpack.c.b16 %v1902, %v1898
    %v2067 = vpack.c.b16 %v1903, %v1899
    %v2068 = vpack.c.b16 %v1904, %v1900
    %v2069 = vpack.c.b16 %v1905, %v1901
    %v2070 = vpack.c.b16 %v1910, %v1906
    %v2071 = vpack.c.b16 %v1911, %v1907
    %v2072 = vpack.c.b16 %v1912, %v1908
    %v2073 = vpack.c.b16 %v1913, %v1909
    %v2074 = vpack.c.b16 %v1918, %v1914
    %v2075 = vpack.c.b16 %v1919, %v1915
    %v2076 = vpack.c.b16 %v1920, %v1916
    %v2077 = vpack.c.b16 %v1921, %v1917
    %v2078 = vpack.c.b16 %v1926, %v1922
    %v2079 = vpack.c.b16 %v1927, %v1923
    %v2080 = vpack.c.b16 %v1928, %v1924
    %v2081 = vpack.c.b16 %v1929, %v1925
    %v2082 = vpack.c.b16 %v1934, %v1930
    %v2083 = vpack.c.b16 %v1935, %v1931
    %v2084 = vpack.c.b16 %v1936, %v1932
    %v2085 = vpack.c.b16 %v1937, %v1933
    %v2086 = vpack.c.b16 %v1942, %v1938
    %v2087 = vpack.c.b16 %v1943, %v1939
    %v2088 = vpack.c.b16 %v1944, %v1940
    %v2089 = vpack.c.b16 %v1945, %v1941
    %v2090 = vpack.c.b16 %v1950, %v1946
    %v2091 = vpack.c.b16 %v1951, %v1947
    %v2092 = vpack.c.b16 %v1952, %v1948
    %v2093 = vpack.c.b16 %v1953, %v1949
    %v2094 = vpack.c.b16 %v1958, %v1954
    %v2095 = vpack.c.b16 %v1959, %v1955
    %v2096 = vpack.c.b16 %v1960, %v1956
    %v2097 = vpack.c.b16 %v1961, %v1957
    %v2098 = vpack.c.b16 %v1966, %v1962
    %v2099 = vpack.c.b16 %v1967, %v1963
    %v2100 = vpack.c.b16 %v1968, %v1964
    %v2101 = vpack.c.b16 %v1969, %v1965
    %v2102 = vpack.c.b16 %v1974, %v1970
    %v2103 = vpack.c.b16 %v1975, %v1971
    %v2104 = vpack.c.b16 %v1976, %v1972
    %v2105 = vpack.c.b16 %v1977, %v1973
    %2234 = vmatprep.subr.bf16.mxu0 %v1979
    %2235 = vmatpush1.bf16.msra.mxu0 %v1978
    %2236 = vmatprep.subr.bf16.mxu0 %v1983
    %2237 = vmatpush1.bf16.msra.mxu0 %v1982
    %2238 = vmatprep.subr.bf16.mxu0 %v1987
    %2239 = vmatpush1.bf16.msra.mxu0 %v1986
    %2240 = vmatprep.subr.bf16.mxu0 %v1991
    %2241 = vmatpush1.bf16.msra.mxu0 %v1990
    %2242 = vmatprep.subr.bf16.mxu0 %v1995
    %2243 = vmatpush1.bf16.msra.mxu0 %v1994
    %2244 = vmatprep.subr.bf16.mxu0 %v1999
    %2245 = vmatpush1.bf16.msra.mxu0 %v1998
    %2246 = vmatprep.subr.bf16.mxu0 %v2003
    %2247 = vmatpush1.bf16.msra.mxu0 %v2002
    %2248 = vmatprep.subr.bf16.mxu0 %v2007
    %2249 = vmatpush1.bf16.msra.mxu0 %v2006
    %2250 = vmatprep.subr.bf16.mxu0 %v2011
    %2251 = vmatpush1.bf16.msra.mxu0 %v2010
    %2252 = vmatprep.subr.bf16.mxu0 %v2015
    %2253 = vmatpush1.bf16.msra.mxu0 %v2014
    %2254 = vmatprep.subr.bf16.mxu0 %v2019
    %2255 = vmatpush1.bf16.msra.mxu0 %v2018
    %2256 = vmatprep.subr.bf16.mxu0 %v2023
    %2257 = vmatpush1.bf16.msra.mxu0 %v2022
    %2258 = vmatprep.subr.bf16.mxu0 %v2027
    %2259 = vmatpush1.bf16.msra.mxu0 %v2026
    %2260 = vmatprep.subr.bf16.mxu0 %v2031
    %2261 = vmatpush1.bf16.msra.mxu0 %v2030
    %2262 = vmatprep.subr.bf16.mxu0 %v2035
    %2263 = vmatpush1.bf16.msra.mxu0 %v2034
    %2264 = vmatprep.subr.bf16.mxu0 %v2039
    %2265 = vmatpush1.bf16.msra.mxu0 %v2038
    %2266 = vmatprep.mubr.bf16.mxu0 %v1439
    %2267 = vmatmul.mubr.bf16.gmra.mrb[0].mxu0 %v1438
    %v2268 = vpop.f32.mrb[0].mxu0
    %v2269 = vadd.f32 %v1577, %v2268
    %v2270 = vpop.f32.mrb[0].mxu0
    %v2271 = vadd.f32 %v1581, %v2270
    %v2272 = vpop.f32.mrb[0].mxu0
    %v2273 = vadd.f32 %v1577, %v2272
    %v2274 = vpop.f32.mrb[0].mxu0
    %v2275 = vadd.f32 %v1581, %v2274
    %2276 = vdwg.mxu0
    %2277 = vmatprep.subr.bf16.mxu0 %v2043
    %2278 = vmatpush1.bf16.msra.mxu0 %v2042
    %2279 = vmatprep.subr.bf16.mxu0 %v2047
    %2280 = vmatpush1.bf16.msra.mxu0 %v2046
    %2281 = vmatprep.subr.bf16.mxu0 %v2051
    %2282 = vmatpush1.bf16.msra.mxu0 %v2050
    %2283 = vmatprep.subr.bf16.mxu0 %v2055
    %2284 = vmatpush1.bf16.msra.mxu0 %v2054
    %2285 = vmatprep.subr.bf16.mxu0 %v2059
    %2286 = vmatpush1.bf16.msra.mxu0 %v2058
    %2287 = vmatprep.subr.bf16.mxu0 %v2063
    %2288 = vmatpush1.bf16.msra.mxu0 %v2062
    %2289 = vmatprep.subr.bf16.mxu0 %v2067
    %2290 = vmatpush1.bf16.msra.mxu0 %v2066
    %2291 = vmatprep.subr.bf16.mxu0 %v2071
    %2292 = vmatpush1.bf16.msra.mxu0 %v2070
    %2293 = vmatprep.subr.bf16.mxu0 %v2075
    %2294 = vmatpush1.bf16.msra.mxu0 %v2074
    %2295 = vmatprep.subr.bf16.mxu0 %v2079
    %2296 = vmatpush1.bf16.msra.mxu0 %v2078
    %2297 = vmatprep.subr.bf16.mxu0 %v2083
    %2298 = vmatpush1.bf16.msra.mxu0 %v2082
    %2299 = vmatprep.subr.bf16.mxu0 %v2087
    %2300 = vmatpush1.bf16.msra.mxu0 %v2086
    %2301 = vmatprep.subr.bf16.mxu0 %v2091
    %2302 = vmatpush1.bf16.msra.mxu0 %v2090
    %2303 = vmatprep.subr.bf16.mxu0 %v2095
    %2304 = vmatpush1.bf16.msra.mxu0 %v2094
    %2305 = vmatprep.subr.bf16.mxu0 %v2099
    %2306 = vmatpush1.bf16.msra.mxu0 %v2098
    %2307 = vmatprep.subr.bf16.mxu0 %v2103
    %2308 = vmatpush1.bf16.msra.mxu0 %v2102
    %2309 = vmatprep.mubr.bf16.mxu0 %v1441
    %2310 = vmatmul.mubr.bf16.gmra.mrb[0].mxu0 %v1440
    %v2311 = vpop.f32.mrb[0].mxu0
    %v2312 = vadd.f32 %v2269, %v2311
    %v2313 = vpop.f32.mrb[0].mxu0
    %v2314 = vadd.f32 %v2271, %v2313
    %v2315 = vpop.f32.mrb[0].mxu0
    %v2316 = vadd.f32 %v2273, %v2315
    %v2317 = vpop.f32.mrb[0].mxu0
    %v2318 = vadd.f32 %v2275, %v2317
    %2319 = vdwg.mxu0
    %2320 = vmatprep.subr.bf16.mxu0 %v1981
    %2321 = vmatpush1.bf16.msra.mxu0 %v1980
    %2322 = vmatprep.subr.bf16.mxu0 %v1985
    %2323 = vmatpush1.bf16.msra.mxu0 %v1984
    %2324 = vmatprep.subr.bf16.mxu0 %v1989
    %2325 = vmatpush1.bf16.msra.mxu0 %v1988
    %2326 = vmatprep.subr.bf16.mxu0 %v1993
    %2327 = vmatpush1.bf16.msra.mxu0 %v1992
    %2328 = vmatprep.subr.bf16.mxu0 %v1997
    %2329 = vmatpush1.bf16.msra.mxu0 %v1996
    %2330 = vmatprep.subr.bf16.mxu0 %v2001
    %2331 = vmatpush1.bf16.msra.mxu0 %v2000
    %2332 = vmatprep.subr.bf16.mxu0 %v2005
    %2333 = vmatpush1.bf16.msra.mxu0 %v2004
    %2334 = vmatprep.subr.bf16.mxu0 %v2009
    %2335 = vmatpush1.bf16.msra.mxu0 %v2008
    %2336 = vmatprep.subr.bf16.mxu0 %v2013
    %2337 = vmatpush1.bf16.msra.mxu0 %v2012
    %2338 = vmatprep.subr.bf16.mxu0 %v2017
    %2339 = vmatpush1.bf16.msra.mxu0 %v2016
    %2340 = vmatprep.subr.bf16.mxu0 %v2021
    %2341 = vmatpush1.bf16.msra.mxu0 %v2020
    %2342 = vmatprep.subr.bf16.mxu0 %v2025
    %2343 = vmatpush1.bf16.msra.mxu0 %v2024
    %2344 = vmatprep.subr.bf16.mxu0 %v2029
    %2345 = vmatpush1.bf16.msra.mxu0 %v2028
    %2346 = vmatprep.subr.bf16.mxu0 %v2033
    %2347 = vmatpush1.bf16.msra.mxu0 %v2032
    %2348 = vmatprep.subr.bf16.mxu0 %v2037
    %2349 = vmatpush1.bf16.msra.mxu0 %v2036
    %2350 = vmatprep.subr.bf16.mxu0 %v2041
    %2351 = vmatpush1.bf16.msra.mxu0 %v2040
    %2352 = vmatprep.mubr.bf16.mxu0 %v1439
    %2353 = vmatmul.mubr.bf16.gmra.mrb[0].mxu0 %v1438
    %v2354 = vpop.f32.mrb[0].mxu0
    %v2355 = vadd.f32 %v1585, %v2354
    %v2356 = vpop.f32.mrb[0].mxu0
    %v2357 = vadd.f32 %v1589, %v2356
    %v2358 = vpop.f32.mrb[0].mxu0
    %v2359 = vadd.f32 %v1585, %v2358
    %v2360 = vpop.f32.mrb[0].mxu0
    %v2361 = vadd.f32 %v1589, %v2360
    %2362 = vdwg.mxu0
    %2363 = vmatprep.subr.bf16.mxu0 %v2045
    %2364 = vmatpush1.bf16.msra.mxu0 %v2044
    %2365 = vmatprep.subr.bf16.mxu0 %v2049
    %2366 = vmatpush1.bf16.msra.mxu0 %v2048
    %2367 = vmatprep.subr.bf16.mxu0 %v2053
    %2368 = vmatpush1.bf16.msra.mxu0 %v2052
    %2369 = vmatprep.subr.bf16.mxu0 %v2057
    %2370 = vmatpush1.bf16.msra.mxu0 %v2056
    %2371 = vmatprep.subr.bf16.mxu0 %v2061
    %2372 = vmatpush1.bf16.msra.mxu0 %v2060
    %2373 = vmatprep.subr.bf16.mxu0 %v2065
    %2374 = vmatpush1.bf16.msra.mxu0 %v2064
    %2375 = vmatprep.subr.bf16.mxu0 %v2069
    %2376 = vmatpush1.bf16.msra.mxu0 %v2068
    %2377 = vmatprep.subr.bf16.mxu0 %v2073
    %2378 = vmatpush1.bf16.msra.mxu0 %v2072
    %2379 = vmatprep.subr.bf16.mxu0 %v2077
    %2380 = vmatpush1.bf16.msra.mxu0 %v2076
    %2381 = vmatprep.subr.bf16.mxu0 %v2081
    %2382 = vmatpush1.bf16.msra.mxu0 %v2080
    %2383 = vmatprep.subr.bf16.mxu0 %v2085
    %2384 = vmatpush1.bf16.msra.mxu0 %v2084
    %2385 = vmatprep.subr.bf16.mxu0 %v2089
    %2386 = vmatpush1.bf16.msra.mxu0 %v2088
    %2387 = vmatprep.subr.bf16.mxu0 %v2093
    %2388 = vmatpush1.bf16.msra.mxu0 %v2092
    %2389 = vmatprep.subr.bf16.mxu0 %v2097
    %2390 = vmatpush1.bf16.msra.mxu0 %v2096
    %2391 = vmatprep.subr.bf16.mxu0 %v2101
    %2392 = vmatpush1.bf16.msra.mxu0 %v2100
    %2393 = vmatprep.subr.bf16.mxu0 %v2105
    %2394 = vmatpush1.bf16.msra.mxu0 %v2104
    %2395 = vmatprep.mubr.bf16.mxu0 %v1441
    %2396 = vmatmul.mubr.bf16.gmra.mrb[0].mxu0 %v1440
    %v2397 = vpop.f32.mrb[0].mxu0
    %v2398 = vadd.f32 %v2355, %v2397
    %v2399 = vpop.f32.mrb[0].mxu0
    %v2400 = vadd.f32 %v2357, %v2399
    %v2401 = vpop.f32.mrb[0].mxu0
    %v2402 = vadd.f32 %v2359, %v2401
    %v2403 = vpop.f32.mrb[0].mxu0
    %v2404 = vadd.f32 %v2361, %v2403
    %2405 = vdwg.mxu0
    %v2406 = vmax.f32 %v2312, 0.0
    %v2407 = vmax.f32 %v2314, 0.0
    %v2408 = vmax.f32 %v2398, 0.0
    %v2409 = vmax.f32 %v2400, 0.0
    %v2410 = vmax.f32 %v2316, 0.0
    %v2411 = vmax.f32 %v2318, 0.0
    %v2412 = vmax.f32 %v2402, 0.0
    %v2413 = vmax.f32 %v2404, 0.0
    %v2414 = vpack.c.bf16 %v2410, %v2406
    %v2415 = vpack.c.bf16 %v2411, %v2407
    %v2416 = vpack.c.bf16 %v2412, %v2408
    %v2417 = vpack.c.bf16 %v2413, %v2409
    %v2418 = vld [vmem:[#allocation2] sm:$0xff]
    %v2419 = vld [vmem:[#allocation2 + $0x8] sm:$0xff]
    %v2420 = vld [vmem:[#allocation15] sm:$0xf]
    %v2421 = vld [vmem:[#allocation15 + $0x4] sm:$0xf]
    %v2422 = vld [vmem:[#allocation15 + $0x8] sm:$0xf]
    %v2423 = vld [vmem:[#allocation15 + $0xc] sm:$0xf]
    %v2424 = vld [vmem:[#allocation15 + $0x10] sm:$0xf]
    %v2425 = vld [vmem:[#allocation15 + $0x14] sm:$0xf]
    %v2426 = vld [vmem:[#allocation15 + $0x18] sm:$0xf]
    %v2427 = vld [vmem:[#allocation15 + $0x1c] sm:$0xf]
    %v2428 = vld [vmem:[#allocation15 + $0x20] sm:$0xf]
    %v2429 = vld [vmem:[#allocation15 + $0x24] sm:$0xf]
    %v2430 = vld [vmem:[#allocation15 + $0x28] sm:$0xf]
    %v2431 = vld [vmem:[#allocation15 + $0x2c] sm:$0xf]
    %v2432 = vld [vmem:[#allocation15 + $0x30] sm:$0xf]
    %v2433 = vld [vmem:[#allocation15 + $0x34] sm:$0xf]
    %v2434 = vld [vmem:[#allocation15 + $0x38] sm:$0xf]
    %v2435 = vld [vmem:[#allocation15 + $0x3c] sm:$0xf]
    %v2436 = vld [vmem:[#allocation15 + $0x40] sm:$0xf]
    %v2437 = vld [vmem:[#allocation15 + $0x44] sm:$0xf]
    %v2438 = vld [vmem:[#allocation15 + $0x48] sm:$0xf]
    %v2439 = vld [vmem:[#allocation15 + $0x4c] sm:$0xf]
    %v2440 = vld [vmem:[#allocation15 + $0x50] sm:$0xf]
    %v2441 = vld [vmem:[#allocation15 + $0x54] sm:$0xf]
    %v2442 = vld [vmem:[#allocation15 + $0x58] sm:$0xf]
    %v2443 = vld [vmem:[#allocation15 + $0x5c] sm:$0xf]
    %v2444 = vld [vmem:[#allocation15 + $0x60] sm:$0xf]
    %v2445 = vld [vmem:[#allocation15 + $0x64] sm:$0xf]
    %v2446 = vld [vmem:[#allocation15 + $0x68] sm:$0xf]
    %v2447 = vld [vmem:[#allocation15 + $0x6c] sm:$0xf]
    %v2448 = vld [vmem:[#allocation15 + $0x70] sm:$0xf]
    %v2449 = vld [vmem:[#allocation15 + $0x74] sm:$0xf]
    %v2450 = vld [vmem:[#allocation15 + $0x78] sm:$0xf]
    %v2451 = vld [vmem:[#allocation15 + $0x7c] sm:$0xf]
    %v2452 = vld [vmem:[#allocation15 + $0x80] sm:$0xf]
    %v2453 = vld [vmem:[#allocation15 + $0x84] sm:$0xf]
    %v2454 = vld [vmem:[#allocation15 + $0x88] sm:$0xf]
    %v2455 = vld [vmem:[#allocation15 + $0x8c] sm:$0xf]
    %v2456 = vld [vmem:[#allocation15 + $0x90] sm:$0xf]
    %v2457 = vld [vmem:[#allocation15 + $0x94] sm:$0xf]
    %v2458 = vld [vmem:[#allocation15 + $0x98] sm:$0xf]
    %v2459 = vld [vmem:[#allocation15 + $0x9c] sm:$0xf]
    %v2460 = vld [vmem:[#allocation15 + $0xa0] sm:$0xf]
    %v2461 = vld [vmem:[#allocation15 + $0xa4] sm:$0xf]
    %v2462 = vld [vmem:[#allocation15 + $0xa8] sm:$0xf]
    %v2463 = vld [vmem:[#allocation15 + $0xac] sm:$0xf]
    %v2464 = vld [vmem:[#allocation15 + $0xb0] sm:$0xf]
    %v2465 = vld [vmem:[#allocation15 + $0xb4] sm:$0xf]
    %v2466 = vld [vmem:[#allocation15 + $0xb8] sm:$0xf]
    %v2467 = vld [vmem:[#allocation15 + $0xbc] sm:$0xf]
    %v2468 = vld [vmem:[#allocation15 + $0xc0] sm:$0xf]
    %v2469 = vld [vmem:[#allocation15 + $0xc4] sm:$0xf]
    %v2470 = vld [vmem:[#allocation15 + $0xc8] sm:$0xf]
    %v2471 = vld [vmem:[#allocation15 + $0xcc] sm:$0xf]
    %v2472 = vld [vmem:[#allocation15 + $0xd0] sm:$0xf]
    %v2473 = vld [vmem:[#allocation15 + $0xd4] sm:$0xf]
    %v2474 = vld [vmem:[#allocation15 + $0xd8] sm:$0xf]
    %v2475 = vld [vmem:[#allocation15 + $0xdc] sm:$0xf]
    %v2476 = vld [vmem:[#allocation15 + $0xe0] sm:$0xf]
    %v2477 = vld [vmem:[#allocation15 + $0xe4] sm:$0xf]
    %v2478 = vld [vmem:[#allocation15 + $0xe8] sm:$0xf]
    %v2479 = vld [vmem:[#allocation15 + $0xec] sm:$0xf]
    %v2480 = vld [vmem:[#allocation15 + $0xf0] sm:$0xf]
    %v2481 = vld [vmem:[#allocation15 + $0xf4] sm:$0xf]
    %v2482 = vld [vmem:[#allocation15 + $0xf8] sm:$0xf]
    %v2483 = vld [vmem:[#allocation15 + $0xfc] sm:$0xf]
    %v2548 = vunpack.c.l.b16 %v2420
    %v2549 = vunpack.c.l.b16 %v2421
    %v2550 = vunpack.c.l.b16 %v2422
    %v2551 = vunpack.c.l.b16 %v2423
    %v2552 = vunpack.c.l.b16 %v2424
    %v2553 = vunpack.c.l.b16 %v2425
    %v2554 = vunpack.c.l.b16 %v2426
    %v2555 = vunpack.c.l.b16 %v2427
    %v2556 = vunpack.c.l.b16 %v2428
    %v2557 = vunpack.c.l.b16 %v2429
    %v2558 = vunpack.c.l.b16 %v2430
    %v2559 = vunpack.c.l.b16 %v2431
    %v2560 = vunpack.c.l.b16 %v2432
    %v2561 = vunpack.c.l.b16 %v2433
    %v2562 = vunpack.c.l.b16 %v2434
    %v2563 = vunpack.c.l.b16 %v2435
    %v2564 = vunpack.c.l.b16 %v2436
    %v2565 = vunpack.c.l.b16 %v2437
    %v2566 = vunpack.c.l.b16 %v2438
    %v2567 = vunpack.c.l.b16 %v2439
    %v2568 = vunpack.c.l.b16 %v2440
    %v2569 = vunpack.c.l.b16 %v2441
    %v2570 = vunpack.c.l.b16 %v2442
    %v2571 = vunpack.c.l.b16 %v2443
    %v2572 = vunpack.c.l.b16 %v2444
    %v2573 = vunpack.c.l.b16 %v2445
    %v2574 = vunpack.c.l.b16 %v2446
    %v2575 = vunpack.c.l.b16 %v2447
    %v2576 = vunpack.c.l.b16 %v2448
    %v2577 = vunpack.c.l.b16 %v2449
    %v2578 = vunpack.c.l.b16 %v2450
    %v2579 = vunpack.c.l.b16 %v2451
    %v2580 = vunpack.c.l.b16 %v2452
    %v2581 = vunpack.c.l.b16 %v2453
    %v2582 = vunpack.c.l.b16 %v2454
    %v2583 = vunpack.c.l.b16 %v2455
    %v2584 = vunpack.c.l.b16 %v2456
    %v2585 = vunpack.c.l.b16 %v2457
    %v2586 = vunpack.c.l.b16 %v2458
    %v2587 = vunpack.c.l.b16 %v2459
    %v2588 = vunpack.c.l.b16 %v2460
    %v2589 = vunpack.c.l.b16 %v2461
    %v2590 = vunpack.c.l.b16 %v2462
    %v2591 = vunpack.c.l.b16 %v2463
    %v2592 = vunpack.c.l.b16 %v2464
    %v2593 = vunpack.c.l.b16 %v2465
    %v2594 = vunpack.c.l.b16 %v2466
    %v2595 = vunpack.c.l.b16 %v2467
    %v2596 = vunpack.c.l.b16 %v2468
    %v2597 = vunpack.c.l.b16 %v2469
    %v2598 = vunpack.c.l.b16 %v2470
    %v2599 = vunpack.c.l.b16 %v2471
    %v2600 = vunpack.c.l.b16 %v2472
    %v2601 = vunpack.c.l.b16 %v2473
    %v2602 = vunpack.c.l.b16 %v2474
    %v2603 = vunpack.c.l.b16 %v2475
    %v2604 = vunpack.c.l.b16 %v2476
    %v2605 = vunpack.c.l.b16 %v2477
    %v2606 = vunpack.c.l.b16 %v2478
    %v2607 = vunpack.c.l.b16 %v2479
    %v2608 = vunpack.c.l.b16 %v2480
    %v2609 = vunpack.c.l.b16 %v2481
    %v2610 = vunpack.c.l.b16 %v2482
    %v2611 = vunpack.c.l.b16 %v2483
    %v2612 = vpack.c.b16 %v2549, %v2548
    %v2613 = vpack.c.b16 %v2551, %v2550
    %v2614 = vpack.c.b16 %v2553, %v2552
    %v2615 = vpack.c.b16 %v2555, %v2554
    %v2616 = vpack.c.b16 %v2557, %v2556
    %v2617 = vpack.c.b16 %v2559, %v2558
    %v2618 = vpack.c.b16 %v2561, %v2560
    %v2619 = vpack.c.b16 %v2563, %v2562
    %v2620 = vpack.c.b16 %v2565, %v2564
    %v2621 = vpack.c.b16 %v2567, %v2566
    %v2622 = vpack.c.b16 %v2569, %v2568
    %v2623 = vpack.c.b16 %v2571, %v2570
    %v2624 = vpack.c.b16 %v2573, %v2572
    %v2625 = vpack.c.b16 %v2575, %v2574
    %v2626 = vpack.c.b16 %v2577, %v2576
    %v2627 = vpack.c.b16 %v2579, %v2578
    %v2628 = vpack.c.b16 %v2581, %v2580
    %v2629 = vpack.c.b16 %v2583, %v2582
    %v2630 = vpack.c.b16 %v2585, %v2584
    %v2631 = vpack.c.b16 %v2587, %v2586
    %v2632 = vpack.c.b16 %v2589, %v2588
    %v2633 = vpack.c.b16 %v2591, %v2590
    %v2634 = vpack.c.b16 %v2593, %v2592
    %v2635 = vpack.c.b16 %v2595, %v2594
    %v2636 = vpack.c.b16 %v2597, %v2596
    %v2637 = vpack.c.b16 %v2599, %v2598
    %v2638 = vpack.c.b16 %v2601, %v2600
    %v2639 = vpack.c.b16 %v2603, %v2602
    %v2640 = vpack.c.b16 %v2605, %v2604
    %v2641 = vpack.c.b16 %v2607, %v2606
    %v2642 = vpack.c.b16 %v2609, %v2608
    %v2643 = vpack.c.b16 %v2611, %v2610
    %2676 = vmatprep.subr.bf16.mxu0 0
    %2677 = vmatpush1.bf16.msra.mxu0 %v2612
    %2678 = vmatprep.subr.bf16.mxu0 0
    %2679 = vmatpush1.bf16.msra.mxu0 %v2613
    %2680 = vmatprep.subr.bf16.mxu0 0
    %2681 = vmatpush1.bf16.msra.mxu0 %v2614
    %2682 = vmatprep.subr.bf16.mxu0 0
    %2683 = vmatpush1.bf16.msra.mxu0 %v2615
    %2684 = vmatprep.subr.bf16.mxu0 0
    %2685 = vmatpush1.bf16.msra.mxu0 %v2616
    %2686 = vmatprep.subr.bf16.mxu0 0
    %2687 = vmatpush1.bf16.msra.mxu0 %v2617
    %2688 = vmatprep.subr.bf16.mxu0 0
    %2689 = vmatpush1.bf16.msra.mxu0 %v2618
    %2690 = vmatprep.subr.bf16.mxu0 0
    %2691 = vmatpush1.bf16.msra.mxu0 %v2619
    %2692 = vmatprep.subr.bf16.mxu0 0
    %2693 = vmatpush1.bf16.msra.mxu0 %v2620
    %2694 = vmatprep.subr.bf16.mxu0 0
    %2695 = vmatpush1.bf16.msra.mxu0 %v2621
    %2696 = vmatprep.subr.bf16.mxu0 0
    %2697 = vmatpush1.bf16.msra.mxu0 %v2622
    %2698 = vmatprep.subr.bf16.mxu0 0
    %2699 = vmatpush1.bf16.msra.mxu0 %v2623
    %2700 = vmatprep.subr.bf16.mxu0 0
    %2701 = vmatpush1.bf16.msra.mxu0 %v2624
    %2702 = vmatprep.subr.bf16.mxu0 0
    %2703 = vmatpush1.bf16.msra.mxu0 %v2625
    %2704 = vmatprep.subr.bf16.mxu0 0
    %2705 = vmatpush1.bf16.msra.mxu0 %v2626
    %2706 = vmatprep.subr.bf16.mxu0 0
    %2707 = vmatpush1.bf16.msra.mxu0 %v2627
    %2708 = vmatprep.mubr.bf16.mxu0 %v2415
    %2709 = vmatmul.mubr.bf16.gmra.mrb[0].mxu0 %v2414
    %v2710 = vpop.f32.mrb[0].mxu0
    %v2711 = vadd.f32 0.0, %v2710
    %v2712 = vpop.f32.mrb[0].mxu0
    %v2713 = vpop.f32.mrb[0].mxu0
    %v2714 = vadd.f32 0.0, %v2713
    %v2715 = vpop.f32.mrb[0].mxu0
    %2716 = vdwg.mxu0
    %2717 = vmatprep.subr.bf16.mxu0 0
    %2718 = vmatpush1.bf16.msra.mxu0 %v2628
    %2719 = vmatprep.subr.bf16.mxu0 0
    %2720 = vmatpush1.bf16.msra.mxu0 %v2629
    %2721 = vmatprep.subr.bf16.mxu0 0
    %2722 = vmatpush1.bf16.msra.mxu0 %v2630
    %2723 = vmatprep.subr.bf16.mxu0 0
    %2724 = vmatpush1.bf16.msra.mxu0 %v2631
    %2725 = vmatprep.subr.bf16.mxu0 0
    %2726 = vmatpush1.bf16.msra.mxu0 %v2632
    %2727 = vmatprep.subr.bf16.mxu0 0
    %2728 = vmatpush1.bf16.msra.mxu0 %v2633
    %2729 = vmatprep.subr.bf16.mxu0 0
    %2730 = vmatpush1.bf16.msra.mxu0 %v2634
    %2731 = vmatprep.subr.bf16.mxu0 0
    %2732 = vmatpush1.bf16.msra.mxu0 %v2635
    %2733 = vmatprep.subr.bf16.mxu0 0
    %2734 = vmatpush1.bf16.msra.mxu0 %v2636
    %2735 = vmatprep.subr.bf16.mxu0 0
    %2736 = vmatpush1.bf16.msra.mxu0 %v2637
    %2737 = vmatprep.subr.bf16.mxu0 0
    %2738 = vmatpush1.bf16.msra.mxu0 %v2638
    %2739 = vmatprep.subr.bf16.mxu0 0
    %2740 = vmatpush1.bf16.msra.mxu0 %v2639
    %2741 = vmatprep.subr.bf16.mxu0 0
    %2742 = vmatpush1.bf16.msra.mxu0 %v2640
    %2743 = vmatprep.subr.bf16.mxu0 0
    %2744 = vmatpush1.bf16.msra.mxu0 %v2641
    %2745 = vmatprep.subr.bf16.mxu0 0
    %2746 = vmatpush1.bf16.msra.mxu0 %v2642
    %2747 = vmatprep.subr.bf16.mxu0 0
    %2748 = vmatpush1.bf16.msra.mxu0 %v2643
    %2749 = vmatprep.mubr.bf16.mxu0 %v2417
    %2750 = vmatmul.mubr.bf16.gmra.mrb[0].mxu0 %v2416
    %v2751 = vpop.f32.mrb[0].mxu0
    %v2752 = vadd.f32 %v2711, %v2751
    %v2753 = vpop.f32.mrb[0].mxu0
    %v2754 = vpop.f32.mrb[0].mxu0
    %v2755 = vadd.f32 %v2714, %v2754
    %v2756 = vpop.f32.mrb[0].mxu0
    %2757 = vdwg.mxu0
    %v2758 = vadd.f32 %v2418, %v2752
    %v2759 = vadd.f32 %v2419, %v2755
    %2760 = vst [vmem:[#allocation2] sm:$0xff] %v2758
    %2761 = vst [vmem:[#allocation2 + $0x8] sm:$0xff] %v2759
    %s2762 = scalar_lea.vmem [#allocation12], 16
    %v2763 = vld [vmem:[%s2762] sm:$0xff]
    %v2764 = vld [vmem:[%s2762 + $0x8] sm:$0xff]
    %v2765 = vld [vmem:[%s2762 + $0x40] sm:$0xff]
    %v2766 = vld [vmem:[%s2762 + $0x48] sm:$0xff]
    %v2767 = vld [vmem:[%s2762 + $0x80] sm:$0xff]
    %v2768 = vld [vmem:[%s2762 + $0x88] sm:$0xff]
    %v2769 = vld [vmem:[%s2762 + $0xc0] sm:$0xff]
    %v2770 = vld [vmem:[%s2762 + $0xc8] sm:$0xff]
    %v2771 = vld [vmem:[%s2762 + $0x100] sm:$0xff]
    %v2772 = vld [vmem:[%s2762 + $0x108] sm:$0xff]
    %v2773 = vld [vmem:[%s2762 + $0x140] sm:$0xff]
    %v2774 = vld [vmem:[%s2762 + $0x148] sm:$0xff]
    %v2775 = vld [vmem:[%s2762 + $0x180] sm:$0xff]
    %v2776 = vld [vmem:[%s2762 + $0x188] sm:$0xff]
    %v2777 = vld [vmem:[%s2762 + $0x1c0] sm:$0xff]
    %v2778 = vld [vmem:[%s2762 + $0x1c8] sm:$0xff]
    %v2779 = vld [vmem:[%s2762 + $0x200] sm:$0xff]
    %v2780 = vld [vmem:[%s2762 + $0x208] sm:$0xff]
    %v2781 = vld [vmem:[%s2762 + $0x240] sm:$0xff]
    %v2782 = vld [vmem:[%s2762 + $0x248] sm:$0xff]
    %v2783 = vld [vmem:[%s2762 + $0x280] sm:$0xff]
    %v2784 = vld [vmem:[%s2762 + $0x288] sm:$0xff]
    %v2785 = vld [vmem:[%s2762 + $0x2c0] sm:$0xff]
    %v2786 = vld [vmem:[%s2762 + $0x2c8] sm:$0xff]
    %v2787 = vld [vmem:[%s2762 + $0x300] sm:$0xff]
    %v2788 = vld [vmem:[%s2762 + $0x308] sm:$0xff]
    %v2789 = vld [vmem:[%s2762 + $0x340] sm:$0xff]
    %v2790 = vld [vmem:[%s2762 + $0x348] sm:$0xff]
    %v2791 = vld [vmem:[%s2762 + $0x380] sm:$0xff]
    %v2792 = vld [vmem:[%s2762 + $0x388] sm:$0xff]
    %v2793 = vld [vmem:[%s2762 + $0x3c0] sm:$0xff]
    %v2794 = vld [vmem:[%s2762 + $0x3c8] sm:$0xff]
    %v2795 = vld [vmem:[%s2762 + $0x400] sm:$0xff]
    %v2796 = vld [vmem:[%s2762 + $0x408] sm:$0xff]
    %v2797 = vld [vmem:[%s2762 + $0x440] sm:$0xff]
    %v2798 = vld [vmem:[%s2762 + $0x448] sm:$0xff]
    %v2799 = vld [vmem:[%s2762 + $0x480] sm:$0xff]
    %v2800 = vld [vmem:[%s2762 + $0x488] sm:$0xff]
    %v2801 = vld [vmem:[%s2762 + $0x4c0] sm:$0xff]
    %v2802 = vld [vmem:[%s2762 + $0x4c8] sm:$0xff]
    %v2803 = vld [vmem:[%s2762 + $0x500] sm:$0xff]
    %v2804 = vld [vmem:[%s2762 + $0x508] sm:$0xff]
    %v2805 = vld [vmem:[%s2762 + $0x540] sm:$0xff]
    %v2806 = vld [vmem:[%s2762 + $0x548] sm:$0xff]
    %v2807 = vld [vmem:[%s2762 + $0x580] sm:$0xff]
    %v2808 = vld [vmem:[%s2762 + $0x588] sm:$0xff]
    %v2809 = vld [vmem:[%s2762 + $0x5c0] sm:$0xff]
    %v2810 = vld [vmem:[%s2762 + $0x5c8] sm:$0xff]
    %v2811 = vld [vmem:[%s2762 + $0x600] sm:$0xff]
    %v2812 = vld [vmem:[%s2762 + $0x608] sm:$0xff]
    %v2813 = vld [vmem:[%s2762 + $0x640] sm:$0xff]
    %v2814 = vld [vmem:[%s2762 + $0x648] sm:$0xff]
    %v2815 = vld [vmem:[%s2762 + $0x680] sm:$0xff]
    %v2816 = vld [vmem:[%s2762 + $0x688] sm:$0xff]
    %v2817 = vld [vmem:[%s2762 + $0x6c0] sm:$0xff]
    %v2818 = vld [vmem:[%s2762 + $0x6c8] sm:$0xff]
    %v2819 = vld [vmem:[%s2762 + $0x700] sm:$0xff]
    %v2820 = vld [vmem:[%s2762 + $0x708] sm:$0xff]
    %v2821 = vld [vmem:[%s2762 + $0x740] sm:$0xff]
    %v2822 = vld [vmem:[%s2762 + $0x748] sm:$0xff]
    %v2823 = vld [vmem:[%s2762 + $0x780] sm:$0xff]
    %v2824 = vld [vmem:[%s2762 + $0x788] sm:$0xff]
    %v2825 = vld [vmem:[%s2762 + $0x7c0] sm:$0xff]
    %v2826 = vld [vmem:[%s2762 + $0x7c8] sm:$0xff]
    %v2827 = vld [vmem:[%s2762 + $0x800] sm:$0xff]
    %v2828 = vld [vmem:[%s2762 + $0x808] sm:$0xff]
    %v2829 = vld [vmem:[%s2762 + $0x840] sm:$0xff]
    %v2830 = vld [vmem:[%s2762 + $0x848] sm:$0xff]
    %v2831 = vld [vmem:[%s2762 + $0x880] sm:$0xff]
    %v2832 = vld [vmem:[%s2762 + $0x888] sm:$0xff]
    %v2833 = vld [vmem:[%s2762 + $0x8c0] sm:$0xff]
    %v2834 = vld [vmem:[%s2762 + $0x8c8] sm:$0xff]
    %v2835 = vld [vmem:[%s2762 + $0x900] sm:$0xff]
    %v2836 = vld [vmem:[%s2762 + $0x908] sm:$0xff]
    %v2837 = vld [vmem:[%s2762 + $0x940] sm:$0xff]
    %v2838 = vld [vmem:[%s2762 + $0x948] sm:$0xff]
    %v2839 = vld [vmem:[%s2762 + $0x980] sm:$0xff]
    %v2840 = vld [vmem:[%s2762 + $0x988] sm:$0xff]
    %v2841 = vld [vmem:[%s2762 + $0x9c0] sm:$0xff]
    %v2842 = vld [vmem:[%s2762 + $0x9c8] sm:$0xff]
    %v2843 = vld [vmem:[%s2762 + $0xa00] sm:$0xff]
    %v2844 = vld [vmem:[%s2762 + $0xa08] sm:$0xff]
    %v2845 = vld [vmem:[%s2762 + $0xa40] sm:$0xff]
    %v2846 = vld [vmem:[%s2762 + $0xa48] sm:$0xff]
    %v2847 = vld [vmem:[%s2762 + $0xa80] sm:$0xff]
    %v2848 = vld [vmem:[%s2762 + $0xa88] sm:$0xff]
    %v2849 = vld [vmem:[%s2762 + $0xac0] sm:$0xff]
    %v2850 = vld [vmem:[%s2762 + $0xac8] sm:$0xff]
    %v2851 = vld [vmem:[%s2762 + $0xb00] sm:$0xff]
    %v2852 = vld [vmem:[%s2762 + $0xb08] sm:$0xff]
    %v2853 = vld [vmem:[%s2762 + $0xb40] sm:$0xff]
    %v2854 = vld [vmem:[%s2762 + $0xb48] sm:$0xff]
    %v2855 = vld [vmem:[%s2762 + $0xb80] sm:$0xff]
    %v2856 = vld [vmem:[%s2762 + $0xb88] sm:$0xff]
    %v2857 = vld [vmem:[%s2762 + $0xbc0] sm:$0xff]
    %v2858 = vld [vmem:[%s2762 + $0xbc8] sm:$0xff]
    %v2859 = vld [vmem:[%s2762 + $0xc00] sm:$0xff]
    %v2860 = vld [vmem:[%s2762 + $0xc08] sm:$0xff]
    %v2861 = vld [vmem:[%s2762 + $0xc40] sm:$0xff]
    %v2862 = vld [vmem:[%s2762 + $0xc48] sm:$0xff]
    %v2863 = vld [vmem:[%s2762 + $0xc80] sm:$0xff]
    %v2864 = vld [vmem:[%s2762 + $0xc88] sm:$0xff]
    %v2865 = vld [vmem:[%s2762 + $0xcc0] sm:$0xff]
    %v2866 = vld [vmem:[%s2762 + $0xcc8] sm:$0xff]
    %v2867 = vld [vmem:[%s2762 + $0xd00] sm:$0xff]
    %v2868 = vld [vmem:[%s2762 + $0xd08] sm:$0xff]
    %v2869 = vld [vmem:[%s2762 + $0xd40] sm:$0xff]
    %v2870 = vld [vmem:[%s2762 + $0xd48] sm:$0xff]
    %v2871 = vld [vmem:[%s2762 + $0xd80] sm:$0xff]
    %v2872 = vld [vmem:[%s2762 + $0xd88] sm:$0xff]
    %v2873 = vld [vmem:[%s2762 + $0xdc0] sm:$0xff]
    %v2874 = vld [vmem:[%s2762 + $0xdc8] sm:$0xff]
    %v2875 = vld [vmem:[%s2762 + $0xe00] sm:$0xff]
    %v2876 = vld [vmem:[%s2762 + $0xe08] sm:$0xff]
    %v2877 = vld [vmem:[%s2762 + $0xe40] sm:$0xff]
    %v2878 = vld [vmem:[%s2762 + $0xe48] sm:$0xff]
    %v2879 = vld [vmem:[%s2762 + $0xe80] sm:$0xff]
    %v2880 = vld [vmem:[%s2762 + $0xe88] sm:$0xff]
    %v2881 = vld [vmem:[%s2762 + $0xec0] sm:$0xff]
    %v2882 = vld [vmem:[%s2762 + $0xec8] sm:$0xff]
    %v2883 = vld [vmem:[%s2762 + $0xf00] sm:$0xff]
    %v2884 = vld [vmem:[%s2762 + $0xf08] sm:$0xff]
    %v2885 = vld [vmem:[%s2762 + $0xf40] sm:$0xff]
    %v2886 = vld [vmem:[%s2762 + $0xf48] sm:$0xff]
    %v2887 = vld [vmem:[%s2762 + $0xf80] sm:$0xff]
    %v2888 = vld [vmem:[%s2762 + $0xf88] sm:$0xff]
    %v2889 = vld [vmem:[%s2762 + $0xfc0] sm:$0xff]
    %v2890 = vld [vmem:[%s2762 + $0xfc8] sm:$0xff]
    %s2891 = scalar_lea.vmem [#allocation14], 4
    %v2892 = vld [vmem:[%s2891] sm:$0xf]
    %v2894 = vlaneseq
    %v2895 = vshrl.u32 %v2894, 7
    %v2896 = vsub.s32 0, %v2895
    %v2897 = vrot.slane %v2892, %v2896
    %v2898 = vlaneseq
    %v2899 = vshrl.u32 %v2898, 7
    %v2900 = vsub.s32 1, %v2899
    %v2901 = vrot.slane %v2892, %v2900
    %v2902 = vlaneseq
    %v2903 = vshrl.u32 %v2902, 7
    %v2904 = vsub.s32 2, %v2903
    %v2905 = vrot.slane %v2892, %v2904
    %v2906 = vlaneseq
    %v2907 = vshrl.u32 %v2906, 7
    %v2908 = vsub.s32 3, %v2907
    %v2909 = vrot.slane %v2892, %v2908
    %v3042 = vunpack.c.l.b16 %v2763
    %v3043 = vunpack.c.h.b16 %v2763
    %v3044 = vunpack.c.l.b16 %v2764
    %v3045 = vunpack.c.h.b16 %v2764
    %v3046 = vunpack.c.l.b16 %v2765
    %v3047 = vunpack.c.h.b16 %v2765
    %v3048 = vunpack.c.l.b16 %v2766
    %v3049 = vunpack.c.h.b16 %v2766
    %v3050 = vunpack.c.l.b16 %v2767
    %v3051 = vunpack.c.h.b16 %v2767
    %v3052 = vunpack.c.l.b16 %v2768
    %v3053 = vunpack.c.h.b16 %v2768
    %v3054 = vunpack.c.l.b16 %v2769
    %v3055 = vunpack.c.h.b16 %v2769
    %v3056 = vunpack.c.l.b16 %v2770
    %v3057 = vunpack.c.h.b16 %v2770
    %v3058 = vunpack.c.l.b16 %v2771
    %v3059 = vunpack.c.h.b16 %v2771
    %v3060 = vunpack.c.l.b16 %v2772
    %v3061 = vunpack.c.h.b16 %v2772
    %v3062 = vunpack.c.l.b16 %v2773
    %v3063 = vunpack.c.h.b16 %v2773
    %v3064 = vunpack.c.l.b16 %v2774
    %v3065 = vunpack.c.h.b16 %v2774
    %v3066 = vunpack.c.l.b16 %v2775
    %v3067 = vunpack.c.h.b16 %v2775
    %v3068 = vunpack.c.l.b16 %v2776
    %v3069 = vunpack.c.h.b16 %v2776
    %v3070 = vunpack.c.l.b16 %v2777
    %v3071 = vunpack.c.h.b16 %v2777
    %v3072 = vunpack.c.l.b16 %v2778
    %v3073 = vunpack.c.h.b16 %v2778
    %v3074 = vunpack.c.l.b16 %v2779
    %v3075 = vunpack.c.h.b16 %v2779
    %v3076 = vunpack.c.l.b16 %v2780
    %v3077 = vunpack.c.h.b16 %v2780
    %v3078 = vunpack.c.l.b16 %v2781
    %v3079 = vunpack.c.h.b16 %v2781
    %v3080 = vunpack.c.l.b16 %v2782
    %v3081 = vunpack.c.h.b16 %v2782
    %v3082 = vunpack.c.l.b16 %v2783
    %v3083 = vunpack.c.h.b16 %v2783
    %v3084 = vunpack.c.l.b16 %v2784
    %v3085 = vunpack.c.h.b16 %v2784
    %v3086 = vunpack.c.l.b16 %v2785
    %v3087 = vunpack.c.h.b16 %v2785
    %v3088 = vunpack.c.l.b16 %v2786
    %v3089 = vunpack.c.h.b16 %v2786
    %v3090 = vunpack.c.l.b16 %v2787
    %v3091 = vunpack.c.h.b16 %v2787
    %v3092 = vunpack.c.l.b16 %v2788
    %v3093 = vunpack.c.h.b16 %v2788
    %v3094 = vunpack.c.l.b16 %v2789
    %v3095 = vunpack.c.h.b16 %v2789
    %v3096 = vunpack.c.l.b16 %v2790
    %v3097 = vunpack.c.h.b16 %v2790
    %v3098 = vunpack.c.l.b16 %v2791
    %v3099 = vunpack.c.h.b16 %v2791
    %v3100 = vunpack.c.l.b16 %v2792
    %v3101 = vunpack.c.h.b16 %v2792
    %v3102 = vunpack.c.l.b16 %v2793
    %v3103 = vunpack.c.h.b16 %v2793
    %v3104 = vunpack.c.l.b16 %v2794
    %v3105 = vunpack.c.h.b16 %v2794
    %v3106 = vunpack.c.l.b16 %v2795
    %v3107 = vunpack.c.h.b16 %v2795
    %v3108 = vunpack.c.l.b16 %v2796
    %v3109 = vunpack.c.h.b16 %v2796
    %v3110 = vunpack.c.l.b16 %v2797
    %v3111 = vunpack.c.h.b16 %v2797
    %v3112 = vunpack.c.l.b16 %v2798
    %v3113 = vunpack.c.h.b16 %v2798
    %v3114 = vunpack.c.l.b16 %v2799
    %v3115 = vunpack.c.h.b16 %v2799
    %v3116 = vunpack.c.l.b16 %v2800
    %v3117 = vunpack.c.h.b16 %v2800
    %v3118 = vunpack.c.l.b16 %v2801
    %v3119 = vunpack.c.h.b16 %v2801
    %v3120 = vunpack.c.l.b16 %v2802
    %v3121 = vunpack.c.h.b16 %v2802
    %v3122 = vunpack.c.l.b16 %v2803
    %v3123 = vunpack.c.h.b16 %v2803
    %v3124 = vunpack.c.l.b16 %v2804
    %v3125 = vunpack.c.h.b16 %v2804
    %v3126 = vunpack.c.l.b16 %v2805
    %v3127 = vunpack.c.h.b16 %v2805
    %v3128 = vunpack.c.l.b16 %v2806
    %v3129 = vunpack.c.h.b16 %v2806
    %v3130 = vunpack.c.l.b16 %v2807
    %v3131 = vunpack.c.h.b16 %v2807
    %v3132 = vunpack.c.l.b16 %v2808
    %v3133 = vunpack.c.h.b16 %v2808
    %v3134 = vunpack.c.l.b16 %v2809
    %v3135 = vunpack.c.h.b16 %v2809
    %v3136 = vunpack.c.l.b16 %v2810
    %v3137 = vunpack.c.h.b16 %v2810
    %v3138 = vunpack.c.l.b16 %v2811
    %v3139 = vunpack.c.h.b16 %v2811
    %v3140 = vunpack.c.l.b16 %v2812
    %v3141 = vunpack.c.h.b16 %v2812
    %v3142 = vunpack.c.l.b16 %v2813
    %v3143 = vunpack.c.h.b16 %v2813
    %v3144 = vunpack.c.l.b16 %v2814
    %v3145 = vunpack.c.h.b16 %v2814
    %v3146 = vunpack.c.l.b16 %v2815
    %v3147 = vunpack.c.h.b16 %v2815
    %v3148 = vunpack.c.l.b16 %v2816
    %v3149 = vunpack.c.h.b16 %v2816
    %v3150 = vunpack.c.l.b16 %v2817
    %v3151 = vunpack.c.h.b16 %v2817
    %v3152 = vunpack.c.l.b16 %v2818
    %v3153 = vunpack.c.h.b16 %v2818
    %v3154 = vunpack.c.l.b16 %v2819
    %v3155 = vunpack.c.h.b16 %v2819
    %v3156 = vunpack.c.l.b16 %v2820
    %v3157 = vunpack.c.h.b16 %v2820
    %v3158 = vunpack.c.l.b16 %v2821
    %v3159 = vunpack.c.h.b16 %v2821
    %v3160 = vunpack.c.l.b16 %v2822
    %v3161 = vunpack.c.h.b16 %v2822
    %v3162 = vunpack.c.l.b16 %v2823
    %v3163 = vunpack.c.h.b16 %v2823
    %v3164 = vunpack.c.l.b16 %v2824
    %v3165 = vunpack.c.h.b16 %v2824
    %v3166 = vunpack.c.l.b16 %v2825
    %v3167 = vunpack.c.h.b16 %v2825
    %v3168 = vunpack.c.l.b16 %v2826
    %v3169 = vunpack.c.h.b16 %v2826
    %v3170 = vunpack.c.l.b16 %v2827
    %v3171 = vunpack.c.h.b16 %v2827
    %v3172 = vunpack.c.l.b16 %v2828
    %v3173 = vunpack.c.h.b16 %v2828
    %v3174 = vunpack.c.l.b16 %v2829
    %v3175 = vunpack.c.h.b16 %v2829
    %v3176 = vunpack.c.l.b16 %v2830
    %v3177 = vunpack.c.h.b16 %v2830
    %v3178 = vunpack.c.l.b16 %v2831
    %v3179 = vunpack.c.h.b16 %v2831
    %v3180 = vunpack.c.l.b16 %v2832
    %v3181 = vunpack.c.h.b16 %v2832
    %v3182 = vunpack.c.l.b16 %v2833
    %v3183 = vunpack.c.h.b16 %v2833
    %v3184 = vunpack.c.l.b16 %v2834
    %v3185 = vunpack.c.h.b16 %v2834
    %v3186 = vunpack.c.l.b16 %v2835
    %v3187 = vunpack.c.h.b16 %v2835
    %v3188 = vunpack.c.l.b16 %v2836
    %v3189 = vunpack.c.h.b16 %v2836
    %v3190 = vunpack.c.l.b16 %v2837
    %v3191 = vunpack.c.h.b16 %v2837
    %v3192 = vunpack.c.l.b16 %v2838
    %v3193 = vunpack.c.h.b16 %v2838
    %v3194 = vunpack.c.l.b16 %v2839
    %v3195 = vunpack.c.h.b16 %v2839
    %v3196 = vunpack.c.l.b16 %v2840
    %v3197 = vunpack.c.h.b16 %v2840
    %v3198 = vunpack.c.l.b16 %v2841
    %v3199 = vunpack.c.h.b16 %v2841
    %v3200 = vunpack.c.l.b16 %v2842
    %v3201 = vunpack.c.h.b16 %v2842
    %v3202 = vunpack.c.l.b16 %v2843
    %v3203 = vunpack.c.h.b16 %v2843
    %v3204 = vunpack.c.l.b16 %v2844
    %v3205 = vunpack.c.h.b16 %v2844
    %v3206 = vunpack.c.l.b16 %v2845
    %v3207 = vunpack.c.h.b16 %v2845
    %v3208 = vunpack.c.l.b16 %v2846
    %v3209 = vunpack.c.h.b16 %v2846
    %v3210 = vunpack.c.l.b16 %v2847
    %v3211 = vunpack.c.h.b16 %v2847
    %v3212 = vunpack.c.l.b16 %v2848
    %v3213 = vunpack.c.h.b16 %v2848
    %v3214 = vunpack.c.l.b16 %v2849
    %v3215 = vunpack.c.h.b16 %v2849
    %v3216 = vunpack.c.l.b16 %v2850
    %v3217 = vunpack.c.h.b16 %v2850
    %v3218 = vunpack.c.l.b16 %v2851
    %v3219 = vunpack.c.h.b16 %v2851
    %v3220 = vunpack.c.l.b16 %v2852
    %v3221 = vunpack.c.h.b16 %v2852
    %v3222 = vunpack.c.l.b16 %v2853
    %v3223 = vunpack.c.h.b16 %v2853
    %v3224 = vunpack.c.l.b16 %v2854
    %v3225 = vunpack.c.h.b16 %v2854
    %v3226 = vunpack.c.l.b16 %v2855
    %v3227 = vunpack.c.h.b16 %v2855
    %v3228 = vunpack.c.l.b16 %v2856
    %v3229 = vunpack.c.h.b16 %v2856
    %v3230 = vunpack.c.l.b16 %v2857
    %v3231 = vunpack.c.h.b16 %v2857
    %v3232 = vunpack.c.l.b16 %v2858
    %v3233 = vunpack.c.h.b16 %v2858
    %v3234 = vunpack.c.l.b16 %v2859
    %v3235 = vunpack.c.h.b16 %v2859
    %v3236 = vunpack.c.l.b16 %v2860
    %v3237 = vunpack.c.h.b16 %v2860
    %v3238 = vunpack.c.l.b16 %v2861
    %v3239 = vunpack.c.h.b16 %v2861
    %v3240 = vunpack.c.l.b16 %v2862
    %v3241 = vunpack.c.h.b16 %v2862
    %v3242 = vunpack.c.l.b16 %v2863
    %v3243 = vunpack.c.h.b16 %v2863
    %v3244 = vunpack.c.l.b16 %v2864
    %v3245 = vunpack.c.h.b16 %v2864
    %v3246 = vunpack.c.l.b16 %v2865
    %v3247 = vunpack.c.h.b16 %v2865
    %v3248 = vunpack.c.l.b16 %v2866
    %v3249 = vunpack.c.h.b16 %v2866
    %v3250 = vunpack.c.l.b16 %v2867
    %v3251 = vunpack.c.h.b16 %v2867
    %v3252 = vunpack.c.l.b16 %v2868
    %v3253 = vunpack.c.h.b16 %v2868
    %v3254 = vunpack.c.l.b16 %v2869
    %v3255 = vunpack.c.h.b16 %v2869
    %v3256 = vunpack.c.l.b16 %v2870
    %v3257 = vunpack.c.h.b16 %v2870
    %v3258 = vunpack.c.l.b16 %v2871
    %v3259 = vunpack.c.h.b16 %v2871
    %v3260 = vunpack.c.l.b16 %v2872
    %v3261 = vunpack.c.h.b16 %v2872
    %v3262 = vunpack.c.l.b16 %v2873
    %v3263 = vunpack.c.h.b16 %v2873
    %v3264 = vunpack.c.l.b16 %v2874
    %v3265 = vunpack.c.h.b16 %v2874
    %v3266 = vunpack.c.l.b16 %v2875
    %v3267 = vunpack.c.h.b16 %v2875
    %v3268 = vunpack.c.l.b16 %v2876
    %v3269 = vunpack.c.h.b16 %v2876
    %v3270 = vunpack.c.l.b16 %v2877
    %v3271 = vunpack.c.h.b16 %v2877
    %v3272 = vunpack.c.l.b16 %v2878
    %v3273 = vunpack.c.h.b16 %v2878
    %v3274 = vunpack.c.l.b16 %v2879
    %v3275 = vunpack.c.h.b16 %v2879
    %v3276 = vunpack.c.l.b16 %v2880
    %v3277 = vunpack.c.h.b16 %v2880
    %v3278 = vunpack.c.l.b16 %v2881
    %v3279 = vunpack.c.h.b16 %v2881
    %v3280 = vunpack.c.l.b16 %v2882
    %v3281 = vunpack.c.h.b16 %v2882
    %v3282 = vunpack.c.l.b16 %v2883
    %v3283 = vunpack.c.h.b16 %v2883
    %v3284 = vunpack.c.l.b16 %v2884
    %v3285 = vunpack.c.h.b16 %v2884
    %v3286 = vunpack.c.l.b16 %v2885
    %v3287 = vunpack.c.h.b16 %v2885
    %v3288 = vunpack.c.l.b16 %v2886
    %v3289 = vunpack.c.h.b16 %v2886
    %v3290 = vunpack.c.l.b16 %v2887
    %v3291 = vunpack.c.h.b16 %v2887
    %v3292 = vunpack.c.l.b16 %v2888
    %v3293 = vunpack.c.h.b16 %v2888
    %v3294 = vunpack.c.l.b16 %v2889
    %v3295 = vunpack.c.h.b16 %v2889
    %v3296 = vunpack.c.l.b16 %v2890
    %v3297 = vunpack.c.h.b16 %v2890
    %v3298 = vpack.c.b16 %v3046, %v3042
    %v3299 = vpack.c.b16 %v3047, %v3043
    %v3300 = vpack.c.b16 %v3048, %v3044
    %v3301 = vpack.c.b16 %v3049, %v3045
    %v3302 = vpack.c.b16 %v3054, %v3050
    %v3303 = vpack.c.b16 %v3055, %v3051
    %v3304 = vpack.c.b16 %v3056, %v3052
    %v3305 = vpack.c.b16 %v3057, %v3053
    %v3306 = vpack.c.b16 %v3062, %v3058
    %v3307 = vpack.c.b16 %v3063, %v3059
    %v3308 = vpack.c.b16 %v3064, %v3060
    %v3309 = vpack.c.b16 %v3065, %v3061
    %v3310 = vpack.c.b16 %v3070, %v3066
    %v3311 = vpack.c.b16 %v3071, %v3067
    %v3312 = vpack.c.b16 %v3072, %v3068
    %v3313 = vpack.c.b16 %v3073, %v3069
    %v3314 = vpack.c.b16 %v3078, %v3074
    %v3315 = vpack.c.b16 %v3079, %v3075
    %v3316 = vpack.c.b16 %v3080, %v3076
    %v3317 = vpack.c.b16 %v3081, %v3077
    %v3318 = vpack.c.b16 %v3086, %v3082
    %v3319 = vpack.c.b16 %v3087, %v3083
    %v3320 = vpack.c.b16 %v3088, %v3084
    %v3321 = vpack.c.b16 %v3089, %v3085
    %v3322 = vpack.c.b16 %v3094, %v3090
    %v3323 = vpack.c.b16 %v3095, %v3091
    %v3324 = vpack.c.b16 %v3096, %v3092
    %v3325 = vpack.c.b16 %v3097, %v3093
    %v3326 = vpack.c.b16 %v3102, %v3098
    %v3327 = vpack.c.b16 %v3103, %v3099
    %v3328 = vpack.c.b16 %v3104, %v3100
    %v3329 = vpack.c.b16 %v3105, %v3101
    %v3330 = vpack.c.b16 %v3110, %v3106
    %v3331 = vpack.c.b16 %v3111, %v3107
    %v3332 = vpack.c.b16 %v3112, %v3108
    %v3333 = vpack.c.b16 %v3113, %v3109
    %v3334 = vpack.c.b16 %v3118, %v3114
    %v3335 = vpack.c.b16 %v3119, %v3115
    %v3336 = vpack.c.b16 %v3120, %v3116
    %v3337 = vpack.c.b16 %v3121, %v3117
    %v3338 = vpack.c.b16 %v3126, %v3122
    %v3339 = vpack.c.b16 %v3127, %v3123
    %v3340 = vpack.c.b16 %v3128, %v3124
    %v3341 = vpack.c.b16 %v3129, %v3125
    %v3342 = vpack.c.b16 %v3134, %v3130
    %v3343 = vpack.c.b16 %v3135, %v3131
    %v3344 = vpack.c.b16 %v3136, %v3132
    %v3345 = vpack.c.b16 %v3137, %v3133
    %v3346 = vpack.c.b16 %v3142, %v3138
    %v3347 = vpack.c.b16 %v3143, %v3139
    %v3348 = vpack.c.b16 %v3144, %v3140
    %v3349 = vpack.c.b16 %v3145, %v3141
    %v3350 = vpack.c.b16 %v3150, %v3146
    %v3351 = vpack.c.b16 %v3151, %v3147
    %v3352 = vpack.c.b16 %v3152, %v3148
    %v3353 = vpack.c.b16 %v3153, %v3149
    %v3354 = vpack.c.b16 %v3158, %v3154
    %v3355 = vpack.c.b16 %v3159, %v3155
    %v3356 = vpack.c.b16 %v3160, %v3156
    %v3357 = vpack.c.b16 %v3161, %v3157
    %v3358 = vpack.c.b16 %v3166, %v3162
    %v3359 = vpack.c.b16 %v3167, %v3163
    %v3360 = vpack.c.b16 %v3168, %v3164
    %v3361 = vpack.c.b16 %v3169, %v3165
    %v3362 = vpack.c.b16 %v3174, %v3170
    %v3363 = vpack.c.b16 %v3175, %v3171
    %v3364 = vpack.c.b16 %v3176, %v3172
    %v3365 = vpack.c.b16 %v3177, %v3173
    %v3366 = vpack.c.b16 %v3182, %v3178
    %v3367 = vpack.c.b16 %v3183, %v3179
    %v3368 = vpack.c.b16 %v3184, %v3180
    %v3369 = vpack.c.b16 %v3185, %v3181
    %v3370 = vpack.c.b16 %v3190, %v3186
    %v3371 = vpack.c.b16 %v3191, %v3187
    %v3372 = vpack.c.b16 %v3192, %v3188
    %v3373 = vpack.c.b16 %v3193, %v3189
    %v3374 = vpack.c.b16 %v3198, %v3194
    %v3375 = vpack.c.b16 %v3199, %v3195
    %v3376 = vpack.c.b16 %v3200, %v3196
    %v3377 = vpack.c.b16 %v3201, %v3197
    %v3378 = vpack.c.b16 %v3206, %v3202
    %v3379 = vpack.c.b16 %v3207, %v3203
    %v3380 = vpack.c.b16 %v3208, %v3204
    %v3381 = vpack.c.b16 %v3209, %v3205
    %v3382 = vpack.c.b16 %v3214, %v3210
    %v3383 = vpack.c.b16 %v3215, %v3211
    %v3384 = vpack.c.b16 %v3216, %v3212
    %v3385 = vpack.c.b16 %v3217, %v3213
    %v3386 = vpack.c.b16 %v3222, %v3218
    %v3387 = vpack.c.b16 %v3223, %v3219
    %v3388 = vpack.c.b16 %v3224, %v3220
    %v3389 = vpack.c.b16 %v3225, %v3221
    %v3390 = vpack.c.b16 %v3230, %v3226
    %v3391 = vpack.c.b16 %v3231, %v3227
    %v3392 = vpack.c.b16 %v3232, %v3228
    %v3393 = vpack.c.b16 %v3233, %v3229
    %v3394 = vpack.c.b16 %v3238, %v3234
    %v3395 = vpack.c.b16 %v3239, %v3235
    %v3396 = vpack.c.b16 %v3240, %v3236
    %v3397 = vpack.c.b16 %v3241, %v3237
    %v3398 = vpack.c.b16 %v3246, %v3242
    %v3399 = vpack.c.b16 %v3247, %v3243
    %v3400 = vpack.c.b16 %v3248, %v3244
    %v3401 = vpack.c.b16 %v3249, %v3245
    %v3402 = vpack.c.b16 %v3254, %v3250
    %v3403 = vpack.c.b16 %v3255, %v3251
    %v3404 = vpack.c.b16 %v3256, %v3252
    %v3405 = vpack.c.b16 %v3257, %v3253
    %v3406 = vpack.c.b16 %v3262, %v3258
    %v3407 = vpack.c.b16 %v3263, %v3259
    %v3408 = vpack.c.b16 %v3264, %v3260
    %v3409 = vpack.c.b16 %v3265, %v3261
    %v3410 = vpack.c.b16 %v3270, %v3266
    %v3411 = vpack.c.b16 %v3271, %v3267
    %v3412 = vpack.c.b16 %v3272, %v3268
    %v3413 = vpack.c.b16 %v3273, %v3269
    %v3414 = vpack.c.b16 %v3278, %v3274
    %v3415 = vpack.c.b16 %v3279, %v3275
    %v3416 = vpack.c.b16 %v3280, %v3276
    %v3417 = vpack.c.b16 %v3281, %v3277
    %v3418 = vpack.c.b16 %v3286, %v3282
    %v3419 = vpack.c.b16 %v3287, %v3283
    %v3420 = vpack.c.b16 %v3288, %v3284
    %v3421 = vpack.c.b16 %v3289, %v3285
    %v3422 = vpack.c.b16 %v3294, %v3290
    %v3423 = vpack.c.b16 %v3295, %v3291
    %v3424 = vpack.c.b16 %v3296, %v3292
    %v3425 = vpack.c.b16 %v3297, %v3293
    %3554 = vmatprep.subr.bf16.mxu0 %v3299
    %3555 = vmatpush1.bf16.msra.mxu0 %v3298
    %3556 = vmatprep.subr.bf16.mxu0 %v3303
    %3557 = vmatpush1.bf16.msra.mxu0 %v3302
    %3558 = vmatprep.subr.bf16.mxu0 %v3307
    %3559 = vmatpush1.bf16.msra.mxu0 %v3306
    %3560 = vmatprep.subr.bf16.mxu0 %v3311
    %3561 = vmatpush1.bf16.msra.mxu0 %v3310
    %3562 = vmatprep.subr.bf16.mxu0 %v3315
    %3563 = vmatpush1.bf16.msra.mxu0 %v3314
    %3564 = vmatprep.subr.bf16.mxu0 %v3319
    %3565 = vmatpush1.bf16.msra.mxu0 %v3318
    %3566 = vmatprep.subr.bf16.mxu0 %v3323
    %3567 = vmatpush1.bf16.msra.mxu0 %v3322
    %3568 = vmatprep.subr.bf16.mxu0 %v3327
    %3569 = vmatpush1.bf16.msra.mxu0 %v3326
    %3570 = vmatprep.subr.bf16.mxu0 %v3331
    %3571 = vmatpush1.bf16.msra.mxu0 %v3330
    %3572 = vmatprep.subr.bf16.mxu0 %v3335
    %3573 = vmatpush1.bf16.msra.mxu0 %v3334
    %3574 = vmatprep.subr.bf16.mxu0 %v3339
    %3575 = vmatpush1.bf16.msra.mxu0 %v3338
    %3576 = vmatprep.subr.bf16.mxu0 %v3343
    %3577 = vmatpush1.bf16.msra.mxu0 %v3342
    %3578 = vmatprep.subr.bf16.mxu0 %v3347
    %3579 = vmatpush1.bf16.msra.mxu0 %v3346
    %3580 = vmatprep.subr.bf16.mxu0 %v3351
    %3581 = vmatpush1.bf16.msra.mxu0 %v3350
    %3582 = vmatprep.subr.bf16.mxu0 %v3355
    %3583 = vmatpush1.bf16.msra.mxu0 %v3354
    %3584 = vmatprep.subr.bf16.mxu0 %v3359
    %3585 = vmatpush1.bf16.msra.mxu0 %v3358
    %3586 = vmatprep.mubr.bf16.mxu0 %v1439
    %3587 = vmatmul.mubr.bf16.gmra.mrb[0].mxu0 %v1438
    %v3588 = vpop.f32.mrb[0].mxu0
    %v3589 = vadd.f32 %v2897, %v3588
    %v3590 = vpop.f32.mrb[0].mxu0
    %v3591 = vadd.f32 %v2901, %v3590
    %v3592 = vpop.f32.mrb[0].mxu0
    %v3593 = vadd.f32 %v2897, %v3592
    %v3594 = vpop.f32.mrb[0].mxu0
    %v3595 = vadd.f32 %v2901, %v3594
    %3596 = vdwg.mxu0
    %3597 = vmatprep.subr.bf16.mxu0 %v3363
    %3598 = vmatpush1.bf16.msra.mxu0 %v3362
    %3599 = vmatprep.subr.bf16.mxu0 %v3367
    %3600 = vmatpush1.bf16.msra.mxu0 %v3366
    %3601 = vmatprep.subr.bf16.mxu0 %v3371
    %3602 = vmatpush1.bf16.msra.mxu0 %v3370
    %3603 = vmatprep.subr.bf16.mxu0 %v3375
    %3604 = vmatpush1.bf16.msra.mxu0 %v3374
    %3605 = vmatprep.subr.bf16.mxu0 %v3379
    %3606 = vmatpush1.bf16.msra.mxu0 %v3378
    %3607 = vmatprep.subr.bf16.mxu0 %v3383
    %3608 = vmatpush1.bf16.msra.mxu0 %v3382
    %3609 = vmatprep.subr.bf16.mxu0 %v3387
    %3610 = vmatpush1.bf16.msra.mxu0 %v3386
    %3611 = vmatprep.subr.bf16.mxu0 %v3391
    %3612 = vmatpush1.bf16.msra.mxu0 %v3390
    %3613 = vmatprep.subr.bf16.mxu0 %v3395
    %3614 = vmatpush1.bf16.msra.mxu0 %v3394
    %3615 = vmatprep.subr.bf16.mxu0 %v3399
    %3616 = vmatpush1.bf16.msra.mxu0 %v3398
    %3617 = vmatprep.subr.bf16.mxu0 %v3403
    %3618 = vmatpush1.bf16.msra.mxu0 %v3402
    %3619 = vmatprep.subr.bf16.mxu0 %v3407
    %3620 = vmatpush1.bf16.msra.mxu0 %v3406
    %3621 = vmatprep.subr.bf16.mxu0 %v3411
    %3622 = vmatpush1.bf16.msra.mxu0 %v3410
    %3623 = vmatprep.subr.bf16.mxu0 %v3415
    %3624 = vmatpush1.bf16.msra.mxu0 %v3414
    %3625 = vmatprep.subr.bf16.mxu0 %v3419
    %3626 = vmatpush1.bf16.msra.mxu0 %v3418
    %3627 = vmatprep.subr.bf16.mxu0 %v3423
    %3628 = vmatpush1.bf16.msra.mxu0 %v3422
    %3629 = vmatprep.mubr.bf16.mxu0 %v1441
    %3630 = vmatmul.mubr.bf16.gmra.mrb[0].mxu0 %v1440
    %v3631 = vpop.f32.mrb[0].mxu0
    %v3632 = vadd.f32 %v3589, %v3631
    %v3633 = vpop.f32.mrb[0].mxu0
    %v3634 = vadd.f32 %v3591, %v3633
    %v3635 = vpop.f32.mrb[0].mxu0
    %v3636 = vadd.f32 %v3593, %v3635
    %v3637 = vpop.f32.mrb[0].mxu0
    %v3638 = vadd.f32 %v3595, %v3637
    %3639 = vdwg.mxu0
    %3640 = vmatprep.subr.bf16.mxu0 %v3301
    %3641 = vmatpush1.bf16.msra.mxu0 %v3300
    %3642 = vmatprep.subr.bf16.mxu0 %v3305
    %3643 = vmatpush1.bf16.msra.mxu0 %v3304
    %3644 = vmatprep.subr.bf16.mxu0 %v3309
    %3645 = vmatpush1.bf16.msra.mxu0 %v3308
    %3646 = vmatprep.subr.bf16.mxu0 %v3313
    %3647 = vmatpush1.bf16.msra.mxu0 %v3312
    %3648 = vmatprep.subr.bf16.mxu0 %v3317
    %3649 = vmatpush1.bf16.msra.mxu0 %v3316
    %3650 = vmatprep.subr.bf16.mxu0 %v3321
    %3651 = vmatpush1.bf16.msra.mxu0 %v3320
    %3652 = vmatprep.subr.bf16.mxu0 %v3325
    %3653 = vmatpush1.bf16.msra.mxu0 %v3324
    %3654 = vmatprep.subr.bf16.mxu0 %v3329
    %3655 = vmatpush1.bf16.msra.mxu0 %v3328
    %3656 = vmatprep.subr.bf16.mxu0 %v3333
    %3657 = vmatpush1.bf16.msra.mxu0 %v3332
    %3658 = vmatprep.subr.bf16.mxu0 %v3337
    %3659 = vmatpush1.bf16.msra.mxu0 %v3336
    %3660 = vmatprep.subr.bf16.mxu0 %v3341
    %3661 = vmatpush1.bf16.msra.mxu0 %v3340
    %3662 = vmatprep.subr.bf16.mxu0 %v3345
    %3663 = vmatpush1.bf16.msra.mxu0 %v3344
    %3664 = vmatprep.subr.bf16.mxu0 %v3349
    %3665 = vmatpush1.bf16.msra.mxu0 %v3348
    %3666 = vmatprep.subr.bf16.mxu0 %v3353
    %3667 = vmatpush1.bf16.msra.mxu0 %v3352
    %3668 = vmatprep.subr.bf16.mxu0 %v3357
    %3669 = vmatpush1.bf16.msra.mxu0 %v3356
    %3670 = vmatprep.subr.bf16.mxu0 %v3361
    %3671 = vmatpush1.bf16.msra.mxu0 %v3360
    %3672 = vmatprep.mubr.bf16.mxu0 %v1439
    %3673 = vmatmul.mubr.bf16.gmra.mrb[0].mxu0 %v1438
    %v3674 = vpop.f32.mrb[0].mxu0
    %v3675 = vadd.f32 %v2905, %v3674
    %v3676 = vpop.f32.mrb[0].mxu0
    %v3677 = vadd.f32 %v2909, %v3676
    %v3678 = vpop.f32.mrb[0].mxu0
    %v3679 = vadd.f32 %v2905, %v3678
    %v3680 = vpop.f32.mrb[0].mxu0
    %v3681 = vadd.f32 %v2909, %v3680
    %3682 = vdwg.mxu0
    %3683 = vmatprep.subr.bf16.mxu0 %v3365
    %3684 = vmatpush1.bf16.msra.mxu0 %v3364
    %3685 = vmatprep.subr.bf16.mxu0 %v3369
    %3686 = vmatpush1.bf16.msra.mxu0 %v3368
    %3687 = vmatprep.subr.bf16.mxu0 %v3373
    %3688 = vmatpush1.bf16.msra.mxu0 %v3372
    %3689 = vmatprep.subr.bf16.mxu0 %v3377
    %3690 = vmatpush1.bf16.msra.mxu0 %v3376
    %3691 = vmatprep.subr.bf16.mxu0 %v3381
    %3692 = vmatpush1.bf16.msra.mxu0 %v3380
    %3693 = vmatprep.subr.bf16.mxu0 %v3385
    %3694 = vmatpush1.bf16.msra.mxu0 %v3384
    %3695 = vmatprep.subr.bf16.mxu0 %v3389
    %3696 = vmatpush1.bf16.msra.mxu0 %v3388
    %3697 = vmatprep.subr.bf16.mxu0 %v3393
    %3698 = vmatpush1.bf16.msra.mxu0 %v3392
    %3699 = vmatprep.subr.bf16.mxu0 %v3397
    %3700 = vmatpush1.bf16.msra.mxu0 %v3396
    %3701 = vmatprep.subr.bf16.mxu0 %v3401
    %3702 = vmatpush1.bf16.msra.mxu0 %v3400
    %3703 = vmatprep.subr.bf16.mxu0 %v3405
    %3704 = vmatpush1.bf16.msra.mxu0 %v3404
    %3705 = vmatprep.subr.bf16.mxu0 %v3409
    %3706 = vmatpush1.bf16.msra.mxu0 %v3408
    %3707 = vmatprep.subr.bf16.mxu0 %v3413
    %3708 = vmatpush1.bf16.msra.mxu0 %v3412
    %3709 = vmatprep.subr.bf16.mxu0 %v3417
    %3710 = vmatpush1.bf16.msra.mxu0 %v3416
    %3711 = vmatprep.subr.bf16.mxu0 %v3421
    %3712 = vmatpush1.bf16.msra.mxu0 %v3420
    %3713 = vmatprep.subr.bf16.mxu0 %v3425
    %3714 = vmatpush1.bf16.msra.mxu0 %v3424
    %3715 = vmatprep.mubr.bf16.mxu0 %v1441
    %3716 = vmatmul.mubr.bf16.gmra.mrb[0].mxu0 %v1440
    %v3717 = vpop.f32.mrb[0].mxu0
    %v3718 = vadd.f32 %v3675, %v3717
    %v3719 = vpop.f32.mrb[0].mxu0
    %v3720 = vadd.f32 %v3677, %v3719
    %v3721 = vpop.f32.mrb[0].mxu0
    %v3722 = vadd.f32 %v3679, %v3721
    %v3723 = vpop.f32.mrb[0].mxu0
    %v3724 = vadd.f32 %v3681, %v3723
    %3725 = vdwg.mxu0
    %v3726 = vmax.f32 %v3632, 0.0
    %v3727 = vmax.f32 %v3634, 0.0
    %v3728 = vmax.f32 %v3718, 0.0
    %v3729 = vmax.f32 %v3720, 0.0
    %v3730 = vmax.f32 %v3636, 0.0
    %v3731 = vmax.f32 %v3638, 0.0
    %v3732 = vmax.f32 %v3722, 0.0
    %v3733 = vmax.f32 %v3724, 0.0
    %v3734 = vpack.c.bf16 %v3730, %v3726
    %v3735 = vpack.c.bf16 %v3731, %v3727
    %v3736 = vpack.c.bf16 %v3732, %v3728
    %v3737 = vpack.c.bf16 %v3733, %v3729
    %v3738 = vld [vmem:[#allocation2] sm:$0xff]
    %v3739 = vld [vmem:[#allocation2 + $0x8] sm:$0xff]
    %s3740 = scalar_lea.vmem [#allocation15], 256
    %v3741 = vld [vmem:[%s3740] sm:$0xf]
    %v3742 = vld [vmem:[%s3740 + $0x4] sm:$0xf]
    %v3743 = vld [vmem:[%s3740 + $0x8] sm:$0xf]
    %v3744 = vld [vmem:[%s3740 + $0xc] sm:$0xf]
    %v3745 = vld [vmem:[%s3740 + $0x10] sm:$0xf]
    %v3746 = vld [vmem:[%s3740 + $0x14] sm:$0xf]
    %v3747 = vld [vmem:[%s3740 + $0x18] sm:$0xf]
    %v3748 = vld [vmem:[%s3740 + $0x1c] sm:$0xf]
    %v3749 = vld [vmem:[%s3740 + $0x20] sm:$0xf]
    %v3750 = vld [vmem:[%s3740 + $0x24] sm:$0xf]
    %v3751 = vld [vmem:[%s3740 + $0x28] sm:$0xf]
    %v3752 = vld [vmem:[%s3740 + $0x2c] sm:$0xf]
    %v3753 = vld [vmem:[%s3740 + $0x30] sm:$0xf]
    %v3754 = vld [vmem:[%s3740 + $0x34] sm:$0xf]
    %v3755 = vld [vmem:[%s3740 + $0x38] sm:$0xf]
    %v3756 = vld [vmem:[%s3740 + $0x3c] sm:$0xf]
    %v3757 = vld [vmem:[%s3740 + $0x40] sm:$0xf]
    %v3758 = vld [vmem:[%s3740 + $0x44] sm:$0xf]
    %v3759 = vld [vmem:[%s3740 + $0x48] sm:$0xf]
    %v3760 = vld [vmem:[%s3740 + $0x4c] sm:$0xf]
    %v3761 = vld [vmem:[%s3740 + $0x50] sm:$0xf]
    %v3762 = vld [vmem:[%s3740 + $0x54] sm:$0xf]
    %v3763 = vld [vmem:[%s3740 + $0x58] sm:$0xf]
    %v3764 = vld [vmem:[%s3740 + $0x5c] sm:$0xf]
    %v3765 = vld [vmem:[%s3740 + $0x60] sm:$0xf]
    %v3766 = vld [vmem:[%s3740 + $0x64] sm:$0xf]
    %v3767 = vld [vmem:[%s3740 + $0x68] sm:$0xf]
    %v3768 = vld [vmem:[%s3740 + $0x6c] sm:$0xf]
    %v3769 = vld [vmem:[%s3740 + $0x70] sm:$0xf]
    %v3770 = vld [vmem:[%s3740 + $0x74] sm:$0xf]
    %v3771 = vld [vmem:[%s3740 + $0x78] sm:$0xf]
    %v3772 = vld [vmem:[%s3740 + $0x7c] sm:$0xf]
    %v3773 = vld [vmem:[%s3740 + $0x80] sm:$0xf]
    %v3774 = vld [vmem:[%s3740 + $0x84] sm:$0xf]
    %v3775 = vld [vmem:[%s3740 + $0x88] sm:$0xf]
    %v3776 = vld [vmem:[%s3740 + $0x8c] sm:$0xf]
    %v3777 = vld [vmem:[%s3740 + $0x90] sm:$0xf]
    %v3778 = vld [vmem:[%s3740 + $0x94] sm:$0xf]
    %v3779 = vld [vmem:[%s3740 + $0x98] sm:$0xf]
    %v3780 = vld [vmem:[%s3740 + $0x9c] sm:$0xf]
    %v3781 = vld [vmem:[%s3740 + $0xa0] sm:$0xf]
    %v3782 = vld [vmem:[%s3740 + $0xa4] sm:$0xf]
    %v3783 = vld [vmem:[%s3740 + $0xa8] sm:$0xf]
    %v3784 = vld [vmem:[%s3740 + $0xac] sm:$0xf]
    %v3785 = vld [vmem:[%s3740 + $0xb0] sm:$0xf]
    %v3786 = vld [vmem:[%s3740 + $0xb4] sm:$0xf]
    %v3787 = vld [vmem:[%s3740 + $0xb8] sm:$0xf]
    %v3788 = vld [vmem:[%s3740 + $0xbc] sm:$0xf]
    %v3789 = vld [vmem:[%s3740 + $0xc0] sm:$0xf]
    %v3790 = vld [vmem:[%s3740 + $0xc4] sm:$0xf]
    %v3791 = vld [vmem:[%s3740 + $0xc8] sm:$0xf]
    %v3792 = vld [vmem:[%s3740 + $0xcc] sm:$0xf]
    %v3793 = vld [vmem:[%s3740 + $0xd0] sm:$0xf]
    %v3794 = vld [vmem:[%s3740 + $0xd4] sm:$0xf]
    %v3795 = vld [vmem:[%s3740 + $0xd8] sm:$0xf]
    %v3796 = vld [vmem:[%s3740 + $0xdc] sm:$0xf]
    %v3797 = vld [vmem:[%s3740 + $0xe0] sm:$0xf]
    %v3798 = vld [vmem:[%s3740 + $0xe4] sm:$0xf]
    %v3799 = vld [vmem:[%s3740 + $0xe8] sm:$0xf]
    %v3800 = vld [vmem:[%s3740 + $0xec] sm:$0xf]
    %v3801 = vld [vmem:[%s3740 + $0xf0] sm:$0xf]
    %v3802 = vld [vmem:[%s3740 + $0xf4] sm:$0xf]
    %v3803 = vld [vmem:[%s3740 + $0xf8] sm:$0xf]
    %v3804 = vld [vmem:[%s3740 + $0xfc] sm:$0xf]
    %v3869 = vunpack.c.l.b16 %v3741
    %v3870 = vunpack.c.l.b16 %v3742
    %v3871 = vunpack.c.l.b16 %v3743
    %v3872 = vunpack.c.l.b16 %v3744
    %v3873 = vunpack.c.l.b16 %v3745
    %v3874 = vunpack.c.l.b16 %v3746
    %v3875 = vunpack.c.l.b16 %v3747
    %v3876 = vunpack.c.l.b16 %v3748
    %v3877 = vunpack.c.l.b16 %v3749
    %v3878 = vunpack.c.l.b16 %v3750
    %v3879 = vunpack.c.l.b16 %v3751
    %v3880 = vunpack.c.l.b16 %v3752
    %v3881 = vunpack.c.l.b16 %v3753
    %v3882 = vunpack.c.l.b16 %v3754
    %v3883 = vunpack.c.l.b16 %v3755
    %v3884 = vunpack.c.l.b16 %v3756
    %v3885 = vunpack.c.l.b16 %v3757
    %v3886 = vunpack.c.l.b16 %v3758
    %v3887 = vunpack.c.l.b16 %v3759
    %v3888 = vunpack.c.l.b16 %v3760
    %v3889 = vunpack.c.l.b16 %v3761
    %v3890 = vunpack.c.l.b16 %v3762
    %v3891 = vunpack.c.l.b16 %v3763
    %v3892 = vunpack.c.l.b16 %v3764
    %v3893 = vunpack.c.l.b16 %v3765
    %v3894 = vunpack.c.l.b16 %v3766
    %v3895 = vunpack.c.l.b16 %v3767
    %v3896 = vunpack.c.l.b16 %v3768
    %v3897 = vunpack.c.l.b16 %v3769
    %v3898 = vunpack.c.l.b16 %v3770
    %v3899 = vunpack.c.l.b16 %v3771
    %v3900 = vunpack.c.l.b16 %v3772
    %v3901 = vunpack.c.l.b16 %v3773
    %v3902 = vunpack.c.l.b16 %v3774
    %v3903 = vunpack.c.l.b16 %v3775
    %v3904 = vunpack.c.l.b16 %v3776
    %v3905 = vunpack.c.l.b16 %v3777
    %v3906 = vunpack.c.l.b16 %v3778
    %v3907 = vunpack.c.l.b16 %v3779
    %v3908 = vunpack.c.l.b16 %v3780
    %v3909 = vunpack.c.l.b16 %v3781
    %v3910 = vunpack.c.l.b16 %v3782
    %v3911 = vunpack.c.l.b16 %v3783
    %v3912 = vunpack.c.l.b16 %v3784
    %v3913 = vunpack.c.l.b16 %v3785
    %v3914 = vunpack.c.l.b16 %v3786
    %v3915 = vunpack.c.l.b16 %v3787
    %v3916 = vunpack.c.l.b16 %v3788
    %v3917 = vunpack.c.l.b16 %v3789
    %v3918 = vunpack.c.l.b16 %v3790
    %v3919 = vunpack.c.l.b16 %v3791
    %v3920 = vunpack.c.l.b16 %v3792
    %v3921 = vunpack.c.l.b16 %v3793
    %v3922 = vunpack.c.l.b16 %v3794
    %v3923 = vunpack.c.l.b16 %v3795
    %v3924 = vunpack.c.l.b16 %v3796
    %v3925 = vunpack.c.l.b16 %v3797
    %v3926 = vunpack.c.l.b16 %v3798
    %v3927 = vunpack.c.l.b16 %v3799
    %v3928 = vunpack.c.l.b16 %v3800
    %v3929 = vunpack.c.l.b16 %v3801
    %v3930 = vunpack.c.l.b16 %v3802
    %v3931 = vunpack.c.l.b16 %v3803
    %v3932 = vunpack.c.l.b16 %v3804
    %v3933 = vpack.c.b16 %v3870, %v3869
    %v3934 = vpack.c.b16 %v3872, %v3871
    %v3935 = vpack.c.b16 %v3874, %v3873
    %v3936 = vpack.c.b16 %v3876, %v3875
    %v3937 = vpack.c.b16 %v3878, %v3877
    %v3938 = vpack.c.b16 %v3880, %v3879
    %v3939 = vpack.c.b16 %v3882, %v3881
    %v3940 = vpack.c.b16 %v3884, %v3883
    %v3941 = vpack.c.b16 %v3886, %v3885
    %v3942 = vpack.c.b16 %v3888, %v3887
    %v3943 = vpack.c.b16 %v3890, %v3889
    %v3944 = vpack.c.b16 %v3892, %v3891
    %v3945 = vpack.c.b16 %v3894, %v3893
    %v3946 = vpack.c.b16 %v3896, %v3895
    %v3947 = vpack.c.b16 %v3898, %v3897
    %v3948 = vpack.c.b16 %v3900, %v3899
    %v3949 = vpack.c.b16 %v3902, %v3901
    %v3950 = vpack.c.b16 %v3904, %v3903
    %v3951 = vpack.c.b16 %v3906, %v3905
    %v3952 = vpack.c.b16 %v3908, %v3907
    %v3953 = vpack.c.b16 %v3910, %v3909
    %v3954 = vpack.c.b16 %v3912, %v3911
    %v3955 = vpack.c.b16 %v3914, %v3913
    %v3956 = vpack.c.b16 %v3916, %v3915
    %v3957 = vpack.c.b16 %v3918, %v3917
    %v3958 = vpack.c.b16 %v3920, %v3919
    %v3959 = vpack.c.b16 %v3922, %v3921
    %v3960 = vpack.c.b16 %v3924, %v3923
    %v3961 = vpack.c.b16 %v3926, %v3925
    %v3962 = vpack.c.b16 %v3928, %v3927
    %v3963 = vpack.c.b16 %v3930, %v3929
    %v3964 = vpack.c.b16 %v3932, %v3931
    %3997 = vmatprep.subr.bf16.mxu0 0
    %3998 = vmatpush1.bf16.msra.mxu0 %v3933
    %3999 = vmatprep.subr.bf16.mxu0 0
    %4000 = vmatpush1.bf16.msra.mxu0 %v3934
    %4001 = vmatprep.subr.bf16.mxu0 0
    %4002 = vmatpush1.bf16.msra.mxu0 %v3935
    %4003 = vmatprep.subr.bf16.mxu0 0
    %4004 = vmatpush1.bf16.msra.mxu0 %v3936
    %4005 = vmatprep.subr.bf16.mxu0 0
    %4006 = vmatpush1.bf16.msra.mxu0 %v3937
    %4007 = vmatprep.subr.bf16.mxu0 0
    %4008 = vmatpush1.bf16.msra.mxu0 %v3938
    %4009 = vmatprep.subr.bf16.mxu0 0
    %4010 = vmatpush1.bf16.msra.mxu0 %v3939
    %4011 = vmatprep.subr.bf16.mxu0 0
    %4012 = vmatpush1.bf16.msra.mxu0 %v3940
    %4013 = vmatprep.subr.bf16.mxu0 0
    %4014 = vmatpush1.bf16.msra.mxu0 %v3941
    %4015 = vmatprep.subr.bf16.mxu0 0
    %4016 = vmatpush1.bf16.msra.mxu0 %v3942
    %4017 = vmatprep.subr.bf16.mxu0 0
    %4018 = vmatpush1.bf16.msra.mxu0 %v3943
    %4019 = vmatprep.subr.bf16.mxu0 0
    %4020 = vmatpush1.bf16.msra.mxu0 %v3944
    %4021 = vmatprep.subr.bf16.mxu0 0
    %4022 = vmatpush1.bf16.msra.mxu0 %v3945
    %4023 = vmatprep.subr.bf16.mxu0 0
    %4024 = vmatpush1.bf16.msra.mxu0 %v3946
    %4025 = vmatprep.subr.bf16.mxu0 0
    %4026 = vmatpush1.bf16.msra.mxu0 %v3947
    %4027 = vmatprep.subr.bf16.mxu0 0
    %4028 = vmatpush1.bf16.msra.mxu0 %v3948
    %4029 = vmatprep.mubr.bf16.mxu0 %v3735
    %4030 = vmatmul.mubr.bf16.gmra.mrb[0].mxu0 %v3734
    %v4031 = vpop.f32.mrb[0].mxu0
    %v4032 = vadd.f32 0.0, %v4031
    %v4033 = vpop.f32.mrb[0].mxu0
    %v4034 = vpop.f32.mrb[0].mxu0
    %v4035 = vadd.f32 0.0, %v4034
    %v4036 = vpop.f32.mrb[0].mxu0
    %4037 = vdwg.mxu0
    %4038 = vmatprep.subr.bf16.mxu0 0
    %4039 = vmatpush1.bf16.msra.mxu0 %v3949
    %4040 = vmatprep.subr.bf16.mxu0 0
    %4041 = vmatpush1.bf16.msra.mxu0 %v3950
    %4042 = vmatprep.subr.bf16.mxu0 0
    %4043 = vmatpush1.bf16.msra.mxu0 %v3951
    %4044 = vmatprep.subr.bf16.mxu0 0
    %4045 = vmatpush1.bf16.msra.mxu0 %v3952
    %4046 = vmatprep.subr.bf16.mxu0 0
    %4047 = vmatpush1.bf16.msra.mxu0 %v3953
    %4048 = vmatprep.subr.bf16.mxu0 0
    %4049 = vmatpush1.bf16.msra.mxu0 %v3954
    %4050 = vmatprep.subr.bf16.mxu0 0
    %4051 = vmatpush1.bf16.msra.mxu0 %v3955
    %4052 = vmatprep.subr.bf16.mxu0 0
    %4053 = vmatpush1.bf16.msra.mxu0 %v3956
    %4054 = vmatprep.subr.bf16.mxu0 0
    %4055 = vmatpush1.bf16.msra.mxu0 %v3957
    %4056 = vmatprep.subr.bf16.mxu0 0
    %4057 = vmatpush1.bf16.msra.mxu0 %v3958
    %4058 = vmatprep.subr.bf16.mxu0 0
    %4059 = vmatpush1.bf16.msra.mxu0 %v3959
    %4060 = vmatprep.subr.bf16.mxu0 0
    %4061 = vmatpush1.bf16.msra.mxu0 %v3960
    %4062 = vmatprep.subr.bf16.mxu0 0
    %4063 = vmatpush1.bf16.msra.mxu0 %v3961
    %4064 = vmatprep.subr.bf16.mxu0 0
    %4065 = vmatpush1.bf16.msra.mxu0 %v3962
    %4066 = vmatprep.subr.bf16.mxu0 0
    %4067 = vmatpush1.bf16.msra.mxu0 %v3963
    %4068 = vmatprep.subr.bf16.mxu0 0
    %4069 = vmatpush1.bf16.msra.mxu0 %v3964
    %4070 = vmatprep.mubr.bf16.mxu0 %v3737
    %4071 = vmatmul.mubr.bf16.gmra.mrb[0].mxu0 %v3736
    %v4072 = vpop.f32.mrb[0].mxu0
    %v4073 = vadd.f32 %v4032, %v4072
    %v4074 = vpop.f32.mrb[0].mxu0
    %v4075 = vpop.f32.mrb[0].mxu0
    %v4076 = vadd.f32 %v4035, %v4075
    %v4077 = vpop.f32.mrb[0].mxu0
    %4078 = vdwg.mxu0
    %v4079 = vadd.f32 %v3738, %v4073
    %v4080 = vadd.f32 %v3739, %v4076
    %4081 = vst [vmem:[#allocation2] sm:$0xff] %v4079
    %4082 = vst [vmem:[#allocation2 + $0x8] sm:$0xff] %v4080
    %s4083 = scalar_lea.vmem [#allocation12], 32
    %v4084 = vld [vmem:[%s4083] sm:$0xff]
    %v4085 = vld [vmem:[%s4083 + $0x8] sm:$0xff]
    %v4086 = vld [vmem:[%s4083 + $0x40] sm:$0xff]
    %v4087 = vld [vmem:[%s4083 + $0x48] sm:$0xff]
    %v4088 = vld [vmem:[%s4083 + $0x80] sm:$0xff]
    %v4089 = vld [vmem:[%s4083 + $0x88] sm:$0xff]
    %v4090 = vld [vmem:[%s4083 + $0xc0] sm:$0xff]
    %v4091 = vld [vmem:[%s4083 + $0xc8] sm:$0xff]
    %v4092 = vld [vmem:[%s4083 + $0x100] sm:$0xff]
    %v4093 = vld [vmem:[%s4083 + $0x108] sm:$0xff]
    %v4094 = vld [vmem:[%s4083 + $0x140] sm:$0xff]
    %v4095 = vld [vmem:[%s4083 + $0x148] sm:$0xff]
    %v4096 = vld [vmem:[%s4083 + $0x180] sm:$0xff]
    %v4097 = vld [vmem:[%s4083 + $0x188] sm:$0xff]
    %v4098 = vld [vmem:[%s4083 + $0x1c0] sm:$0xff]
    %v4099 = vld [vmem:[%s4083 + $0x1c8] sm:$0xff]
    %v4100 = vld [vmem:[%s4083 + $0x200] sm:$0xff]
    %v4101 = vld [vmem:[%s4083 + $0x208] sm:$0xff]
    %v4102 = vld [vmem:[%s4083 + $0x240] sm:$0xff]
    %v4103 = vld [vmem:[%s4083 + $0x248] sm:$0xff]
    %v4104 = vld [vmem:[%s4083 + $0x280] sm:$0xff]
    %v4105 = vld [vmem:[%s4083 + $0x288] sm:$0xff]
    %v4106 = vld [vmem:[%s4083 + $0x2c0] sm:$0xff]
    %v4107 = vld [vmem:[%s4083 + $0x2c8] sm:$0xff]
    %v4108 = vld [vmem:[%s4083 + $0x300] sm:$0xff]
    %v4109 = vld [vmem:[%s4083 + $0x308] sm:$0xff]
    %v4110 = vld [vmem:[%s4083 + $0x340] sm:$0xff]
    %v4111 = vld [vmem:[%s4083 + $0x348] sm:$0xff]
    %v4112 = vld [vmem:[%s4083 + $0x380] sm:$0xff]
    %v4113 = vld [vmem:[%s4083 + $0x388] sm:$0xff]
    %v4114 = vld [vmem:[%s4083 + $0x3c0] sm:$0xff]
    %v4115 = vld [vmem:[%s4083 + $0x3c8] sm:$0xff]
    %v4116 = vld [vmem:[%s4083 + $0x400] sm:$0xff]
    %v4117 = vld [vmem:[%s4083 + $0x408] sm:$0xff]
    %v4118 = vld [vmem:[%s4083 + $0x440] sm:$0xff]
    %v4119 = vld [vmem:[%s4083 + $0x448] sm:$0xff]
    %v4120 = vld [vmem:[%s4083 + $0x480] sm:$0xff]
    %v4121 = vld [vmem:[%s4083 + $0x488] sm:$0xff]
    %v4122 = vld [vmem:[%s4083 + $0x4c0] sm:$0xff]
    %v4123 = vld [vmem:[%s4083 + $0x4c8] sm:$0xff]
    %v4124 = vld [vmem:[%s4083 + $0x500] sm:$0xff]
    %v4125 = vld [vmem:[%s4083 + $0x508] sm:$0xff]
    %v4126 = vld [vmem:[%s4083 + $0x540] sm:$0xff]
    %v4127 = vld [vmem:[%s4083 + $0x548] sm:$0xff]
    %v4128 = vld [vmem:[%s4083 + $0x580] sm:$0xff]
    %v4129 = vld [vmem:[%s4083 + $0x588] sm:$0xff]
    %v4130 = vld [vmem:[%s4083 + $0x5c0] sm:$0xff]
    %v4131 = vld [vmem:[%s4083 + $0x5c8] sm:$0xff]
    %v4132 = vld [vmem:[%s4083 + $0x600] sm:$0xff]
    %v4133 = vld [vmem:[%s4083 + $0x608] sm:$0xff]
    %v4134 = vld [vmem:[%s4083 + $0x640] sm:$0xff]
    %v4135 = vld [vmem:[%s4083 + $0x648] sm:$0xff]
    %v4136 = vld [vmem:[%s4083 + $0x680] sm:$0xff]
    %v4137 = vld [vmem:[%s4083 + $0x688] sm:$0xff]
    %v4138 = vld [vmem:[%s4083 + $0x6c0] sm:$0xff]
    %v4139 = vld [vmem:[%s4083 + $0x6c8] sm:$0xff]
    %v4140 = vld [vmem:[%s4083 + $0x700] sm:$0xff]
    %v4141 = vld [vmem:[%s4083 + $0x708] sm:$0xff]
    %v4142 = vld [vmem:[%s4083 + $0x740] sm:$0xff]
    %v4143 = vld [vmem:[%s4083 + $0x748] sm:$0xff]
    %v4144 = vld [vmem:[%s4083 + $0x780] sm:$0xff]
    %v4145 = vld [vmem:[%s4083 + $0x788] sm:$0xff]
    %v4146 = vld [vmem:[%s4083 + $0x7c0] sm:$0xff]
    %v4147 = vld [vmem:[%s4083 + $0x7c8] sm:$0xff]
    %v4148 = vld [vmem:[%s4083 + $0x800] sm:$0xff]
    %v4149 = vld [vmem:[%s4083 + $0x808] sm:$0xff]
    %v4150 = vld [vmem:[%s4083 + $0x840] sm:$0xff]
    %v4151 = vld [vmem:[%s4083 + $0x848] sm:$0xff]
    %v4152 = vld [vmem:[%s4083 + $0x880] sm:$0xff]
    %v4153 = vld [vmem:[%s4083 + $0x888] sm:$0xff]
    %v4154 = vld [vmem:[%s4083 + $0x8c0] sm:$0xff]
    %v4155 = vld [vmem:[%s4083 + $0x8c8] sm:$0xff]
    %v4156 = vld [vmem:[%s4083 + $0x900] sm:$0xff]
    %v4157 = vld [vmem:[%s4083 + $0x908] sm:$0xff]
    %v4158 = vld [vmem:[%s4083 + $0x940] sm:$0xff]
    %v4159 = vld [vmem:[%s4083 + $0x948] sm:$0xff]
    %v4160 = vld [vmem:[%s4083 + $0x980] sm:$0xff]
    %v4161 = vld [vmem:[%s4083 + $0x988] sm:$0xff]
    %v4162 = vld [vmem:[%s4083 + $0x9c0] sm:$0xff]
    %v4163 = vld [vmem:[%s4083 + $0x9c8] sm:$0xff]
    %v4164 = vld [vmem:[%s4083 + $0xa00] sm:$0xff]
    %v4165 = vld [vmem:[%s4083 + $0xa08] sm:$0xff]
    %v4166 = vld [vmem:[%s4083 + $0xa40] sm:$0xff]
    %v4167 = vld [vmem:[%s4083 + $0xa48] sm:$0xff]
    %v4168 = vld [vmem:[%s4083 + $0xa80] sm:$0xff]
    %v4169 = vld [vmem:[%s4083 + $0xa88] sm:$0xff]
    %v4170 = vld [vmem:[%s4083 + $0xac0] sm:$0xff]
    %v4171 = vld [vmem:[%s4083 + $0xac8] sm:$0xff]
    %v4172 = vld [vmem:[%s4083 + $0xb00] sm:$0xff]
    %v4173 = vld [vmem:[%s4083 + $0xb08] sm:$0xff]
    %v4174 = vld [vmem:[%s4083 + $0xb40] sm:$0xff]
    %v4175 = vld [vmem:[%s4083 + $0xb48] sm:$0xff]
    %v4176 = vld [vmem:[%s4083 + $0xb80] sm:$0xff]
    %v4177 = vld [vmem:[%s4083 + $0xb88] sm:$0xff]
    %v4178 = vld [vmem:[%s4083 + $0xbc0] sm:$0xff]
    %v4179 = vld [vmem:[%s4083 + $0xbc8] sm:$0xff]
    %v4180 = vld [vmem:[%s4083 + $0xc00] sm:$0xff]
    %v4181 = vld [vmem:[%s4083 + $0xc08] sm:$0xff]
    %v4182 = vld [vmem:[%s4083 + $0xc40] sm:$0xff]
    %v4183 = vld [vmem:[%s4083 + $0xc48] sm:$0xff]
    %v4184 = vld [vmem:[%s4083 + $0xc80] sm:$0xff]
    %v4185 = vld [vmem:[%s4083 + $0xc88] sm:$0xff]
    %v4186 = vld [vmem:[%s4083 + $0xcc0] sm:$0xff]
    %v4187 = vld [vmem:[%s4083 + $0xcc8] sm:$0xff]
    %v4188 = vld [vmem:[%s4083 + $0xd00] sm:$0xff]
    %v4189 = vld [vmem:[%s4083 + $0xd08] sm:$0xff]
    %v4190 = vld [vmem:[%s4083 + $0xd40] sm:$0xff]
    %v4191 = vld [vmem:[%s4083 + $0xd48] sm:$0xff]
    %v4192 = vld [vmem:[%s4083 + $0xd80] sm:$0xff]
    %v4193 = vld [vmem:[%s4083 + $0xd88] sm:$0xff]
    %v4194 = vld [vmem:[%s4083 + $0xdc0] sm:$0xff]
    %v4195 = vld [vmem:[%s4083 + $0xdc8] sm:$0xff]
    %v4196 = vld [vmem:[%s4083 + $0xe00] sm:$0xff]
    %v4197 = vld [vmem:[%s4083 + $0xe08] sm:$0xff]
    %v4198 = vld [vmem:[%s4083 + $0xe40] sm:$0xff]
    %v4199 = vld [vmem:[%s4083 + $0xe48] sm:$0xff]
    %v4200 = vld [vmem:[%s4083 + $0xe80] sm:$0xff]
    %v4201 = vld [vmem:[%s4083 + $0xe88] sm:$0xff]
    %v4202 = vld [vmem:[%s4083 + $0xec0] sm:$0xff]
    %v4203 = vld [vmem:[%s4083 + $0xec8] sm:$0xff]
    %v4204 = vld [vmem:[%s4083 + $0xf00] sm:$0xff]
    %v4205 = vld [vmem:[%s4083 + $0xf08] sm:$0xff]
    %v4206 = vld [vmem:[%s4083 + $0xf40] sm:$0xff]
    %v4207 = vld [vmem:[%s4083 + $0xf48] sm:$0xff]
    %v4208 = vld [vmem:[%s4083 + $0xf80] sm:$0xff]
    %v4209 = vld [vmem:[%s4083 + $0xf88] sm:$0xff]
    %v4210 = vld [vmem:[%s4083 + $0xfc0] sm:$0xff]
    %v4211 = vld [vmem:[%s4083 + $0xfc8] sm:$0xff]
    %s4212 = scalar_lea.vmem [#allocation14], 8
    %v4213 = vld [vmem:[%s4212] sm:$0xf]
    %v4215 = vlaneseq
    %v4216 = vshrl.u32 %v4215, 7
    %v4217 = vsub.s32 0, %v4216
    %v4218 = vrot.slane %v4213, %v4217
    %v4219 = vlaneseq
    %v4220 = vshrl.u32 %v4219, 7
    %v4221 = vsub.s32 1, %v4220
    %v4222 = vrot.slane %v4213, %v4221
    %v4223 = vlaneseq
    %v4224 = vshrl.u32 %v4223, 7
    %v4225 = vsub.s32 2, %v4224
    %v4226 = vrot.slane %v4213, %v4225
    %v4227 = vlaneseq
    %v4228 = vshrl.u32 %v4227, 7
    %v4229 = vsub.s32 3, %v4228
    %v4230 = vrot.slane %v4213, %v4229
    %v4363 = vunpack.c.l.b16 %v4084
    %v4364 = vunpack.c.h.b16 %v4084
    %v4365 = vunpack.c.l.b16 %v4085
    %v4366 = vunpack.c.h.b16 %v4085
    %v4367 = vunpack.c.l.b16 %v4086
    %v4368 = vunpack.c.h.b16 %v4086
    %v4369 = vunpack.c.l.b16 %v4087
    %v4370 = vunpack.c.h.b16 %v4087
    %v4371 = vunpack.c.l.b16 %v4088
    %v4372 = vunpack.c.h.b16 %v4088
    %v4373 = vunpack.c.l.b16 %v4089
    %v4374 = vunpack.c.h.b16 %v4089
    %v4375 = vunpack.c.l.b16 %v4090
    %v4376 = vunpack.c.h.b16 %v4090
    %v4377 = vunpack.c.l.b16 %v4091
    %v4378 = vunpack.c.h.b16 %v4091
    %v4379 = vunpack.c.l.b16 %v4092
    %v4380 = vunpack.c.h.b16 %v4092
    %v4381 = vunpack.c.l.b16 %v4093
    %v4382 = vunpack.c.h.b16 %v4093
    %v4383 = vunpack.c.l.b16 %v4094
    %v4384 = vunpack.c.h.b16 %v4094
    %v4385 = vunpack.c.l.b16 %v4095
    %v4386 = vunpack.c.h.b16 %v4095
    %v4387 = vunpack.c.l.b16 %v4096
    %v4388 = vunpack.c.h.b16 %v4096
    %v4389 = vunpack.c.l.b16 %v4097
    %v4390 = vunpack.c.h.b16 %v4097
    %v4391 = vunpack.c.l.b16 %v4098
    %v4392 = vunpack.c.h.b16 %v4098
    %v4393 = vunpack.c.l.b16 %v4099
    %v4394 = vunpack.c.h.b16 %v4099
    %v4395 = vunpack.c.l.b16 %v4100
    %v4396 = vunpack.c.h.b16 %v4100
    %v4397 = vunpack.c.l.b16 %v4101
    %v4398 = vunpack.c.h.b16 %v4101
    %v4399 = vunpack.c.l.b16 %v4102
    %v4400 = vunpack.c.h.b16 %v4102
    %v4401 = vunpack.c.l.b16 %v4103
    %v4402 = vunpack.c.h.b16 %v4103
    %v4403 = vunpack.c.l.b16 %v4104
    %v4404 = vunpack.c.h.b16 %v4104
    %v4405 = vunpack.c.l.b16 %v4105
    %v4406 = vunpack.c.h.b16 %v4105
    %v4407 = vunpack.c.l.b16 %v4106
    %v4408 = vunpack.c.h.b16 %v4106
    %v4409 = vunpack.c.l.b16 %v4107
    %v4410 = vunpack.c.h.b16 %v4107
    %v4411 = vunpack.c.l.b16 %v4108
    %v4412 = vunpack.c.h.b16 %v4108
    %v4413 = vunpack.c.l.b16 %v4109
    %v4414 = vunpack.c.h.b16 %v4109
    %v4415 = vunpack.c.l.b16 %v4110
    %v4416 = vunpack.c.h.b16 %v4110
    %v4417 = vunpack.c.l.b16 %v4111
    %v4418 = vunpack.c.h.b16 %v4111
    %v4419 = vunpack.c.l.b16 %v4112
    %v4420 = vunpack.c.h.b16 %v4112
    %v4421 = vunpack.c.l.b16 %v4113
    %v4422 = vunpack.c.h.b16 %v4113
    %v4423 = vunpack.c.l.b16 %v4114
    %v4424 = vunpack.c.h.b16 %v4114
    %v4425 = vunpack.c.l.b16 %v4115
    %v4426 = vunpack.c.h.b16 %v4115
    %v4427 = vunpack.c.l.b16 %v4116
    %v4428 = vunpack.c.h.b16 %v4116
    %v4429 = vunpack.c.l.b16 %v4117
    %v4430 = vunpack.c.h.b16 %v4117
    %v4431 = vunpack.c.l.b16 %v4118
    %v4432 = vunpack.c.h.b16 %v4118
    %v4433 = vunpack.c.l.b16 %v4119
    %v4434 = vunpack.c.h.b16 %v4119
    %v4435 = vunpack.c.l.b16 %v4120
    %v4436 = vunpack.c.h.b16 %v4120
    %v4437 = vunpack.c.l.b16 %v4121
    %v4438 = vunpack.c.h.b16 %v4121
    %v4439 = vunpack.c.l.b16 %v4122
    %v4440 = vunpack.c.h.b16 %v4122
    %v4441 = vunpack.c.l.b16 %v4123
    %v4442 = vunpack.c.h.b16 %v4123
    %v4443 = vunpack.c.l.b16 %v4124
    %v4444 = vunpack.c.h.b16 %v4124
    %v4445 = vunpack.c.l.b16 %v4125
    %v4446 = vunpack.c.h.b16 %v4125
    %v4447 = vunpack.c.l.b16 %v4126
    %v4448 = vunpack.c.h.b16 %v4126
    %v4449 = vunpack.c.l.b16 %v4127
    %v4450 = vunpack.c.h.b16 %v4127
    %v4451 = vunpack.c.l.b16 %v4128
    %v4452 = vunpack.c.h.b16 %v4128
    %v4453 = vunpack.c.l.b16 %v4129
    %v4454 = vunpack.c.h.b16 %v4129
    %v4455 = vunpack.c.l.b16 %v4130
    %v4456 = vunpack.c.h.b16 %v4130
    %v4457 = vunpack.c.l.b16 %v4131
    %v4458 = vunpack.c.h.b16 %v4131
    %v4459 = vunpack.c.l.b16 %v4132
    %v4460 = vunpack.c.h.b16 %v4132
    %v4461 = vunpack.c.l.b16 %v4133
    %v4462 = vunpack.c.h.b16 %v4133
    %v4463 = vunpack.c.l.b16 %v4134
    %v4464 = vunpack.c.h.b16 %v4134
    %v4465 = vunpack.c.l.b16 %v4135
    %v4466 = vunpack.c.h.b16 %v4135
    %v4467 = vunpack.c.l.b16 %v4136
    %v4468 = vunpack.c.h.b16 %v4136
    %v4469 = vunpack.c.l.b16 %v4137
    %v4470 = vunpack.c.h.b16 %v4137
    %v4471 = vunpack.c.l.b16 %v4138
    %v4472 = vunpack.c.h.b16 %v4138
    %v4473 = vunpack.c.l.b16 %v4139
    %v4474 = vunpack.c.h.b16 %v4139
    %v4475 = vunpack.c.l.b16 %v4140
    %v4476 = vunpack.c.h.b16 %v4140
    %v4477 = vunpack.c.l.b16 %v4141
    %v4478 = vunpack.c.h.b16 %v4141
    %v4479 = vunpack.c.l.b16 %v4142
    %v4480 = vunpack.c.h.b16 %v4142
    %v4481 = vunpack.c.l.b16 %v4143
    %v4482 = vunpack.c.h.b16 %v4143
    %v4483 = vunpack.c.l.b16 %v4144
    %v4484 = vunpack.c.h.b16 %v4144
    %v4485 = vunpack.c.l.b16 %v4145
    %v4486 = vunpack.c.h.b16 %v4145
    %v4487 = vunpack.c.l.b16 %v4146
    %v4488 = vunpack.c.h.b16 %v4146
    %v4489 = vunpack.c.l.b16 %v4147
    %v4490 = vunpack.c.h.b16 %v4147
    %v4491 = vunpack.c.l.b16 %v4148
    %v4492 = vunpack.c.h.b16 %v4148
    %v4493 = vunpack.c.l.b16 %v4149
    %v4494 = vunpack.c.h.b16 %v4149
    %v4495 = vunpack.c.l.b16 %v4150
    %v4496 = vunpack.c.h.b16 %v4150
    %v4497 = vunpack.c.l.b16 %v4151
    %v4498 = vunpack.c.h.b16 %v4151
    %v4499 = vunpack.c.l.b16 %v4152
    %v4500 = vunpack.c.h.b16 %v4152
    %v4501 = vunpack.c.l.b16 %v4153
    %v4502 = vunpack.c.h.b16 %v4153
    %v4503 = vunpack.c.l.b16 %v4154
    %v4504 = vunpack.c.h.b16 %v4154
    %v4505 = vunpack.c.l.b16 %v4155
    %v4506 = vunpack.c.h.b16 %v4155
    %v4507 = vunpack.c.l.b16 %v4156
    %v4508 = vunpack.c.h.b16 %v4156
    %v4509 = vunpack.c.l.b16 %v4157
    %v4510 = vunpack.c.h.b16 %v4157
    %v4511 = vunpack.c.l.b16 %v4158
    %v4512 = vunpack.c.h.b16 %v4158
    %v4513 = vunpack.c.l.b16 %v4159
    %v4514 = vunpack.c.h.b16 %v4159
    %v4515 = vunpack.c.l.b16 %v4160
    %v4516 = vunpack.c.h.b16 %v4160
    %v4517 = vunpack.c.l.b16 %v4161
    %v4518 = vunpack.c.h.b16 %v4161
    %v4519 = vunpack.c.l.b16 %v4162
    %v4520 = vunpack.c.h.b16 %v4162
    %v4521 = vunpack.c.l.b16 %v4163
    %v4522 = vunpack.c.h.b16 %v4163
    %v4523 = vunpack.c.l.b16 %v4164
    %v4524 = vunpack.c.h.b16 %v4164
    %v4525 = vunpack.c.l.b16 %v4165
    %v4526 = vunpack.c.h.b16 %v4165
    %v4527 = vunpack.c.l.b16 %v4166
    %v4528 = vunpack.c.h.b16 %v4166
    %v4529 = vunpack.c.l.b16 %v4167
    %v4530 = vunpack.c.h.b16 %v4167
    %v4531 = vunpack.c.l.b16 %v4168
    %v4532 = vunpack.c.h.b16 %v4168
    %v4533 = vunpack.c.l.b16 %v4169
    %v4534 = vunpack.c.h.b16 %v4169
    %v4535 = vunpack.c.l.b16 %v4170
    %v4536 = vunpack.c.h.b16 %v4170
    %v4537 = vunpack.c.l.b16 %v4171
    %v4538 = vunpack.c.h.b16 %v4171
    %v4539 = vunpack.c.l.b16 %v4172
    %v4540 = vunpack.c.h.b16 %v4172
    %v4541 = vunpack.c.l.b16 %v4173
    %v4542 = vunpack.c.h.b16 %v4173
    %v4543 = vunpack.c.l.b16 %v4174
    %v4544 = vunpack.c.h.b16 %v4174
    %v4545 = vunpack.c.l.b16 %v4175
    %v4546 = vunpack.c.h.b16 %v4175
    %v4547 = vunpack.c.l.b16 %v4176
    %v4548 = vunpack.c.h.b16 %v4176
    %v4549 = vunpack.c.l.b16 %v4177
    %v4550 = vunpack.c.h.b16 %v4177
    %v4551 = vunpack.c.l.b16 %v4178
    %v4552 = vunpack.c.h.b16 %v4178
    %v4553 = vunpack.c.l.b16 %v4179
    %v4554 = vunpack.c.h.b16 %v4179
    %v4555 = vunpack.c.l.b16 %v4180
    %v4556 = vunpack.c.h.b16 %v4180
    %v4557 = vunpack.c.l.b16 %v4181
    %v4558 = vunpack.c.h.b16 %v4181
    %v4559 = vunpack.c.l.b16 %v4182
    %v4560 = vunpack.c.h.b16 %v4182
    %v4561 = vunpack.c.l.b16 %v4183
    %v4562 = vunpack.c.h.b16 %v4183
    %v4563 = vunpack.c.l.b16 %v4184
    %v4564 = vunpack.c.h.b16 %v4184
    %v4565 = vunpack.c.l.b16 %v4185
    %v4566 = vunpack.c.h.b16 %v4185
    %v4567 = vunpack.c.l.b16 %v4186
    %v4568 = vunpack.c.h.b16 %v4186
    %v4569 = vunpack.c.l.b16 %v4187
    %v4570 = vunpack.c.h.b16 %v4187
    %v4571 = vunpack.c.l.b16 %v4188
    %v4572 = vunpack.c.h.b16 %v4188
    %v4573 = vunpack.c.l.b16 %v4189
    %v4574 = vunpack.c.h.b16 %v4189
    %v4575 = vunpack.c.l.b16 %v4190
    %v4576 = vunpack.c.h.b16 %v4190
    %v4577 = vunpack.c.l.b16 %v4191
    %v4578 = vunpack.c.h.b16 %v4191
    %v4579 = vunpack.c.l.b16 %v4192
    %v4580 = vunpack.c.h.b16 %v4192
    %v4581 = vunpack.c.l.b16 %v4193
    %v4582 = vunpack.c.h.b16 %v4193
    %v4583 = vunpack.c.l.b16 %v4194
    %v4584 = vunpack.c.h.b16 %v4194
    %v4585 = vunpack.c.l.b16 %v4195
    %v4586 = vunpack.c.h.b16 %v4195
    %v4587 = vunpack.c.l.b16 %v4196
    %v4588 = vunpack.c.h.b16 %v4196
    %v4589 = vunpack.c.l.b16 %v4197
    %v4590 = vunpack.c.h.b16 %v4197
    %v4591 = vunpack.c.l.b16 %v4198
    %v4592 = vunpack.c.h.b16 %v4198
    %v4593 = vunpack.c.l.b16 %v4199
    %v4594 = vunpack.c.h.b16 %v4199
    %v4595 = vunpack.c.l.b16 %v4200
    %v4596 = vunpack.c.h.b16 %v4200
    %v4597 = vunpack.c.l.b16 %v4201
    %v4598 = vunpack.c.h.b16 %v4201
    %v4599 = vunpack.c.l.b16 %v4202
    %v4600 = vunpack.c.h.b16 %v4202
    %v4601 = vunpack.c.l.b16 %v4203
    %v4602 = vunpack.c.h.b16 %v4203
    %v4603 = vunpack.c.l.b16 %v4204
    %v4604 = vunpack.c.h.b16 %v4204
    %v4605 = vunpack.c.l.b16 %v4205
    %v4606 = vunpack.c.h.b16 %v4205
    %v4607 = vunpack.c.l.b16 %v4206
    %v4608 = vunpack.c.h.b16 %v4206
    %v4609 = vunpack.c.l.b16 %v4207
    %v4610 = vunpack.c.h.b16 %v4207
    %v4611 = vunpack.c.l.b16 %v4208
    %v4612 = vunpack.c.h.b16 %v4208
    %v4613 = vunpack.c.l.b16 %v4209
    %v4614 = vunpack.c.h.b16 %v4209
    %v4615 = vunpack.c.l.b16 %v4210
    %v4616 = vunpack.c.h.b16 %v4210
    %v4617 = vunpack.c.l.b16 %v4211
    %v4618 = vunpack.c.h.b16 %v4211
    %v4619 = vpack.c.b16 %v4367, %v4363
    %v4620 = vpack.c.b16 %v4368, %v4364
    %v4621 = vpack.c.b16 %v4369, %v4365
    %v4622 = vpack.c.b16 %v4370, %v4366
    %v4623 = vpack.c.b16 %v4375, %v4371
    %v4624 = vpack.c.b16 %v4376, %v4372
    %v4625 = vpack.c.b16 %v4377, %v4373
    %v4626 = vpack.c.b16 %v4378, %v4374
    %v4627 = vpack.c.b16 %v4383, %v4379
    %v4628 = vpack.c.b16 %v4384, %v4380
    %v4629 = vpack.c.b16 %v4385, %v4381
    %v4630 = vpack.c.b16 %v4386, %v4382
    %v4631 = vpack.c.b16 %v4391, %v4387
    %v4632 = vpack.c.b16 %v4392, %v4388
    %v4633 = vpack.c.b16 %v4393, %v4389
    %v4634 = vpack.c.b16 %v4394, %v4390
    %v4635 = vpack.c.b16 %v4399, %v4395
    %v4636 = vpack.c.b16 %v4400, %v4396
    %v4637 = vpack.c.b16 %v4401, %v4397
    %v4638 = vpack.c.b16 %v4402, %v4398
    %v4639 = vpack.c.b16 %v4407, %v4403
    %v4640 = vpack.c.b16 %v4408, %v4404
    %v4641 = vpack.c.b16 %v4409, %v4405
    %v4642 = vpack.c.b16 %v4410, %v4406
    %v4643 = vpack.c.b16 %v4415, %v4411
    %v4644 = vpack.c.b16 %v4416, %v4412
    %v4645 = vpack.c.b16 %v4417, %v4413
    %v4646 = vpack.c.b16 %v4418, %v4414
    %v4647 = vpack.c.b16 %v4423, %v4419
    %v4648 = vpack.c.b16 %v4424, %v4420
    %v4649 = vpack.c.b16 %v4425, %v4421
    %v4650 = vpack.c.b16 %v4426, %v4422
    %v4651 = vpack.c.b16 %v4431, %v4427
    %v4652 = vpack.c.b16 %v4432, %v4428
    %v4653 = vpack.c.b16 %v4433, %v4429
    %v4654 = vpack.c.b16 %v4434, %v4430
    %v4655 = vpack.c.b16 %v4439, %v4435
    %v4656 = vpack.c.b16 %v4440, %v4436
    %v4657 = vpack.c.b16 %v4441, %v4437
    %v4658 = vpack.c.b16 %v4442, %v4438
    %v4659 = vpack.c.b16 %v4447, %v4443
    %v4660 = vpack.c.b16 %v4448, %v4444
    %v4661 = vpack.c.b16 %v4449, %v4445
    %v4662 = vpack.c.b16 %v4450, %v4446
    %v4663 = vpack.c.b16 %v4455, %v4451
    %v4664 = vpack.c.b16 %v4456, %v4452
    %v4665 = vpack.c.b16 %v4457, %v4453
    %v4666 = vpack.c.b16 %v4458, %v4454
    %v4667 = vpack.c.b16 %v4463, %v4459
    %v4668 = vpack.c.b16 %v4464, %v4460
    %v4669 = vpack.c.b16 %v4465, %v4461
    %v4670 = vpack.c.b16 %v4466, %v4462
    %v4671 = vpack.c.b16 %v4471, %v4467
    %v4672 = vpack.c.b16 %v4472, %v4468
    %v4673 = vpack.c.b16 %v4473, %v4469
    %v4674 = vpack.c.b16 %v4474, %v4470
    %v4675 = vpack.c.b16 %v4479, %v4475
    %v4676 = vpack.c.b16 %v4480, %v4476
    %v4677 = vpack.c.b16 %v4481, %v4477
    %v4678 = vpack.c.b16 %v4482, %v4478
    %v4679 = vpack.c.b16 %v4487, %v4483
    %v4680 = vpack.c.b16 %v4488, %v4484
    %v4681 = vpack.c.b16 %v4489, %v4485
    %v4682 = vpack.c.b16 %v4490, %v4486
    %v4683 = vpack.c.b16 %v4495, %v4491
    %v4684 = vpack.c.b16 %v4496, %v4492
    %v4685 = vpack.c.b16 %v4497, %v4493
    %v4686 = vpack.c.b16 %v4498, %v4494
    %v4687 = vpack.c.b16 %v4503, %v4499
    %v4688 = vpack.c.b16 %v4504, %v4500
    %v4689 = vpack.c.b16 %v4505, %v4501
    %v4690 = vpack.c.b16 %v4506, %v4502
    %v4691 = vpack.c.b16 %v4511, %v4507
    %v4692 = vpack.c.b16 %v4512, %v4508
    %v4693 = vpack.c.b16 %v4513, %v4509
    %v4694 = vpack.c.b16 %v4514, %v4510
    %v4695 = vpack.c.b16 %v4519, %v4515
    %v4696 = vpack.c.b16 %v4520, %v4516
    %v4697 = vpack.c.b16 %v4521, %v4517
    %v4698 = vpack.c.b16 %v4522, %v4518
    %v4699 = vpack.c.b16 %v4527, %v4523
    %v4700 = vpack.c.b16 %v4528, %v4524
    %v4701 = vpack.c.b16 %v4529, %v4525
    %v4702 = vpack.c.b16 %v4530, %v4526
    %v4703 = vpack.c.b16 %v4535, %v4531
    %v4704 = vpack.c.b16 %v4536, %v4532
    %v4705 = vpack.c.b16 %v4537, %v4533
    %v4706 = vpack.c.b16 %v4538, %v4534
    %v4707 = vpack.c.b16 %v4543, %v4539
    %v4708 = vpack.c.b16 %v4544, %v4540
    %v4709 = vpack.c.b16 %v4545, %v4541
    %v4710 = vpack.c.b16 %v4546, %v4542
    %v4711 = vpack.c.b16 %v4551, %v4547
    %v4712 = vpack.c.b16 %v4552, %v4548
    %v4713 = vpack.c.b16 %v4553, %v4549
    %v4714 = vpack.c.b16 %v4554, %v4550
    %v4715 = vpack.c.b16 %v4559, %v4555
    %v4716 = vpack.c.b16 %v4560, %v4556
    %v4717 = vpack.c.b16 %v4561, %v4557
    %v4718 = vpack.c.b16 %v4562, %v4558
    %v4719 = vpack.c.b16 %v4567, %v4563
    %v4720 = vpack.c.b16 %v4568, %v4564
    %v4721 = vpack.c.b16 %v4569, %v4565
    %v4722 = vpack.c.b16 %v4570, %v4566
    %v4723 = vpack.c.b16 %v4575, %v4571
    %v4724 = vpack.c.b16 %v4576, %v4572
    %v4725 = vpack.c.b16 %v4577, %v4573
    %v4726 = vpack.c.b16 %v4578, %v4574
    %v4727 = vpack.c.b16 %v4583, %v4579
    %v4728 = vpack.c.b16 %v4584, %v4580
    %v4729 = vpack.c.b16 %v4585, %v4581
    %v4730 = vpack.c.b16 %v4586, %v4582
    %v4731 = vpack.c.b16 %v4591, %v4587
    %v4732 = vpack.c.b16 %v4592, %v4588
    %v4733 = vpack.c.b16 %v4593, %v4589
    %v4734 = vpack.c.b16 %v4594, %v4590
    %v4735 = vpack.c.b16 %v4599, %v4595
    %v4736 = vpack.c.b16 %v4600, %v4596
    %v4737 = vpack.c.b16 %v4601, %v4597
    %v4738 = vpack.c.b16 %v4602, %v4598
    %v4739 = vpack.c.b16 %v4607, %v4603
    %v4740 = vpack.c.b16 %v4608, %v4604
    %v4741 = vpack.c.b16 %v4609, %v4605
    %v4742 = vpack.c.b16 %v4610, %v4606
    %v4743 = vpack.c.b16 %v4615, %v4611
    %v4744 = vpack.c.b16 %v4616, %v4612
    %v4745 = vpack.c.b16 %v4617, %v4613
    %v4746 = vpack.c.b16 %v4618, %v4614
    %4875 = vmatprep.subr.bf16.mxu0 %v4620
    %4876 = vmatpush1.bf16.msra.mxu0 %v4619
    %4877 = vmatprep.subr.bf16.mxu0 %v4624
    %4878 = vmatpush1.bf16.msra.mxu0 %v4623
    %4879 = vmatprep.subr.bf16.mxu0 %v4628
    %4880 = vmatpush1.bf16.msra.mxu0 %v4627
    %4881 = vmatprep.subr.bf16.mxu0 %v4632
    %4882 = vmatpush1.bf16.msra.mxu0 %v4631
    %4883 = vmatprep.subr.bf16.mxu0 %v4636
    %4884 = vmatpush1.bf16.msra.mxu0 %v4635
    %4885 = vmatprep.subr.bf16.mxu0 %v4640
    %4886 = vmatpush1.bf16.msra.mxu0 %v4639
    %4887 = vmatprep.subr.bf16.mxu0 %v4644
    %4888 = vmatpush1.bf16.msra.mxu0 %v4643
    %4889 = vmatprep.subr.bf16.mxu0 %v4648
    %4890 = vmatpush1.bf16.msra.mxu0 %v4647
    %4891 = vmatprep.subr.bf16.mxu0 %v4652
    %4892 = vmatpush1.bf16.msra.mxu0 %v4651
    %4893 = vmatprep.subr.bf16.mxu0 %v4656
    %4894 = vmatpush1.bf16.msra.mxu0 %v4655
    %4895 = vmatprep.subr.bf16.mxu0 %v4660
    %4896 = vmatpush1.bf16.msra.mxu0 %v4659
    %4897 = vmatprep.subr.bf16.mxu0 %v4664
    %4898 = vmatpush1.bf16.msra.mxu0 %v4663
    %4899 = vmatprep.subr.bf16.mxu0 %v4668
    %4900 = vmatpush1.bf16.msra.mxu0 %v4667
    %4901 = vmatprep.subr.bf16.mxu0 %v4672
    %4902 = vmatpush1.bf16.msra.mxu0 %v4671
    %4903 = vmatprep.subr.bf16.mxu0 %v4676
    %4904 = vmatpush1.bf16.msra.mxu0 %v4675
    %4905 = vmatprep.subr.bf16.mxu0 %v4680
    %4906 = vmatpush1.bf16.msra.mxu0 %v4679
    %4907 = vmatprep.mubr.bf16.mxu0 %v1439
    %4908 = vmatmul.mubr.bf16.gmra.mrb[0].mxu0 %v1438
    %v4909 = vpop.f32.mrb[0].mxu0
    %v4910 = vadd.f32 %v4218, %v4909
    %v4911 = vpop.f32.mrb[0].mxu0
    %v4912 = vadd.f32 %v4222, %v4911
    %v4913 = vpop.f32.mrb[0].mxu0
    %v4914 = vadd.f32 %v4218, %v4913
    %v4915 = vpop.f32.mrb[0].mxu0
    %v4916 = vadd.f32 %v4222, %v4915
    %4917 = vdwg.mxu0
    %4918 = vmatprep.subr.bf16.mxu0 %v4684
    %4919 = vmatpush1.bf16.msra.mxu0 %v4683
    %4920 = vmatprep.subr.bf16.mxu0 %v4688
    %4921 = vmatpush1.bf16.msra.mxu0 %v4687
    %4922 = vmatprep.subr.bf16.mxu0 %v4692
    %4923 = vmatpush1.bf16.msra.mxu0 %v4691
    %4924 = vmatprep.subr.bf16.mxu0 %v4696
    %4925 = vmatpush1.bf16.msra.mxu0 %v4695
    %4926 = vmatprep.subr.bf16.mxu0 %v4700
    %4927 = vmatpush1.bf16.msra.mxu0 %v4699
    %4928 = vmatprep.subr.bf16.mxu0 %v4704
    %4929 = vmatpush1.bf16.msra.mxu0 %v4703
    %4930 = vmatprep.subr.bf16.mxu0 %v4708
    %4931 = vmatpush1.bf16.msra.mxu0 %v4707
    %4932 = vmatprep.subr.bf16.mxu0 %v4712
    %4933 = vmatpush1.bf16.msra.mxu0 %v4711
    %4934 = vmatprep.subr.bf16.mxu0 %v4716
    %4935 = vmatpush1.bf16.msra.mxu0 %v4715
    %4936 = vmatprep.subr.bf16.mxu0 %v4720
    %4937 = vmatpush1.bf16.msra.mxu0 %v4719
    %4938 = vmatprep.subr.bf16.mxu0 %v4724
    %4939 = vmatpush1.bf16.msra.mxu0 %v4723
    %4940 = vmatprep.subr.bf16.mxu0 %v4728
    %4941 = vmatpush1.bf16.msra.mxu0 %v4727
    %4942 = vmatprep.subr.bf16.mxu0 %v4732
    %4943 = vmatpush1.bf16.msra.mxu0 %v4731
    %4944 = vmatprep.subr.bf16.mxu0 %v4736
    %4945 = vmatpush1.bf16.msra.mxu0 %v4735
    %4946 = vmatprep.subr.bf16.mxu0 %v4740
    %4947 = vmatpush1.bf16.msra.mxu0 %v4739
    %4948 = vmatprep.subr.bf16.mxu0 %v4744
    %4949 = vmatpush1.bf16.msra.mxu0 %v4743
    %4950 = vmatprep.mubr.bf16.mxu0 %v1441
    %4951 = vmatmul.mubr.bf16.gmra.mrb[0].mxu0 %v1440
    %v4952 = vpop.f32.mrb[0].mxu0
    %v4953 = vadd.f32 %v4910, %v4952
    %v4954 = vpop.f32.mrb[0].mxu0
    %v4955 = vadd.f32 %v4912, %v4954
    %v4956 = vpop.f32.mrb[0].mxu0
    %v4957 = vadd.f32 %v4914, %v4956
    %v4958 = vpop.f32.mrb[0].mxu0
    %v4959 = vadd.f32 %v4916, %v4958
    %4960 = vdwg.mxu0
    %4961 = vmatprep.subr.bf16.mxu0 %v4622
    %4962 = vmatpush1.bf16.msra.mxu0 %v4621
    %4963 = vmatprep.subr.bf16.mxu0 %v4626
    %4964 = vmatpush1.bf16.msra.mxu0 %v4625
    %4965 = vmatprep.subr.bf16.mxu0 %v4630
    %4966 = vmatpush1.bf16.msra.mxu0 %v4629
    %4967 = vmatprep.subr.bf16.mxu0 %v4634
    %4968 = vmatpush1.bf16.msra.mxu0 %v4633
    %4969 = vmatprep.subr.bf16.mxu0 %v4638
    %4970 = vmatpush1.bf16.msra.mxu0 %v4637
    %4971 = vmatprep.subr.bf16.mxu0 %v4642
    %4972 = vmatpush1.bf16.msra.mxu0 %v4641
    %4973 = vmatprep.subr.bf16.mxu0 %v4646
    %4974 = vmatpush1.bf16.msra.mxu0 %v4645
    %4975 = vmatprep.subr.bf16.mxu0 %v4650
    %4976 = vmatpush1.bf16.msra.mxu0 %v4649
    %4977 = vmatprep.subr.bf16.mxu0 %v4654
    %4978 = vmatpush1.bf16.msra.mxu0 %v4653
    %4979 = vmatprep.subr.bf16.mxu0 %v4658
    %4980 = vmatpush1.bf16.msra.mxu0 %v4657
    %4981 = vmatprep.subr.bf16.mxu0 %v4662
    %4982 = vmatpush1.bf16.msra.mxu0 %v4661
    %4983 = vmatprep.subr.bf16.mxu0 %v4666
    %4984 = vmatpush1.bf16.msra.mxu0 %v4665
    %4985 = vmatprep.subr.bf16.mxu0 %v4670
    %4986 = vmatpush1.bf16.msra.mxu0 %v4669
    %4987 = vmatprep.subr.bf16.mxu0 %v4674
    %4988 = vmatpush1.bf16.msra.mxu0 %v4673
    %4989 = vmatprep.subr.bf16.mxu0 %v4678
    %4990 = vmatpush1.bf16.msra.mxu0 %v4677
    %4991 = vmatprep.subr.bf16.mxu0 %v4682
    %4992 = vmatpush1.bf16.msra.mxu0 %v4681
    %4993 = vmatprep.mubr.bf16.mxu0 %v1439
    %4994 = vmatmul.mubr.bf16.gmra.mrb[0].mxu0 %v1438
    %v4995 = vpop.f32.mrb[0].mxu0
    %v4996 = vadd.f32 %v4226, %v4995
    %v4997 = vpop.f32.mrb[0].mxu0
    %v4998 = vadd.f32 %v4230, %v4997
    %v4999 = vpop.f32.mrb[0].mxu0
    %v5000 = vadd.f32 %v4226, %v4999
    %v5001 = vpop.f32.mrb[0].mxu0
    %v5002 = vadd.f32 %v4230, %v5001
    %5003 = vdwg.mxu0
    %5004 = vmatprep.subr.bf16.mxu0 %v4686
    %5005 = vmatpush1.bf16.msra.mxu0 %v4685
    %5006 = vmatprep.subr.bf16.mxu0 %v4690
    %5007 = vmatpush1.bf16.msra.mxu0 %v4689
    %5008 = vmatprep.subr.bf16.mxu0 %v4694
    %5009 = vmatpush1.bf16.msra.mxu0 %v4693
    %5010 = vmatprep.subr.bf16.mxu0 %v4698
    %5011 = vmatpush1.bf16.msra.mxu0 %v4697
    %5012 = vmatprep.subr.bf16.mxu0 %v4702
    %5013 = vmatpush1.bf16.msra.mxu0 %v4701
    %5014 = vmatprep.subr.bf16.mxu0 %v4706
    %5015 = vmatpush1.bf16.msra.mxu0 %v4705
    %5016 = vmatprep.subr.bf16.mxu0 %v4710
    %5017 = vmatpush1.bf16.msra.mxu0 %v4709
    %5018 = vmatprep.subr.bf16.mxu0 %v4714
    %5019 = vmatpush1.bf16.msra.mxu0 %v4713
    %5020 = vmatprep.subr.bf16.mxu0 %v4718
    %5021 = vmatpush1.bf16.msra.mxu0 %v4717
    %5022 = vmatprep.subr.bf16.mxu0 %v4722
    %5023 = vmatpush1.bf16.msra.mxu0 %v4721
    %5024 = vmatprep.subr.bf16.mxu0 %v4726
    %5025 = vmatpush1.bf16.msra.mxu0 %v4725
    %5026 = vmatprep.subr.bf16.mxu0 %v4730
    %5027 = vmatpush1.bf16.msra.mxu0 %v4729
    %5028 = vmatprep.subr.bf16.mxu0 %v4734
    %5029 = vmatpush1.bf16.msra.mxu0 %v4733
    %5030 = vmatprep.subr.bf16.mxu0 %v4738
    %5031 = vmatpush1.bf16.msra.mxu0 %v4737
    %5032 = vmatprep.subr.bf16.mxu0 %v4742
    %5033 = vmatpush1.bf16.msra.mxu0 %v4741
    %5034 = vmatprep.subr.bf16.mxu0 %v4746
    %5035 = vmatpush1.bf16.msra.mxu0 %v4745
    %5036 = vmatprep.mubr.bf16.mxu0 %v1441
    %5037 = vmatmul.mubr.bf16.gmra.mrb[0].mxu0 %v1440
    %v5038 = vpop.f32.mrb[0].mxu0
    %v5039 = vadd.f32 %v4996, %v5038
    %v5040 = vpop.f32.mrb[0].mxu0
    %v5041 = vadd.f32 %v4998, %v5040
    %v5042 = vpop.f32.mrb[0].mxu0
    %v5043 = vadd.f32 %v5000, %v5042
    %v5044 = vpop.f32.mrb[0].mxu0
    %v5045 = vadd.f32 %v5002, %v5044
    %5046 = vdwg.mxu0
    %v5047 = vmax.f32 %v4953, 0.0
    %v5048 = vmax.f32 %v4955, 0.0
    %v5049 = vmax.f32 %v5039, 0.0
    %v5050 = vmax.f32 %v5041, 0.0
    %v5051 = vmax.f32 %v4957, 0.0
    %v5052 = vmax.f32 %v4959, 0.0
    %v5053 = vmax.f32 %v5043, 0.0
    %v5054 = vmax.f32 %v5045, 0.0
    %v5055 = vpack.c.bf16 %v5051, %v5047
    %v5056 = vpack.c.bf16 %v5052, %v5048
    %v5057 = vpack.c.bf16 %v5053, %v5049
    %v5058 = vpack.c.bf16 %v5054, %v5050
    %v5059 = vld [vmem:[#allocation2] sm:$0xff]
    %v5060 = vld [vmem:[#allocation2 + $0x8] sm:$0xff]
    %s5061 = scalar_lea.vmem [#allocation15], 512
    %v5062 = vld [vmem:[%s5061] sm:$0xf]
    %v5063 = vld [vmem:[%s5061 + $0x4] sm:$0xf]
    %v5064 = vld [vmem:[%s5061 + $0x8] sm:$0xf]
    %v5065 = vld [vmem:[%s5061 + $0xc] sm:$0xf]
    %v5066 = vld [vmem:[%s5061 + $0x10] sm:$0xf]
    %v5067 = vld [vmem:[%s5061 + $0x14] sm:$0xf]
    %v5068 = vld [vmem:[%s5061 + $0x18] sm:$0xf]
    %v5069 = vld [vmem:[%s5061 + $0x1c] sm:$0xf]
    %v5070 = vld [vmem:[%s5061 + $0x20] sm:$0xf]
    %v5071 = vld [vmem:[%s5061 + $0x24] sm:$0xf]
    %v5072 = vld [vmem:[%s5061 + $0x28] sm:$0xf]
    %v5073 = vld [vmem:[%s5061 + $0x2c] sm:$0xf]
    %v5074 = vld [vmem:[%s5061 + $0x30] sm:$0xf]
    %v5075 = vld [vmem:[%s5061 + $0x34] sm:$0xf]
    %v5076 = vld [vmem:[%s5061 + $0x38] sm:$0xf]
    %v5077 = vld [vmem:[%s5061 + $0x3c] sm:$0xf]
    %v5078 = vld [vmem:[%s5061 + $0x40] sm:$0xf]
    %v5079 = vld [vmem:[%s5061 + $0x44] sm:$0xf]
    %v5080 = vld [vmem:[%s5061 + $0x48] sm:$0xf]
    %v5081 = vld [vmem:[%s5061 + $0x4c] sm:$0xf]
    %v5082 = vld [vmem:[%s5061 + $0x50] sm:$0xf]
    %v5083 = vld [vmem:[%s5061 + $0x54] sm:$0xf]
    %v5084 = vld [vmem:[%s5061 + $0x58] sm:$0xf]
    %v5085 = vld [vmem:[%s5061 + $0x5c] sm:$0xf]
    %v5086 = vld [vmem:[%s5061 + $0x60] sm:$0xf]
    %v5087 = vld [vmem:[%s5061 + $0x64] sm:$0xf]
    %v5088 = vld [vmem:[%s5061 + $0x68] sm:$0xf]
    %v5089 = vld [vmem:[%s5061 + $0x6c] sm:$0xf]
    %v5090 = vld [vmem:[%s5061 + $0x70] sm:$0xf]
    %v5091 = vld [vmem:[%s5061 + $0x74] sm:$0xf]
    %v5092 = vld [vmem:[%s5061 + $0x78] sm:$0xf]
    %v5093 = vld [vmem:[%s5061 + $0x7c] sm:$0xf]
    %v5094 = vld [vmem:[%s5061 + $0x80] sm:$0xf]
    %v5095 = vld [vmem:[%s5061 + $0x84] sm:$0xf]
    %v5096 = vld [vmem:[%s5061 + $0x88] sm:$0xf]
    %v5097 = vld [vmem:[%s5061 + $0x8c] sm:$0xf]
    %v5098 = vld [vmem:[%s5061 + $0x90] sm:$0xf]
    %v5099 = vld [vmem:[%s5061 + $0x94] sm:$0xf]
    %v5100 = vld [vmem:[%s5061 + $0x98] sm:$0xf]
    %v5101 = vld [vmem:[%s5061 + $0x9c] sm:$0xf]
    %v5102 = vld [vmem:[%s5061 + $0xa0] sm:$0xf]
    %v5103 = vld [vmem:[%s5061 + $0xa4] sm:$0xf]
    %v5104 = vld [vmem:[%s5061 + $0xa8] sm:$0xf]
    %v5105 = vld [vmem:[%s5061 + $0xac] sm:$0xf]
    %v5106 = vld [vmem:[%s5061 + $0xb0] sm:$0xf]
    %v5107 = vld [vmem:[%s5061 + $0xb4] sm:$0xf]
    %v5108 = vld [vmem:[%s5061 + $0xb8] sm:$0xf]
    %v5109 = vld [vmem:[%s5061 + $0xbc] sm:$0xf]
    %v5110 = vld [vmem:[%s5061 + $0xc0] sm:$0xf]
    %v5111 = vld [vmem:[%s5061 + $0xc4] sm:$0xf]
    %v5112 = vld [vmem:[%s5061 + $0xc8] sm:$0xf]
    %v5113 = vld [vmem:[%s5061 + $0xcc] sm:$0xf]
    %v5114 = vld [vmem:[%s5061 + $0xd0] sm:$0xf]
    %v5115 = vld [vmem:[%s5061 + $0xd4] sm:$0xf]
    %v5116 = vld [vmem:[%s5061 + $0xd8] sm:$0xf]
    %v5117 = vld [vmem:[%s5061 + $0xdc] sm:$0xf]
    %v5118 = vld [vmem:[%s5061 + $0xe0] sm:$0xf]
    %v5119 = vld [vmem:[%s5061 + $0xe4] sm:$0xf]
    %v5120 = vld [vmem:[%s5061 + $0xe8] sm:$0xf]
    %v5121 = vld [vmem:[%s5061 + $0xec] sm:$0xf]
    %v5122 = vld [vmem:[%s5061 + $0xf0] sm:$0xf]
    %v5123 = vld [vmem:[%s5061 + $0xf4] sm:$0xf]
    %v5124 = vld [vmem:[%s5061 + $0xf8] sm:$0xf]
    %v5125 = vld [vmem:[%s5061 + $0xfc] sm:$0xf]
    %v5190 = vunpack.c.l.b16 %v5062
    %v5191 = vunpack.c.l.b16 %v5063
    %v5192 = vunpack.c.l.b16 %v5064
    %v5193 = vunpack.c.l.b16 %v5065
    %v5194 = vunpack.c.l.b16 %v5066
    %v5195 = vunpack.c.l.b16 %v5067
    %v5196 = vunpack.c.l.b16 %v5068
    %v5197 = vunpack.c.l.b16 %v5069
    %v5198 = vunpack.c.l.b16 %v5070
    %v5199 = vunpack.c.l.b16 %v5071
    %v5200 = vunpack.c.l.b16 %v5072
    %v5201 = vunpack.c.l.b16 %v5073
    %v5202 = vunpack.c.l.b16 %v5074
    %v5203 = vunpack.c.l.b16 %v5075
    %v5204 = vunpack.c.l.b16 %v5076
    %v5205 = vunpack.c.l.b16 %v5077
    %v5206 = vunpack.c.l.b16 %v5078
    %v5207 = vunpack.c.l.b16 %v5079
    %v5208 = vunpack.c.l.b16 %v5080
    %v5209 = vunpack.c.l.b16 %v5081
    %v5210 = vunpack.c.l.b16 %v5082
    %v5211 = vunpack.c.l.b16 %v5083
    %v5212 = vunpack.c.l.b16 %v5084
    %v5213 = vunpack.c.l.b16 %v5085
    %v5214 = vunpack.c.l.b16 %v5086
    %v5215 = vunpack.c.l.b16 %v5087
    %v5216 = vunpack.c.l.b16 %v5088
    %v5217 = vunpack.c.l.b16 %v5089
    %v5218 = vunpack.c.l.b16 %v5090
    %v5219 = vunpack.c.l.b16 %v5091
    %v5220 = vunpack.c.l.b16 %v5092
    %v5221 = vunpack.c.l.b16 %v5093
    %v5222 = vunpack.c.l.b16 %v5094
    %v5223 = vunpack.c.l.b16 %v5095
    %v5224 = vunpack.c.l.b16 %v5096
    %v5225 = vunpack.c.l.b16 %v5097
    %v5226 = vunpack.c.l.b16 %v5098
    %v5227 = vunpack.c.l.b16 %v5099
    %v5228 = vunpack.c.l.b16 %v5100
    %v5229 = vunpack.c.l.b16 %v5101
    %v5230 = vunpack.c.l.b16 %v5102
    %v5231 = vunpack.c.l.b16 %v5103
    %v5232 = vunpack.c.l.b16 %v5104
    %v5233 = vunpack.c.l.b16 %v5105
    %v5234 = vunpack.c.l.b16 %v5106
    %v5235 = vunpack.c.l.b16 %v5107
    %v5236 = vunpack.c.l.b16 %v5108
    %v5237 = vunpack.c.l.b16 %v5109
    %v5238 = vunpack.c.l.b16 %v5110
    %v5239 = vunpack.c.l.b16 %v5111
    %v5240 = vunpack.c.l.b16 %v5112
    %v5241 = vunpack.c.l.b16 %v5113
    %v5242 = vunpack.c.l.b16 %v5114
    %v5243 = vunpack.c.l.b16 %v5115
    %v5244 = vunpack.c.l.b16 %v5116
    %v5245 = vunpack.c.l.b16 %v5117
    %v5246 = vunpack.c.l.b16 %v5118
    %v5247 = vunpack.c.l.b16 %v5119
    %v5248 = vunpack.c.l.b16 %v5120
    %v5249 = vunpack.c.l.b16 %v5121
    %v5250 = vunpack.c.l.b16 %v5122
    %v5251 = vunpack.c.l.b16 %v5123
    %v5252 = vunpack.c.l.b16 %v5124
    %v5253 = vunpack.c.l.b16 %v5125
    %v5254 = vpack.c.b16 %v5191, %v5190
    %v5255 = vpack.c.b16 %v5193, %v5192
    %v5256 = vpack.c.b16 %v5195, %v5194
    %v5257 = vpack.c.b16 %v5197, %v5196
    %v5258 = vpack.c.b16 %v5199, %v5198
    %v5259 = vpack.c.b16 %v5201, %v5200
    %v5260 = vpack.c.b16 %v5203, %v5202
    %v5261 = vpack.c.b16 %v5205, %v5204
    %v5262 = vpack.c.b16 %v5207, %v5206
    %v5263 = vpack.c.b16 %v5209, %v5208
    %v5264 = vpack.c.b16 %v5211, %v5210
    %v5265 = vpack.c.b16 %v5213, %v5212
    %v5266 = vpack.c.b16 %v5215, %v5214
    %v5267 = vpack.c.b16 %v5217, %v5216
    %v5268 = vpack.c.b16 %v5219, %v5218
    %v5269 = vpack.c.b16 %v5221, %v5220
    %v5270 = vpack.c.b16 %v5223, %v5222
    %v5271 = vpack.c.b16 %v5225, %v5224
    %v5272 = vpack.c.b16 %v5227, %v5226
    %v5273 = vpack.c.b16 %v5229, %v5228
    %v5274 = vpack.c.b16 %v5231, %v5230
    %v5275 = vpack.c.b16 %v5233, %v5232
    %v5276 = vpack.c.b16 %v5235, %v5234
    %v5277 = vpack.c.b16 %v5237, %v5236
    %v5278 = vpack.c.b16 %v5239, %v5238
    %v5279 = vpack.c.b16 %v5241, %v5240
    %v5280 = vpack.c.b16 %v5243, %v5242
    %v5281 = vpack.c.b16 %v5245, %v5244
    %v5282 = vpack.c.b16 %v5247, %v5246
    %v5283 = vpack.c.b16 %v5249, %v5248
    %v5284 = vpack.c.b16 %v5251, %v5250
    %v5285 = vpack.c.b16 %v5253, %v5252
    %5318 = vmatprep.subr.bf16.mxu0 0
    %5319 = vmatpush1.bf16.msra.mxu0 %v5254
    %5320 = vmatprep.subr.bf16.mxu0 0
    %5321 = vmatpush1.bf16.msra.mxu0 %v5255
    %5322 = vmatprep.subr.bf16.mxu0 0
    %5323 = vmatpush1.bf16.msra.mxu0 %v5256
    %5324 = vmatprep.subr.bf16.mxu0 0
    %5325 = vmatpush1.bf16.msra.mxu0 %v5257
    %5326 = vmatprep.subr.bf16.mxu0 0
    %5327 = vmatpush1.bf16.msra.mxu0 %v5258
    %5328 = vmatprep.subr.bf16.mxu0 0
    %5329 = vmatpush1.bf16.msra.mxu0 %v5259
    %5330 = vmatprep.subr.bf16.mxu0 0
    %5331 = vmatpush1.bf16.msra.mxu0 %v5260
    %5332 = vmatprep.subr.bf16.mxu0 0
    %5333 = vmatpush1.bf16.msra.mxu0 %v5261
    %5334 = vmatprep.subr.bf16.mxu0 0
    %5335 = vmatpush1.bf16.msra.mxu0 %v5262
    %5336 = vmatprep.subr.bf16.mxu0 0
    %5337 = vmatpush1.bf16.msra.mxu0 %v5263
    %5338 = vmatprep.subr.bf16.mxu0 0
    %5339 = vmatpush1.bf16.msra.mxu0 %v5264
    %5340 = vmatprep.subr.bf16.mxu0 0
    %5341 = vmatpush1.bf16.msra.mxu0 %v5265
    %5342 = vmatprep.subr.bf16.mxu0 0
    %5343 = vmatpush1.bf16.msra.mxu0 %v5266
    %5344 = vmatprep.subr.bf16.mxu0 0
    %5345 = vmatpush1.bf16.msra.mxu0 %v5267
    %5346 = vmatprep.subr.bf16.mxu0 0
    %5347 = vmatpush1.bf16.msra.mxu0 %v5268
    %5348 = vmatprep.subr.bf16.mxu0 0
    %5349 = vmatpush1.bf16.msra.mxu0 %v5269
    %5350 = vmatprep.mubr.bf16.mxu0 %v5056
    %5351 = vmatmul.mubr.bf16.gmra.mrb[0].mxu0 %v5055
    %v5352 = vpop.f32.mrb[0].mxu0
    %v5353 = vadd.f32 0.0, %v5352
    %v5354 = vpop.f32.mrb[0].mxu0
    %v5355 = vpop.f32.mrb[0].mxu0
    %v5356 = vadd.f32 0.0, %v5355
    %v5357 = vpop.f32.mrb[0].mxu0
    %5358 = vdwg.mxu0
    %5359 = vmatprep.subr.bf16.mxu0 0
    %5360 = vmatpush1.bf16.msra.mxu0 %v5270
    %5361 = vmatprep.subr.bf16.mxu0 0
    %5362 = vmatpush1.bf16.msra.mxu0 %v5271
    %5363 = vmatprep.subr.bf16.mxu0 0
    %5364 = vmatpush1.bf16.msra.mxu0 %v5272
    %5365 = vmatprep.subr.bf16.mxu0 0
    %5366 = vmatpush1.bf16.msra.mxu0 %v5273
    %5367 = vmatprep.subr.bf16.mxu0 0
    %5368 = vmatpush1.bf16.msra.mxu0 %v5274
    %5369 = vmatprep.subr.bf16.mxu0 0
    %5370 = vmatpush1.bf16.msra.mxu0 %v5275
    %5371 = vmatprep.subr.bf16.mxu0 0
    %5372 = vmatpush1.bf16.msra.mxu0 %v5276
    %5373 = vmatprep.subr.bf16.mxu0 0
    %5374 = vmatpush1.bf16.msra.mxu0 %v5277
    %5375 = vmatprep.subr.bf16.mxu0 0
    %5376 = vmatpush1.bf16.msra.mxu0 %v5278
    %5377 = vmatprep.subr.bf16.mxu0 0
    %5378 = vmatpush1.bf16.msra.mxu0 %v5279
    %5379 = vmatprep.subr.bf16.mxu0 0
    %5380 = vmatpush1.bf16.msra.mxu0 %v5280
    %5381 = vmatprep.subr.bf16.mxu0 0
    %5382 = vmatpush1.bf16.msra.mxu0 %v5281
    %5383 = vmatprep.subr.bf16.mxu0 0
    %5384 = vmatpush1.bf16.msra.mxu0 %v5282
    %5385 = vmatprep.subr.bf16.mxu0 0
    %5386 = vmatpush1.bf16.msra.mxu0 %v5283
    %5387 = vmatprep.subr.bf16.mxu0 0
    %5388 = vmatpush1.bf16.msra.mxu0 %v5284
    %5389 = vmatprep.subr.bf16.mxu0 0
    %5390 = vmatpush1.bf16.msra.mxu0 %v5285
    %5391 = vmatprep.mubr.bf16.mxu0 %v5058
    %5392 = vmatmul.mubr.bf16.gmra.mrb[0].mxu0 %v5057
    %v5393 = vpop.f32.mrb[0].mxu0
    %v5394 = vadd.f32 %v5353, %v5393
    %v5395 = vpop.f32.mrb[0].mxu0
    %v5396 = vpop.f32.mrb[0].mxu0
    %v5397 = vadd.f32 %v5356, %v5396
    %v5398 = vpop.f32.mrb[0].mxu0
    %5399 = vdwg.mxu0
    %v5400 = vadd.f32 %v5059, %v5394
    %v5401 = vadd.f32 %v5060, %v5397
    %5402 = vst [vmem:[#allocation2] sm:$0xff] %v5400
    %5403 = vst [vmem:[#allocation2 + $0x8] sm:$0xff] %v5401
    %s5404 = scalar_lea.vmem [#allocation12], 48
    %v5405 = vld [vmem:[%s5404] sm:$0xff]
    %v5406 = vld [vmem:[%s5404 + $0x8] sm:$0xff]
    %v5407 = vld [vmem:[%s5404 + $0x40] sm:$0xff]
    %v5408 = vld [vmem:[%s5404 + $0x48] sm:$0xff]
    %v5409 = vld [vmem:[%s5404 + $0x80] sm:$0xff]
    %v5410 = vld [vmem:[%s5404 + $0x88] sm:$0xff]
    %v5411 = vld [vmem:[%s5404 + $0xc0] sm:$0xff]
    %v5412 = vld [vmem:[%s5404 + $0xc8] sm:$0xff]
    %v5413 = vld [vmem:[%s5404 + $0x100] sm:$0xff]
    %v5414 = vld [vmem:[%s5404 + $0x108] sm:$0xff]
    %v5415 = vld [vmem:[%s5404 + $0x140] sm:$0xff]
    %v5416 = vld [vmem:[%s5404 + $0x148] sm:$0xff]
    %v5417 = vld [vmem:[%s5404 + $0x180] sm:$0xff]
    %v5418 = vld [vmem:[%s5404 + $0x188] sm:$0xff]
    %v5419 = vld [vmem:[%s5404 + $0x1c0] sm:$0xff]
    %v5420 = vld [vmem:[%s5404 + $0x1c8] sm:$0xff]
    %v5421 = vld [vmem:[%s5404 + $0x200] sm:$0xff]
    %v5422 = vld [vmem:[%s5404 + $0x208] sm:$0xff]
    %v5423 = vld [vmem:[%s5404 + $0x240] sm:$0xff]
    %v5424 = vld [vmem:[%s5404 + $0x248] sm:$0xff]
    %v5425 = vld [vmem:[%s5404 + $0x280] sm:$0xff]
    %v5426 = vld [vmem:[%s5404 + $0x288] sm:$0xff]
    %v5427 = vld [vmem:[%s5404 + $0x2c0] sm:$0xff]
    %v5428 = vld [vmem:[%s5404 + $0x2c8] sm:$0xff]
    %v5429 = vld [vmem:[%s5404 + $0x300] sm:$0xff]
    %v5430 = vld [vmem:[%s5404 + $0x308] sm:$0xff]
    %v5431 = vld [vmem:[%s5404 + $0x340] sm:$0xff]
    %v5432 = vld [vmem:[%s5404 + $0x348] sm:$0xff]
    %v5433 = vld [vmem:[%s5404 + $0x380] sm:$0xff]
    %v5434 = vld [vmem:[%s5404 + $0x388] sm:$0xff]
    %v5435 = vld [vmem:[%s5404 + $0x3c0] sm:$0xff]
    %v5436 = vld [vmem:[%s5404 + $0x3c8] sm:$0xff]
    %v5437 = vld [vmem:[%s5404 + $0x400] sm:$0xff]
    %v5438 = vld [vmem:[%s5404 + $0x408] sm:$0xff]
    %v5439 = vld [vmem:[%s5404 + $0x440] sm:$0xff]
    %v5440 = vld [vmem:[%s5404 + $0x448] sm:$0xff]
    %v5441 = vld [vmem:[%s5404 + $0x480] sm:$0xff]
    %v5442 = vld [vmem:[%s5404 + $0x488] sm:$0xff]
    %v5443 = vld [vmem:[%s5404 + $0x4c0] sm:$0xff]
    %v5444 = vld [vmem:[%s5404 + $0x4c8] sm:$0xff]
    %v5445 = vld [vmem:[%s5404 + $0x500] sm:$0xff]
    %v5446 = vld [vmem:[%s5404 + $0x508] sm:$0xff]
    %v5447 = vld [vmem:[%s5404 + $0x540] sm:$0xff]
    %v5448 = vld [vmem:[%s5404 + $0x548] sm:$0xff]
    %v5449 = vld [vmem:[%s5404 + $0x580] sm:$0xff]
    %v5450 = vld [vmem:[%s5404 + $0x588] sm:$0xff]
    %v5451 = vld [vmem:[%s5404 + $0x5c0] sm:$0xff]
    %v5452 = vld [vmem:[%s5404 + $0x5c8] sm:$0xff]
    %v5453 = vld [vmem:[%s5404 + $0x600] sm:$0xff]
    %v5454 = vld [vmem:[%s5404 + $0x608] sm:$0xff]
    %v5455 = vld [vmem:[%s5404 + $0x640] sm:$0xff]
    %v5456 = vld [vmem:[%s5404 + $0x648] sm:$0xff]
    %v5457 = vld [vmem:[%s5404 + $0x680] sm:$0xff]
    %v5458 = vld [vmem:[%s5404 + $0x688] sm:$0xff]
    %v5459 = vld [vmem:[%s5404 + $0x6c0] sm:$0xff]
    %v5460 = vld [vmem:[%s5404 + $0x6c8] sm:$0xff]
    %v5461 = vld [vmem:[%s5404 + $0x700] sm:$0xff]
    %v5462 = vld [vmem:[%s5404 + $0x708] sm:$0xff]
    %v5463 = vld [vmem:[%s5404 + $0x740] sm:$0xff]
    %v5464 = vld [vmem:[%s5404 + $0x748] sm:$0xff]
    %v5465 = vld [vmem:[%s5404 + $0x780] sm:$0xff]
    %v5466 = vld [vmem:[%s5404 + $0x788] sm:$0xff]
    %v5467 = vld [vmem:[%s5404 + $0x7c0] sm:$0xff]
    %v5468 = vld [vmem:[%s5404 + $0x7c8] sm:$0xff]
    %v5469 = vld [vmem:[%s5404 + $0x800] sm:$0xff]
    %v5470 = vld [vmem:[%s5404 + $0x808] sm:$0xff]
    %v5471 = vld [vmem:[%s5404 + $0x840] sm:$0xff]
    %v5472 = vld [vmem:[%s5404 + $0x848] sm:$0xff]
    %v5473 = vld [vmem:[%s5404 + $0x880] sm:$0xff]
    %v5474 = vld [vmem:[%s5404 + $0x888] sm:$0xff]
    %v5475 = vld [vmem:[%s5404 + $0x8c0] sm:$0xff]
    %v5476 = vld [vmem:[%s5404 + $0x8c8] sm:$0xff]
    %v5477 = vld [vmem:[%s5404 + $0x900] sm:$0xff]
    %v5478 = vld [vmem:[%s5404 + $0x908] sm:$0xff]
    %v5479 = vld [vmem:[%s5404 + $0x940] sm:$0xff]
    %v5480 = vld [vmem:[%s5404 + $0x948] sm:$0xff]
    %v5481 = vld [vmem:[%s5404 + $0x980] sm:$0xff]
    %v5482 = vld [vmem:[%s5404 + $0x988] sm:$0xff]
    %v5483 = vld [vmem:[%s5404 + $0x9c0] sm:$0xff]
    %v5484 = vld [vmem:[%s5404 + $0x9c8] sm:$0xff]
    %v5485 = vld [vmem:[%s5404 + $0xa00] sm:$0xff]
    %v5486 = vld [vmem:[%s5404 + $0xa08] sm:$0xff]
    %v5487 = vld [vmem:[%s5404 + $0xa40] sm:$0xff]
    %v5488 = vld [vmem:[%s5404 + $0xa48] sm:$0xff]
    %v5489 = vld [vmem:[%s5404 + $0xa80] sm:$0xff]
    %v5490 = vld [vmem:[%s5404 + $0xa88] sm:$0xff]
    %v5491 = vld [vmem:[%s5404 + $0xac0] sm:$0xff]
    %v5492 = vld [vmem:[%s5404 + $0xac8] sm:$0xff]
    %v5493 = vld [vmem:[%s5404 + $0xb00] sm:$0xff]
    %v5494 = vld [vmem:[%s5404 + $0xb08] sm:$0xff]
    %v5495 = vld [vmem:[%s5404 + $0xb40] sm:$0xff]
    %v5496 = vld [vmem:[%s5404 + $0xb48] sm:$0xff]
    %v5497 = vld [vmem:[%s5404 + $0xb80] sm:$0xff]
    %v5498 = vld [vmem:[%s5404 + $0xb88] sm:$0xff]
    %v5499 = vld [vmem:[%s5404 + $0xbc0] sm:$0xff]
    %v5500 = vld [vmem:[%s5404 + $0xbc8] sm:$0xff]
    %v5501 = vld [vmem:[%s5404 + $0xc00] sm:$0xff]
    %v5502 = vld [vmem:[%s5404 + $0xc08] sm:$0xff]
    %v5503 = vld [vmem:[%s5404 + $0xc40] sm:$0xff]
    %v5504 = vld [vmem:[%s5404 + $0xc48] sm:$0xff]
    %v5505 = vld [vmem:[%s5404 + $0xc80] sm:$0xff]
    %v5506 = vld [vmem:[%s5404 + $0xc88] sm:$0xff]
    %v5507 = vld [vmem:[%s5404 + $0xcc0] sm:$0xff]
    %v5508 = vld [vmem:[%s5404 + $0xcc8] sm:$0xff]
    %v5509 = vld [vmem:[%s5404 + $0xd00] sm:$0xff]
    %v5510 = vld [vmem:[%s5404 + $0xd08] sm:$0xff]
    %v5511 = vld [vmem:[%s5404 + $0xd40] sm:$0xff]
    %v5512 = vld [vmem:[%s5404 + $0xd48] sm:$0xff]
    %v5513 = vld [vmem:[%s5404 + $0xd80] sm:$0xff]
    %v5514 = vld [vmem:[%s5404 + $0xd88] sm:$0xff]
    %v5515 = vld [vmem:[%s5404 + $0xdc0] sm:$0xff]
    %v5516 = vld [vmem:[%s5404 + $0xdc8] sm:$0xff]
    %v5517 = vld [vmem:[%s5404 + $0xe00] sm:$0xff]
    %v5518 = vld [vmem:[%s5404 + $0xe08] sm:$0xff]
    %v5519 = vld [vmem:[%s5404 + $0xe40] sm:$0xff]
    %v5520 = vld [vmem:[%s5404 + $0xe48] sm:$0xff]
    %v5521 = vld [vmem:[%s5404 + $0xe80] sm:$0xff]
    %v5522 = vld [vmem:[%s5404 + $0xe88] sm:$0xff]
    %v5523 = vld [vmem:[%s5404 + $0xec0] sm:$0xff]
    %v5524 = vld [vmem:[%s5404 + $0xec8] sm:$0xff]
    %v5525 = vld [vmem:[%s5404 + $0xf00] sm:$0xff]
    %v5526 = vld [vmem:[%s5404 + $0xf08] sm:$0xff]
    %v5527 = vld [vmem:[%s5404 + $0xf40] sm:$0xff]
    %v5528 = vld [vmem:[%s5404 + $0xf48] sm:$0xff]
    %v5529 = vld [vmem:[%s5404 + $0xf80] sm:$0xff]
    %v5530 = vld [vmem:[%s5404 + $0xf88] sm:$0xff]
    %v5531 = vld [vmem:[%s5404 + $0xfc0] sm:$0xff]
    %v5532 = vld [vmem:[%s5404 + $0xfc8] sm:$0xff]
    %s5533 = scalar_lea.vmem [#allocation14], 12
    %v5534 = vld [vmem:[%s5533] sm:$0xf]
    %v5536 = vlaneseq
    %v5537 = vshrl.u32 %v5536, 7
    %v5538 = vsub.s32 0, %v5537
    %v5539 = vrot.slane %v5534, %v5538
    %v5540 = vlaneseq
    %v5541 = vshrl.u32 %v5540, 7
    %v5542 = vsub.s32 1, %v5541
    %v5543 = vrot.slane %v5534, %v5542
    %v5544 = vlaneseq
    %v5545 = vshrl.u32 %v5544, 7
    %v5546 = vsub.s32 2, %v5545
    %v5547 = vrot.slane %v5534, %v5546
    %v5548 = vlaneseq
    %v5549 = vshrl.u32 %v5548, 7
    %v5550 = vsub.s32 3, %v5549
    %v5551 = vrot.slane %v5534, %v5550
    %v5684 = vunpack.c.l.b16 %v5405
    %v5685 = vunpack.c.h.b16 %v5405
    %v5686 = vunpack.c.l.b16 %v5406
    %v5687 = vunpack.c.h.b16 %v5406
    %v5688 = vunpack.c.l.b16 %v5407
    %v5689 = vunpack.c.h.b16 %v5407
    %v5690 = vunpack.c.l.b16 %v5408
    %v5691 = vunpack.c.h.b16 %v5408
    %v5692 = vunpack.c.l.b16 %v5409
    %v5693 = vunpack.c.h.b16 %v5409
    %v5694 = vunpack.c.l.b16 %v5410
    %v5695 = vunpack.c.h.b16 %v5410
    %v5696 = vunpack.c.l.b16 %v5411
    %v5697 = vunpack.c.h.b16 %v5411
    %v5698 = vunpack.c.l.b16 %v5412
    %v5699 = vunpack.c.h.b16 %v5412
    %v5700 = vunpack.c.l.b16 %v5413
    %v5701 = vunpack.c.h.b16 %v5413
    %v5702 = vunpack.c.l.b16 %v5414
    %v5703 = vunpack.c.h.b16 %v5414
    %v5704 = vunpack.c.l.b16 %v5415
    %v5705 = vunpack.c.h.b16 %v5415
    %v5706 = vunpack.c.l.b16 %v5416
    %v5707 = vunpack.c.h.b16 %v5416
    %v5708 = vunpack.c.l.b16 %v5417
    %v5709 = vunpack.c.h.b16 %v5417
    %v5710 = vunpack.c.l.b16 %v5418
    %v5711 = vunpack.c.h.b16 %v5418
    %v5712 = vunpack.c.l.b16 %v5419
    %v5713 = vunpack.c.h.b16 %v5419
    %v5714 = vunpack.c.l.b16 %v5420
    %v5715 = vunpack.c.h.b16 %v5420
    %v5716 = vunpack.c.l.b16 %v5421
    %v5717 = vunpack.c.h.b16 %v5421
    %v5718 = vunpack.c.l.b16 %v5422
    %v5719 = vunpack.c.h.b16 %v5422
    %v5720 = vunpack.c.l.b16 %v5423
    %v5721 = vunpack.c.h.b16 %v5423
    %v5722 = vunpack.c.l.b16 %v5424
    %v5723 = vunpack.c.h.b16 %v5424
    %v5724 = vunpack.c.l.b16 %v5425
    %v5725 = vunpack.c.h.b16 %v5425
    %v5726 = vunpack.c.l.b16 %v5426
    %v5727 = vunpack.c.h.b16 %v5426
    %v5728 = vunpack.c.l.b16 %v5427
    %v5729 = vunpack.c.h.b16 %v5427
    %v5730 = vunpack.c.l.b16 %v5428
    %v5731 = vunpack.c.h.b16 %v5428
    %v5732 = vunpack.c.l.b16 %v5429
    %v5733 = vunpack.c.h.b16 %v5429
    %v5734 = vunpack.c.l.b16 %v5430
    %v5735 = vunpack.c.h.b16 %v5430
    %v5736 = vunpack.c.l.b16 %v5431
    %v5737 = vunpack.c.h.b16 %v5431
    %v5738 = vunpack.c.l.b16 %v5432
    %v5739 = vunpack.c.h.b16 %v5432
    %v5740 = vunpack.c.l.b16 %v5433
    %v5741 = vunpack.c.h.b16 %v5433
    %v5742 = vunpack.c.l.b16 %v5434
    %v5743 = vunpack.c.h.b16 %v5434
    %v5744 = vunpack.c.l.b16 %v5435
    %v5745 = vunpack.c.h.b16 %v5435
    %v5746 = vunpack.c.l.b16 %v5436
    %v5747 = vunpack.c.h.b16 %v5436
    %v5748 = vunpack.c.l.b16 %v5437
    %v5749 = vunpack.c.h.b16 %v5437
    %v5750 = vunpack.c.l.b16 %v5438
    %v5751 = vunpack.c.h.b16 %v5438
    %v5752 = vunpack.c.l.b16 %v5439
    %v5753 = vunpack.c.h.b16 %v5439
    %v5754 = vunpack.c.l.b16 %v5440
    %v5755 = vunpack.c.h.b16 %v5440
    %v5756 = vunpack.c.l.b16 %v5441
    %v5757 = vunpack.c.h.b16 %v5441
    %v5758 = vunpack.c.l.b16 %v5442
    %v5759 = vunpack.c.h.b16 %v5442
    %v5760 = vunpack.c.l.b16 %v5443
    %v5761 = vunpack.c.h.b16 %v5443
    %v5762 = vunpack.c.l.b16 %v5444
    %v5763 = vunpack.c.h.b16 %v5444
    %v5764 = vunpack.c.l.b16 %v5445
    %v5765 = vunpack.c.h.b16 %v5445
    %v5766 = vunpack.c.l.b16 %v5446
    %v5767 = vunpack.c.h.b16 %v5446
    %v5768 = vunpack.c.l.b16 %v5447
    %v5769 = vunpack.c.h.b16 %v5447
    %v5770 = vunpack.c.l.b16 %v5448
    %v5771 = vunpack.c.h.b16 %v5448
    %v5772 = vunpack.c.l.b16 %v5449
    %v5773 = vunpack.c.h.b16 %v5449
    %v5774 = vunpack.c.l.b16 %v5450
    %v5775 = vunpack.c.h.b16 %v5450
    %v5776 = vunpack.c.l.b16 %v5451
    %v5777 = vunpack.c.h.b16 %v5451
    %v5778 = vunpack.c.l.b16 %v5452
    %v5779 = vunpack.c.h.b16 %v5452
    %v5780 = vunpack.c.l.b16 %v5453
    %v5781 = vunpack.c.h.b16 %v5453
    %v5782 = vunpack.c.l.b16 %v5454
    %v5783 = vunpack.c.h.b16 %v5454
    %v5784 = vunpack.c.l.b16 %v5455
    %v5785 = vunpack.c.h.b16 %v5455
    %v5786 = vunpack.c.l.b16 %v5456
    %v5787 = vunpack.c.h.b16 %v5456
    %v5788 = vunpack.c.l.b16 %v5457
    %v5789 = vunpack.c.h.b16 %v5457
    %v5790 = vunpack.c.l.b16 %v5458
    %v5791 = vunpack.c.h.b16 %v5458
    %v5792 = vunpack.c.l.b16 %v5459
    %v5793 = vunpack.c.h.b16 %v5459
    %v5794 = vunpack.c.l.b16 %v5460
    %v5795 = vunpack.c.h.b16 %v5460
    %v5796 = vunpack.c.l.b16 %v5461
    %v5797 = vunpack.c.h.b16 %v5461
    %v5798 = vunpack.c.l.b16 %v5462
    %v5799 = vunpack.c.h.b16 %v5462
    %v5800 = vunpack.c.l.b16 %v5463
    %v5801 = vunpack.c.h.b16 %v5463
    %v5802 = vunpack.c.l.b16 %v5464
    %v5803 = vunpack.c.h.b16 %v5464
    %v5804 = vunpack.c.l.b16 %v5465
    %v5805 = vunpack.c.h.b16 %v5465
    %v5806 = vunpack.c.l.b16 %v5466
    %v5807 = vunpack.c.h.b16 %v5466
    %v5808 = vunpack.c.l.b16 %v5467
    %v5809 = vunpack.c.h.b16 %v5467
    %v5810 = vunpack.c.l.b16 %v5468
    %v5811 = vunpack.c.h.b16 %v5468
    %v5812 = vunpack.c.l.b16 %v5469
    %v5813 = vunpack.c.h.b16 %v5469
    %v5814 = vunpack.c.l.b16 %v5470
    %v5815 = vunpack.c.h.b16 %v5470
    %v5816 = vunpack.c.l.b16 %v5471
    %v5817 = vunpack.c.h.b16 %v5471
    %v5818 = vunpack.c.l.b16 %v5472
    %v5819 = vunpack.c.h.b16 %v5472
    %v5820 = vunpack.c.l.b16 %v5473
    %v5821 = vunpack.c.h.b16 %v5473
    %v5822 = vunpack.c.l.b16 %v5474
    %v5823 = vunpack.c.h.b16 %v5474
    %v5824 = vunpack.c.l.b16 %v5475
    %v5825 = vunpack.c.h.b16 %v5475
    %v5826 = vunpack.c.l.b16 %v5476
    %v5827 = vunpack.c.h.b16 %v5476
    %v5828 = vunpack.c.l.b16 %v5477
    %v5829 = vunpack.c.h.b16 %v5477
    %v5830 = vunpack.c.l.b16 %v5478
    %v5831 = vunpack.c.h.b16 %v5478
    %v5832 = vunpack.c.l.b16 %v5479
    %v5833 = vunpack.c.h.b16 %v5479
    %v5834 = vunpack.c.l.b16 %v5480
    %v5835 = vunpack.c.h.b16 %v5480
    %v5836 = vunpack.c.l.b16 %v5481
    %v5837 = vunpack.c.h.b16 %v5481
    %v5838 = vunpack.c.l.b16 %v5482
    %v5839 = vunpack.c.h.b16 %v5482
    %v5840 = vunpack.c.l.b16 %v5483
    %v5841 = vunpack.c.h.b16 %v5483
    %v5842 = vunpack.c.l.b16 %v5484
    %v5843 = vunpack.c.h.b16 %v5484
    %v5844 = vunpack.c.l.b16 %v5485
    %v5845 = vunpack.c.h.b16 %v5485
    %v5846 = vunpack.c.l.b16 %v5486
    %v5847 = vunpack.c.h.b16 %v5486
    %v5848 = vunpack.c.l.b16 %v5487
    %v5849 = vunpack.c.h.b16 %v5487
    %v5850 = vunpack.c.l.b16 %v5488
    %v5851 = vunpack.c.h.b16 %v5488
    %v5852 = vunpack.c.l.b16 %v5489
    %v5853 = vunpack.c.h.b16 %v5489
    %v5854 = vunpack.c.l.b16 %v5490
    %v5855 = vunpack.c.h.b16 %v5490
    %v5856 = vunpack.c.l.b16 %v5491
    %v5857 = vunpack.c.h.b16 %v5491
    %v5858 = vunpack.c.l.b16 %v5492
    %v5859 = vunpack.c.h.b16 %v5492
    %v5860 = vunpack.c.l.b16 %v5493
    %v5861 = vunpack.c.h.b16 %v5493
    %v5862 = vunpack.c.l.b16 %v5494
    %v5863 = vunpack.c.h.b16 %v5494
    %v5864 = vunpack.c.l.b16 %v5495
    %v5865 = vunpack.c.h.b16 %v5495
    %v5866 = vunpack.c.l.b16 %v5496
    %v5867 = vunpack.c.h.b16 %v5496
    %v5868 = vunpack.c.l.b16 %v5497
    %v5869 = vunpack.c.h.b16 %v5497
    %v5870 = vunpack.c.l.b16 %v5498
    %v5871 = vunpack.c.h.b16 %v5498
    %v5872 = vunpack.c.l.b16 %v5499
    %v5873 = vunpack.c.h.b16 %v5499
    %v5874 = vunpack.c.l.b16 %v5500
    %v5875 = vunpack.c.h.b16 %v5500
    %v5876 = vunpack.c.l.b16 %v5501
    %v5877 = vunpack.c.h.b16 %v5501
    %v5878 = vunpack.c.l.b16 %v5502
    %v5879 = vunpack.c.h.b16 %v5502
    %v5880 = vunpack.c.l.b16 %v5503
    %v5881 = vunpack.c.h.b16 %v5503
    %v5882 = vunpack.c.l.b16 %v5504
    %v5883 = vunpack.c.h.b16 %v5504
    %v5884 = vunpack.c.l.b16 %v5505
    %v5885 = vunpack.c.h.b16 %v5505
    %v5886 = vunpack.c.l.b16 %v5506
    %v5887 = vunpack.c.h.b16 %v5506
    %v5888 = vunpack.c.l.b16 %v5507
    %v5889 = vunpack.c.h.b16 %v5507
    %v5890 = vunpack.c.l.b16 %v5508
    %v5891 = vunpack.c.h.b16 %v5508
    %v5892 = vunpack.c.l.b16 %v5509
    %v5893 = vunpack.c.h.b16 %v5509
    %v5894 = vunpack.c.l.b16 %v5510
    %v5895 = vunpack.c.h.b16 %v5510
    %v5896 = vunpack.c.l.b16 %v5511
    %v5897 = vunpack.c.h.b16 %v5511
    %v5898 = vunpack.c.l.b16 %v5512
    %v5899 = vunpack.c.h.b16 %v5512
    %v5900 = vunpack.c.l.b16 %v5513
    %v5901 = vunpack.c.h.b16 %v5513
    %v5902 = vunpack.c.l.b16 %v5514
    %v5903 = vunpack.c.h.b16 %v5514
    %v5904 = vunpack.c.l.b16 %v5515
    %v5905 = vunpack.c.h.b16 %v5515
    %v5906 = vunpack.c.l.b16 %v5516
    %v5907 = vunpack.c.h.b16 %v5516
    %v5908 = vunpack.c.l.b16 %v5517
    %v5909 = vunpack.c.h.b16 %v5517
    %v5910 = vunpack.c.l.b16 %v5518
    %v5911 = vunpack.c.h.b16 %v5518
    %v5912 = vunpack.c.l.b16 %v5519
    %v5913 = vunpack.c.h.b16 %v5519
    %v5914 = vunpack.c.l.b16 %v5520
    %v5915 = vunpack.c.h.b16 %v5520
    %v5916 = vunpack.c.l.b16 %v5521
    %v5917 = vunpack.c.h.b16 %v5521
    %v5918 = vunpack.c.l.b16 %v5522
    %v5919 = vunpack.c.h.b16 %v5522
    %v5920 = vunpack.c.l.b16 %v5523
    %v5921 = vunpack.c.h.b16 %v5523
    %v5922 = vunpack.c.l.b16 %v5524
    %v5923 = vunpack.c.h.b16 %v5524
    %v5924 = vunpack.c.l.b16 %v5525
    %v5925 = vunpack.c.h.b16 %v5525
    %v5926 = vunpack.c.l.b16 %v5526
    %v5927 = vunpack.c.h.b16 %v5526
    %v5928 = vunpack.c.l.b16 %v5527
    %v5929 = vunpack.c.h.b16 %v5527
    %v5930 = vunpack.c.l.b16 %v5528
    %v5931 = vunpack.c.h.b16 %v5528
    %v5932 = vunpack.c.l.b16 %v5529
    %v5933 = vunpack.c.h.b16 %v5529
    %v5934 = vunpack.c.l.b16 %v5530
    %v5935 = vunpack.c.h.b16 %v5530
    %v5936 = vunpack.c.l.b16 %v5531
    %v5937 = vunpack.c.h.b16 %v5531
    %v5938 = vunpack.c.l.b16 %v5532
    %v5939 = vunpack.c.h.b16 %v5532
    %v5940 = vpack.c.b16 %v5688, %v5684
    %v5941 = vpack.c.b16 %v5689, %v5685
    %v5942 = vpack.c.b16 %v5690, %v5686
    %v5943 = vpack.c.b16 %v5691, %v5687
    %v5944 = vpack.c.b16 %v5696, %v5692
    %v5945 = vpack.c.b16 %v5697, %v5693
    %v5946 = vpack.c.b16 %v5698, %v5694
    %v5947 = vpack.c.b16 %v5699, %v5695
    %v5948 = vpack.c.b16 %v5704, %v5700
    %v5949 = vpack.c.b16 %v5705, %v5701
    %v5950 = vpack.c.b16 %v5706, %v5702
    %v5951 = vpack.c.b16 %v5707, %v5703
    %v5952 = vpack.c.b16 %v5712, %v5708
    %v5953 = vpack.c.b16 %v5713, %v5709
    %v5954 = vpack.c.b16 %v5714, %v5710
    %v5955 = vpack.c.b16 %v5715, %v5711
    %v5956 = vpack.c.b16 %v5720, %v5716
    %v5957 = vpack.c.b16 %v5721, %v5717
    %v5958 = vpack.c.b16 %v5722, %v5718
    %v5959 = vpack.c.b16 %v5723, %v5719
    %v5960 = vpack.c.b16 %v5728, %v5724
    %v5961 = vpack.c.b16 %v5729, %v5725
    %v5962 = vpack.c.b16 %v5730, %v5726
    %v5963 = vpack.c.b16 %v5731, %v5727
    %v5964 = vpack.c.b16 %v5736, %v5732
    %v5965 = vpack.c.b16 %v5737, %v5733
    %v5966 = vpack.c.b16 %v5738, %v5734
    %v5967 = vpack.c.b16 %v5739, %v5735
    %v5968 = vpack.c.b16 %v5744, %v5740
    %v5969 = vpack.c.b16 %v5745, %v5741
    %v5970 = vpack.c.b16 %v5746, %v5742
    %v5971 = vpack.c.b16 %v5747, %v5743
    %v5972 = vpack.c.b16 %v5752, %v5748
    %v5973 = vpack.c.b16 %v5753, %v5749
    %v5974 = vpack.c.b16 %v5754, %v5750
    %v5975 = vpack.c.b16 %v5755, %v5751
    %v5976 = vpack.c.b16 %v5760, %v5756
    %v5977 = vpack.c.b16 %v5761, %v5757
    %v5978 = vpack.c.b16 %v5762, %v5758
    %v5979 = vpack.c.b16 %v5763, %v5759
    %v5980 = vpack.c.b16 %v5768, %v5764
    %v5981 = vpack.c.b16 %v5769, %v5765
    %v5982 = vpack.c.b16 %v5770, %v5766
    %v5983 = vpack.c.b16 %v5771, %v5767
    %v5984 = vpack.c.b16 %v5776, %v5772
    %v5985 = vpack.c.b16 %v5777, %v5773
    %v5986 = vpack.c.b16 %v5778, %v5774
    %v5987 = vpack.c.b16 %v5779, %v5775
    %v5988 = vpack.c.b16 %v5784, %v5780
    %v5989 = vpack.c.b16 %v5785, %v5781
    %v5990 = vpack.c.b16 %v5786, %v5782
    %v5991 = vpack.c.b16 %v5787, %v5783
    %v5992 = vpack.c.b16 %v5792, %v5788
    %v5993 = vpack.c.b16 %v5793, %v5789
    %v5994 = vpack.c.b16 %v5794, %v5790
    %v5995 = vpack.c.b16 %v5795, %v5791
    %v5996 = vpack.c.b16 %v5800, %v5796
    %v5997 = vpack.c.b16 %v5801, %v5797
    %v5998 = vpack.c.b16 %v5802, %v5798
    %v5999 = vpack.c.b16 %v5803, %v5799
    %v6000 = vpack.c.b16 %v5808, %v5804
    %v6001 = vpack.c.b16 %v5809, %v5805
    %v6002 = vpack.c.b16 %v5810, %v5806
    %v6003 = vpack.c.b16 %v5811, %v5807
    %v6004 = vpack.c.b16 %v5816, %v5812
    %v6005 = vpack.c.b16 %v5817, %v5813
    %v6006 = vpack.c.b16 %v5818, %v5814
    %v6007 = vpack.c.b16 %v5819, %v5815
    %v6008 = vpack.c.b16 %v5824, %v5820
    %v6009 = vpack.c.b16 %v5825, %v5821
    %v6010 = vpack.c.b16 %v5826, %v5822
    %v6011 = vpack.c.b16 %v5827, %v5823
    %v6012 = vpack.c.b16 %v5832, %v5828
    %v6013 = vpack.c.b16 %v5833, %v5829
    %v6014 = vpack.c.b16 %v5834, %v5830
    %v6015 = vpack.c.b16 %v5835, %v5831
    %v6016 = vpack.c.b16 %v5840, %v5836
    %v6017 = vpack.c.b16 %v5841, %v5837
    %v6018 = vpack.c.b16 %v5842, %v5838
    %v6019 = vpack.c.b16 %v5843, %v5839
    %v6020 = vpack.c.b16 %v5848, %v5844
    %v6021 = vpack.c.b16 %v5849, %v5845
    %v6022 = vpack.c.b16 %v5850, %v5846
    %v6023 = vpack.c.b16 %v5851, %v5847
    %v6024 = vpack.c.b16 %v5856, %v5852
    %v6025 = vpack.c.b16 %v5857, %v5853
    %v6026 = vpack.c.b16 %v5858, %v5854
    %v6027 = vpack.c.b16 %v5859, %v5855
    %v6028 = vpack.c.b16 %v5864, %v5860
    %v6029 = vpack.c.b16 %v5865, %v5861
    %v6030 = vpack.c.b16 %v5866, %v5862
    %v6031 = vpack.c.b16 %v5867, %v5863
    %v6032 = vpack.c.b16 %v5872, %v5868
    %v6033 = vpack.c.b16 %v5873, %v5869
    %v6034 = vpack.c.b16 %v5874, %v5870
    %v6035 = vpack.c.b16 %v5875, %v5871
    %v6036 = vpack.c.b16 %v5880, %v5876
    %v6037 = vpack.c.b16 %v5881, %v5877
    %v6038 = vpack.c.b16 %v5882, %v5878
    %v6039 = vpack.c.b16 %v5883, %v5879
    %v6040 = vpack.c.b16 %v5888, %v5884
    %v6041 = vpack.c.b16 %v5889, %v5885
    %v6042 = vpack.c.b16 %v5890, %v5886
    %v6043 = vpack.c.b16 %v5891, %v5887
    %v6044 = vpack.c.b16 %v5896, %v5892
    %v6045 = vpack.c.b16 %v5897, %v5893
    %v6046 = vpack.c.b16 %v5898, %v5894
    %v6047 = vpack.c.b16 %v5899, %v5895
    %v6048 = vpack.c.b16 %v5904, %v5900
    %v6049 = vpack.c.b16 %v5905, %v5901
    %v6050 = vpack.c.b16 %v5906, %v5902
    %v6051 = vpack.c.b16 %v5907, %v5903
    %v6052 = vpack.c.b16 %v5912, %v5908
    %v6053 = vpack.c.b16 %v5913, %v5909
    %v6054 = vpack.c.b16 %v5914, %v5910
    %v6055 = vpack.c.b16 %v5915, %v5911
    %v6056 = vpack.c.b16 %v5920, %v5916
    %v6057 = vpack.c.b16 %v5921, %v5917
    %v6058 = vpack.c.b16 %v5922, %v5918
    %v6059 = vpack.c.b16 %v5923, %v5919
    %v6060 = vpack.c.b16 %v5928, %v5924
    %v6061 = vpack.c.b16 %v5929, %v5925
    %v6062 = vpack.c.b16 %v5930, %v5926
    %v6063 = vpack.c.b16 %v5931, %v5927
    %v6064 = vpack.c.b16 %v5936, %v5932
    %v6065 = vpack.c.b16 %v5937, %v5933
    %v6066 = vpack.c.b16 %v5938, %v5934
    %v6067 = vpack.c.b16 %v5939, %v5935
    %6196 = vmatprep.subr.bf16.mxu0 %v5941
    %6197 = vmatpush1.bf16.msra.mxu0 %v5940
    %6198 = vmatprep.subr.bf16.mxu0 %v5945
    %6199 = vmatpush1.bf16.msra.mxu0 %v5944
    %6200 = vmatprep.subr.bf16.mxu0 %v5949
    %6201 = vmatpush1.bf16.msra.mxu0 %v5948
    %6202 = vmatprep.subr.bf16.mxu0 %v5953
    %6203 = vmatpush1.bf16.msra.mxu0 %v5952
    %6204 = vmatprep.subr.bf16.mxu0 %v5957
    %6205 = vmatpush1.bf16.msra.mxu0 %v5956
    %6206 = vmatprep.subr.bf16.mxu0 %v5961
    %6207 = vmatpush1.bf16.msra.mxu0 %v5960
    %6208 = vmatprep.subr.bf16.mxu0 %v5965
    %6209 = vmatpush1.bf16.msra.mxu0 %v5964
    %6210 = vmatprep.subr.bf16.mxu0 %v5969
    %6211 = vmatpush1.bf16.msra.mxu0 %v5968
    %6212 = vmatprep.subr.bf16.mxu0 %v5973
    %6213 = vmatpush1.bf16.msra.mxu0 %v5972
    %6214 = vmatprep.subr.bf16.mxu0 %v5977
    %6215 = vmatpush1.bf16.msra.mxu0 %v5976
    %6216 = vmatprep.subr.bf16.mxu0 %v5981
    %6217 = vmatpush1.bf16.msra.mxu0 %v5980
    %6218 = vmatprep.subr.bf16.mxu0 %v5985
    %6219 = vmatpush1.bf16.msra.mxu0 %v5984
    %6220 = vmatprep.subr.bf16.mxu0 %v5989
    %6221 = vmatpush1.bf16.msra.mxu0 %v5988
    %6222 = vmatprep.subr.bf16.mxu0 %v5993
    %6223 = vmatpush1.bf16.msra.mxu0 %v5992
    %6224 = vmatprep.subr.bf16.mxu0 %v5997
    %6225 = vmatpush1.bf16.msra.mxu0 %v5996
    %6226 = vmatprep.subr.bf16.mxu0 %v6001
    %6227 = vmatpush1.bf16.msra.mxu0 %v6000
    %6228 = vmatprep.mubr.bf16.mxu0 %v1439
    %6229 = vmatmul.mubr.bf16.gmra.mrb[0].mxu0 %v1438
    %v6230 = vpop.f32.mrb[0].mxu0
    %v6231 = vadd.f32 %v5539, %v6230
    %v6232 = vpop.f32.mrb[0].mxu0
    %v6233 = vadd.f32 %v5543, %v6232
    %v6234 = vpop.f32.mrb[0].mxu0
    %v6235 = vadd.f32 %v5539, %v6234
    %v6236 = vpop.f32.mrb[0].mxu0
    %v6237 = vadd.f32 %v5543, %v6236
    %6238 = vdwg.mxu0
    %6239 = vmatprep.subr.bf16.mxu0 %v6005
    %6240 = vmatpush1.bf16.msra.mxu0 %v6004
    %6241 = vmatprep.subr.bf16.mxu0 %v6009
    %6242 = vmatpush1.bf16.msra.mxu0 %v6008
    %6243 = vmatprep.subr.bf16.mxu0 %v6013
    %6244 = vmatpush1.bf16.msra.mxu0 %v6012
    %6245 = vmatprep.subr.bf16.mxu0 %v6017
    %6246 = vmatpush1.bf16.msra.mxu0 %v6016
    %6247 = vmatprep.subr.bf16.mxu0 %v6021
    %6248 = vmatpush1.bf16.msra.mxu0 %v6020
    %6249 = vmatprep.subr.bf16.mxu0 %v6025
    %6250 = vmatpush1.bf16.msra.mxu0 %v6024
    %6251 = vmatprep.subr.bf16.mxu0 %v6029
    %6252 = vmatpush1.bf16.msra.mxu0 %v6028
    %6253 = vmatprep.subr.bf16.mxu0 %v6033
    %6254 = vmatpush1.bf16.msra.mxu0 %v6032
    %6255 = vmatprep.subr.bf16.mxu0 %v6037
    %6256 = vmatpush1.bf16.msra.mxu0 %v6036
    %6257 = vmatprep.subr.bf16.mxu0 %v6041
    %6258 = vmatpush1.bf16.msra.mxu0 %v6040
    %6259 = vmatprep.subr.bf16.mxu0 %v6045
    %6260 = vmatpush1.bf16.msra.mxu0 %v6044
    %6261 = vmatprep.subr.bf16.mxu0 %v6049
    %6262 = vmatpush1.bf16.msra.mxu0 %v6048
    %6263 = vmatprep.subr.bf16.mxu0 %v6053
    %6264 = vmatpush1.bf16.msra.mxu0 %v6052
    %6265 = vmatprep.subr.bf16.mxu0 %v6057
    %6266 = vmatpush1.bf16.msra.mxu0 %v6056
    %6267 = vmatprep.subr.bf16.mxu0 %v6061
    %6268 = vmatpush1.bf16.msra.mxu0 %v6060
    %6269 = vmatprep.subr.bf16.mxu0 %v6065
    %6270 = vmatpush1.bf16.msra.mxu0 %v6064
    %6271 = vmatprep.mubr.bf16.mxu0 %v1441
    %6272 = vmatmul.mubr.bf16.gmra.mrb[0].mxu0 %v1440
    %v6273 = vpop.f32.mrb[0].mxu0
    %v6274 = vadd.f32 %v6231, %v6273
    %v6275 = vpop.f32.mrb[0].mxu0
    %v6276 = vadd.f32 %v6233, %v6275
    %v6277 = vpop.f32.mrb[0].mxu0
    %v6278 = vadd.f32 %v6235, %v6277
    %v6279 = vpop.f32.mrb[0].mxu0
    %v6280 = vadd.f32 %v6237, %v6279
    %6281 = vdwg.mxu0
    %6282 = vmatprep.subr.bf16.mxu0 %v5943
    %6283 = vmatpush1.bf16.msra.mxu0 %v5942
    %6284 = vmatprep.subr.bf16.mxu0 %v5947
    %6285 = vmatpush1.bf16.msra.mxu0 %v5946
    %6286 = vmatprep.subr.bf16.mxu0 %v5951
    %6287 = vmatpush1.bf16.msra.mxu0 %v5950
    %6288 = vmatprep.subr.bf16.mxu0 %v5955
    %6289 = vmatpush1.bf16.msra.mxu0 %v5954
    %6290 = vmatprep.subr.bf16.mxu0 %v5959
    %6291 = vmatpush1.bf16.msra.mxu0 %v5958
    %6292 = vmatprep.subr.bf16.mxu0 %v5963
    %6293 = vmatpush1.bf16.msra.mxu0 %v5962
    %6294 = vmatprep.subr.bf16.mxu0 %v5967
    %6295 = vmatpush1.bf16.msra.mxu0 %v5966
    %6296 = vmatprep.subr.bf16.mxu0 %v5971
    %6297 = vmatpush1.bf16.msra.mxu0 %v5970
    %6298 = vmatprep.subr.bf16.mxu0 %v5975
    %6299 = vmatpush1.bf16.msra.mxu0 %v5974
    %6300 = vmatprep.subr.bf16.mxu0 %v5979
    %6301 = vmatpush1.bf16.msra.mxu0 %v5978
    %6302 = vmatprep.subr.bf16.mxu0 %v5983
    %6303 = vmatpush1.bf16.msra.mxu0 %v5982
    %6304 = vmatprep.subr.bf16.mxu0 %v5987
    %6305 = vmatpush1.bf16.msra.mxu0 %v5986
    %6306 = vmatprep.subr.bf16.mxu0 %v5991
    %6307 = vmatpush1.bf16.msra.mxu0 %v5990
    %6308 = vmatprep.subr.bf16.mxu0 %v5995
    %6309 = vmatpush1.bf16.msra.mxu0 %v5994
    %6310 = vmatprep.subr.bf16.mxu0 %v5999
    %6311 = vmatpush1.bf16.msra.mxu0 %v5998
    %6312 = vmatprep.subr.bf16.mxu0 %v6003
    %6313 = vmatpush1.bf16.msra.mxu0 %v6002
    %6314 = vmatprep.mubr.bf16.mxu0 %v1439
    %6315 = vmatmul.mubr.bf16.gmra.mrb[0].mxu0 %v1438
    %v6316 = vpop.f32.mrb[0].mxu0
    %v6317 = vadd.f32 %v5547, %v6316
    %v6318 = vpop.f32.mrb[0].mxu0
    %v6319 = vadd.f32 %v5551, %v6318
    %v6320 = vpop.f32.mrb[0].mxu0
    %v6321 = vadd.f32 %v5547, %v6320
    %v6322 = vpop.f32.mrb[0].mxu0
    %v6323 = vadd.f32 %v5551, %v6322
    %6324 = vdwg.mxu0
    %6325 = vmatprep.subr.bf16.mxu0 %v6007
    %6326 = vmatpush1.bf16.msra.mxu0 %v6006
    %6327 = vmatprep.subr.bf16.mxu0 %v6011
    %6328 = vmatpush1.bf16.msra.mxu0 %v6010
    %6329 = vmatprep.subr.bf16.mxu0 %v6015
    %6330 = vmatpush1.bf16.msra.mxu0 %v6014
    %6331 = vmatprep.subr.bf16.mxu0 %v6019
    %6332 = vmatpush1.bf16.msra.mxu0 %v6018
    %6333 = vmatprep.subr.bf16.mxu0 %v6023
    %6334 = vmatpush1.bf16.msra.mxu0 %v6022
    %6335 = vmatprep.subr.bf16.mxu0 %v6027
    %6336 = vmatpush1.bf16.msra.mxu0 %v6026
    %6337 = vmatprep.subr.bf16.mxu0 %v6031
    %6338 = vmatpush1.bf16.msra.mxu0 %v6030
    %6339 = vmatprep.subr.bf16.mxu0 %v6035
    %6340 = vmatpush1.bf16.msra.mxu0 %v6034
    %6341 = vmatprep.subr.bf16.mxu0 %v6039
    %6342 = vmatpush1.bf16.msra.mxu0 %v6038
    %6343 = vmatprep.subr.bf16.mxu0 %v6043
    %6344 = vmatpush1.bf16.msra.mxu0 %v6042
    %6345 = vmatprep.subr.bf16.mxu0 %v6047
    %6346 = vmatpush1.bf16.msra.mxu0 %v6046
    %6347 = vmatprep.subr.bf16.mxu0 %v6051
    %6348 = vmatpush1.bf16.msra.mxu0 %v6050
    %6349 = vmatprep.subr.bf16.mxu0 %v6055
    %6350 = vmatpush1.bf16.msra.mxu0 %v6054
    %6351 = vmatprep.subr.bf16.mxu0 %v6059
    %6352 = vmatpush1.bf16.msra.mxu0 %v6058
    %6353 = vmatprep.subr.bf16.mxu0 %v6063
    %6354 = vmatpush1.bf16.msra.mxu0 %v6062
    %6355 = vmatprep.subr.bf16.mxu0 %v6067
    %6356 = vmatpush1.bf16.msra.mxu0 %v6066
    %6357 = vmatprep.mubr.bf16.mxu0 %v1441
    %6358 = vmatmul.mubr.bf16.gmra.mrb[0].mxu0 %v1440
    %v6359 = vpop.f32.mrb[0].mxu0
    %v6360 = vadd.f32 %v6317, %v6359
    %v6361 = vpop.f32.mrb[0].mxu0
    %v6362 = vadd.f32 %v6319, %v6361
    %v6363 = vpop.f32.mrb[0].mxu0
    %v6364 = vadd.f32 %v6321, %v6363
    %v6365 = vpop.f32.mrb[0].mxu0
    %v6366 = vadd.f32 %v6323, %v6365
    %6367 = vdwg.mxu0
    %v6368 = vmax.f32 %v6274, 0.0
    %v6369 = vmax.f32 %v6276, 0.0
    %v6370 = vmax.f32 %v6360, 0.0
    %v6371 = vmax.f32 %v6362, 0.0
    %v6372 = vmax.f32 %v6278, 0.0
    %v6373 = vmax.f32 %v6280, 0.0
    %v6374 = vmax.f32 %v6364, 0.0
    %v6375 = vmax.f32 %v6366, 0.0
    %v6376 = vpack.c.bf16 %v6372, %v6368
    %v6377 = vpack.c.bf16 %v6373, %v6369
    %v6378 = vpack.c.bf16 %v6374, %v6370
    %v6379 = vpack.c.bf16 %v6375, %v6371
    %v6380 = vld [vmem:[#allocation2] sm:$0xff]
    %v6381 = vld [vmem:[#allocation2 + $0x8] sm:$0xff]
    %s6382 = scalar_lea.vmem [#allocation15], 768
    %v6383 = vld [vmem:[%s6382] sm:$0xf]
    %v6384 = vld [vmem:[%s6382 + $0x4] sm:$0xf]
    %v6385 = vld [vmem:[%s6382 + $0x8] sm:$0xf]
    %v6386 = vld [vmem:[%s6382 + $0xc] sm:$0xf]
    %v6387 = vld [vmem:[%s6382 + $0x10] sm:$0xf]
    %v6388 = vld [vmem:[%s6382 + $0x14] sm:$0xf]
    %v6389 = vld [vmem:[%s6382 + $0x18] sm:$0xf]
    %v6390 = vld [vmem:[%s6382 + $0x1c] sm:$0xf]
    %v6391 = vld [vmem:[%s6382 + $0x20] sm:$0xf]
    %v6392 = vld [vmem:[%s6382 + $0x24] sm:$0xf]
    %v6393 = vld [vmem:[%s6382 + $0x28] sm:$0xf]
    %v6394 = vld [vmem:[%s6382 + $0x2c] sm:$0xf]
    %v6395 = vld [vmem:[%s6382 + $0x30] sm:$0xf]
    %v6396 = vld [vmem:[%s6382 + $0x34] sm:$0xf]
    %v6397 = vld [vmem:[%s6382 + $0x38] sm:$0xf]
    %v6398 = vld [vmem:[%s6382 + $0x3c] sm:$0xf]
    %v6399 = vld [vmem:[%s6382 + $0x40] sm:$0xf]
    %v6400 = vld [vmem:[%s6382 + $0x44] sm:$0xf]
    %v6401 = vld [vmem:[%s6382 + $0x48] sm:$0xf]
    %v6402 = vld [vmem:[%s6382 + $0x4c] sm:$0xf]
    %v6403 = vld [vmem:[%s6382 + $0x50] sm:$0xf]
    %v6404 = vld [vmem:[%s6382 + $0x54] sm:$0xf]
    %v6405 = vld [vmem:[%s6382 + $0x58] sm:$0xf]
    %v6406 = vld [vmem:[%s6382 + $0x5c] sm:$0xf]
    %v6407 = vld [vmem:[%s6382 + $0x60] sm:$0xf]
    %v6408 = vld [vmem:[%s6382 + $0x64] sm:$0xf]
    %v6409 = vld [vmem:[%s6382 + $0x68] sm:$0xf]
    %v6410 = vld [vmem:[%s6382 + $0x6c] sm:$0xf]
    %v6411 = vld [vmem:[%s6382 + $0x70] sm:$0xf]
    %v6412 = vld [vmem:[%s6382 + $0x74] sm:$0xf]
    %v6413 = vld [vmem:[%s6382 + $0x78] sm:$0xf]
    %v6414 = vld [vmem:[%s6382 + $0x7c] sm:$0xf]
    %v6415 = vld [vmem:[%s6382 + $0x80] sm:$0xf]
    %v6416 = vld [vmem:[%s6382 + $0x84] sm:$0xf]
    %v6417 = vld [vmem:[%s6382 + $0x88] sm:$0xf]
    %v6418 = vld [vmem:[%s6382 + $0x8c] sm:$0xf]
    %v6419 = vld [vmem:[%s6382 + $0x90] sm:$0xf]
    %v6420 = vld [vmem:[%s6382 + $0x94] sm:$0xf]
    %v6421 = vld [vmem:[%s6382 + $0x98] sm:$0xf]
    %v6422 = vld [vmem:[%s6382 + $0x9c] sm:$0xf]
    %v6423 = vld [vmem:[%s6382 + $0xa0] sm:$0xf]
    %v6424 = vld [vmem:[%s6382 + $0xa4] sm:$0xf]
    %v6425 = vld [vmem:[%s6382 + $0xa8] sm:$0xf]
    %v6426 = vld [vmem:[%s6382 + $0xac] sm:$0xf]
    %v6427 = vld [vmem:[%s6382 + $0xb0] sm:$0xf]
    %v6428 = vld [vmem:[%s6382 + $0xb4] sm:$0xf]
    %v6429 = vld [vmem:[%s6382 + $0xb8] sm:$0xf]
    %v6430 = vld [vmem:[%s6382 + $0xbc] sm:$0xf]
    %v6431 = vld [vmem:[%s6382 + $0xc0] sm:$0xf]
    %v6432 = vld [vmem:[%s6382 + $0xc4] sm:$0xf]
    %v6433 = vld [vmem:[%s6382 + $0xc8] sm:$0xf]
    %v6434 = vld [vmem:[%s6382 + $0xcc] sm:$0xf]
    %v6435 = vld [vmem:[%s6382 + $0xd0] sm:$0xf]
    %v6436 = vld [vmem:[%s6382 + $0xd4] sm:$0xf]
    %v6437 = vld [vmem:[%s6382 + $0xd8] sm:$0xf]
    %v6438 = vld [vmem:[%s6382 + $0xdc] sm:$0xf]
    %v6439 = vld [vmem:[%s6382 + $0xe0] sm:$0xf]
    %v6440 = vld [vmem:[%s6382 + $0xe4] sm:$0xf]
    %v6441 = vld [vmem:[%s6382 + $0xe8] sm:$0xf]
    %v6442 = vld [vmem:[%s6382 + $0xec] sm:$0xf]
    %v6443 = vld [vmem:[%s6382 + $0xf0] sm:$0xf]
    %v6444 = vld [vmem:[%s6382 + $0xf4] sm:$0xf]
    %v6445 = vld [vmem:[%s6382 + $0xf8] sm:$0xf]
    %v6446 = vld [vmem:[%s6382 + $0xfc] sm:$0xf]
    %v6511 = vunpack.c.l.b16 %v6383
    %v6512 = vunpack.c.l.b16 %v6384
    %v6513 = vunpack.c.l.b16 %v6385
    %v6514 = vunpack.c.l.b16 %v6386
    %v6515 = vunpack.c.l.b16 %v6387
    %v6516 = vunpack.c.l.b16 %v6388
    %v6517 = vunpack.c.l.b16 %v6389
    %v6518 = vunpack.c.l.b16 %v6390
    %v6519 = vunpack.c.l.b16 %v6391
    %v6520 = vunpack.c.l.b16 %v6392
    %v6521 = vunpack.c.l.b16 %v6393
    %v6522 = vunpack.c.l.b16 %v6394
    %v6523 = vunpack.c.l.b16 %v6395
    %v6524 = vunpack.c.l.b16 %v6396
    %v6525 = vunpack.c.l.b16 %v6397
    %v6526 = vunpack.c.l.b16 %v6398
    %v6527 = vunpack.c.l.b16 %v6399
    %v6528 = vunpack.c.l.b16 %v6400
    %v6529 = vunpack.c.l.b16 %v6401
    %v6530 = vunpack.c.l.b16 %v6402
    %v6531 = vunpack.c.l.b16 %v6403
    %v6532 = vunpack.c.l.b16 %v6404
    %v6533 = vunpack.c.l.b16 %v6405
    %v6534 = vunpack.c.l.b16 %v6406
    %v6535 = vunpack.c.l.b16 %v6407
    %v6536 = vunpack.c.l.b16 %v6408
    %v6537 = vunpack.c.l.b16 %v6409
    %v6538 = vunpack.c.l.b16 %v6410
    %v6539 = vunpack.c.l.b16 %v6411
    %v6540 = vunpack.c.l.b16 %v6412
    %v6541 = vunpack.c.l.b16 %v6413
    %v6542 = vunpack.c.l.b16 %v6414
    %v6543 = vunpack.c.l.b16 %v6415
    %v6544 = vunpack.c.l.b16 %v6416
    %v6545 = vunpack.c.l.b16 %v6417
    %v6546 = vunpack.c.l.b16 %v6418
    %v6547 = vunpack.c.l.b16 %v6419
    %v6548 = vunpack.c.l.b16 %v6420
    %v6549 = vunpack.c.l.b16 %v6421
    %v6550 = vunpack.c.l.b16 %v6422
    %v6551 = vunpack.c.l.b16 %v6423
    %v6552 = vunpack.c.l.b16 %v6424
    %v6553 = vunpack.c.l.b16 %v6425
    %v6554 = vunpack.c.l.b16 %v6426
    %v6555 = vunpack.c.l.b16 %v6427
    %v6556 = vunpack.c.l.b16 %v6428
    %v6557 = vunpack.c.l.b16 %v6429
    %v6558 = vunpack.c.l.b16 %v6430
    %v6559 = vunpack.c.l.b16 %v6431
    %v6560 = vunpack.c.l.b16 %v6432
    %v6561 = vunpack.c.l.b16 %v6433
    %v6562 = vunpack.c.l.b16 %v6434
    %v6563 = vunpack.c.l.b16 %v6435
    %v6564 = vunpack.c.l.b16 %v6436
    %v6565 = vunpack.c.l.b16 %v6437
    %v6566 = vunpack.c.l.b16 %v6438
    %v6567 = vunpack.c.l.b16 %v6439
    %v6568 = vunpack.c.l.b16 %v6440
    %v6569 = vunpack.c.l.b16 %v6441
    %v6570 = vunpack.c.l.b16 %v6442
    %v6571 = vunpack.c.l.b16 %v6443
    %v6572 = vunpack.c.l.b16 %v6444
    %v6573 = vunpack.c.l.b16 %v6445
    %v6574 = vunpack.c.l.b16 %v6446
    %v6575 = vpack.c.b16 %v6512, %v6511
    %v6576 = vpack.c.b16 %v6514, %v6513
    %v6577 = vpack.c.b16 %v6516, %v6515
    %v6578 = vpack.c.b16 %v6518, %v6517
    %v6579 = vpack.c.b16 %v6520, %v6519
    %v6580 = vpack.c.b16 %v6522, %v6521
    %v6581 = vpack.c.b16 %v6524, %v6523
    %v6582 = vpack.c.b16 %v6526, %v6525
    %v6583 = vpack.c.b16 %v6528, %v6527
    %v6584 = vpack.c.b16 %v6530, %v6529
    %v6585 = vpack.c.b16 %v6532, %v6531
    %v6586 = vpack.c.b16 %v6534, %v6533
    %v6587 = vpack.c.b16 %v6536, %v6535
    %v6588 = vpack.c.b16 %v6538, %v6537
    %v6589 = vpack.c.b16 %v6540, %v6539
    %v6590 = vpack.c.b16 %v6542, %v6541
    %v6591 = vpack.c.b16 %v6544, %v6543
    %v6592 = vpack.c.b16 %v6546, %v6545
    %v6593 = vpack.c.b16 %v6548, %v6547
    %v6594 = vpack.c.b16 %v6550, %v6549
    %v6595 = vpack.c.b16 %v6552, %v6551
    %v6596 = vpack.c.b16 %v6554, %v6553
    %v6597 = vpack.c.b16 %v6556, %v6555
    %v6598 = vpack.c.b16 %v6558, %v6557
    %v6599 = vpack.c.b16 %v6560, %v6559
    %v6600 = vpack.c.b16 %v6562, %v6561
    %v6601 = vpack.c.b16 %v6564, %v6563
    %v6602 = vpack.c.b16 %v6566, %v6565
    %v6603 = vpack.c.b16 %v6568, %v6567
    %v6604 = vpack.c.b16 %v6570, %v6569
    %v6605 = vpack.c.b16 %v6572, %v6571
    %v6606 = vpack.c.b16 %v6574, %v6573
    %6639 = vmatprep.subr.bf16.mxu0 0
    %6640 = vmatpush1.bf16.msra.mxu0 %v6575
    %6641 = vmatprep.subr.bf16.mxu0 0
    %6642 = vmatpush1.bf16.msra.mxu0 %v6576
    %6643 = vmatprep.subr.bf16.mxu0 0
    %6644 = vmatpush1.bf16.msra.mxu0 %v6577
    %6645 = vmatprep.subr.bf16.mxu0 0
    %6646 = vmatpush1.bf16.msra.mxu0 %v6578
    %6647 = vmatprep.subr.bf16.mxu0 0
    %6648 = vmatpush1.bf16.msra.mxu0 %v6579
    %6649 = vmatprep.subr.bf16.mxu0 0
    %6650 = vmatpush1.bf16.msra.mxu0 %v6580
    %6651 = vmatprep.subr.bf16.mxu0 0
    %6652 = vmatpush1.bf16.msra.mxu0 %v6581
    %6653 = vmatprep.subr.bf16.mxu0 0
    %6654 = vmatpush1.bf16.msra.mxu0 %v6582
    %6655 = vmatprep.subr.bf16.mxu0 0
    %6656 = vmatpush1.bf16.msra.mxu0 %v6583
    %6657 = vmatprep.subr.bf16.mxu0 0
    %6658 = vmatpush1.bf16.msra.mxu0 %v6584
    %6659 = vmatprep.subr.bf16.mxu0 0
    %6660 = vmatpush1.bf16.msra.mxu0 %v6585
    %6661 = vmatprep.subr.bf16.mxu0 0
    %6662 = vmatpush1.bf16.msra.mxu0 %v6586
    %6663 = vmatprep.subr.bf16.mxu0 0
    %6664 = vmatpush1.bf16.msra.mxu0 %v6587
    %6665 = vmatprep.subr.bf16.mxu0 0
    %6666 = vmatpush1.bf16.msra.mxu0 %v6588
    %6667 = vmatprep.subr.bf16.mxu0 0
    %6668 = vmatpush1.bf16.msra.mxu0 %v6589
    %6669 = vmatprep.subr.bf16.mxu0 0
    %6670 = vmatpush1.bf16.msra.mxu0 %v6590
    %6671 = vmatprep.mubr.bf16.mxu0 %v6377
    %6672 = vmatmul.mubr.bf16.gmra.mrb[0].mxu0 %v6376
    %v6673 = vpop.f32.mrb[0].mxu0
    %v6674 = vadd.f32 0.0, %v6673
    %v6675 = vpop.f32.mrb[0].mxu0
    %v6676 = vpop.f32.mrb[0].mxu0
    %v6677 = vadd.f32 0.0, %v6676
    %v6678 = vpop.f32.mrb[0].mxu0
    %6679 = vdwg.mxu0
    %6680 = vmatprep.subr.bf16.mxu0 0
    %6681 = vmatpush1.bf16.msra.mxu0 %v6591
    %6682 = vmatprep.subr.bf16.mxu0 0
    %6683 = vmatpush1.bf16.msra.mxu0 %v6592
    %6684 = vmatprep.subr.bf16.mxu0 0
    %6685 = vmatpush1.bf16.msra.mxu0 %v6593
    %6686 = vmatprep.subr.bf16.mxu0 0
    %6687 = vmatpush1.bf16.msra.mxu0 %v6594
    %6688 = vmatprep.subr.bf16.mxu0 0
    %6689 = vmatpush1.bf16.msra.mxu0 %v6595
    %6690 = vmatprep.subr.bf16.mxu0 0
    %6691 = vmatpush1.bf16.msra.mxu0 %v6596
    %6692 = vmatprep.subr.bf16.mxu0 0
    %6693 = vmatpush1.bf16.msra.mxu0 %v6597
    %6694 = vmatprep.subr.bf16.mxu0 0
    %6695 = vmatpush1.bf16.msra.mxu0 %v6598
    %6696 = vmatprep.subr.bf16.mxu0 0
    %6697 = vmatpush1.bf16.msra.mxu0 %v6599
    %6698 = vmatprep.subr.bf16.mxu0 0
    %6699 = vmatpush1.bf16.msra.mxu0 %v6600
    %6700 = vmatprep.subr.bf16.mxu0 0
    %6701 = vmatpush1.bf16.msra.mxu0 %v6601
    %6702 = vmatprep.subr.bf16.mxu0 0
    %6703 = vmatpush1.bf16.msra.mxu0 %v6602
    %6704 = vmatprep.subr.bf16.mxu0 0
    %6705 = vmatpush1.bf16.msra.mxu0 %v6603
    %6706 = vmatprep.subr.bf16.mxu0 0
    %6707 = vmatpush1.bf16.msra.mxu0 %v6604
    %6708 = vmatprep.subr.bf16.mxu0 0
    %6709 = vmatpush1.bf16.msra.mxu0 %v6605
    %6710 = vmatprep.subr.bf16.mxu0 0
    %6711 = vmatpush1.bf16.msra.mxu0 %v6606
    %6712 = vmatprep.mubr.bf16.mxu0 %v6379
    %6713 = vmatmul.mubr.bf16.gmra.mrb[0].mxu0 %v6378
    %v6714 = vpop.f32.mrb[0].mxu0
    %v6715 = vadd.f32 %v6674, %v6714
    %v6716 = vpop.f32.mrb[0].mxu0
    %v6717 = vpop.f32.mrb[0].mxu0
    %v6718 = vadd.f32 %v6677, %v6717
    %v6719 = vpop.f32.mrb[0].mxu0
    %6720 = vdwg.mxu0
    %v6721 = vadd.f32 %v6380, %v6715
    %v6722 = vadd.f32 %v6381, %v6718
    %6723 = vst [vmem:[#allocation2] sm:$0xff] %v6721
    %6724 = vst [vmem:[#allocation2 + $0x8] sm:$0xff] %v6722
    %v6725 = vld [vmem:[#allocation2] sm:$0xff]
    %v6726 = vld [vmem:[#allocation2 + $0x8] sm:$0xff]
    %v6727 = vld [vmem:[#allocation17] sm:$0x1]
    %v6729 = vlaneseq
    %v6730 = vshrl.u32 %v6729, 7
    %v6731 = vsub.s32 0, %v6730
    %v6732 = vrot.slane %v6727, %v6731
    %v6734 = vadd.f32 %v6725, %v6732
    %v6735 = vadd.f32 %v6726, %v6732
    %6736 = vst [vmem:[#allocation18] sm:$0xff] %v6734
    %6737 = vst [vmem:[#allocation18 + $0x8] sm:$0xff] %v6735
    // Predicated region
    $region74: #{tpu_custom_call.1} parent=1 // pred_check
      _
    $region75: #{tpu_custom_call.1} parent=1 // pred_check_branch
      %6739 = sbr.rel (0) target = $region77
    $region76: #{tpu_custom_call.1} parent=1 // pred_region
      %s6741 = ssub.s32 256, 256
      %6742 = vsyncadd [#allocation5], %s6741
      %s6743 = sshll.u32 [#allocation18], 4
      %s6744 = int_to_ptr.vmem [resolvable:$true] %s6743
      %6749 = dma.vmem_to_hbm [thread:$0]  %s6744, 256, %s9, [#allocation5], 128, 128, 8
    $region77: #{tpu_custom_call.1} parent=1 // pred_fallthru
      _
    // Predicated region
    $region78: #{tpu_custom_call.1} parent=1 // pred_check
      _
    $region79: #{tpu_custom_call.1} parent=1 // pred_check_branch
      %6751 = sbr.rel (0) target = $region81
    $region80: #{tpu_custom_call.1} parent=1 // pred_region
      %6752 = dma.done [#allocation5], 256
    $region81: #{tpu_custom_call.1} parent=1 // pred_fallthru
      _
    %6753 = vsyncpa [#allocation4], 1
    %6754 = vsyncpa [#allocation7], 1
    %6755 = vsyncpa [#allocation10], 1
    %6756 = vsyncpa [#allocation13], 1
    %6757 = vsyncpa [#allocation16], 1
    %6758 = vsyncpa [#allocation5], 1

// kernel: tpu_custom_call.1
$region0: #{tpu_custom_call.1}
  #allocation0 [shape = 'u32[]', space=smem, size = 0x4, offset = 0x4, fixed_abs, tag = 'smem constant byte address 0x4 - core index']
  #allocation1 [shape = 'u32[144,128]{1,0:T(1,128)}', space=vmem, size = 0x12000, scoped, tag = 'internal scratch']
  #allocation2 [shape = 'f32[16,128]{1,0:T(8,128)}', space=vmem, size = 0x2000, scoped, tag = 'scratch operand']
  %s0 = inlined_call_operand.hbm [shape: bf16[16,128], index: 0, kind: input, shape index: {}]
  %s1 = inlined_call_operand.hbm [shape: bf16[128,512], index: 1, kind: input, shape index: {}]
  %s2 = inlined_call_operand.hbm [shape: f32[1,512], index: 2, kind: input, shape index: {}]
  %s3 = inlined_call_operand.hbm [shape: bf16[512,512], index: 3, kind: input, shape index: {}]
  %s4 = inlined_call_operand.hbm [shape: f32[1,512], index: 4, kind: input, shape index: {}]
  %s5 = inlined_call_operand.hbm [shape: bf16[512,2048], index: 5, kind: input, shape index: {}]
  %s6 = inlined_call_operand.hbm [shape: f32[1,2048], index: 6, kind: input, shape index: {}]
  %s7 = inlined_call_operand.hbm [shape: bf16[2048,128], index: 7, kind: input, shape index: {}]
  %s8 = inlined_call_operand.hbm [shape: f32[1,128], index: 8, kind: input, shape index: {}]
  %s9 = inlined_call_operand.hbm [shape: f32[16,128], index: 9, kind: output, shape index: {}]
  %s10 = sld [smem:[#allocation0]]
  $region82: #{tpu_custom_call.1} parent=0
    _
  %s12 = ssub.s32 1, %s10
  %s13 = scalar_select 0, %s12, %s10
  $region1: #{tpu_custom_call.1} parent=0
    #allocation3 [shape = 'u8[4096]{0}', space=vmem, size = 0x1000, scoped, tag = 'input window, operand 0, single buffered']
    #allocation4 [shape = 's32[1]{0}', space=sflag, size = 0x4, scoped, tag = 'scoped memory for tpu_custom_call.1']
    #allocation5 [shape = 's32[1]{0}', space=sflag, size = 0x4, scoped, tag = 'scoped memory for tpu_custom_call.1']
    #allocation6 [shape = 'u8[131072]{0}', space=vmem, size = 0x20000, scoped, tag = 'input window, operand 1, single buffered']
    #allocation7 [shape = 's32[1]{0}', space=sflag, size = 0x4, scoped, tag = 'scoped memory for tpu_custom_call.1']
    #allocation8 [shape = 'u8[2048]{0}', space=vmem, size = 0x800, scoped, tag = 'input window, operand 2, single buffered']
    #allocation9 [shape = 'u8[524288]{0}', space=vmem, size = 0x80000, scoped, tag = 'input window, operand 3, single buffered']
    #allocation10 [shape = 's32[1]{0}', space=sflag, size = 0x4, scoped, tag = 'scoped memory for tpu_custom_call.1']
    #allocation11 [shape = 'u8[2048]{0}', space=vmem, size = 0x800, scoped, tag = 'input window, operand 4, single buffered']
    #allocation12 [shape = 'u8[2097152]{0}', space=vmem, size = 0x200000, scoped, tag = 'input window, operand 5, single buffered']
    #allocation13 [shape = 's32[1]{0}', space=sflag, size = 0x4, scoped, tag = 'scoped memory for tpu_custom_call.1']
    #allocation14 [shape = 'u8[8192]{0}', space=vmem, size = 0x2000, scoped, tag = 'input window, operand 6, single buffered']
    #allocation15 [shape = 'u8[524288]{0}', space=vmem, size = 0x80000, scoped, tag = 'input window, operand 7, single buffered']
    #allocation16 [shape = 's32[1]{0}', space=sflag, size = 0x4, scoped, tag = 'scoped memory for tpu_custom_call.1']
    #allocation17 [shape = 'u8[512]{0}', space=vmem, size = 0x400, scoped, tag = 'input window, operand 8, single buffered']
    #allocation18 [shape = 'u8[8192]{0}', space=vmem, size = 0x2000, scoped, tag = 'output window, operand 0, single buffered']
    %14 = vsyncpa [#allocation4], 0
    %15 = vsyncpa [#allocation7], 0
    %16 = vsyncpa [#allocation10], 0
    %17 = vsyncpa [#allocation13], 0
    %18 = vsyncpa [#allocation16], 0
    %19 = vsyncpa [#allocation5], 0
    // Predicated region
    $region2: #{tpu_custom_call.1} parent=1 // pred_check
      _
    $region3: #{tpu_custom_call.1} parent=1 // pred_check_branch
      %21 = sbr.rel (0) target = $region5
    $region4: #{tpu_custom_call.1} parent=1 // pred_region
      %s23 = ssub.s32 128, 128
      %24 = vsyncadd [#allocation4], %s23
      %s25 = sshll.u32 [#allocation3], 4
      %s26 = int_to_ptr.vmem [resolvable:$true] %s25
      %31 = dma.hbm_to_vmem [thread:$0]  %s0, 128, %s26, [#allocation4], 64, 64, 4
    $region5: #{tpu_custom_call.1} parent=1 // pred_fallthru
      _
    // Predicated region
    $region6: #{tpu_custom_call.1} parent=1 // pred_check
      _
    $region7: #{tpu_custom_call.1} parent=1 // pred_check_branch
      %33 = sbr.rel (0) target = $region9
    $region8: #{tpu_custom_call.1} parent=1 // pred_region
      %s35 = ssub.s32 4096, 4096
      %36 = vsyncadd [#allocation7], %s35
      %s37 = sshll.u32 [#allocation6], 4
      %s38 = int_to_ptr.vmem [resolvable:$true] %s37
      %43 = dma.hbm_to_vmem [thread:$0]  %s1, 4096, %s38, [#allocation7], 256, 256, 16
    $region9: #{tpu_custom_call.1} parent=1 // pred_fallthru
      _
    // Predicated region
    $region10: #{tpu_custom_call.1} parent=1 // pred_check
      _
    $region11: #{tpu_custom_call.1} parent=1 // pred_check_branch
      %45 = sbr.rel (0) target = $region13
    $region12: #{tpu_custom_call.1} parent=1 // pred_region
      %s47 = ssub.s32 64, 64
      %48 = vsyncadd [#allocation7], %s47
      %s50 = sshll.u32 [#allocation8], 4
      %s51 = int_to_ptr.vmem [resolvable:$true] %s50
      %53 = dma.hbm_to_vmem [thread:$0]  %s2, 64, %s51, [#allocation7]
    $region13: #{tpu_custom_call.1} parent=1 // pred_fallthru
      _
    // Predicated region
    $region14: #{tpu_custom_call.1} parent=1 // pred_check
      _
    $region15: #{tpu_custom_call.1} parent=1 // pred_check_branch
      %55 = sbr.rel (0) target = $region17
    $region16: #{tpu_custom_call.1} parent=1 // pred_region
      %s57 = ssub.s32 16384, 16384
      %58 = vsyncadd [#allocation10], %s57
      %s59 = sshll.u32 [#allocation9], 4
      %s60 = int_to_ptr.vmem [resolvable:$true] %s59
      %65 = dma.hbm_to_vmem [thread:$0]  %s3, 16384, %s60, [#allocation10], 256, 256, 16
    $region17: #{tpu_custom_call.1} parent=1 // pred_fallthru
      _
    // Predicated region
    $region18: #{tpu_custom_call.1} parent=1 // pred_check
      _
    $region19: #{tpu_custom_call.1} parent=1 // pred_check_branch
      %67 = sbr.rel (0) target = $region21
    $region20: #{tpu_custom_call.1} parent=1 // pred_region
      %s69 = ssub.s32 64, 64
      %70 = vsyncadd [#allocation10], %s69
      %s72 = sshll.u32 [#allocation11], 4
      %s73 = int_to_ptr.vmem [resolvable:$true] %s72
      %75 = dma.hbm_to_vmem [thread:$0]  %s4, 64, %s73, [#allocation10]
    $region21: #{tpu_custom_call.1} parent=1 // pred_fallthru
      _
    // Predicated region
    $region22: #{tpu_custom_call.1} parent=1 // pred_check
      _
    $region23: #{tpu_custom_call.1} parent=1 // pred_check_branch
      %77 = sbr.rel (0) target = $region25
    $region24: #{tpu_custom_call.1} parent=1 // pred_region
      %s79 = ssub.s32 65536, 65536
      %80 = vsyncadd [#allocation13], %s79
      %s81 = sshll.u32 [#allocation12], 4
      %s82 = int_to_ptr.vmem [resolvable:$true] %s81
      %87 = dma.hbm_to_vmem [thread:$0]  %s5, 65536, %s82, [#allocation13], 1024, 1024, 64
    $region25: #{tpu_custom_call.1} parent=1 // pred_fallthru
      _
    // Predicated region
    $region26: #{tpu_custom_call.1} parent=1 // pred_check
      _
    $region27: #{tpu_custom_call.1} parent=1 // pred_check_branch
      %89 = sbr.rel (0) target = $region29
    $region28: #{tpu_custom_call.1} parent=1 // pred_region
      %s91 = ssub.s32 256, 256
      %92 = vsyncadd [#allocation13], %s91
      %s94 = sshll.u32 [#allocation14], 4
      %s95 = int_to_ptr.vmem [resolvable:$true] %s94
      %97 = dma.hbm_to_vmem [thread:$0]  %s6, 256, %s95, [#allocation13]
    $region29: #{tpu_custom_call.1} parent=1 // pred_fallthru
      _
    // Predicated region
    $region30: #{tpu_custom_call.1} parent=1 // pred_check
      _
    $region31: #{tpu_custom_call.1} parent=1 // pred_check_branch
      %99 = sbr.rel (0) target = $region33
    $region32: #{tpu_custom_call.1} parent=1 // pred_region
      %s101 = ssub.s32 16384, 16384
      %102 = vsyncadd [#allocation16], %s101
      %s103 = sshll.u32 [#allocation15], 4
      %s104 = int_to_ptr.vmem [resolvable:$true] %s103
      %109 = dma.hbm_to_vmem [thread:$0]  %s7, 16384, %s104, [#allocation16], 64, 64, 4
    $region33: #{tpu_custom_call.1} parent=1 // pred_fallthru
      _
    // Predicated region
    $region34: #{tpu_custom_call.1} parent=1 // pred_check
      _
    $region35: #{tpu_custom_call.1} parent=1 // pred_check_branch
      %111 = sbr.rel (0) target = $region37
    $region36: #{tpu_custom_call.1} parent=1 // pred_region
      %s113 = ssub.s32 16, 16
      %114 = vsyncadd [#allocation16], %s113
      %s116 = sshll.u32 [#allocation17], 4
      %s117 = int_to_ptr.vmem [resolvable:$true] %s116
      %119 = dma.hbm_to_vmem [thread:$0]  %s8, 16, %s117, [#allocation16]
    $region37: #{tpu_custom_call.1} parent=1 // pred_fallthru
      _
    // Predicated region
    $region38: #{tpu_custom_call.1} parent=1 // pred_check
      _
    $region39: #{tpu_custom_call.1} parent=1 // pred_check_branch
      %121 = sbr.rel (0) target = $region41
    $region40: #{tpu_custom_call.1} parent=1 // pred_region
      %122 = dma.done [#allocation4], 128
    $region41: #{tpu_custom_call.1} parent=1 // pred_fallthru
      _
    // Predicated region
    $region42: #{tpu_custom_call.1} parent=1 // pred_check
      _
    $region43: #{tpu_custom_call.1} parent=1 // pred_check_branch
      %124 = sbr.rel (0) target = $region45
    $region44: #{tpu_custom_call.1} parent=1 // pred_region
      %125 = dma.done [#allocation7], 4096
    $region45: #{tpu_custom_call.1} parent=1 // pred_fallthru
      _
    // Predicated region
    $region46: #{tpu_custom_call.1} parent=1 // pred_check
      _
    $region47: #{tpu_custom_call.1} parent=1 // pred_check_branch
      %127 = sbr.rel (0) target = $region49
    $region48: #{tpu_custom_call.1} parent=1 // pred_region
      %128 = dma.done [#allocation7], 64
    $region49: #{tpu_custom_call.1} parent=1 // pred_fallthru
      _
    // Predicated region
    $region50: #{tpu_custom_call.1} parent=1 // pred_check
      _
    $region51: #{tpu_custom_call.1} parent=1 // pred_check_branch
      %130 = sbr.rel (0) target = $region53
    $region52: #{tpu_custom_call.1} parent=1 // pred_region
      %131 = dma.done [#allocation10], 16384
    $region53: #{tpu_custom_call.1} parent=1 // pred_fallthru
      _
    // Predicated region
    $region54: #{tpu_custom_call.1} parent=1 // pred_check
      _
    $region55: #{tpu_custom_call.1} parent=1 // pred_check_branch
      %133 = sbr.rel (0) target = $region57
    $region56: #{tpu_custom_call.1} parent=1 // pred_region
      %134 = dma.done [#allocation10], 64
    $region57: #{tpu_custom_call.1} parent=1 // pred_fallthru
      _
    // Predicated region
    $region58: #{tpu_custom_call.1} parent=1 // pred_check
      _
    $region59: #{tpu_custom_call.1} parent=1 // pred_check_branch
      %136 = sbr.rel (0) target = $region61
    $region60: #{tpu_custom_call.1} parent=1 // pred_region
      %137 = dma.done [#allocation13], 65536
    $region61: #{tpu_custom_call.1} parent=1 // pred_fallthru
      _
    // Predicated region
    $region62: #{tpu_custom_call.1} parent=1 // pred_check
      _
    $region63: #{tpu_custom_call.1} parent=1 // pred_check_branch
      %139 = sbr.rel (0) target = $region65
    $region64: #{tpu_custom_call.1} parent=1 // pred_region
      %140 = dma.done [#allocation13], 256
    $region65: #{tpu_custom_call.1} parent=1 // pred_fallthru
      _
    // Predicated region
    $region66: #{tpu_custom_call.1} parent=1 // pred_check
      _
    $region67: #{tpu_custom_call.1} parent=1 // pred_check_branch
      %142 = sbr.rel (0) target = $region69
    $region68: #{tpu_custom_call.1} parent=1 // pred_region
      %143 = dma.done [#allocation16], 16384
    $region69: #{tpu_custom_call.1} parent=1 // pred_fallthru
      _
    // Predicated region
    $region70: #{tpu_custom_call.1} parent=1 // pred_check
      _
    $region71: #{tpu_custom_call.1} parent=1 // pred_check_branch
      %145 = sbr.rel (0) target = $region73
    $region72: #{tpu_custom_call.1} parent=1 // pred_region
      %146 = dma.done [#allocation16], 16
    $region73: #{tpu_custom_call.1} parent=1 // pred_fallthru
      _
    %v148 = vld [vmem:[#allocation3] sm:$0xf]
    %v149 = vld [vmem:[#allocation3 + $0x4] sm:$0xf]
    %v150 = vld [vmem:[#allocation6] sm:$0xff]
    %v151 = vld [vmem:[#allocation6 + $0x8] sm:$0xff]
    %v152 = vld [vmem:[#allocation6 + $0x10] sm:$0xff]
    %v153 = vld [vmem:[#allocation6 + $0x18] sm:$0xff]
    %v154 = vld [vmem:[#allocation6 + $0x20] sm:$0xff]
    %v155 = vld [vmem:[#allocation6 + $0x28] sm:$0xff]
    %v156 = vld [vmem:[#allocation6 + $0x30] sm:$0xff]
    %v157 = vld [vmem:[#allocation6 + $0x38] sm:$0xff]
    %v158 = vld [vmem:[#allocation6 + $0x40] sm:$0xff]
    %v159 = vld [vmem:[#allocation6 + $0x48] sm:$0xff]
    %v160 = vld [vmem:[#allocation6 + $0x50] sm:$0xff]
    %v161 = vld [vmem:[#allocation6 + $0x58] sm:$0xff]
    %v162 = vld [vmem:[#allocation6 + $0x60] sm:$0xff]
    %v163 = vld [vmem:[#allocation6 + $0x68] sm:$0xff]
    %v164 = vld [vmem:[#allocation6 + $0x70] sm:$0xff]
    %v165 = vld [vmem:[#allocation6 + $0x78] sm:$0xff]
    %v166 = vld [vmem:[#allocation6 + $0x80] sm:$0xff]
    %v167 = vld [vmem:[#allocation6 + $0x88] sm:$0xff]
    %v168 = vld [vmem:[#allocation6 + $0x90] sm:$0xff]
    %v169 = vld [vmem:[#allocation6 + $0x98] sm:$0xff]
    %v170 = vld [vmem:[#allocation6 + $0xa0] sm:$0xff]
    %v171 = vld [vmem:[#allocation6 + $0xa8] sm:$0xff]
    %v172 = vld [vmem:[#allocation6 + $0xb0] sm:$0xff]
    %v173 = vld [vmem:[#allocation6 + $0xb8] sm:$0xff]
    %v174 = vld [vmem:[#allocation6 + $0xc0] sm:$0xff]
    %v175 = vld [vmem:[#allocation6 + $0xc8] sm:$0xff]
    %v176 = vld [vmem:[#allocation6 + $0xd0] sm:$0xff]
    %v177 = vld [vmem:[#allocation6 + $0xd8] sm:$0xff]
    %v178 = vld [vmem:[#allocation6 + $0xe0] sm:$0xff]
    %v179 = vld [vmem:[#allocation6 + $0xe8] sm:$0xff]
    %v180 = vld [vmem:[#allocation6 + $0xf0] sm:$0xff]
    %v181 = vld [vmem:[#allocation6 + $0xf8] sm:$0xff]
    %v182 = vld [vmem:[#allocation8] sm:$0xf]
    %v184 = vlaneseq
    %v185 = vshrl.u32 %v184, 7
    %v186 = vsub.s32 0, %v185
    %v187 = vrot.slane %v182, %v186
    %v188 = vlaneseq
    %v189 = vshrl.u32 %v188, 7
    %v190 = vsub.s32 1, %v189
    %v191 = vrot.slane %v182, %v190
    %v192 = vlaneseq
    %v193 = vshrl.u32 %v192, 7
    %v194 = vsub.s32 2, %v193
    %v195 = vrot.slane %v182, %v194
    %v196 = vlaneseq
    %v197 = vshrl.u32 %v196, 7
    %v198 = vsub.s32 3, %v197
    %v199 = vrot.slane %v182, %v198
    %v206 = vunpack.c.l.b16 %v148
    %v207 = vunpack.c.l.b16 %v149
    %v208 = vpack.c.b16 %v207, %v206
    %v242 = vunpack.c.l.b16 %v150
    %v243 = vunpack.c.h.b16 %v150
    %v244 = vunpack.c.l.b16 %v151
    %v245 = vunpack.c.h.b16 %v151
    %v246 = vunpack.c.l.b16 %v152
    %v247 = vunpack.c.h.b16 %v152
    %v248 = vunpack.c.l.b16 %v153
    %v249 = vunpack.c.h.b16 %v153
    %v250 = vunpack.c.l.b16 %v154
    %v251 = vunpack.c.h.b16 %v154
    %v252 = vunpack.c.l.b16 %v155
    %v253 = vunpack.c.h.b16 %v155
    %v254 = vunpack.c.l.b16 %v156
    %v255 = vunpack.c.h.b16 %v156
    %v256 = vunpack.c.l.b16 %v157
    %v257 = vunpack.c.h.b16 %v157
    %v258 = vunpack.c.l.b16 %v158
    %v259 = vunpack.c.h.b16 %v158
    %v260 = vunpack.c.l.b16 %v159
    %v261 = vunpack.c.h.b16 %v159
    %v262 = vunpack.c.l.b16 %v160
    %v263 = vunpack.c.h.b16 %v160
    %v264 = vunpack.c.l.b16 %v161
    %v265 = vunpack.c.h.b16 %v161
    %v266 = vunpack.c.l.b16 %v162
    %v267 = vunpack.c.h.b16 %v162
    %v268 = vunpack.c.l.b16 %v163
    %v269 = vunpack.c.h.b16 %v163
    %v270 = vunpack.c.l.b16 %v164
    %v271 = vunpack.c.h.b16 %v164
    %v272 = vunpack.c.l.b16 %v165
    %v273 = vunpack.c.h.b16 %v165
    %v274 = vunpack.c.l.b16 %v166
    %v275 = vunpack.c.h.b16 %v166
    %v276 = vunpack.c.l.b16 %v167
    %v277 = vunpack.c.h.b16 %v167
    %v278 = vunpack.c.l.b16 %v168
    %v279 = vunpack.c.h.b16 %v168
    %v280 = vunpack.c.l.b16 %v169
    %v281 = vunpack.c.h.b16 %v169
    %v282 = vunpack.c.l.b16 %v170
    %v283 = vunpack.c.h.b16 %v170
    %v284 = vunpack.c.l.b16 %v171
    %v285 = vunpack.c.h.b16 %v171
    %v286 = vunpack.c.l.b16 %v172
    %v287 = vunpack.c.h.b16 %v172
    %v288 = vunpack.c.l.b16 %v173
    %v289 = vunpack.c.h.b16 %v173
    %v290 = vunpack.c.l.b16 %v174
    %v291 = vunpack.c.h.b16 %v174
    %v292 = vunpack.c.l.b16 %v175
    %v293 = vunpack.c.h.b16 %v175
    %v294 = vunpack.c.l.b16 %v176
    %v295 = vunpack.c.h.b16 %v176
    %v296 = vunpack.c.l.b16 %v177
    %v297 = vunpack.c.h.b16 %v177
    %v298 = vunpack.c.l.b16 %v178
    %v299 = vunpack.c.h.b16 %v178
    %v300 = vunpack.c.l.b16 %v179
    %v301 = vunpack.c.h.b16 %v179
    %v302 = vunpack.c.l.b16 %v180
    %v303 = vunpack.c.h.b16 %v180
    %v304 = vunpack.c.l.b16 %v181
    %v305 = vunpack.c.h.b16 %v181
    %v306 = vpack.c.b16 %v246, %v242
    %v307 = vpack.c.b16 %v247, %v243
    %v308 = vpack.c.b16 %v248, %v244
    %v309 = vpack.c.b16 %v249, %v245
    %v310 = vpack.c.b16 %v254, %v250
    %v311 = vpack.c.b16 %v255, %v251
    %v312 = vpack.c.b16 %v256, %v252
    %v313 = vpack.c.b16 %v257, %v253
    %v314 = vpack.c.b16 %v262, %v258
    %v315 = vpack.c.b16 %v263, %v259
    %v316 = vpack.c.b16 %v264, %v260
    %v317 = vpack.c.b16 %v265, %v261
    %v318 = vpack.c.b16 %v270, %v266
    %v319 = vpack.c.b16 %v271, %v267
    %v320 = vpack.c.b16 %v272, %v268
    %v321 = vpack.c.b16 %v273, %v269
    %v322 = vpack.c.b16 %v278, %v274
    %v323 = vpack.c.b16 %v279, %v275
    %v324 = vpack.c.b16 %v280, %v276
    %v325 = vpack.c.b16 %v281, %v277
    %v326 = vpack.c.b16 %v286, %v282
    %v327 = vpack.c.b16 %v287, %v283
    %v328 = vpack.c.b16 %v288, %v284
    %v329 = vpack.c.b16 %v289, %v285
    %v330 = vpack.c.b16 %v294, %v290
    %v331 = vpack.c.b16 %v295, %v291
    %v332 = vpack.c.b16 %v296, %v292
    %v333 = vpack.c.b16 %v297, %v293
    %v334 = vpack.c.b16 %v302, %v298
    %v335 = vpack.c.b16 %v303, %v299
    %v336 = vpack.c.b16 %v304, %v300
    %v337 = vpack.c.b16 %v305, %v301
    %370 = vmatprep.subr.bf16.mxu0 %v307
    %371 = vmatpush1.bf16.msra.mxu0 %v306
    %372 = vmatprep.subr.bf16.mxu0 %v311
    %373 = vmatpush1.bf16.msra.mxu0 %v310
    %374 = vmatprep.subr.bf16.mxu0 %v315
    %375 = vmatpush1.bf16.msra.mxu0 %v314
    %376 = vmatprep.subr.bf16.mxu0 %v319
    %377 = vmatpush1.bf16.msra.mxu0 %v318
    %378 = vmatprep.subr.bf16.mxu0 %v323
    %379 = vmatpush1.bf16.msra.mxu0 %v322
    %380 = vmatprep.subr.bf16.mxu0 %v327
    %381 = vmatpush1.bf16.msra.mxu0 %v326
    %382 = vmatprep.subr.bf16.mxu0 %v331
    %383 = vmatpush1.bf16.msra.mxu0 %v330
    %384 = vmatprep.subr.bf16.mxu0 %v335
    %385 = vmatpush1.bf16.msra.mxu0 %v334
    %386 = vmatprep.subr.bf16.mxu0 0
    %387 = vmatpush1.bf16.msra.mxu0 0
    %388 = vmatprep.subr.bf16.mxu0 0
    %389 = vmatpush1.bf16.msra.mxu0 0
    %390 = vmatprep.subr.bf16.mxu0 0
    %391 = vmatpush1.bf16.msra.mxu0 0
    %392 = vmatprep.subr.bf16.mxu0 0
    %393 = vmatpush1.bf16.msra.mxu0 0
    %394 = vmatprep.subr.bf16.mxu0 0
    %395 = vmatpush1.bf16.msra.mxu0 0
    %396 = vmatprep.subr.bf16.mxu0 0
    %397 = vmatpush1.bf16.msra.mxu0 0
    %398 = vmatprep.subr.bf16.mxu0 0
    %399 = vmatpush1.bf16.msra.mxu0 0
    %400 = vmatprep.subr.bf16.mxu0 0
    %401 = vmatpush1.bf16.msra.mxu0 0
    %402 = vmatprep.mubr.bf16.mxu0 0
    %403 = vmatmul.mubr.bf16.gmra.mrb[0].mxu0 %v208
    %v404 = vpop.f32.mrb[0].mxu0
    %v405 = vadd.f32 %v187, %v404
    %v406 = vpop.f32.mrb[0].mxu0
    %v407 = vadd.f32 %v191, %v406
    %v408 = vpop.f32.mrb[0].mxu0
    %v409 = vadd.f32 %v187, %v408
    %v410 = vpop.f32.mrb[0].mxu0
    %v411 = vadd.f32 %v191, %v410
    %412 = vdwg.mxu0
    %413 = vmatprep.subr.bf16.mxu0 %v309
    %414 = vmatpush1.bf16.msra.mxu0 %v308
    %415 = vmatprep.subr.bf16.mxu0 %v313
    %416 = vmatpush1.bf16.msra.mxu0 %v312
    %417 = vmatprep.subr.bf16.mxu0 %v317
    %418 = vmatpush1.bf16.msra.mxu0 %v316
    %419 = vmatprep.subr.bf16.mxu0 %v321
    %420 = vmatpush1.bf16.msra.mxu0 %v320
    %421 = vmatprep.subr.bf16.mxu0 %v325
    %422 = vmatpush1.bf16.msra.mxu0 %v324
    %423 = vmatprep.subr.bf16.mxu0 %v329
    %424 = vmatpush1.bf16.msra.mxu0 %v328
    %425 = vmatprep.subr.bf16.mxu0 %v333
    %426 = vmatpush1.bf16.msra.mxu0 %v332
    %427 = vmatprep.subr.bf16.mxu0 %v337
    %428 = vmatpush1.bf16.msra.mxu0 %v336
    %429 = vmatprep.subr.bf16.mxu0 0
    %430 = vmatpush1.bf16.msra.mxu0 0
    %431 = vmatprep.subr.bf16.mxu0 0
    %432 = vmatpush1.bf16.msra.mxu0 0
    %433 = vmatprep.subr.bf16.mxu0 0
    %434 = vmatpush1.bf16.msra.mxu0 0
    %435 = vmatprep.subr.bf16.mxu0 0
    %436 = vmatpush1.bf16.msra.mxu0 0
    %437 = vmatprep.subr.bf16.mxu0 0
    %438 = vmatpush1.bf16.msra.mxu0 0
    %439 = vmatprep.subr.bf16.mxu0 0
    %440 = vmatpush1.bf16.msra.mxu0 0
    %441 = vmatprep.subr.bf16.mxu0 0
    %442 = vmatpush1.bf16.msra.mxu0 0
    %443 = vmatprep.subr.bf16.mxu0 0
    %444 = vmatpush1.bf16.msra.mxu0 0
    %445 = vmatprep.mubr.bf16.mxu0 0
    %446 = vmatmul.mubr.bf16.gmra.mrb[0].mxu0 %v208
    %v447 = vpop.f32.mrb[0].mxu0
    %v448 = vadd.f32 %v195, %v447
    %v449 = vpop.f32.mrb[0].mxu0
    %v450 = vadd.f32 %v199, %v449
    %v451 = vpop.f32.mrb[0].mxu0
    %v452 = vadd.f32 %v195, %v451
    %v453 = vpop.f32.mrb[0].mxu0
    %v454 = vadd.f32 %v199, %v453
    %455 = vdwg.mxu0
    %v456 = vmax.f32 %v405, 0.0
    %v457 = vmax.f32 %v407, 0.0
    %v458 = vmax.f32 %v448, 0.0
    %v459 = vmax.f32 %v450, 0.0
    %v460 = vmax.f32 %v409, 0.0
    %v461 = vmax.f32 %v411, 0.0
    %v462 = vmax.f32 %v452, 0.0
    %v463 = vmax.f32 %v454, 0.0
    %v464 = vpack.c.bf16 %v460, %v456
    %v465 = vpack.c.bf16 %v461, %v457
    %v466 = vpack.c.bf16 %v462, %v458
    %v467 = vpack.c.bf16 %v463, %v459
    %v468 = vld [vmem:[#allocation9] sm:$0xff]
    %v469 = vld [vmem:[#allocation9 + $0x8] sm:$0xff]
    %v470 = vld [vmem:[#allocation9 + $0x10] sm:$0xff]
    %v471 = vld [vmem:[#allocation9 + $0x18] sm:$0xff]
    %v472 = vld [vmem:[#allocation9 + $0x20] sm:$0xff]
    %v473 = vld [vmem:[#allocation9 + $0x28] sm:$0xff]
    %v474 = vld [vmem:[#allocation9 + $0x30] sm:$0xff]
    %v475 = vld [vmem:[#allocation9 + $0x38] sm:$0xff]
    %v476 = vld [vmem:[#allocation9 + $0x40] sm:$0xff]
    %v477 = vld [vmem:[#allocation9 + $0x48] sm:$0xff]
    %v478 = vld [vmem:[#allocation9 + $0x50] sm:$0xff]
    %v479 = vld [vmem:[#allocation9 + $0x58] sm:$0xff]
    %v480 = vld [vmem:[#allocation9 + $0x60] sm:$0xff]
    %v481 = vld [vmem:[#allocation9 + $0x68] sm:$0xff]
    %v482 = vld [vmem:[#allocation9 + $0x70] sm:$0xff]
    %v483 = vld [vmem:[#allocation9 + $0x78] sm:$0xff]
    %v484 = vld [vmem:[#allocation9 + $0x80] sm:$0xff]
    %v485 = vld [vmem:[#allocation9 + $0x88] sm:$0xff]
    %v486 = vld [vmem:[#allocation9 + $0x90] sm:$0xff]
    %v487 = vld [vmem:[#allocation9 + $0x98] sm:$0xff]
    %v488 = vld [vmem:[#allocation9 + $0xa0] sm:$0xff]
    %v489 = vld [vmem:[#allocation9 + $0xa8] sm:$0xff]
    %v490 = vld [vmem:[#allocation9 + $0xb0] sm:$0xff]
    %v491 = vld [vmem:[#allocation9 + $0xb8] sm:$0xff]
    %v492 = vld [vmem:[#allocation9 + $0xc0] sm:$0xff]
    %v493 = vld [vmem:[#allocation9 + $0xc8] sm:$0xff]
    %v494 = vld [vmem:[#allocation9 + $0xd0] sm:$0xff]
    %v495 = vld [vmem:[#allocation9 + $0xd8] sm:$0xff]
    %v496 = vld [vmem:[#allocation9 + $0xe0] sm:$0xff]
    %v497 = vld [vmem:[#allocation9 + $0xe8] sm:$0xff]
    %v498 = vld [vmem:[#allocation9 + $0xf0] sm:$0xff]
    %v499 = vld [vmem:[#allocation9 + $0xf8] sm:$0xff]
    %v500 = vld [vmem:[#allocation9 + $0x100] sm:$0xff]
    %v501 = vld [vmem:[#allocation9 + $0x108] sm:$0xff]
    %v502 = vld [vmem:[#allocation9 + $0x110] sm:$0xff]
    %v503 = vld [vmem:[#allocation9 + $0x118] sm:$0xff]
    %v504 = vld [vmem:[#allocation9 + $0x120] sm:$0xff]
    %v505 = vld [vmem:[#allocation9 + $0x128] sm:$0xff]
    %v506 = vld [vmem:[#allocation9 + $0x130] sm:$0xff]
    %v507 = vld [vmem:[#allocation9 + $0x138] sm:$0xff]
    %v508 = vld [vmem:[#allocation9 + $0x140] sm:$0xff]
    %v509 = vld [vmem:[#allocation9 + $0x148] sm:$0xff]
    %v510 = vld [vmem:[#allocation9 + $0x150] sm:$0xff]
    %v511 = vld [vmem:[#allocation9 + $0x158] sm:$0xff]
    %v512 = vld [vmem:[#allocation9 + $0x160] sm:$0xff]
    %v513 = vld [vmem:[#allocation9 + $0x168] sm:$0xff]
    %v514 = vld [vmem:[#allocation9 + $0x170] sm:$0xff]
    %v515 = vld [vmem:[#allocation9 + $0x178] sm:$0xff]
    %v516 = vld [vmem:[#allocation9 + $0x180] sm:$0xff]
    %v517 = vld [vmem:[#allocation9 + $0x188] sm:$0xff]
    %v518 = vld [vmem:[#allocation9 + $0x190] sm:$0xff]
    %v519 = vld [vmem:[#allocation9 + $0x198] sm:$0xff]
    %v520 = vld [vmem:[#allocation9 + $0x1a0] sm:$0xff]
    %v521 = vld [vmem:[#allocation9 + $0x1a8] sm:$0xff]
    %v522 = vld [vmem:[#allocation9 + $0x1b0] sm:$0xff]
    %v523 = vld [vmem:[#allocation9 + $0x1b8] sm:$0xff]
    %v524 = vld [vmem:[#allocation9 + $0x1c0] sm:$0xff]
    %v525 = vld [vmem:[#allocation9 + $0x1c8] sm:$0xff]
    %v526 = vld [vmem:[#allocation9 + $0x1d0] sm:$0xff]
    %v527 = vld [vmem:[#allocation9 + $0x1d8] sm:$0xff]
    %v528 = vld [vmem:[#allocation9 + $0x1e0] sm:$0xff]
    %v529 = vld [vmem:[#allocation9 + $0x1e8] sm:$0xff]
    %v530 = vld [vmem:[#allocation9 + $0x1f0] sm:$0xff]
    %v531 = vld [vmem:[#allocation9 + $0x1f8] sm:$0xff]
    %v532 = vld [vmem:[#allocation9 + $0x200] sm:$0xff]
    %v533 = vld [vmem:[#allocation9 + $0x208] sm:$0xff]
    %v534 = vld [vmem:[#allocation9 + $0x210] sm:$0xff]
    %v535 = vld [vmem:[#allocation9 + $0x218] sm:$0xff]
    %v536 = vld [vmem:[#allocation9 + $0x220] sm:$0xff]
    %v537 = vld [vmem:[#allocation9 + $0x228] sm:$0xff]
    %v538 = vld [vmem:[#allocation9 + $0x230] sm:$0xff]
    %v539 = vld [vmem:[#allocation9 + $0x238] sm:$0xff]
    %v540 = vld [vmem:[#allocation9 + $0x240] sm:$0xff]
    %v541 = vld [vmem:[#allocation9 + $0x248] sm:$0xff]
    %v542 = vld [vmem:[#allocation9 + $0x250] sm:$0xff]
    %v543 = vld [vmem:[#allocation9 + $0x258] sm:$0xff]
    %v544 = vld [vmem:[#allocation9 + $0x260] sm:$0xff]
    %v545 = vld [vmem:[#allocation9 + $0x268] sm:$0xff]
    %v546 = vld [vmem:[#allocation9 + $0x270] sm:$0xff]
    %v547 = vld [vmem:[#allocation9 + $0x278] sm:$0xff]
    %v548 = vld [vmem:[#allocation9 + $0x280] sm:$0xff]
    %v549 = vld [vmem:[#allocation9 + $0x288] sm:$0xff]
    %v550 = vld [vmem:[#allocation9 + $0x290] sm:$0xff]
    %v551 = vld [vmem:[#allocation9 + $0x298] sm:$0xff]
    %v552 = vld [vmem:[#allocation9 + $0x2a0] sm:$0xff]
    %v553 = vld [vmem:[#allocation9 + $0x2a8] sm:$0xff]
    %v554 = vld [vmem:[#allocation9 + $0x2b0] sm:$0xff]
    %v555 = vld [vmem:[#allocation9 + $0x2b8] sm:$0xff]
    %v556 = vld [vmem:[#allocation9 + $0x2c0] sm:$0xff]
    %v557 = vld [vmem:[#allocation9 + $0x2c8] sm:$0xff]
    %v558 = vld [vmem:[#allocation9 + $0x2d0] sm:$0xff]
    %v559 = vld [vmem:[#allocation9 + $0x2d8] sm:$0xff]
    %v560 = vld [vmem:[#allocation9 + $0x2e0] sm:$0xff]
    %v561 = vld [vmem:[#allocation9 + $0x2e8] sm:$0xff]
    %v562 = vld [vmem:[#allocation9 + $0x2f0] sm:$0xff]
    %v563 = vld [vmem:[#allocation9 + $0x2f8] sm:$0xff]
    %v564 = vld [vmem:[#allocation9 + $0x300] sm:$0xff]
    %v565 = vld [vmem:[#allocation9 + $0x308] sm:$0xff]
    %v566 = vld [vmem:[#allocation9 + $0x310] sm:$0xff]
    %v567 = vld [vmem:[#allocation9 + $0x318] sm:$0xff]
    %v568 = vld [vmem:[#allocation9 + $0x320] sm:$0xff]
    %v569 = vld [vmem:[#allocation9 + $0x328] sm:$0xff]
    %v570 = vld [vmem:[#allocation9 + $0x330] sm:$0xff]
    %v571 = vld [vmem:[#allocation9 + $0x338] sm:$0xff]
    %v572 = vld [vmem:[#allocation9 + $0x340] sm:$0xff]
    %v573 = vld [vmem:[#allocation9 + $0x348] sm:$0xff]
    %v574 = vld [vmem:[#allocation9 + $0x350] sm:$0xff]
    %v575 = vld [vmem:[#allocation9 + $0x358] sm:$0xff]
    %v576 = vld [vmem:[#allocation9 + $0x360] sm:$0xff]
    %v577 = vld [vmem:[#allocation9 + $0x368] sm:$0xff]
    %v578 = vld [vmem:[#allocation9 + $0x370] sm:$0xff]
    %v579 = vld [vmem:[#allocation9 + $0x378] sm:$0xff]
    %v580 = vld [vmem:[#allocation9 + $0x380] sm:$0xff]
    %v581 = vld [vmem:[#allocation9 + $0x388] sm:$0xff]
    %v582 = vld [vmem:[#allocation9 + $0x390] sm:$0xff]
    %v583 = vld [vmem:[#allocation9 + $0x398] sm:$0xff]
    %v584 = vld [vmem:[#allocation9 + $0x3a0] sm:$0xff]
    %v585 = vld [vmem:[#allocation9 + $0x3a8] sm:$0xff]
    %v586 = vld [vmem:[#allocation9 + $0x3b0] sm:$0xff]
    %v587 = vld [vmem:[#allocation9 + $0x3b8] sm:$0xff]
    %v588 = vld [vmem:[#allocation9 + $0x3c0] sm:$0xff]
    %v589 = vld [vmem:[#allocation9 + $0x3c8] sm:$0xff]
    %v590 = vld [vmem:[#allocation9 + $0x3d0] sm:$0xff]
    %v591 = vld [vmem:[#allocation9 + $0x3d8] sm:$0xff]
    %v592 = vld [vmem:[#allocation9 + $0x3e0] sm:$0xff]
    %v593 = vld [vmem:[#allocation9 + $0x3e8] sm:$0xff]
    %v594 = vld [vmem:[#allocation9 + $0x3f0] sm:$0xff]
    %v595 = vld [vmem:[#allocation9 + $0x3f8] sm:$0xff]
    %v596 = vld [vmem:[#allocation11] sm:$0xf]
    %v598 = vlaneseq
    %v599 = vshrl.u32 %v598, 7
    %v600 = vsub.s32 0, %v599
    %v601 = vrot.slane %v596, %v600
    %v602 = vlaneseq
    %v603 = vshrl.u32 %v602, 7
    %v604 = vsub.s32 1, %v603
    %v605 = vrot.slane %v596, %v604
    %v606 = vlaneseq
    %v607 = vshrl.u32 %v606, 7
    %v608 = vsub.s32 2, %v607
    %v609 = vrot.slane %v596, %v608
    %v610 = vlaneseq
    %v611 = vshrl.u32 %v610, 7
    %v612 = vsub.s32 3, %v611
    %v613 = vrot.slane %v596, %v612
    %v746 = vunpack.c.l.b16 %v468
    %v747 = vunpack.c.h.b16 %v468
    %v748 = vunpack.c.l.b16 %v469
    %v749 = vunpack.c.h.b16 %v469
    %v750 = vunpack.c.l.b16 %v470
    %v751 = vunpack.c.h.b16 %v470
    %v752 = vunpack.c.l.b16 %v471
    %v753 = vunpack.c.h.b16 %v471
    %v754 = vunpack.c.l.b16 %v472
    %v755 = vunpack.c.h.b16 %v472
    %v756 = vunpack.c.l.b16 %v473
    %v757 = vunpack.c.h.b16 %v473
    %v758 = vunpack.c.l.b16 %v474
    %v759 = vunpack.c.h.b16 %v474
    %v760 = vunpack.c.l.b16 %v475
    %v761 = vunpack.c.h.b16 %v475
    %v762 = vunpack.c.l.b16 %v476
    %v763 = vunpack.c.h.b16 %v476
    %v764 = vunpack.c.l.b16 %v477
    %v765 = vunpack.c.h.b16 %v477
    %v766 = vunpack.c.l.b16 %v478
    %v767 = vunpack.c.h.b16 %v478
    %v768 = vunpack.c.l.b16 %v479
    %v769 = vunpack.c.h.b16 %v479
    %v770 = vunpack.c.l.b16 %v480
    %v771 = vunpack.c.h.b16 %v480
    %v772 = vunpack.c.l.b16 %v481
    %v773 = vunpack.c.h.b16 %v481
    %v774 = vunpack.c.l.b16 %v482
    %v775 = vunpack.c.h.b16 %v482
    %v776 = vunpack.c.l.b16 %v483
    %v777 = vunpack.c.h.b16 %v483
    %v778 = vunpack.c.l.b16 %v484
    %v779 = vunpack.c.h.b16 %v484
    %v780 = vunpack.c.l.b16 %v485
    %v781 = vunpack.c.h.b16 %v485
    %v782 = vunpack.c.l.b16 %v486
    %v783 = vunpack.c.h.b16 %v486
    %v784 = vunpack.c.l.b16 %v487
    %v785 = vunpack.c.h.b16 %v487
    %v786 = vunpack.c.l.b16 %v488
    %v787 = vunpack.c.h.b16 %v488
    %v788 = vunpack.c.l.b16 %v489
    %v789 = vunpack.c.h.b16 %v489
    %v790 = vunpack.c.l.b16 %v490
    %v791 = vunpack.c.h.b16 %v490
    %v792 = vunpack.c.l.b16 %v491
    %v793 = vunpack.c.h.b16 %v491
    %v794 = vunpack.c.l.b16 %v492
    %v795 = vunpack.c.h.b16 %v492
    %v796 = vunpack.c.l.b16 %v493
    %v797 = vunpack.c.h.b16 %v493
    %v798 = vunpack.c.l.b16 %v494
    %v799 = vunpack.c.h.b16 %v494
    %v800 = vunpack.c.l.b16 %v495
    %v801 = vunpack.c.h.b16 %v495
    %v802 = vunpack.c.l.b16 %v496
    %v803 = vunpack.c.h.b16 %v496
    %v804 = vunpack.c.l.b16 %v497
    %v805 = vunpack.c.h.b16 %v497
    %v806 = vunpack.c.l.b16 %v498
    %v807 = vunpack.c.h.b16 %v498
    %v808 = vunpack.c.l.b16 %v499
    %v809 = vunpack.c.h.b16 %v499
    %v810 = vunpack.c.l.b16 %v500
    %v811 = vunpack.c.h.b16 %v500
    %v812 = vunpack.c.l.b16 %v501
    %v813 = vunpack.c.h.b16 %v501
    %v814 = vunpack.c.l.b16 %v502
    %v815 = vunpack.c.h.b16 %v502
    %v816 = vunpack.c.l.b16 %v503
    %v817 = vunpack.c.h.b16 %v503
    %v818 = vunpack.c.l.b16 %v504
    %v819 = vunpack.c.h.b16 %v504
    %v820 = vunpack.c.l.b16 %v505
    %v821 = vunpack.c.h.b16 %v505
    %v822 = vunpack.c.l.b16 %v506
    %v823 = vunpack.c.h.b16 %v506
    %v824 = vunpack.c.l.b16 %v507
    %v825 = vunpack.c.h.b16 %v507
    %v826 = vunpack.c.l.b16 %v508
    %v827 = vunpack.c.h.b16 %v508
    %v828 = vunpack.c.l.b16 %v509
    %v829 = vunpack.c.h.b16 %v509
    %v830 = vunpack.c.l.b16 %v510
    %v831 = vunpack.c.h.b16 %v510
    %v832 = vunpack.c.l.b16 %v511
    %v833 = vunpack.c.h.b16 %v511
    %v834 = vunpack.c.l.b16 %v512
    %v835 = vunpack.c.h.b16 %v512
    %v836 = vunpack.c.l.b16 %v513
    %v837 = vunpack.c.h.b16 %v513
    %v838 = vunpack.c.l.b16 %v514
    %v839 = vunpack.c.h.b16 %v514
    %v840 = vunpack.c.l.b16 %v515
    %v841 = vunpack.c.h.b16 %v515
    %v842 = vunpack.c.l.b16 %v516
    %v843 = vunpack.c.h.b16 %v516
    %v844 = vunpack.c.l.b16 %v517
    %v845 = vunpack.c.h.b16 %v517
    %v846 = vunpack.c.l.b16 %v518
    %v847 = vunpack.c.h.b16 %v518
    %v848 = vunpack.c.l.b16 %v519
    %v849 = vunpack.c.h.b16 %v519
    %v850 = vunpack.c.l.b16 %v520
    %v851 = vunpack.c.h.b16 %v520
    %v852 = vunpack.c.l.b16 %v521
    %v853 = vunpack.c.h.b16 %v521
    %v854 = vunpack.c.l.b16 %v522
    %v855 = vunpack.c.h.b16 %v522
    %v856 = vunpack.c.l.b16 %v523
    %v857 = vunpack.c.h.b16 %v523
    %v858 = vunpack.c.l.b16 %v524
    %v859 = vunpack.c.h.b16 %v524
    %v860 = vunpack.c.l.b16 %v525
    %v861 = vunpack.c.h.b16 %v525
    %v862 = vunpack.c.l.b16 %v526
    %v863 = vunpack.c.h.b16 %v526
    %v864 = vunpack.c.l.b16 %v527
    %v865 = vunpack.c.h.b16 %v527
    %v866 = vunpack.c.l.b16 %v528
    %v867 = vunpack.c.h.b16 %v528
    %v868 = vunpack.c.l.b16 %v529
    %v869 = vunpack.c.h.b16 %v529
    %v870 = vunpack.c.l.b16 %v530
    %v871 = vunpack.c.h.b16 %v530
    %v872 = vunpack.c.l.b16 %v531
    %v873 = vunpack.c.h.b16 %v531
    %v874 = vunpack.c.l.b16 %v532
    %v875 = vunpack.c.h.b16 %v532
    %v876 = vunpack.c.l.b16 %v533
    %v877 = vunpack.c.h.b16 %v533
    %v878 = vunpack.c.l.b16 %v534
    %v879 = vunpack.c.h.b16 %v534
    %v880 = vunpack.c.l.b16 %v535
    %v881 = vunpack.c.h.b16 %v535
    %v882 = vunpack.c.l.b16 %v536
    %v883 = vunpack.c.h.b16 %v536
    %v884 = vunpack.c.l.b16 %v537
    %v885 = vunpack.c.h.b16 %v537
    %v886 = vunpack.c.l.b16 %v538
    %v887 = vunpack.c.h.b16 %v538
    %v888 = vunpack.c.l.b16 %v539
    %v889 = vunpack.c.h.b16 %v539
    %v890 = vunpack.c.l.b16 %v540
    %v891 = vunpack.c.h.b16 %v540
    %v892 = vunpack.c.l.b16 %v541
    %v893 = vunpack.c.h.b16 %v541
    %v894 = vunpack.c.l.b16 %v542
    %v895 = vunpack.c.h.b16 %v542
    %v896 = vunpack.c.l.b16 %v543
    %v897 = vunpack.c.h.b16 %v543
    %v898 = vunpack.c.l.b16 %v544
    %v899 = vunpack.c.h.b16 %v544
    %v900 = vunpack.c.l.b16 %v545
    %v901 = vunpack.c.h.b16 %v545
    %v902 = vunpack.c.l.b16 %v546
    %v903 = vunpack.c.h.b16 %v546
    %v904 = vunpack.c.l.b16 %v547
    %v905 = vunpack.c.h.b16 %v547
    %v906 = vunpack.c.l.b16 %v548
    %v907 = vunpack.c.h.b16 %v548
    %v908 = vunpack.c.l.b16 %v549
    %v909 = vunpack.c.h.b16 %v549
    %v910 = vunpack.c.l.b16 %v550
    %v911 = vunpack.c.h.b16 %v550
    %v912 = vunpack.c.l.b16 %v551
    %v913 = vunpack.c.h.b16 %v551
    %v914 = vunpack.c.l.b16 %v552
    %v915 = vunpack.c.h.b16 %v552
    %v916 = vunpack.c.l.b16 %v553
    %v917 = vunpack.c.h.b16 %v553
    %v918 = vunpack.c.l.b16 %v554
    %v919 = vunpack.c.h.b16 %v554
    %v920 = vunpack.c.l.b16 %v555
    %v921 = vunpack.c.h.b16 %v555
    %v922 = vunpack.c.l.b16 %v556
    %v923 = vunpack.c.h.b16 %v556
    %v924 = vunpack.c.l.b16 %v557
    %v925 = vunpack.c.h.b16 %v557
    %v926 = vunpack.c.l.b16 %v558
    %v927 = vunpack.c.h.b16 %v558
    %v928 = vunpack.c.l.b16 %v559
    %v929 = vunpack.c.h.b16 %v559
    %v930 = vunpack.c.l.b16 %v560
    %v931 = vunpack.c.h.b16 %v560
    %v932 = vunpack.c.l.b16 %v561
    %v933 = vunpack.c.h.b16 %v561
    %v934 = vunpack.c.l.b16 %v562
    %v935 = vunpack.c.h.b16 %v562
    %v936 = vunpack.c.l.b16 %v563
    %v937 = vunpack.c.h.b16 %v563
    %v938 = vunpack.c.l.b16 %v564
    %v939 = vunpack.c.h.b16 %v564
    %v940 = vunpack.c.l.b16 %v565
    %v941 = vunpack.c.h.b16 %v565
    %v942 = vunpack.c.l.b16 %v566
    %v943 = vunpack.c.h.b16 %v566
    %v944 = vunpack.c.l.b16 %v567
    %v945 = vunpack.c.h.b16 %v567
    %v946 = vunpack.c.l.b16 %v568
    %v947 = vunpack.c.h.b16 %v568
    %v948 = vunpack.c.l.b16 %v569
    %v949 = vunpack.c.h.b16 %v569
    %v950 = vunpack.c.l.b16 %v570
    %v951 = vunpack.c.h.b16 %v570
    %v952 = vunpack.c.l.b16 %v571
    %v953 = vunpack.c.h.b16 %v571
    %v954 = vunpack.c.l.b16 %v572
    %v955 = vunpack.c.h.b16 %v572
    %v956 = vunpack.c.l.b16 %v573
    %v957 = vunpack.c.h.b16 %v573
    %v958 = vunpack.c.l.b16 %v574
    %v959 = vunpack.c.h.b16 %v574
    %v960 = vunpack.c.l.b16 %v575
    %v961 = vunpack.c.h.b16 %v575
    %v962 = vunpack.c.l.b16 %v576
    %v963 = vunpack.c.h.b16 %v576
    %v964 = vunpack.c.l.b16 %v577
    %v965 = vunpack.c.h.b16 %v577
    %v966 = vunpack.c.l.b16 %v578
    %v967 = vunpack.c.h.b16 %v578
    %v968 = vunpack.c.l.b16 %v579
    %v969 = vunpack.c.h.b16 %v579
    %v970 = vunpack.c.l.b16 %v580
    %v971 = vunpack.c.h.b16 %v580
    %v972 = vunpack.c.l.b16 %v581
    %v973 = vunpack.c.h.b16 %v581
    %v974 = vunpack.c.l.b16 %v582
    %v975 = vunpack.c.h.b16 %v582
    %v976 = vunpack.c.l.b16 %v583
    %v977 = vunpack.c.h.b16 %v583
    %v978 = vunpack.c.l.b16 %v584
    %v979 = vunpack.c.h.b16 %v584
    %v980 = vunpack.c.l.b16 %v585
    %v981 = vunpack.c.h.b16 %v585
    %v982 = vunpack.c.l.b16 %v586
    %v983 = vunpack.c.h.b16 %v586
    %v984 = vunpack.c.l.b16 %v587
    %v985 = vunpack.c.h.b16 %v587
    %v986 = vunpack.c.l.b16 %v588
    %v987 = vunpack.c.h.b16 %v588
    %v988 = vunpack.c.l.b16 %v589
    %v989 = vunpack.c.h.b16 %v589
    %v990 = vunpack.c.l.b16 %v590
    %v991 = vunpack.c.h.b16 %v590
    %v992 = vunpack.c.l.b16 %v591
    %v993 = vunpack.c.h.b16 %v591
    %v994 = vunpack.c.l.b16 %v592
    %v995 = vunpack.c.h.b16 %v592
    %v996 = vunpack.c.l.b16 %v593
    %v997 = vunpack.c.h.b16 %v593
    %v998 = vunpack.c.l.b16 %v594
    %v999 = vunpack.c.h.b16 %v594
    %v1000 = vunpack.c.l.b16 %v595
    %v1001 = vunpack.c.h.b16 %v595
    %v1002 = vpack.c.b16 %v750, %v746
    %v1003 = vpack.c.b16 %v751, %v747
    %v1004 = vpack.c.b16 %v752, %v748
    %v1005 = vpack.c.b16 %v753, %v749
    %v1006 = vpack.c.b16 %v758, %v754
    %v1007 = vpack.c.b16 %v759, %v755
    %v1008 = vpack.c.b16 %v760, %v756
    %v1009 = vpack.c.b16 %v761, %v757
    %v1010 = vpack.c.b16 %v766, %v762
    %v1011 = vpack.c.b16 %v767, %v763
    %v1012 = vpack.c.b16 %v768, %v764
    %v1013 = vpack.c.b16 %v769, %v765
    %v1014 = vpack.c.b16 %v774, %v770
    %v1015 = vpack.c.b16 %v775, %v771
    %v1016 = vpack.c.b16 %v776, %v772
    %v1017 = vpack.c.b16 %v777, %v773
    %v1018 = vpack.c.b16 %v782, %v778
    %v1019 = vpack.c.b16 %v783, %v779
    %v1020 = vpack.c.b16 %v784, %v780
    %v1021 = vpack.c.b16 %v785, %v781
    %v1022 = vpack.c.b16 %v790, %v786
    %v1023 = vpack.c.b16 %v791, %v787
    %v1024 = vpack.c.b16 %v792, %v788
    %v1025 = vpack.c.b16 %v793, %v789
    %v1026 = vpack.c.b16 %v798, %v794
    %v1027 = vpack.c.b16 %v799, %v795
    %v1028 = vpack.c.b16 %v800, %v796
    %v1029 = vpack.c.b16 %v801, %v797
    %v1030 = vpack.c.b16 %v806, %v802
    %v1031 = vpack.c.b16 %v807, %v803
    %v1032 = vpack.c.b16 %v808, %v804
    %v1033 = vpack.c.b16 %v809, %v805
    %v1034 = vpack.c.b16 %v814, %v810
    %v1035 = vpack.c.b16 %v815, %v811
    %v1036 = vpack.c.b16 %v816, %v812
    %v1037 = vpack.c.b16 %v817, %v813
    %v1038 = vpack.c.b16 %v822, %v818
    %v1039 = vpack.c.b16 %v823, %v819
    %v1040 = vpack.c.b16 %v824, %v820
    %v1041 = vpack.c.b16 %v825, %v821
    %v1042 = vpack.c.b16 %v830, %v826
    %v1043 = vpack.c.b16 %v831, %v827
    %v1044 = vpack.c.b16 %v832, %v828
    %v1045 = vpack.c.b16 %v833, %v829
    %v1046 = vpack.c.b16 %v838, %v834
    %v1047 = vpack.c.b16 %v839, %v835
    %v1048 = vpack.c.b16 %v840, %v836
    %v1049 = vpack.c.b16 %v841, %v837
    %v1050 = vpack.c.b16 %v846, %v842
    %v1051 = vpack.c.b16 %v847, %v843
    %v1052 = vpack.c.b16 %v848, %v844
    %v1053 = vpack.c.b16 %v849, %v845
    %v1054 = vpack.c.b16 %v854, %v850
    %v1055 = vpack.c.b16 %v855, %v851
    %v1056 = vpack.c.b16 %v856, %v852
    %v1057 = vpack.c.b16 %v857, %v853
    %v1058 = vpack.c.b16 %v862, %v858
    %v1059 = vpack.c.b16 %v863, %v859
    %v1060 = vpack.c.b16 %v864, %v860
    %v1061 = vpack.c.b16 %v865, %v861
    %v1062 = vpack.c.b16 %v870, %v866
    %v1063 = vpack.c.b16 %v871, %v867
    %v1064 = vpack.c.b16 %v872, %v868
    %v1065 = vpack.c.b16 %v873, %v869
    %v1066 = vpack.c.b16 %v878, %v874
    %v1067 = vpack.c.b16 %v879, %v875
    %v1068 = vpack.c.b16 %v880, %v876
    %v1069 = vpack.c.b16 %v881, %v877
    %v1070 = vpack.c.b16 %v886, %v882
    %v1071 = vpack.c.b16 %v887, %v883
    %v1072 = vpack.c.b16 %v888, %v884
    %v1073 = vpack.c.b16 %v889, %v885
    %v1074 = vpack.c.b16 %v894, %v890
    %v1075 = vpack.c.b16 %v895, %v891
    %v1076 = vpack.c.b16 %v896, %v892
    %v1077 = vpack.c.b16 %v897, %v893
    %v1078 = vpack.c.b16 %v902, %v898
    %v1079 = vpack.c.b16 %v903, %v899
    %v1080 = vpack.c.b16 %v904, %v900
    %v1081 = vpack.c.b16 %v905, %v901
    %v1082 = vpack.c.b16 %v910, %v906
    %v1083 = vpack.c.b16 %v911, %v907
    %v1084 = vpack.c.b16 %v912, %v908
    %v1085 = vpack.c.b16 %v913, %v909
    %v1086 = vpack.c.b16 %v918, %v914
    %v1087 = vpack.c.b16 %v919, %v915
    %v1088 = vpack.c.b16 %v920, %v916
    %v1089 = vpack.c.b16 %v921, %v917
    %v1090 = vpack.c.b16 %v926, %v922
    %v1091 = vpack.c.b16 %v927, %v923
    %v1092 = vpack.c.b16 %v928, %v924
    %v1093 = vpack.c.b16 %v929, %v925
    %v1094 = vpack.c.b16 %v934, %v930
    %v1095 = vpack.c.b16 %v935, %v931
    %v1096 = vpack.c.b16 %v936, %v932
    %v1097 = vpack.c.b16 %v937, %v933
    %v1098 = vpack.c.b16 %v942, %v938
    %v1099 = vpack.c.b16 %v943, %v939
    %v1100 = vpack.c.b16 %v944, %v940
    %v1101 = vpack.c.b16 %v945, %v941
    %v1102 = vpack.c.b16 %v950, %v946
    %v1103 = vpack.c.b16 %v951, %v947
    %v1104 = vpack.c.b16 %v952, %v948
    %v1105 = vpack.c.b16 %v953, %v949
    %v1106 = vpack.c.b16 %v958, %v954
    %v1107 = vpack.c.b16 %v959, %v955
    %v1108 = vpack.c.b16 %v960, %v956
    %v1109 = vpack.c.b16 %v961, %v957
    %v1110 = vpack.c.b16 %v966, %v962
    %v1111 = vpack.c.b16 %v967, %v963
    %v1112 = vpack.c.b16 %v968, %v964
    %v1113 = vpack.c.b16 %v969, %v965
    %v1114 = vpack.c.b16 %v974, %v970
    %v1115 = vpack.c.b16 %v975, %v971
    %v1116 = vpack.c.b16 %v976, %v972
    %v1117 = vpack.c.b16 %v977, %v973
    %v1118 = vpack.c.b16 %v982, %v978
    %v1119 = vpack.c.b16 %v983, %v979
    %v1120 = vpack.c.b16 %v984, %v980
    %v1121 = vpack.c.b16 %v985, %v981
    %v1122 = vpack.c.b16 %v990, %v986
    %v1123 = vpack.c.b16 %v991, %v987
    %v1124 = vpack.c.b16 %v992, %v988
    %v1125 = vpack.c.b16 %v993, %v989
    %v1126 = vpack.c.b16 %v998, %v994
    %v1127 = vpack.c.b16 %v999, %v995
    %v1128 = vpack.c.b16 %v1000, %v996
    %v1129 = vpack.c.b16 %v1001, %v997
    %1258 = vmatprep.subr.bf16.mxu0 %v1003
    %1259 = vmatpush1.bf16.msra.mxu0 %v1002
    %1260 = vmatprep.subr.bf16.mxu0 %v1007
    %1261 = vmatpush1.bf16.msra.mxu0 %v1006
    %1262 = vmatprep.subr.bf16.mxu0 %v1011
    %1263 = vmatpush1.bf16.msra.mxu0 %v1010
    %1264 = vmatprep.subr.bf16.mxu0 %v1015
    %1265 = vmatpush1.bf16.msra.mxu0 %v1014
    %1266 = vmatprep.subr.bf16.mxu0 %v1019
    %1267 = vmatpush1.bf16.msra.mxu0 %v1018
    %1268 = vmatprep.subr.bf16.mxu0 %v1023
    %1269 = vmatpush1.bf16.msra.mxu0 %v1022
    %1270 = vmatprep.subr.bf16.mxu0 %v1027
    %1271 = vmatpush1.bf16.msra.mxu0 %v1026
    %1272 = vmatprep.subr.bf16.mxu0 %v1031
    %1273 = vmatpush1.bf16.msra.mxu0 %v1030
    %1274 = vmatprep.subr.bf16.mxu0 %v1035
    %1275 = vmatpush1.bf16.msra.mxu0 %v1034
    %1276 = vmatprep.subr.bf16.mxu0 %v1039
    %1277 = vmatpush1.bf16.msra.mxu0 %v1038
    %1278 = vmatprep.subr.bf16.mxu0 %v1043
    %1279 = vmatpush1.bf16.msra.mxu0 %v1042
    %1280 = vmatprep.subr.bf16.mxu0 %v1047
    %1281 = vmatpush1.bf16.msra.mxu0 %v1046
    %1282 = vmatprep.subr.bf16.mxu0 %v1051
    %1283 = vmatpush1.bf16.msra.mxu0 %v1050
    %1284 = vmatprep.subr.bf16.mxu0 %v1055
    %1285 = vmatpush1.bf16.msra.mxu0 %v1054
    %1286 = vmatprep.subr.bf16.mxu0 %v1059
    %1287 = vmatpush1.bf16.msra.mxu0 %v1058
    %1288 = vmatprep.subr.bf16.mxu0 %v1063
    %1289 = vmatpush1.bf16.msra.mxu0 %v1062
    %1290 = vmatprep.mubr.bf16.mxu0 %v465
    %1291 = vmatmul.mubr.bf16.gmra.mrb[0].mxu0 %v464
    %v1292 = vpop.f32.mrb[0].mxu0
    %v1293 = vadd.f32 %v601, %v1292
    %v1294 = vpop.f32.mrb[0].mxu0
    %v1295 = vadd.f32 %v605, %v1294
    %v1296 = vpop.f32.mrb[0].mxu0
    %v1297 = vadd.f32 %v601, %v1296
    %v1298 = vpop.f32.mrb[0].mxu0
    %v1299 = vadd.f32 %v605, %v1298
    %1300 = vdwg.mxu0
    %1301 = vmatprep.subr.bf16.mxu0 %v1067
    %1302 = vmatpush1.bf16.msra.mxu0 %v1066
    %1303 = vmatprep.subr.bf16.mxu0 %v1071
    %1304 = vmatpush1.bf16.msra.mxu0 %v1070
    %1305 = vmatprep.subr.bf16.mxu0 %v1075
    %1306 = vmatpush1.bf16.msra.mxu0 %v1074
    %1307 = vmatprep.subr.bf16.mxu0 %v1079
    %1308 = vmatpush1.bf16.msra.mxu0 %v1078
    %1309 = vmatprep.subr.bf16.mxu0 %v1083
    %1310 = vmatpush1.bf16.msra.mxu0 %v1082
    %1311 = vmatprep.subr.bf16.mxu0 %v1087
    %1312 = vmatpush1.bf16.msra.mxu0 %v1086
    %1313 = vmatprep.subr.bf16.mxu0 %v1091
    %1314 = vmatpush1.bf16.msra.mxu0 %v1090
    %1315 = vmatprep.subr.bf16.mxu0 %v1095
    %1316 = vmatpush1.bf16.msra.mxu0 %v1094
    %1317 = vmatprep.subr.bf16.mxu0 %v1099
    %1318 = vmatpush1.bf16.msra.mxu0 %v1098
    %1319 = vmatprep.subr.bf16.mxu0 %v1103
    %1320 = vmatpush1.bf16.msra.mxu0 %v1102
    %1321 = vmatprep.subr.bf16.mxu0 %v1107
    %1322 = vmatpush1.bf16.msra.mxu0 %v1106
    %1323 = vmatprep.subr.bf16.mxu0 %v1111
    %1324 = vmatpush1.bf16.msra.mxu0 %v1110
    %1325 = vmatprep.subr.bf16.mxu0 %v1115
    %1326 = vmatpush1.bf16.msra.mxu0 %v1114
    %1327 = vmatprep.subr.bf16.mxu0 %v1119
    %1328 = vmatpush1.bf16.msra.mxu0 %v1118
    %1329 = vmatprep.subr.bf16.mxu0 %v1123
    %1330 = vmatpush1.bf16.msra.mxu0 %v1122
    %1331 = vmatprep.subr.bf16.mxu0 %v1127
    %1332 = vmatpush1.bf16.msra.mxu0 %v1126
    %1333 = vmatprep.mubr.bf16.mxu0 %v467
    %1334 = vmatmul.mubr.bf16.gmra.mrb[0].mxu0 %v466
    %v1335 = vpop.f32.mrb[0].mxu0
    %v1336 = vadd.f32 %v1293, %v1335
    %v1337 = vpop.f32.mrb[0].mxu0
    %v1338 = vadd.f32 %v1295, %v1337
    %v1339 = vpop.f32.mrb[0].mxu0
    %v1340 = vadd.f32 %v1297, %v1339
    %v1341 = vpop.f32.mrb[0].mxu0
    %v1342 = vadd.f32 %v1299, %v1341
    %1343 = vdwg.mxu0
    %1344 = vmatprep.subr.bf16.mxu0 %v1005
    %1345 = vmatpush1.bf16.msra.mxu0 %v1004
    %1346 = vmatprep.subr.bf16.mxu0 %v1009
    %1347 = vmatpush1.bf16.msra.mxu0 %v1008
    %1348 = vmatprep.subr.bf16.mxu0 %v1013
    %1349 = vmatpush1.bf16.msra.mxu0 %v1012
    %1350 = vmatprep.subr.bf16.mxu0 %v1017
    %1351 = vmatpush1.bf16.msra.mxu0 %v1016
    %1352 = vmatprep.subr.bf16.mxu0 %v1021
    %1353 = vmatpush1.bf16.msra.mxu0 %v1020
    %1354 = vmatprep.subr.bf16.mxu0 %v1025
    %1355 = vmatpush1.bf16.msra.mxu0 %v1024
    %1356 = vmatprep.subr.bf16.mxu0 %v1029
    %1357 = vmatpush1.bf16.msra.mxu0 %v1028
    %1358 = vmatprep.subr.bf16.mxu0 %v1033
    %1359 = vmatpush1.bf16.msra.mxu0 %v1032
    %1360 = vmatprep.subr.bf16.mxu0 %v1037
    %1361 = vmatpush1.bf16.msra.mxu0 %v1036
    %1362 = vmatprep.subr.bf16.mxu0 %v1041
    %1363 = vmatpush1.bf16.msra.mxu0 %v1040
    %1364 = vmatprep.subr.bf16.mxu0 %v1045
    %1365 = vmatpush1.bf16.msra.mxu0 %v1044
    %1366 = vmatprep.subr.bf16.mxu0 %v1049
    %1367 = vmatpush1.bf16.msra.mxu0 %v1048
    %1368 = vmatprep.subr.bf16.mxu0 %v1053
    %1369 = vmatpush1.bf16.msra.mxu0 %v1052
    %1370 = vmatprep.subr.bf16.mxu0 %v1057
    %1371 = vmatpush1.bf16.msra.mxu0 %v1056
    %1372 = vmatprep.subr.bf16.mxu0 %v1061
    %1373 = vmatpush1.bf16.msra.mxu0 %v1060
    %1374 = vmatprep.subr.bf16.mxu0 %v1065
    %1375 = vmatpush1.bf16.msra.mxu0 %v1064
    %1376 = vmatprep.mubr.bf16.mxu0 %v465
    %1377 = vmatmul.mubr.bf16.gmra.mrb[0].mxu0 %v464
    %v1378 = vpop.f32.mrb[0].mxu0
    %v1379 = vadd.f32 %v609, %v1378
    %v1380 = vpop.f32.mrb[0].mxu0
    %v1381 = vadd.f32 %v613, %v1380
    %v1382 = vpop.f32.mrb[0].mxu0
    %v1383 = vadd.f32 %v609, %v1382
    %v1384 = vpop.f32.mrb[0].mxu0
    %v1385 = vadd.f32 %v613, %v1384
    %1386 = vdwg.mxu0
    %1387 = vmatprep.subr.bf16.mxu0 %v1069
    %1388 = vmatpush1.bf16.msra.mxu0 %v1068
    %1389 = vmatprep.subr.bf16.mxu0 %v1073
    %1390 = vmatpush1.bf16.msra.mxu0 %v1072
    %1391 = vmatprep.subr.bf16.mxu0 %v1077
    %1392 = vmatpush1.bf16.msra.mxu0 %v1076
    %1393 = vmatprep.subr.bf16.mxu0 %v1081
    %1394 = vmatpush1.bf16.msra.mxu0 %v1080
    %1395 = vmatprep.subr.bf16.mxu0 %v1085
    %1396 = vmatpush1.bf16.msra.mxu0 %v1084
    %1397 = vmatprep.subr.bf16.mxu0 %v1089
    %1398 = vmatpush1.bf16.msra.mxu0 %v1088
    %1399 = vmatprep.subr.bf16.mxu0 %v1093
    %1400 = vmatpush1.bf16.msra.mxu0 %v1092
    %1401 = vmatprep.subr.bf16.mxu0 %v1097
    %1402 = vmatpush1.bf16.msra.mxu0 %v1096
    %1403 = vmatprep.subr.bf16.mxu0 %v1101
    %1404 = vmatpush1.bf16.msra.mxu0 %v1100
    %1405 = vmatprep.subr.bf16.mxu0 %v1105
    %1406 = vmatpush1.bf16.msra.mxu0 %v1104
    %1407 = vmatprep.subr.bf16.mxu0 %v1109
    %1408 = vmatpush1.bf16.msra.mxu0 %v1108
    %1409 = vmatprep.subr.bf16.mxu0 %v1113
    %1410 = vmatpush1.bf16.msra.mxu0 %v1112
    %1411 = vmatprep.subr.bf16.mxu0 %v1117
    %1412 = vmatpush1.bf16.msra.mxu0 %v1116
    %1413 = vmatprep.subr.bf16.mxu0 %v1121
    %1414 = vmatpush1.bf16.msra.mxu0 %v1120
    %1415 = vmatprep.subr.bf16.mxu0 %v1125
    %1416 = vmatpush1.bf16.msra.mxu0 %v1124
    %1417 = vmatprep.subr.bf16.mxu0 %v1129
    %1418 = vmatpush1.bf16.msra.mxu0 %v1128
    %1419 = vmatprep.mubr.bf16.mxu0 %v467
    %1420 = vmatmul.mubr.bf16.gmra.mrb[0].mxu0 %v466
    %v1421 = vpop.f32.mrb[0].mxu0
    %v1422 = vadd.f32 %v1379, %v1421
    %v1423 = vpop.f32.mrb[0].mxu0
    %v1424 = vadd.f32 %v1381, %v1423
    %v1425 = vpop.f32.mrb[0].mxu0
    %v1426 = vadd.f32 %v1383, %v1425
    %v1427 = vpop.f32.mrb[0].mxu0
    %v1428 = vadd.f32 %v1385, %v1427
    %1429 = vdwg.mxu0
    %v1430 = vmax.f32 %v1336, 0.0
    %v1431 = vmax.f32 %v1338, 0.0
    %v1432 = vmax.f32 %v1422, 0.0
    %v1433 = vmax.f32 %v1424, 0.0
    %v1434 = vmax.f32 %v1340, 0.0
    %v1435 = vmax.f32 %v1342, 0.0
    %v1436 = vmax.f32 %v1426, 0.0
    %v1437 = vmax.f32 %v1428, 0.0
    %v1438 = vpack.c.bf16 %v1434, %v1430
    %v1439 = vpack.c.bf16 %v1435, %v1431
    %v1440 = vpack.c.bf16 %v1436, %v1432
    %v1441 = vpack.c.bf16 %v1437, %v1433
    %1442 = vst [vmem:[#allocation2] sm:$0xff] 0.0
    %1443 = vst [vmem:[#allocation2 + $0x8] sm:$0xff] 0.0
    %v1444 = vld [vmem:[#allocation12] sm:$0xff]
    %v1445 = vld [vmem:[#allocation12 + $0x8] sm:$0xff]
    %v1446 = vld [vmem:[#allocation12 + $0x40] sm:$0xff]
    %v1447 = vld [vmem:[#allocation12 + $0x48] sm:$0xff]
    %v1448 = vld [vmem:[#allocation12 + $0x80] sm:$0xff]
    %v1449 = vld [vmem:[#allocation12 + $0x88] sm:$0xff]
    %v1450 = vld [vmem:[#allocation12 + $0xc0] sm:$0xff]
    %v1451 = vld [vmem:[#allocation12 + $0xc8] sm:$0xff]
    %v1452 = vld [vmem:[#allocation12 + $0x100] sm:$0xff]
    %v1453 = vld [vmem:[#allocation12 + $0x108] sm:$0xff]
    %v1454 = vld [vmem:[#allocation12 + $0x140] sm:$0xff]
    %v1455 = vld [vmem:[#allocation12 + $0x148] sm:$0xff]
    %v1456 = vld [vmem:[#allocation12 + $0x180] sm:$0xff]
    %v1457 = vld [vmem:[#allocation12 + $0x188] sm:$0xff]
    %v1458 = vld [vmem:[#allocation12 + $0x1c0] sm:$0xff]
    %v1459 = vld [vmem:[#allocation12 + $0x1c8] sm:$0xff]
    %v1460 = vld [vmem:[#allocation12 + $0x200] sm:$0xff]
    %v1461 = vld [vmem:[#allocation12 + $0x208] sm:$0xff]
    %v1462 = vld [vmem:[#allocation12 + $0x240] sm:$0xff]
    %v1463 = vld [vmem:[#allocation12 + $0x248] sm:$0xff]
    %v1464 = vld [vmem:[#allocation12 + $0x280] sm:$0xff]
    %v1465 = vld [vmem:[#allocation12 + $0x288] sm:$0xff]
    %v1466 = vld [vmem:[#allocation12 + $0x2c0] sm:$0xff]
    %v1467 = vld [vmem:[#allocation12 + $0x2c8] sm:$0xff]
    %v1468 = vld [vmem:[#allocation12 + $0x300] sm:$0xff]
    %v1469 = vld [vmem:[#allocation12 + $0x308] sm:$0xff]
    %v1470 = vld [vmem:[#allocation12 + $0x340] sm:$0xff]
    %v1471 = vld [vmem:[#allocation12 + $0x348] sm:$0xff]
    %v1472 = vld [vmem:[#allocation12 + $0x380] sm:$0xff]
    %v1473 = vld [vmem:[#allocation12 + $0x388] sm:$0xff]
    %v1474 = vld [vmem:[#allocation12 + $0x3c0] sm:$0xff]
    %v1475 = vld [vmem:[#allocation12 + $0x3c8] sm:$0xff]
    %v1476 = vld [vmem:[#allocation12 + $0x400] sm:$0xff]
    %v1477 = vld [vmem:[#allocation12 + $0x408] sm:$0xff]
    %v1478 = vld [vmem:[#allocation12 + $0x440] sm:$0xff]
    %v1479 = vld [vmem:[#allocation12 + $0x448] sm:$0xff]
    %v1480 = vld [vmem:[#allocation12 + $0x480] sm:$0xff]
    %v1481 = vld [vmem:[#allocation12 + $0x488] sm:$0xff]
    %v1482 = vld [vmem:[#allocation12 + $0x4c0] sm:$0xff]
    %v1483 = vld [vmem:[#allocation12 + $0x4c8] sm:$0xff]
    %v1484 = vld [vmem:[#allocation12 + $0x500] sm:$0xff]
    %v1485 = vld [vmem:[#allocation12 + $0x508] sm:$0xff]
    %v1486 = vld [vmem:[#allocation12 + $0x540] sm:$0xff]
    %v1487 = vld [vmem:[#allocation12 + $0x548] sm:$0xff]
    %v1488 = vld [vmem:[#allocation12 + $0x580] sm:$0xff]
    %v1489 = vld [vmem:[#allocation12 + $0x588] sm:$0xff]
    %v1490 = vld [vmem:[#allocation12 + $0x5c0] sm:$0xff]
    %v1491 = vld [vmem:[#allocation12 + $0x5c8] sm:$0xff]
    %v1492 = vld [vmem:[#allocation12 + $0x600] sm:$0xff]
    %v1493 = vld [vmem:[#allocation12 + $0x608] sm:$0xff]
    %v1494 = vld [vmem:[#allocation12 + $0x640] sm:$0xff]
    %v1495 = vld [vmem:[#allocation12 + $0x648] sm:$0xff]
    %v1496 = vld [vmem:[#allocation12 + $0x680] sm:$0xff]
    %v1497 = vld [vmem:[#allocation12 + $0x688] sm:$0xff]
    %v1498 = vld [vmem:[#allocation12 + $0x6c0] sm:$0xff]
    %v1499 = vld [vmem:[#allocation12 + $0x6c8] sm:$0xff]
    %v1500 = vld [vmem:[#allocation12 + $0x700] sm:$0xff]
    %v1501 = vld [vmem:[#allocation12 + $0x708] sm:$0xff]
    %v1502 = vld [vmem:[#allocation12 + $0x740] sm:$0xff]
    %v1503 = vld [vmem:[#allocation12 + $0x748] sm:$0xff]
    %v1504 = vld [vmem:[#allocation12 + $0x780] sm:$0xff]
    %v1505 = vld [vmem:[#allocation12 + $0x788] sm:$0xff]
    %v1506 = vld [vmem:[#allocation12 + $0x7c0] sm:$0xff]
    %v1507 = vld [vmem:[#allocation12 + $0x7c8] sm:$0xff]
    %v1508 = vld [vmem:[#allocation12 + $0x800] sm:$0xff]
    %v1509 = vld [vmem:[#allocation12 + $0x808] sm:$0xff]
    %v1510 = vld [vmem:[#allocation12 + $0x840] sm:$0xff]
    %v1511 = vld [vmem:[#allocation12 + $0x848] sm:$0xff]
    %v1512 = vld [vmem:[#allocation12 + $0x880] sm:$0xff]
    %v1513 = vld [vmem:[#allocation12 + $0x888] sm:$0xff]
    %v1514 = vld [vmem:[#allocation12 + $0x8c0] sm:$0xff]
    %v1515 = vld [vmem:[#allocation12 + $0x8c8] sm:$0xff]
    %v1516 = vld [vmem:[#allocation12 + $0x900] sm:$0xff]
    %v1517 = vld [vmem:[#allocation12 + $0x908] sm:$0xff]
    %v1518 = vld [vmem:[#allocation12 + $0x940] sm:$0xff]
    %v1519 = vld [vmem:[#allocation12 + $0x948] sm:$0xff]
    %v1520 = vld [vmem:[#allocation12 + $0x980] sm:$0xff]
    %v1521 = vld [vmem:[#allocation12 + $0x988] sm:$0xff]
    %v1522 = vld [vmem:[#allocation12 + $0x9c0] sm:$0xff]
    %v1523 = vld [vmem:[#allocation12 + $0x9c8] sm:$0xff]
    %v1524 = vld [vmem:[#allocation12 + $0xa00] sm:$0xff]
    %v1525 = vld [vmem:[#allocation12 + $0xa08] sm:$0xff]
    %v1526 = vld [vmem:[#allocation12 + $0xa40] sm:$0xff]
    %v1527 = vld [vmem:[#allocation12 + $0xa48] sm:$0xff]
    %v1528 = vld [vmem:[#allocation12 + $0xa80] sm:$0xff]
    %v1529 = vld [vmem:[#allocation12 + $0xa88] sm:$0xff]
    %v1530 = vld [vmem:[#allocation12 + $0xac0] sm:$0xff]
    %v1531 = vld [vmem:[#allocation12 + $0xac8] sm:$0xff]
    %v1532 = vld [vmem:[#allocation12 + $0xb00] sm:$0xff]
    %v1533 = vld [vmem:[#allocation12 + $0xb08] sm:$0xff]
    %v1534 = vld [vmem:[#allocation12 + $0xb40] sm:$0xff]
    %v1535 = vld [vmem:[#allocation12 + $0xb48] sm:$0xff]
    %v1536 = vld [vmem:[#allocation12 + $0xb80] sm:$0xff]
    %v1537 = vld [vmem:[#allocation12 + $0xb88] sm:$0xff]
    %v1538 = vld [vmem:[#allocation12 + $0xbc0] sm:$0xff]
    %v1539 = vld [vmem:[#allocation12 + $0xbc8] sm:$0xff]
    %v1540 = vld [vmem:[#allocation12 + $0xc00] sm:$0xff]
    %v1541 = vld [vmem:[#allocation12 + $0xc08] sm:$0xff]
    %v1542 = vld [vmem:[#allocation12 + $0xc40] sm:$0xff]
    %v1543 = vld [vmem:[#allocation12 + $0xc48] sm:$0xff]
    %v1544 = vld [vmem:[#allocation12 + $0xc80] sm:$0xff]
    %v1545 = vld [vmem:[#allocation12 + $0xc88] sm:$0xff]
    %v1546 = vld [vmem:[#allocation12 + $0xcc0] sm:$0xff]
    %v1547 = vld [vmem:[#allocation12 + $0xcc8] sm:$0xff]
    %v1548 = vld [vmem:[#allocation12 + $0xd00] sm:$0xff]
    %v1549 = vld [vmem:[#allocation12 + $0xd08] sm:$0xff]
    %v1550 = vld [vmem:[#allocation12 + $0xd40] sm:$0xff]
    %v1551 = vld [vmem:[#allocation12 + $0xd48] sm:$0xff]
    %v1552 = vld [vmem:[#allocation12 + $0xd80] sm:$0xff]
    %v1553 = vld [vmem:[#allocation12 + $0xd88] sm:$0xff]
    %v1554 = vld [vmem:[#allocation12 + $0xdc0] sm:$0xff]
    %v1555 = vld [vmem:[#allocation12 + $0xdc8] sm:$0xff]
    %v1556 = vld [vmem:[#allocation12 + $0xe00] sm:$0xff]
    %v1557 = vld [vmem:[#allocation12 + $0xe08] sm:$0xff]
    %v1558 = vld [vmem:[#allocation12 + $0xe40] sm:$0xff]
    %v1559 = vld [vmem:[#allocation12 + $0xe48] sm:$0xff]
    %v1560 = vld [vmem:[#allocation12 + $0xe80] sm:$0xff]
    %v1561 = vld [vmem:[#allocation12 + $0xe88] sm:$0xff]
    %v1562 = vld [vmem:[#allocation12 + $0xec0] sm:$0xff]
    %v1563 = vld [vmem:[#allocation12 + $0xec8] sm:$0xff]
    %v1564 = vld [vmem:[#allocation12 + $0xf00] sm:$0xff]
    %v1565 = vld [vmem:[#allocation12 + $0xf08] sm:$0xff]
    %v1566 = vld [vmem:[#allocation12 + $0xf40] sm:$0xff]
    %v1567 = vld [vmem:[#allocation12 + $0xf48] sm:$0xff]
    %v1568 = vld [vmem:[#allocation12 + $0xf80] sm:$0xff]
    %v1569 = vld [vmem:[#allocation12 + $0xf88] sm:$0xff]
    %v1570 = vld [vmem:[#allocation12 + $0xfc0] sm:$0xff]
    %v1571 = vld [vmem:[#allocation12 + $0xfc8] sm:$0xff]
    %v1572 = vld [vmem:[#allocation14] sm:$0xf]
    %v1574 = vlaneseq
    %v1575 = vshrl.u32 %v1574, 7
    %v1576 = vsub.s32 0, %v1575
    %v1577 = vrot.slane %v1572, %v1576
    %v1578 = vlaneseq
    %v1579 = vshrl.u32 %v1578, 7
    %v1580 = vsub.s32 1, %v1579
    %v1581 = vrot.slane %v1572, %v1580
    %v1582 = vlaneseq
    %v1583 = vshrl.u32 %v1582, 7
    %v1584 = vsub.s32 2, %v1583
    %v1585 = vrot.slane %v1572, %v1584
    %v1586 = vlaneseq
    %v1587 = vshrl.u32 %v1586, 7
    %v1588 = vsub.s32 3, %v1587
    %v1589 = vrot.slane %v1572, %v1588
    %v1722 = vunpack.c.l.b16 %v1444
    %v1723 = vunpack.c.h.b16 %v1444
    %v1724 = vunpack.c.l.b16 %v1445
    %v1725 = vunpack.c.h.b16 %v1445
    %v1726 = vunpack.c.l.b16 %v1446
    %v1727 = vunpack.c.h.b16 %v1446
    %v1728 = vunpack.c.l.b16 %v1447
    %v1729 = vunpack.c.h.b16 %v1447
    %v1730 = vunpack.c.l.b16 %v1448
    %v1731 = vunpack.c.h.b16 %v1448
    %v1732 = vunpack.c.l.b16 %v1449
    %v1733 = vunpack.c.h.b16 %v1449
    %v1734 = vunpack.c.l.b16 %v1450
    %v1735 = vunpack.c.h.b16 %v1450
    %v1736 = vunpack.c.l.b16 %v1451
    %v1737 = vunpack.c.h.b16 %v1451
    %v1738 = vunpack.c.l.b16 %v1452
    %v1739 = vunpack.c.h.b16 %v1452
    %v1740 = vunpack.c.l.b16 %v1453
    %v1741 = vunpack.c.h.b16 %v1453
    %v1742 = vunpack.c.l.b16 %v1454
    %v1743 = vunpack.c.h.b16 %v1454
    %v1744 = vunpack.c.l.b16 %v1455
    %v1745 = vunpack.c.h.b16 %v1455
    %v1746 = vunpack.c.l.b16 %v1456
    %v1747 = vunpack.c.h.b16 %v1456
    %v1748 = vunpack.c.l.b16 %v1457
    %v1749 = vunpack.c.h.b16 %v1457
    %v1750 = vunpack.c.l.b16 %v1458
    %v1751 = vunpack.c.h.b16 %v1458
    %v1752 = vunpack.c.l.b16 %v1459
    %v1753 = vunpack.c.h.b16 %v1459
    %v1754 = vunpack.c.l.b16 %v1460
    %v1755 = vunpack.c.h.b16 %v1460
    %v1756 = vunpack.c.l.b16 %v1461
    %v1757 = vunpack.c.h.b16 %v1461
    %v1758 = vunpack.c.l.b16 %v1462
    %v1759 = vunpack.c.h.b16 %v1462
    %v1760 = vunpack.c.l.b16 %v1463
    %v1761 = vunpack.c.h.b16 %v1463
    %v1762 = vunpack.c.l.b16 %v1464
    %v1763 = vunpack.c.h.b16 %v1464
    %v1764 = vunpack.c.l.b16 %v1465
    %v1765 = vunpack.c.h.b16 %v1465
    %v1766 = vunpack.c.l.b16 %v1466
    %v1767 = vunpack.c.h.b16 %v1466
    %v1768 = vunpack.c.l.b16 %v1467
    %v1769 = vunpack.c.h.b16 %v1467
    %v1770 = vunpack.c.l.b16 %v1468
    %v1771 = vunpack.c.h.b16 %v1468
    %v1772 = vunpack.c.l.b16 %v1469
    %v1773 = vunpack.c.h.b16 %v1469
    %v1774 = vunpack.c.l.b16 %v1470
    %v1775 = vunpack.c.h.b16 %v1470
    %v1776 = vunpack.c.l.b16 %v1471
    %v1777 = vunpack.c.h.b16 %v1471
    %v1778 = vunpack.c.l.b16 %v1472
    %v1779 = vunpack.c.h.b16 %v1472
    %v1780 = vunpack.c.l.b16 %v1473
    %v1781 = vunpack.c.h.b16 %v1473
    %v1782 = vunpack.c.l.b16 %v1474
    %v1783 = vunpack.c.h.b16 %v1474
    %v1784 = vunpack.c.l.b16 %v1475
    %v1785 = vunpack.c.h.b16 %v1475
    %v1786 = vunpack.c.l.b16 %v1476
    %v1787 = vunpack.c.h.b16 %v1476
    %v1788 = vunpack.c.l.b16 %v1477
    %v1789 = vunpack.c.h.b16 %v1477
    %v1790 = vunpack.c.l.b16 %v1478
    %v1791 = vunpack.c.h.b16 %v1478
    %v1792 = vunpack.c.l.b16 %v1479
    %v1793 = vunpack.c.h.b16 %v1479
    %v1794 = vunpack.c.l.b16 %v1480
    %v1795 = vunpack.c.h.b16 %v1480
    %v1796 = vunpack.c.l.b16 %v1481
    %v1797 = vunpack.c.h.b16 %v1481
    %v1798 = vunpack.c.l.b16 %v1482
    %v1799 = vunpack.c.h.b16 %v1482
    %v1800 = vunpack.c.l.b16 %v1483
    %v1801 = vunpack.c.h.b16 %v1483
    %v1802 = vunpack.c.l.b16 %v1484
    %v1803 = vunpack.c.h.b16 %v1484
    %v1804 = vunpack.c.l.b16 %v1485
    %v1805 = vunpack.c.h.b16 %v1485
    %v1806 = vunpack.c.l.b16 %v1486
    %v1807 = vunpack.c.h.b16 %v1486
    %v1808 = vunpack.c.l.b16 %v1487
    %v1809 = vunpack.c.h.b16 %v1487
    %v1810 = vunpack.c.l.b16 %v1488
    %v1811 = vunpack.c.h.b16 %v1488
    %v1812 = vunpack.c.l.b16 %v1489
    %v1813 = vunpack.c.h.b16 %v1489
    %v1814 = vunpack.c.l.b16 %v1490
    %v1815 = vunpack.c.h.b16 %v1490
    %v1816 = vunpack.c.l.b16 %v1491
    %v1817 = vunpack.c.h.b16 %v1491
    %v1818 = vunpack.c.l.b16 %v1492
    %v1819 = vunpack.c.h.b16 %v1492
    %v1820 = vunpack.c.l.b16 %v1493
    %v1821 = vunpack.c.h.b16 %v1493
    %v1822 = vunpack.c.l.b16 %v1494
    %v1823 = vunpack.c.h.b16 %v1494
    %v1824 = vunpack.c.l.b16 %v1495
    %v1825 = vunpack.c.h.b16 %v1495
    %v1826 = vunpack.c.l.b16 %v1496
    %v1827 = vunpack.c.h.b16 %v1496
    %v1828 = vunpack.c.l.b16 %v1497
    %v1829 = vunpack.c.h.b16 %v1497
    %v1830 = vunpack.c.l.b16 %v1498
    %v1831 = vunpack.c.h.b16 %v1498
    %v1832 = vunpack.c.l.b16 %v1499
    %v1833 = vunpack.c.h.b16 %v1499
    %v1834 = vunpack.c.l.b16 %v1500
    %v1835 = vunpack.c.h.b16 %v1500
    %v1836 = vunpack.c.l.b16 %v1501
    %v1837 = vunpack.c.h.b16 %v1501
    %v1838 = vunpack.c.l.b16 %v1502
    %v1839 = vunpack.c.h.b16 %v1502
    %v1840 = vunpack.c.l.b16 %v1503
    %v1841 = vunpack.c.h.b16 %v1503
    %v1842 = vunpack.c.l.b16 %v1504
    %v1843 = vunpack.c.h.b16 %v1504
    %v1844 = vunpack.c.l.b16 %v1505
    %v1845 = vunpack.c.h.b16 %v1505
    %v1846 = vunpack.c.l.b16 %v1506
    %v1847 = vunpack.c.h.b16 %v1506
    %v1848 = vunpack.c.l.b16 %v1507
    %v1849 = vunpack.c.h.b16 %v1507
    %v1850 = vunpack.c.l.b16 %v1508
    %v1851 = vunpack.c.h.b16 %v1508
    %v1852 = vunpack.c.l.b16 %v1509
    %v1853 = vunpack.c.h.b16 %v1509
    %v1854 = vunpack.c.l.b16 %v1510
    %v1855 = vunpack.c.h.b16 %v1510
    %v1856 = vunpack.c.l.b16 %v1511
    %v1857 = vunpack.c.h.b16 %v1511
    %v1858 = vunpack.c.l.b16 %v1512
    %v1859 = vunpack.c.h.b16 %v1512
    %v1860 = vunpack.c.l.b16 %v1513
    %v1861 = vunpack.c.h.b16 %v1513
    %v1862 = vunpack.c.l.b16 %v1514
    %v1863 = vunpack.c.h.b16 %v1514
    %v1864 = vunpack.c.l.b16 %v1515
    %v1865 = vunpack.c.h.b16 %v1515
    %v1866 = vunpack.c.l.b16 %v1516
    %v1867 = vunpack.c.h.b16 %v1516
    %v1868 = vunpack.c.l.b16 %v1517
    %v1869 = vunpack.c.h.b16 %v1517
    %v1870 = vunpack.c.l.b16 %v1518
    %v1871 = vunpack.c.h.b16 %v1518
    %v1872 = vunpack.c.l.b16 %v1519
    %v1873 = vunpack.c.h.b16 %v1519
    %v1874 = vunpack.c.l.b16 %v1520
    %v1875 = vunpack.c.h.b16 %v1520
    %v1876 = vunpack.c.l.b16 %v1521
    %v1877 = vunpack.c.h.b16 %v1521
    %v1878 = vunpack.c.l.b16 %v1522
    %v1879 = vunpack.c.h.b16 %v1522
    %v1880 = vunpack.c.l.b16 %v1523
    %v1881 = vunpack.c.h.b16 %v1523
    %v1882 = vunpack.c.l.b16 %v1524
    %v1883 = vunpack.c.h.b16 %v1524
    %v1884 = vunpack.c.l.b16 %v1525
    %v1885 = vunpack.c.h.b16 %v1525
    %v1886 = vunpack.c.l.b16 %v1526
    %v1887 = vunpack.c.h.b16 %v1526
    %v1888 = vunpack.c.l.b16 %v1527
    %v1889 = vunpack.c.h.b16 %v1527
    %v1890 = vunpack.c.l.b16 %v1528
    %v1891 = vunpack.c.h.b16 %v1528
    %v1892 = vunpack.c.l.b16 %v1529
    %v1893 = vunpack.c.h.b16 %v1529
    %v1894 = vunpack.c.l.b16 %v1530
    %v1895 = vunpack.c.h.b16 %v1530
    %v1896 = vunpack.c.l.b16 %v1531
    %v1897 = vunpack.c.h.b16 %v1531
    %v1898 = vunpack.c.l.b16 %v1532
    %v1899 = vunpack.c.h.b16 %v1532
    %v1900 = vunpack.c.l.b16 %v1533
    %v1901 = vunpack.c.h.b16 %v1533
    %v1902 = vunpack.c.l.b16 %v1534
    %v1903 = vunpack.c.h.b16 %v1534
    %v1904 = vunpack.c.l.b16 %v1535
    %v1905 = vunpack.c.h.b16 %v1535
    %v1906 = vunpack.c.l.b16 %v1536
    %v1907 = vunpack.c.h.b16 %v1536
    %v1908 = vunpack.c.l.b16 %v1537
    %v1909 = vunpack.c.h.b16 %v1537
    %v1910 = vunpack.c.l.b16 %v1538
    %v1911 = vunpack.c.h.b16 %v1538
    %v1912 = vunpack.c.l.b16 %v1539
    %v1913 = vunpack.c.h.b16 %v1539
    %v1914 = vunpack.c.l.b16 %v1540
    %v1915 = vunpack.c.h.b16 %v1540
    %v1916 = vunpack.c.l.b16 %v1541
    %v1917 = vunpack.c.h.b16 %v1541
    %v1918 = vunpack.c.l.b16 %v1542
    %v1919 = vunpack.c.h.b16 %v1542
    %v1920 = vunpack.c.l.b16 %v1543
    %v1921 = vunpack.c.h.b16 %v1543
    %v1922 = vunpack.c.l.b16 %v1544
    %v1923 = vunpack.c.h.b16 %v1544
    %v1924 = vunpack.c.l.b16 %v1545
    %v1925 = vunpack.c.h.b16 %v1545
    %v1926 = vunpack.c.l.b16 %v1546
    %v1927 = vunpack.c.h.b16 %v1546
    %v1928 = vunpack.c.l.b16 %v1547
    %v1929 = vunpack.c.h.b16 %v1547
    %v1930 = vunpack.c.l.b16 %v1548
    %v1931 = vunpack.c.h.b16 %v1548
    %v1932 = vunpack.c.l.b16 %v1549
    %v1933 = vunpack.c.h.b16 %v1549
    %v1934 = vunpack.c.l.b16 %v1550
    %v1935 = vunpack.c.h.b16 %v1550
    %v1936 = vunpack.c.l.b16 %v1551
    %v1937 = vunpack.c.h.b16 %v1551
    %v1938 = vunpack.c.l.b16 %v1552
    %v1939 = vunpack.c.h.b16 %v1552
    %v1940 = vunpack.c.l.b16 %v1553
    %v1941 = vunpack.c.h.b16 %v1553
    %v1942 = vunpack.c.l.b16 %v1554
    %v1943 = vunpack.c.h.b16 %v1554
    %v1944 = vunpack.c.l.b16 %v1555
    %v1945 = vunpack.c.h.b16 %v1555
    %v1946 = vunpack.c.l.b16 %v1556
    %v1947 = vunpack.c.h.b16 %v1556
    %v1948 = vunpack.c.l.b16 %v1557
    %v1949 = vunpack.c.h.b16 %v1557
    %v1950 = vunpack.c.l.b16 %v1558
    %v1951 = vunpack.c.h.b16 %v1558
    %v1952 = vunpack.c.l.b16 %v1559
    %v1953 = vunpack.c.h.b16 %v1559
    %v1954 = vunpack.c.l.b16 %v1560
    %v1955 = vunpack.c.h.b16 %v1560
    %v1956 = vunpack.c.l.b16 %v1561
    %v1957 = vunpack.c.h.b16 %v1561
    %v1958 = vunpack.c.l.b16 %v1562
    %v1959 = vunpack.c.h.b16 %v1562
    %v1960 = vunpack.c.l.b16 %v1563
    %v1961 = vunpack.c.h.b16 %v1563
    %v1962 = vunpack.c.l.b16 %v1564
    %v1963 = vunpack.c.h.b16 %v1564
    %v1964 = vunpack.c.l.b16 %v1565
    %v1965 = vunpack.c.h.b16 %v1565
    %v1966 = vunpack.c.l.b16 %v1566
    %v1967 = vunpack.c.h.b16 %v1566
    %v1968 = vunpack.c.l.b16 %v1567
    %v1969 = vunpack.c.h.b16 %v1567
    %v1970 = vunpack.c.l.b16 %v1568
    %v1971 = vunpack.c.h.b16 %v1568
    %v1972 = vunpack.c.l.b16 %v1569
    %v1973 = vunpack.c.h.b16 %v1569
    %v1974 = vunpack.c.l.b16 %v1570
    %v1975 = vunpack.c.h.b16 %v1570
    %v1976 = vunpack.c.l.b16 %v1571
    %v1977 = vunpack.c.h.b16 %v1571
    %v1978 = vpack.c.b16 %v1726, %v1722
    %v1979 = vpack.c.b16 %v1727, %v1723
    %v1980 = vpack.c.b16 %v1728, %v1724
    %v1981 = vpack.c.b16 %v1729, %v1725
    %v1982 = vpack.c.b16 %v1734, %v1730
    %v1983 = vpack.c.b16 %v1735, %v1731
    %v1984 = vpack.c.b16 %v1736, %v1732
    %v1985 = vpack.c.b16 %v1737, %v1733
    %v1986 = vpack.c.b16 %v1742, %v1738
    %v1987 = vpack.c.b16 %v1743, %v1739
    %v1988 = vpack.c.b16 %v1744, %v1740
    %v1989 = vpack.c.b16 %v1745, %v1741
    %v1990 = vpack.c.b16 %v1750, %v1746
    %v1991 = vpack.c.b16 %v1751, %v1747
    %v1992 = vpack.c.b16 %v1752, %v1748
    %v1993 = vpack.c.b16 %v1753, %v1749
    %v1994 = vpack.c.b16 %v1758, %v1754
    %v1995 = vpack.c.b16 %v1759, %v1755
    %v1996 = vpack.c.b16 %v1760, %v1756
    %v1997 = vpack.c.b16 %v1761, %v1757
    %v1998 = vpack.c.b16 %v1766, %v1762
    %v1999 = vpack.c.b16 %v1767, %v1763
    %v2000 = vpack.c.b16 %v1768, %v1764
    %v2001 = vpack.c.b16 %v1769, %v1765
    %v2002 = vpack.c.b16 %v1774, %v1770
    %v2003 = vpack.c.b16 %v1775, %v1771
    %v2004 = vpack.c.b16 %v1776, %v1772
    %v2005 = vpack.c.b16 %v1777, %v1773
    %v2006 = vpack.c.b16 %v1782, %v1778
    %v2007 = vpack.c.b16 %v1783, %v1779
    %v2008 = vpack.c.b16 %v1784, %v1780
    %v2009 = vpack.c.b16 %v1785, %v1781
    %v2010 = vpack.c.b16 %v1790, %v1786
    %v2011 = vpack.c.b16 %v1791, %v1787
    %v2012 = vpack.c.b16 %v1792, %v1788
    %v2013 = vpack.c.b16 %v1793, %v1789
    %v2014 = vpack.c.b16 %v1798, %v1794
    %v2015 = vpack.c.b16 %v1799, %v1795
    %v2016 = vpack.c.b16 %v1800, %v1796
    %v2017 = vpack.c.b16 %v1801, %v1797
    %v2018 = vpack.c.b16 %v1806, %v1802
    %v2019 = vpack.c.b16 %v1807, %v1803
    %v2020 = vpack.c.b16 %v1808, %v1804
    %v2021 = vpack.c.b16 %v1809, %v1805
    %v2022 = vpack.c.b16 %v1814, %v1810
    %v2023 = vpack.c.b16 %v1815, %v1811
    %v2024 = vpack.c.b16 %v1816, %v1812
    %v2025 = vpack.c.b16 %v1817, %v1813
    %v2026 = vpack.c.b16 %v1822, %v1818
    %v2027 = vpack.c.b16 %v1823, %v1819
    %v2028 = vpack.c.b16 %v1824, %v1820
    %v2029 = vpack.c.b16 %v1825, %v1821
    %v2030 = vpack.c.b16 %v1830, %v1826
    %v2031 = vpack.c.b16 %v1831, %v1827
    %v2032 = vpack.c.b16 %v1832, %v1828
    %v2033 = vpack.c.b16 %v1833, %v1829
    %v2034 = vpack.c.b16 %v1838, %v1834
    %v2035 = vpack.c.b16 %v1839, %v1835
    %v2036 = vpack.c.b16 %v1840, %v1836
    %v2037 = vpack.c.b16 %v1841, %v1837
    %v2038 = vpack.c.b16 %v1846, %v1842
    %v2039 = vpack.c.b16 %v1847, %v1843
    %v2040 = vpack.c.b16 %v1848, %v1844
    %v2041 = vpack.c.b16 %v1849, %v1845
    %v2042 = vpack.c.b16 %v1854, %v1850
    %v2043 = vpack.c.b16 %v1855, %v1851
    %v2044 = vpack.c.b16 %v1856, %v1852
    %v2045 = vpack.c.b16 %v1857, %v1853
    %v2046 = vpack.c.b16 %v1862, %v1858
    %v2047 = vpack.c.b16 %v1863, %v1859
    %v2048 = vpack.c.b16 %v1864, %v1860
    %v2049 = vpack.c.b16 %v1865, %v1861
    %v2050 = vpack.c.b16 %v1870, %v1866
    %v2051 = vpack.c.b16 %v1871, %v1867
    %v2052 = vpack.c.b16 %v1872, %v1868
    %v2053 = vpack.c.b16 %v1873, %v1869
    %v2054 = vpack.c.b16 %v1878, %v1874
    %v2055 = vpack.c.b16 %v1879, %v1875
    %v2056 = vpack.c.b16 %v1880, %v1876
    %v2057 = vpack.c.b16 %v1881, %v1877
    %v2058 = vpack.c.b16 %v1886, %v1882
    %v2059 = vpack.c.b16 %v1887, %v1883
    %v2060 = vpack.c.b16 %v1888, %v1884
    %v2061 = vpack.c.b16 %v1889, %v1885
    %v2062 = vpack.c.b16 %v1894, %v1890
    %v2063 = vpack.c.b16 %v1895, %v1891
    %v2064 = vpack.c.b16 %v1896, %v1892
    %v2065 = vpack.c.b16 %v1897, %v1893
    %v2066 = vpack.c.b16 %v1902, %v1898
    %v2067 = vpack.c.b16 %v1903, %v1899
    %v2068 = vpack.c.b16 %v1904, %v1900
    %v2069 = vpack.c.b16 %v1905, %v1901
    %v2070 = vpack.c.b16 %v1910, %v1906
    %v2071 = vpack.c.b16 %v1911, %v1907
    %v2072 = vpack.c.b16 %v1912, %v1908
    %v2073 = vpack.c.b16 %v1913, %v1909
    %v2074 = vpack.c.b16 %v1918, %v1914
    %v2075 = vpack.c.b16 %v1919, %v1915
    %v2076 = vpack.c.b16 %v1920, %v1916
    %v2077 = vpack.c.b16 %v1921, %v1917
    %v2078 = vpack.c.b16 %v1926, %v1922
    %v2079 = vpack.c.b16 %v1927, %v1923
    %v2080 = vpack.c.b16 %v1928, %v1924
    %v2081 = vpack.c.b16 %v1929, %v1925
    %v2082 = vpack.c.b16 %v1934, %v1930
    %v2083 = vpack.c.b16 %v1935, %v1931
    %v2084 = vpack.c.b16 %v1936, %v1932
    %v2085 = vpack.c.b16 %v1937, %v1933
    %v2086 = vpack.c.b16 %v1942, %v1938
    %v2087 = vpack.c.b16 %v1943, %v1939
    %v2088 = vpack.c.b16 %v1944, %v1940
    %v2089 = vpack.c.b16 %v1945, %v1941
    %v2090 = vpack.c.b16 %v1950, %v1946
    %v2091 = vpack.c.b16 %v1951, %v1947
    %v2092 = vpack.c.b16 %v1952, %v1948
    %v2093 = vpack.c.b16 %v1953, %v1949
    %v2094 = vpack.c.b16 %v1958, %v1954
    %v2095 = vpack.c.b16 %v1959, %v1955
    %v2096 = vpack.c.b16 %v1960, %v1956
    %v2097 = vpack.c.b16 %v1961, %v1957
    %v2098 = vpack.c.b16 %v1966, %v1962
    %v2099 = vpack.c.b16 %v1967, %v1963
    %v2100 = vpack.c.b16 %v1968, %v1964
    %v2101 = vpack.c.b16 %v1969, %v1965
    %v2102 = vpack.c.b16 %v1974, %v1970
    %v2103 = vpack.c.b16 %v1975, %v1971
    %v2104 = vpack.c.b16 %v1976, %v1972
    %v2105 = vpack.c.b16 %v1977, %v1973
    %2234 = vmatprep.subr.bf16.mxu0 %v1979
    %2235 = vmatpush1.bf16.msra.mxu0 %v1978
    %2236 = vmatprep.subr.bf16.mxu0 %v1983
    %2237 = vmatpush1.bf16.msra.mxu0 %v1982
    %2238 = vmatprep.subr.bf16.mxu0 %v1987
    %2239 = vmatpush1.bf16.msra.mxu0 %v1986
    %2240 = vmatprep.subr.bf16.mxu0 %v1991
    %2241 = vmatpush1.bf16.msra.mxu0 %v1990
    %2242 = vmatprep.subr.bf16.mxu0 %v1995
    %2243 = vmatpush1.bf16.msra.mxu0 %v1994
    %2244 = vmatprep.subr.bf16.mxu0 %v1999
    %2245 = vmatpush1.bf16.msra.mxu0 %v1998
    %2246 = vmatprep.subr.bf16.mxu0 %v2003
    %2247 = vmatpush1.bf16.msra.mxu0 %v2002
    %2248 = vmatprep.subr.bf16.mxu0 %v2007
    %2249 = vmatpush1.bf16.msra.mxu0 %v2006
    %2250 = vmatprep.subr.bf16.mxu0 %v2011
    %2251 = vmatpush1.bf16.msra.mxu0 %v2010
    %2252 = vmatprep.subr.bf16.mxu0 %v2015
    %2253 = vmatpush1.bf16.msra.mxu0 %v2014
    %2254 = vmatprep.subr.bf16.mxu0 %v2019
    %2255 = vmatpush1.bf16.msra.mxu0 %v2018
    %2256 = vmatprep.subr.bf16.mxu0 %v2023
    %2257 = vmatpush1.bf16.msra.mxu0 %v2022
    %2258 = vmatprep.subr.bf16.mxu0 %v2027
    %2259 = vmatpush1.bf16.msra.mxu0 %v2026
    %2260 = vmatprep.subr.bf16.mxu0 %v2031
    %2261 = vmatpush1.bf16.msra.mxu0 %v2030
    %2262 = vmatprep.subr.bf16.mxu0 %v2035
    %2263 = vmatpush1.bf16.msra.mxu0 %v2034
    %2264 = vmatprep.subr.bf16.mxu0 %v2039
    %2265 = vmatpush1.bf16.msra.mxu0 %v2038
    %2266 = vmatprep.mubr.bf16.mxu0 %v1439
    %2267 = vmatmul.mubr.bf16.gmra.mrb[0].mxu0 %v1438
    %v2268 = vpop.f32.mrb[0].mxu0
    %v2269 = vadd.f32 %v1577, %v2268
    %v2270 = vpop.f32.mrb[0].mxu0
    %v2271 = vadd.f32 %v1581, %v2270
    %v2272 = vpop.f32.mrb[0].mxu0
    %v2273 = vadd.f32 %v1577, %v2272
    %v2274 = vpop.f32.mrb[0].mxu0
    %v2275 = vadd.f32 %v1581, %v2274
    %2276 = vdwg.mxu0
    %2277 = vmatprep.subr.bf16.mxu0 %v2043
    %2278 = vmatpush1.bf16.msra.mxu0 %v2042
    %2279 = vmatprep.subr.bf16.mxu0 %v2047
    %2280 = vmatpush1.bf16.msra.mxu0 %v2046
    %2281 = vmatprep.subr.bf16.mxu0 %v2051
    %2282 = vmatpush1.bf16.msra.mxu0 %v2050
    %2283 = vmatprep.subr.bf16.mxu0 %v2055
    %2284 = vmatpush1.bf16.msra.mxu0 %v2054
    %2285 = vmatprep.subr.bf16.mxu0 %v2059
    %2286 = vmatpush1.bf16.msra.mxu0 %v2058
    %2287 = vmatprep.subr.bf16.mxu0 %v2063
    %2288 = vmatpush1.bf16.msra.mxu0 %v2062
    %2289 = vmatprep.subr.bf16.mxu0 %v2067
    %2290 = vmatpush1.bf16.msra.mxu0 %v2066
    %2291 = vmatprep.subr.bf16.mxu0 %v2071
    %2292 = vmatpush1.bf16.msra.mxu0 %v2070
    %2293 = vmatprep.subr.bf16.mxu0 %v2075
    %2294 = vmatpush1.bf16.msra.mxu0 %v2074
    %2295 = vmatprep.subr.bf16.mxu0 %v2079
    %2296 = vmatpush1.bf16.msra.mxu0 %v2078
    %2297 = vmatprep.subr.bf16.mxu0 %v2083
    %2298 = vmatpush1.bf16.msra.mxu0 %v2082
    %2299 = vmatprep.subr.bf16.mxu0 %v2087
    %2300 = vmatpush1.bf16.msra.mxu0 %v2086
    %2301 = vmatprep.subr.bf16.mxu0 %v2091
    %2302 = vmatpush1.bf16.msra.mxu0 %v2090
    %2303 = vmatprep.subr.bf16.mxu0 %v2095
    %2304 = vmatpush1.bf16.msra.mxu0 %v2094
    %2305 = vmatprep.subr.bf16.mxu0 %v2099
    %2306 = vmatpush1.bf16.msra.mxu0 %v2098
    %2307 = vmatprep.subr.bf16.mxu0 %v2103
    %2308 = vmatpush1.bf16.msra.mxu0 %v2102
    %2309 = vmatprep.mubr.bf16.mxu0 %v1441
    %2310 = vmatmul.mubr.bf16.gmra.mrb[0].mxu0 %v1440
    %v2311 = vpop.f32.mrb[0].mxu0
    %v2312 = vadd.f32 %v2269, %v2311
    %v2313 = vpop.f32.mrb[0].mxu0
    %v2314 = vadd.f32 %v2271, %v2313
    %v2315 = vpop.f32.mrb[0].mxu0
    %v2316 = vadd.f32 %v2273, %v2315
    %v2317 = vpop.f32.mrb[0].mxu0
    %v2318 = vadd.f32 %v2275, %v2317
    %2319 = vdwg.mxu0
    %2320 = vmatprep.subr.bf16.mxu0 %v1981
    %2321 = vmatpush1.bf16.msra.mxu0 %v1980
    %2322 = vmatprep.subr.bf16.mxu0 %v1985
    %2323 = vmatpush1.bf16.msra.mxu0 %v1984
    %2324 = vmatprep.subr.bf16.mxu0 %v1989
    %2325 = vmatpush1.bf16.msra.mxu0 %v1988
    %2326 = vmatprep.subr.bf16.mxu0 %v1993
    %2327 = vmatpush1.bf16.msra.mxu0 %v1992
    %2328 = vmatprep.subr.bf16.mxu0 %v1997
    %2329 = vmatpush1.bf16.msra.mxu0 %v1996
    %2330 = vmatprep.subr.bf16.mxu0 %v2001
    %2331 = vmatpush1.bf16.msra.mxu0 %v2000
    %2332 = vmatprep.subr.bf16.mxu0 %v2005
    %2333 = vmatpush1.bf16.msra.mxu0 %v2004
    %2334 = vmatprep.subr.bf16.mxu0 %v2009
    %2335 = vmatpush1.bf16.msra.mxu0 %v2008
    %2336 = vmatprep.subr.bf16.mxu0 %v2013
    %2337 = vmatpush1.bf16.msra.mxu0 %v2012
    %2338 = vmatprep.subr.bf16.mxu0 %v2017
    %2339 = vmatpush1.bf16.msra.mxu0 %v2016
    %2340 = vmatprep.subr.bf16.mxu0 %v2021
    %2341 = vmatpush1.bf16.msra.mxu0 %v2020
    %2342 = vmatprep.subr.bf16.mxu0 %v2025
    %2343 = vmatpush1.bf16.msra.mxu0 %v2024
    %2344 = vmatprep.subr.bf16.mxu0 %v2029
    %2345 = vmatpush1.bf16.msra.mxu0 %v2028
    %2346 = vmatprep.subr.bf16.mxu0 %v2033
    %2347 = vmatpush1.bf16.msra.mxu0 %v2032
    %2348 = vmatprep.subr.bf16.mxu0 %v2037
    %2349 = vmatpush1.bf16.msra.mxu0 %v2036
    %2350 = vmatprep.subr.bf16.mxu0 %v2041
    %2351 = vmatpush1.bf16.msra.mxu0 %v2040
    %2352 = vmatprep.mubr.bf16.mxu0 %v1439
    %2353 = vmatmul.mubr.bf16.gmra.mrb[0].mxu0 %v1438
    %v2354 = vpop.f32.mrb[0].mxu0
    %v2355 = vadd.f32 %v1585, %v2354
    %v2356 = vpop.f32.mrb[0].mxu0
    %v2357 = vadd.f32 %v1589, %v2356
    %v2358 = vpop.f32.mrb[0].mxu0
    %v2359 = vadd.f32 %v1585, %v2358
    %v2360 = vpop.f32.mrb[0].mxu0
    %v2361 = vadd.f32 %v1589, %v2360
    %2362 = vdwg.mxu0
    %2363 = vmatprep.subr.bf16.mxu0 %v2045
    %2364 = vmatpush1.bf16.msra.mxu0 %v2044
    %2365 = vmatprep.subr.bf16.mxu0 %v2049
    %2366 = vmatpush1.bf16.msra.mxu0 %v2048
    %2367 = vmatprep.subr.bf16.mxu0 %v2053
    %2368 = vmatpush1.bf16.msra.mxu0 %v2052
    %2369 = vmatprep.subr.bf16.mxu0 %v2057
    %2370 = vmatpush1.bf16.msra.mxu0 %v2056
    %2371 = vmatprep.subr.bf16.mxu0 %v2061
    %2372 = vmatpush1.bf16.msra.mxu0 %v2060
    %2373 = vmatprep.subr.bf16.mxu0 %v2065
    %2374 = vmatpush1.bf16.msra.mxu0 %v2064
    %2375 = vmatprep.subr.bf16.mxu0 %v2069
    %2376 = vmatpush1.bf16.msra.mxu0 %v2068
    %2377 = vmatprep.subr.bf16.mxu0 %v2073
    %2378 = vmatpush1.bf16.msra.mxu0 %v2072
    %2379 = vmatprep.subr.bf16.mxu0 %v2077
    %2380 = vmatpush1.bf16.msra.mxu0 %v2076
    %2381 = vmatprep.subr.bf16.mxu0 %v2081
    %2382 = vmatpush1.bf16.msra.mxu0 %v2080
    %2383 = vmatprep.subr.bf16.mxu0 %v2085
    %2384 = vmatpush1.bf16.msra.mxu0 %v2084
    %2385 = vmatprep.subr.bf16.mxu0 %v2089
    %2386 = vmatpush1.bf16.msra.mxu0 %v2088
    %2387 = vmatprep.subr.bf16.mxu0 %v2093
    %2388 = vmatpush1.bf16.msra.mxu0 %v2092
    %2389 = vmatprep.subr.bf16.mxu0 %v2097
    %2390 = vmatpush1.bf16.msra.mxu0 %v2096
    %2391 = vmatprep.subr.bf16.mxu0 %v2101
    %2392 = vmatpush1.bf16.msra.mxu0 %v2100
    %2393 = vmatprep.subr.bf16.mxu0 %v2105
    %2394 = vmatpush1.bf16.msra.mxu0 %v2104
    %2395 = vmatprep.mubr.bf16.mxu0 %v1441
    %2396 = vmatmul.mubr.bf16.gmra.mrb[0].mxu0 %v1440
    %v2397 = vpop.f32.mrb[0].mxu0
    %v2398 = vadd.f32 %v2355, %v2397
    %v2399 = vpop.f32.mrb[0].mxu0
    %v2400 = vadd.f32 %v2357, %v2399
    %v2401 = vpop.f32.mrb[0].mxu0
    %v2402 = vadd.f32 %v2359, %v2401
    %v2403 = vpop.f32.mrb[0].mxu0
    %v2404 = vadd.f32 %v2361, %v2403
    %2405 = vdwg.mxu0
    %v2406 = vmax.f32 %v2312, 0.0
    %v2407 = vmax.f32 %v2314, 0.0
    %v2408 = vmax.f32 %v2398, 0.0
    %v2409 = vmax.f32 %v2400, 0.0
    %v2410 = vmax.f32 %v2316, 0.0
    %v2411 = vmax.f32 %v2318, 0.0
    %v2412 = vmax.f32 %v2402, 0.0
    %v2413 = vmax.f32 %v2404, 0.0
    %v2414 = vpack.c.bf16 %v2410, %v2406
    %v2415 = vpack.c.bf16 %v2411, %v2407
    %v2416 = vpack.c.bf16 %v2412, %v2408
    %v2417 = vpack.c.bf16 %v2413, %v2409
    %v2418 = vld [vmem:[#allocation2] sm:$0xff]
    %v2419 = vld [vmem:[#allocation2 + $0x8] sm:$0xff]
    %v2420 = vld [vmem:[#allocation15] sm:$0xf]
    %v2421 = vld [vmem:[#allocation15 + $0x4] sm:$0xf]
    %v2422 = vld [vmem:[#allocation15 + $0x8] sm:$0xf]
    %v2423 = vld [vmem:[#allocation15 + $0xc] sm:$0xf]
    %v2424 = vld [vmem:[#allocation15 + $0x10] sm:$0xf]
    %v2425 = vld [vmem:[#allocation15 + $0x14] sm:$0xf]
    %v2426 = vld [vmem:[#allocation15 + $0x18] sm:$0xf]
    %v2427 = vld [vmem:[#allocation15 + $0x1c] sm:$0xf]
    %v2428 = vld [vmem:[#allocation15 + $0x20] sm:$0xf]
    %v2429 = vld [vmem:[#allocation15 + $0x24] sm:$0xf]
    %v2430 = vld [vmem:[#allocation15 + $0x28] sm:$0xf]
    %v2431 = vld [vmem:[#allocation15 + $0x2c] sm:$0xf]
    %v2432 = vld [vmem:[#allocation15 + $0x30] sm:$0xf]
    %v2433 = vld [vmem:[#allocation15 + $0x34] sm:$0xf]
    %v2434 = vld [vmem:[#allocation15 + $0x38] sm:$0xf]
    %v2435 = vld [vmem:[#allocation15 + $0x3c] sm:$0xf]
    %v2436 = vld [vmem:[#allocation15 + $0x40] sm:$0xf]
    %v2437 = vld [vmem:[#allocation15 + $0x44] sm:$0xf]
    %v2438 = vld [vmem:[#allocation15 + $0x48] sm:$0xf]
    %v2439 = vld [vmem:[#allocation15 + $0x4c] sm:$0xf]
    %v2440 = vld [vmem:[#allocation15 + $0x50] sm:$0xf]
    %v2441 = vld [vmem:[#allocation15 + $0x54] sm:$0xf]
    %v2442 = vld [vmem:[#allocation15 + $0x58] sm:$0xf]
    %v2443 = vld [vmem:[#allocation15 + $0x5c] sm:$0xf]
    %v2444 = vld [vmem:[#allocation15 + $0x60] sm:$0xf]
    %v2445 = vld [vmem:[#allocation15 + $0x64] sm:$0xf]
    %v2446 = vld [vmem:[#allocation15 + $0x68] sm:$0xf]
    %v2447 = vld [vmem:[#allocation15 + $0x6c] sm:$0xf]
    %v2448 = vld [vmem:[#allocation15 + $0x70] sm:$0xf]
    %v2449 = vld [vmem:[#allocation15 + $0x74] sm:$0xf]
    %v2450 = vld [vmem:[#allocation15 + $0x78] sm:$0xf]
    %v2451 = vld [vmem:[#allocation15 + $0x7c] sm:$0xf]
    %v2452 = vld [vmem:[#allocation15 + $0x80] sm:$0xf]
    %v2453 = vld [vmem:[#allocation15 + $0x84] sm:$0xf]
    %v2454 = vld [vmem:[#allocation15 + $0x88] sm:$0xf]
    %v2455 = vld [vmem:[#allocation15 + $0x8c] sm:$0xf]
    %v2456 = vld [vmem:[#allocation15 + $0x90] sm:$0xf]
    %v2457 = vld [vmem:[#allocation15 + $0x94] sm:$0xf]
    %v2458 = vld [vmem:[#allocation15 + $0x98] sm:$0xf]
    %v2459 = vld [vmem:[#allocation15 + $0x9c] sm:$0xf]
    %v2460 = vld [vmem:[#allocation15 + $0xa0] sm:$0xf]
    %v2461 = vld [vmem:[#allocation15 + $0xa4] sm:$0xf]
    %v2462 = vld [vmem:[#allocation15 + $0xa8] sm:$0xf]
    %v2463 = vld [vmem:[#allocation15 + $0xac] sm:$0xf]
    %v2464 = vld [vmem:[#allocation15 + $0xb0] sm:$0xf]
    %v2465 = vld [vmem:[#allocation15 + $0xb4] sm:$0xf]
    %v2466 = vld [vmem:[#allocation15 + $0xb8] sm:$0xf]
    %v2467 = vld [vmem:[#allocation15 + $0xbc] sm:$0xf]
    %v2468 = vld [vmem:[#allocation15 + $0xc0] sm:$0xf]
    %v2469 = vld [vmem:[#allocation15 + $0xc4] sm:$0xf]
    %v2470 = vld [vmem:[#allocation15 + $0xc8] sm:$0xf]
    %v2471 = vld [vmem:[#allocation15 + $0xcc] sm:$0xf]
    %v2472 = vld [vmem:[#allocation15 + $0xd0] sm:$0xf]
    %v2473 = vld [vmem:[#allocation15 + $0xd4] sm:$0xf]
    %v2474 = vld [vmem:[#allocation15 + $0xd8] sm:$0xf]
    %v2475 = vld [vmem:[#allocation15 + $0xdc] sm:$0xf]
    %v2476 = vld [vmem:[#allocation15 + $0xe0] sm:$0xf]
    %v2477 = vld [vmem:[#allocation15 + $0xe4] sm:$0xf]
    %v2478 = vld [vmem:[#allocation15 + $0xe8] sm:$0xf]
    %v2479 = vld [vmem:[#allocation15 + $0xec] sm:$0xf]
    %v2480 = vld [vmem:[#allocation15 + $0xf0] sm:$0xf]
    %v2481 = vld [vmem:[#allocation15 + $0xf4] sm:$0xf]
    %v2482 = vld [vmem:[#allocation15 + $0xf8] sm:$0xf]
    %v2483 = vld [vmem:[#allocation15 + $0xfc] sm:$0xf]
    %v2548 = vunpack.c.l.b16 %v2420
    %v2549 = vunpack.c.l.b16 %v2421
    %v2550 = vunpack.c.l.b16 %v2422
    %v2551 = vunpack.c.l.b16 %v2423
    %v2552 = vunpack.c.l.b16 %v2424
    %v2553 = vunpack.c.l.b16 %v2425
    %v2554 = vunpack.c.l.b16 %v2426
    %v2555 = vunpack.c.l.b16 %v2427
    %v2556 = vunpack.c.l.b16 %v2428
    %v2557 = vunpack.c.l.b16 %v2429
    %v2558 = vunpack.c.l.b16 %v2430
    %v2559 = vunpack.c.l.b16 %v2431
    %v2560 = vunpack.c.l.b16 %v2432
    %v2561 = vunpack.c.l.b16 %v2433
    %v2562 = vunpack.c.l.b16 %v2434
    %v2563 = vunpack.c.l.b16 %v2435
    %v2564 = vunpack.c.l.b16 %v2436
    %v2565 = vunpack.c.l.b16 %v2437
    %v2566 = vunpack.c.l.b16 %v2438
    %v2567 = vunpack.c.l.b16 %v2439
    %v2568 = vunpack.c.l.b16 %v2440
    %v2569 = vunpack.c.l.b16 %v2441
    %v2570 = vunpack.c.l.b16 %v2442
    %v2571 = vunpack.c.l.b16 %v2443
    %v2572 = vunpack.c.l.b16 %v2444
    %v2573 = vunpack.c.l.b16 %v2445
    %v2574 = vunpack.c.l.b16 %v2446
    %v2575 = vunpack.c.l.b16 %v2447
    %v2576 = vunpack.c.l.b16 %v2448
    %v2577 = vunpack.c.l.b16 %v2449
    %v2578 = vunpack.c.l.b16 %v2450
    %v2579 = vunpack.c.l.b16 %v2451
    %v2580 = vunpack.c.l.b16 %v2452
    %v2581 = vunpack.c.l.b16 %v2453
    %v2582 = vunpack.c.l.b16 %v2454
    %v2583 = vunpack.c.l.b16 %v2455
    %v2584 = vunpack.c.l.b16 %v2456
    %v2585 = vunpack.c.l.b16 %v2457
    %v2586 = vunpack.c.l.b16 %v2458
    %v2587 = vunpack.c.l.b16 %v2459
    %v2588 = vunpack.c.l.b16 %v2460
    %v2589 = vunpack.c.l.b16 %v2461
    %v2590 = vunpack.c.l.b16 %v2462
    %v2591 = vunpack.c.l.b16 %v2463
    %v2592 = vunpack.c.l.b16 %v2464
    %v2593 = vunpack.c.l.b16 %v2465
    %v2594 = vunpack.c.l.b16 %v2466
    %v2595 = vunpack.c.l.b16 %v2467
    %v2596 = vunpack.c.l.b16 %v2468
    %v2597 = vunpack.c.l.b16 %v2469
    %v2598 = vunpack.c.l.b16 %v2470
    %v2599 = vunpack.c.l.b16 %v2471
    %v2600 = vunpack.c.l.b16 %v2472
    %v2601 = vunpack.c.l.b16 %v2473
    %v2602 = vunpack.c.l.b16 %v2474
    %v2603 = vunpack.c.l.b16 %v2475
    %v2604 = vunpack.c.l.b16 %v2476
    %v2605 = vunpack.c.l.b16 %v2477
    %v2606 = vunpack.c.l.b16 %v2478
    %v2607 = vunpack.c.l.b16 %v2479
    %v2608 = vunpack.c.l.b16 %v2480
    %v2609 = vunpack.c.l.b16 %v2481
    %v2610 = vunpack.c.l.b16 %v2482
    %v2611 = vunpack.c.l.b16 %v2483
    %v2612 = vpack.c.b16 %v2549, %v2548
    %v2613 = vpack.c.b16 %v2551, %v2550
    %v2614 = vpack.c.b16 %v2553, %v2552
    %v2615 = vpack.c.b16 %v2555, %v2554
    %v2616 = vpack.c.b16 %v2557, %v2556
    %v2617 = vpack.c.b16 %v2559, %v2558
    %v2618 = vpack.c.b16 %v2561, %v2560
    %v2619 = vpack.c.b16 %v2563, %v2562
    %v2620 = vpack.c.b16 %v2565, %v2564
    %v2621 = vpack.c.b16 %v2567, %v2566
    %v2622 = vpack.c.b16 %v2569, %v2568
    %v2623 = vpack.c.b16 %v2571, %v2570
    %v2624 = vpack.c.b16 %v2573, %v2572
    %v2625 = vpack.c.b16 %v2575, %v2574
    %v2626 = vpack.c.b16 %v2577, %v2576
    %v2627 = vpack.c.b16 %v2579, %v2578
    %v2628 = vpack.c.b16 %v2581, %v2580
    %v2629 = vpack.c.b16 %v2583, %v2582
    %v2630 = vpack.c.b16 %v2585, %v2584
    %v2631 = vpack.c.b16 %v2587, %v2586
    %v2632 = vpack.c.b16 %v2589, %v2588
    %v2633 = vpack.c.b16 %v2591, %v2590
    %v2634 = vpack.c.b16 %v2593, %v2592
    %v2635 = vpack.c.b16 %v2595, %v2594
    %v2636 = vpack.c.b16 %v2597, %v2596
    %v2637 = vpack.c.b16 %v2599, %v2598
    %v2638 = vpack.c.b16 %v2601, %v2600
    %v2639 = vpack.c.b16 %v2603, %v2602
    %v2640 = vpack.c.b16 %v2605, %v2604
    %v2641 = vpack.c.b16 %v2607, %v2606
    %v2642 = vpack.c.b16 %v2609, %v2608
    %v2643 = vpack.c.b16 %v2611, %v2610
    %2676 = vmatprep.subr.bf16.mxu0 0
    %2677 = vmatpush1.bf16.msra.mxu0 %v2612
    %2678 = vmatprep.subr.bf16.mxu0 0
    %2679 = vmatpush1.bf16.msra.mxu0 %v2613
    %2680 = vmatprep.subr.bf16.mxu0 0
    %2681 = vmatpush1.bf16.msra.mxu0 %v2614
    %2682 = vmatprep.subr.bf16.mxu0 0
    %2683 = vmatpush1.bf16.msra.mxu0 %v2615
    %2684 = vmatprep.subr.bf16.mxu0 0
    %2685 = vmatpush1.bf16.msra.mxu0 %v2616
    %2686 = vmatprep.subr.bf16.mxu0 0
    %2687 = vmatpush1.bf16.msra.mxu0 %v2617
    %2688 = vmatprep.subr.bf16.mxu0 0
    %2689 = vmatpush1.bf16.msra.mxu0 %v2618
    %2690 = vmatprep.subr.bf16.mxu0 0
    %2691 = vmatpush1.bf16.msra.mxu0 %v2619
    %2692 = vmatprep.subr.bf16.mxu0 0
    %2693 = vmatpush1.bf16.msra.mxu0 %v2620
    %2694 = vmatprep.subr.bf16.mxu0 0
    %2695 = vmatpush1.bf16.msra.mxu0 %v2621
    %2696 = vmatprep.subr.bf16.mxu0 0
    %2697 = vmatpush1.bf16.msra.mxu0 %v2622
    %2698 = vmatprep.subr.bf16.mxu0 0
    %2699 = vmatpush1.bf16.msra.mxu0 %v2623
    %2700 = vmatprep.subr.bf16.mxu0 0
    %2701 = vmatpush1.bf16.msra.mxu0 %v2624
    %2702 = vmatprep.subr.bf16.mxu0 0
    %2703 = vmatpush1.bf16.msra.mxu0 %v2625
    %2704 = vmatprep.subr.bf16.mxu0 0
    %2705 = vmatpush1.bf16.msra.mxu0 %v2626
    %2706 = vmatprep.subr.bf16.mxu0 0
    %2707 = vmatpush1.bf16.msra.mxu0 %v2627
    %2708 = vmatprep.mubr.bf16.mxu0 %v2415
    %2709 = vmatmul.mubr.bf16.gmra.mrb[0].mxu0 %v2414
    %v2710 = vpop.f32.mrb[0].mxu0
    %v2711 = vadd.f32 0.0, %v2710
    %v2712 = vpop.f32.mrb[0].mxu0
    %v2713 = vpop.f32.mrb[0].mxu0
    %v2714 = vadd.f32 0.0, %v2713
    %v2715 = vpop.f32.mrb[0].mxu0
    %2716 = vdwg.mxu0
    %2717 = vmatprep.subr.bf16.mxu0 0
    %2718 = vmatpush1.bf16.msra.mxu0 %v2628
    %2719 = vmatprep.subr.bf16.mxu0 0
    %2720 = vmatpush1.bf16.msra.mxu0 %v2629
    %2721 = vmatprep.subr.bf16.mxu0 0
    %2722 = vmatpush1.bf16.msra.mxu0 %v2630
    %2723 = vmatprep.subr.bf16.mxu0 0
    %2724 = vmatpush1.bf16.msra.mxu0 %v2631
    %2725 = vmatprep.subr.bf16.mxu0 0
    %2726 = vmatpush1.bf16.msra.mxu0 %v2632
    %2727 = vmatprep.subr.bf16.mxu0 0
    %2728 = vmatpush1.bf16.msra.mxu0 %v2633
    %2729 = vmatprep.subr.bf16.mxu0 0
    %2730 = vmatpush1.bf16.msra.mxu0 %v2634
    %2731 = vmatprep.subr.bf16.mxu0 0
    %2732 = vmatpush1.bf16.msra.mxu0 %v2635
    %2733 = vmatprep.subr.bf16.mxu0 0
    %2734 = vmatpush1.bf16.msra.mxu0 %v2636
    %2735 = vmatprep.subr.bf16.mxu0 0
    %2736 = vmatpush1.bf16.msra.mxu0 %v2637
    %2737 = vmatprep.subr.bf16.mxu0 0
    %2738 = vmatpush1.bf16.msra.mxu0 %v2638
    %2739 = vmatprep.subr.bf16.mxu0 0
    %2740 = vmatpush1.bf16.msra.mxu0 %v2639
    %2741 = vmatprep.subr.bf16.mxu0 0
    %2742 = vmatpush1.bf16.msra.mxu0 %v2640
    %2743 = vmatprep.subr.bf16.mxu0 0
    %2744 = vmatpush1.bf16.msra.mxu0 %v2641
    %2745 = vmatprep.subr.bf16.mxu0 0
    %2746 = vmatpush1.bf16.msra.mxu0 %v2642
    %2747 = vmatprep.subr.bf16.mxu0 0
    %2748 = vmatpush1.bf16.msra.mxu0 %v2643
    %2749 = vmatprep.mubr.bf16.mxu0 %v2417
    %2750 = vmatmul.mubr.bf16.gmra.mrb[0].mxu0 %v2416
    %v2751 = vpop.f32.mrb[0].mxu0
    %v2752 = vadd.f32 %v2711, %v2751
    %v2753 = vpop.f32.mrb[0].mxu0
    %v2754 = vpop.f32.mrb[0].mxu0
    %v2755 = vadd.f32 %v2714, %v2754
    %v2756 = vpop.f32.mrb[0].mxu0
    %2757 = vdwg.mxu0
    %v2758 = vadd.f32 %v2418, %v2752
    %v2759 = vadd.f32 %v2419, %v2755
    %2760 = vst [vmem:[#allocation2] sm:$0xff] %v2758
    %2761 = vst [vmem:[#allocation2 + $0x8] sm:$0xff] %v2759
    %s2762 = scalar_lea.vmem [#allocation12], 16
    %v2763 = vld [vmem:[%s2762] sm:$0xff]
    %v2764 = vld [vmem:[%s2762 + $0x8] sm:$0xff]
    %v2765 = vld [vmem:[%s2762 + $0x40] sm:$0xff]
    %v2766 = vld [vmem:[%s2762 + $0x48] sm:$0xff]
    %v2767 = vld [vmem:[%s2762 + $0x80] sm:$0xff]
    %v2768 = vld [vmem:[%s2762 + $0x88] sm:$0xff]
    %v2769 = vld [vmem:[%s2762 + $0xc0] sm:$0xff]
    %v2770 = vld [vmem:[%s2762 + $0xc8] sm:$0xff]
    %v2771 = vld [vmem:[%s2762 + $0x100] sm:$0xff]
    %v2772 = vld [vmem:[%s2762 + $0x108] sm:$0xff]
    %v2773 = vld [vmem:[%s2762 + $0x140] sm:$0xff]
    %v2774 = vld [vmem:[%s2762 + $0x148] sm:$0xff]
    %v2775 = vld [vmem:[%s2762 + $0x180] sm:$0xff]
    %v2776 = vld [vmem:[%s2762 + $0x188] sm:$0xff]
    %v2777 = vld [vmem:[%s2762 + $0x1c0] sm:$0xff]
    %v2778 = vld [vmem:[%s2762 + $0x1c8] sm:$0xff]
    %v2779 = vld [vmem:[%s2762 + $0x200] sm:$0xff]
    %v2780 = vld [vmem:[%s2762 + $0x208] sm:$0xff]
    %v2781 = vld [vmem:[%s2762 + $0x240] sm:$0xff]
    %v2782 = vld [vmem:[%s2762 + $0x248] sm:$0xff]
    %v2783 = vld [vmem:[%s2762 + $0x280] sm:$0xff]
    %v2784 = vld [vmem:[%s2762 + $0x288] sm:$0xff]
    %v2785 = vld [vmem:[%s2762 + $0x2c0] sm:$0xff]
    %v2786 = vld [vmem:[%s2762 + $0x2c8] sm:$0xff]
    %v2787 = vld [vmem:[%s2762 + $0x300] sm:$0xff]
    %v2788 = vld [vmem:[%s2762 + $0x308] sm:$0xff]
    %v2789 = vld [vmem:[%s2762 + $0x340] sm:$0xff]
    %v2790 = vld [vmem:[%s2762 + $0x348] sm:$0xff]
    %v2791 = vld [vmem:[%s2762 + $0x380] sm:$0xff]
    %v2792 = vld [vmem:[%s2762 + $0x388] sm:$0xff]
    %v2793 = vld [vmem:[%s2762 + $0x3c0] sm:$0xff]
    %v2794 = vld [vmem:[%s2762 + $0x3c8] sm:$0xff]
    %v2795 = vld [vmem:[%s2762 + $0x400] sm:$0xff]
    %v2796 = vld [vmem:[%s2762 + $0x408] sm:$0xff]
    %v2797 = vld [vmem:[%s2762 + $0x440] sm:$0xff]
    %v2798 = vld [vmem:[%s2762 + $0x448] sm:$0xff]
    %v2799 = vld [vmem:[%s2762 + $0x480] sm:$0xff]
    %v2800 = vld [vmem:[%s2762 + $0x488] sm:$0xff]
    %v2801 = vld [vmem:[%s2762 + $0x4c0] sm:$0xff]
    %v2802 = vld [vmem:[%s2762 + $0x4c8] sm:$0xff]
    %v2803 = vld [vmem:[%s2762 + $0x500] sm:$0xff]
    %v2804 = vld [vmem:[%s2762 + $0x508] sm:$0xff]
    %v2805 = vld [vmem:[%s2762 + $0x540] sm:$0xff]
    %v2806 = vld [vmem:[%s2762 + $0x548] sm:$0xff]
    %v2807 = vld [vmem:[%s2762 + $0x580] sm:$0xff]
    %v2808 = vld [vmem:[%s2762 + $0x588] sm:$0xff]
    %v2809 = vld [vmem:[%s2762 + $0x5c0] sm:$0xff]
    %v2810 = vld [vmem:[%s2762 + $0x5c8] sm:$0xff]
    %v2811 = vld [vmem:[%s2762 + $0x600] sm:$0xff]
    %v2812 = vld [vmem:[%s2762 + $0x608] sm:$0xff]
    %v2813 = vld [vmem:[%s2762 + $0x640] sm:$0xff]
    %v2814 = vld [vmem:[%s2762 + $0x648] sm:$0xff]
    %v2815 = vld [vmem:[%s2762 + $0x680] sm:$0xff]
    %v2816 = vld [vmem:[%s2762 + $0x688] sm:$0xff]
    %v2817 = vld [vmem:[%s2762 + $0x6c0] sm:$0xff]
    %v2818 = vld [vmem:[%s2762 + $0x6c8] sm:$0xff]
    %v2819 = vld [vmem:[%s2762 + $0x700] sm:$0xff]
    %v2820 = vld [vmem:[%s2762 + $0x708] sm:$0xff]
    %v2821 = vld [vmem:[%s2762 + $0x740] sm:$0xff]
    %v2822 = vld [vmem:[%s2762 + $0x748] sm:$0xff]
    %v2823 = vld [vmem:[%s2762 + $0x780] sm:$0xff]
    %v2824 = vld [vmem:[%s2762 + $0x788] sm:$0xff]
    %v2825 = vld [vmem:[%s2762 + $0x7c0] sm:$0xff]
    %v2826 = vld [vmem:[%s2762 + $0x7c8] sm:$0xff]
    %v2827 = vld [vmem:[%s2762 + $0x800] sm:$0xff]
    %v2828 = vld [vmem:[%s2762 + $0x808] sm:$0xff]
    %v2829 = vld [vmem:[%s2762 + $0x840] sm:$0xff]
    %v2830 = vld [vmem:[%s2762 + $0x848] sm:$0xff]
    %v2831 = vld [vmem:[%s2762 + $0x880] sm:$0xff]
    %v2832 = vld [vmem:[%s2762 + $0x888] sm:$0xff]
    %v2833 = vld [vmem:[%s2762 + $0x8c0] sm:$0xff]
    %v2834 = vld [vmem:[%s2762 + $0x8c8] sm:$0xff]
    %v2835 = vld [vmem:[%s2762 + $0x900] sm:$0xff]
    %v2836 = vld [vmem:[%s2762 + $0x908] sm:$0xff]
    %v2837 = vld [vmem:[%s2762 + $0x940] sm:$0xff]
    %v2838 = vld [vmem:[%s2762 + $0x948] sm:$0xff]
    %v2839 = vld [vmem:[%s2762 + $0x980] sm:$0xff]
    %v2840 = vld [vmem:[%s2762 + $0x988] sm:$0xff]
    %v2841 = vld [vmem:[%s2762 + $0x9c0] sm:$0xff]
    %v2842 = vld [vmem:[%s2762 + $0x9c8] sm:$0xff]
    %v2843 = vld [vmem:[%s2762 + $0xa00] sm:$0xff]
    %v2844 = vld [vmem:[%s2762 + $0xa08] sm:$0xff]
    %v2845 = vld [vmem:[%s2762 + $0xa40] sm:$0xff]
    %v2846 = vld [vmem:[%s2762 + $0xa48] sm:$0xff]
    %v2847 = vld [vmem:[%s2762 + $0xa80] sm:$0xff]
    %v2848 = vld [vmem:[%s2762 + $0xa88] sm:$0xff]
    %v2849 = vld [vmem:[%s2762 + $0xac0] sm:$0xff]
    %v2850 = vld [vmem:[%s2762 + $0xac8] sm:$0xff]
    %v2851 = vld [vmem:[%s2762 + $0xb00] sm:$0xff]
    %v2852 = vld [vmem:[%s2762 + $0xb08] sm:$0xff]
    %v2853 = vld [vmem:[%s2762 + $0xb40] sm:$0xff]
    %v2854 = vld [vmem:[%s2762 + $0xb48] sm:$0xff]
    %v2855 = vld [vmem:[%s2762 + $0xb80] sm:$0xff]
    %v2856 = vld [vmem:[%s2762 + $0xb88] sm:$0xff]
    %v2857 = vld [vmem:[%s2762 + $0xbc0] sm:$0xff]
    %v2858 = vld [vmem:[%s2762 + $0xbc8] sm:$0xff]
    %v2859 = vld [vmem:[%s2762 + $0xc00] sm:$0xff]
    %v2860 = vld [vmem:[%s2762 + $0xc08] sm:$0xff]
    %v2861 = vld [vmem:[%s2762 + $0xc40] sm:$0xff]
    %v2862 = vld [vmem:[%s2762 + $0xc48] sm:$0xff]
    %v2863 = vld [vmem:[%s2762 + $0xc80] sm:$0xff]
    %v2864 = vld [vmem:[%s2762 + $0xc88] sm:$0xff]
    %v2865 = vld [vmem:[%s2762 + $0xcc0] sm:$0xff]
    %v2866 = vld [vmem:[%s2762 + $0xcc8] sm:$0xff]
    %v2867 = vld [vmem:[%s2762 + $0xd00] sm:$0xff]
    %v2868 = vld [vmem:[%s2762 + $0xd08] sm:$0xff]
    %v2869 = vld [vmem:[%s2762 + $0xd40] sm:$0xff]
    %v2870 = vld [vmem:[%s2762 + $0xd48] sm:$0xff]
    %v2871 = vld [vmem:[%s2762 + $0xd80] sm:$0xff]
    %v2872 = vld [vmem:[%s2762 + $0xd88] sm:$0xff]
    %v2873 = vld [vmem:[%s2762 + $0xdc0] sm:$0xff]
    %v2874 = vld [vmem:[%s2762 + $0xdc8] sm:$0xff]
    %v2875 = vld [vmem:[%s2762 + $0xe00] sm:$0xff]
    %v2876 = vld [vmem:[%s2762 + $0xe08] sm:$0xff]
    %v2877 = vld [vmem:[%s2762 + $0xe40] sm:$0xff]
    %v2878 = vld [vmem:[%s2762 + $0xe48] sm:$0xff]
    %v2879 = vld [vmem:[%s2762 + $0xe80] sm:$0xff]
    %v2880 = vld [vmem:[%s2762 + $0xe88] sm:$0xff]
    %v2881 = vld [vmem:[%s2762 + $0xec0] sm:$0xff]
    %v2882 = vld [vmem:[%s2762 + $0xec8] sm:$0xff]
    %v2883 = vld [vmem:[%s2762 + $0xf00] sm:$0xff]
    %v2884 = vld [vmem:[%s2762 + $0xf08] sm:$0xff]
    %v2885 = vld [vmem:[%s2762 + $0xf40] sm:$0xff]
    %v2886 = vld [vmem:[%s2762 + $0xf48] sm:$0xff]
    %v2887 = vld [vmem:[%s2762 + $0xf80] sm:$0xff]
    %v2888 = vld [vmem:[%s2762 + $0xf88] sm:$0xff]
    %v2889 = vld [vmem:[%s2762 + $0xfc0] sm:$0xff]
    %v2890 = vld [vmem:[%s2762 + $0xfc8] sm:$0xff]
    %s2891 = scalar_lea.vmem [#allocation14], 4
    %v2892 = vld [vmem:[%s2891] sm:$0xf]
    %v2894 = vlaneseq
    %v2895 = vshrl.u32 %v2894, 7
    %v2896 = vsub.s32 0, %v2895
    %v2897 = vrot.slane %v2892, %v2896
    %v2898 = vlaneseq
    %v2899 = vshrl.u32 %v2898, 7
    %v2900 = vsub.s32 1, %v2899
    %v2901 = vrot.slane %v2892, %v2900
    %v2902 = vlaneseq
    %v2903 = vshrl.u32 %v2902, 7
    %v2904 = vsub.s32 2, %v2903
    %v2905 = vrot.slane %v2892, %v2904
    %v2906 = vlaneseq
    %v2907 = vshrl.u32 %v2906, 7
    %v2908 = vsub.s32 3, %v2907
    %v2909 = vrot.slane %v2892, %v2908
    %v3042 = vunpack.c.l.b16 %v2763
    %v3043 = vunpack.c.h.b16 %v2763
    %v3044 = vunpack.c.l.b16 %v2764
    %v3045 = vunpack.c.h.b16 %v2764
    %v3046 = vunpack.c.l.b16 %v2765
    %v3047 = vunpack.c.h.b16 %v2765
    %v3048 = vunpack.c.l.b16 %v2766
    %v3049 = vunpack.c.h.b16 %v2766
    %v3050 = vunpack.c.l.b16 %v2767
    %v3051 = vunpack.c.h.b16 %v2767
    %v3052 = vunpack.c.l.b16 %v2768
    %v3053 = vunpack.c.h.b16 %v2768
    %v3054 = vunpack.c.l.b16 %v2769
    %v3055 = vunpack.c.h.b16 %v2769
    %v3056 = vunpack.c.l.b16 %v2770
    %v3057 = vunpack.c.h.b16 %v2770
    %v3058 = vunpack.c.l.b16 %v2771
    %v3059 = vunpack.c.h.b16 %v2771
    %v3060 = vunpack.c.l.b16 %v2772
    %v3061 = vunpack.c.h.b16 %v2772
    %v3062 = vunpack.c.l.b16 %v2773
    %v3063 = vunpack.c.h.b16 %v2773
    %v3064 = vunpack.c.l.b16 %v2774
    %v3065 = vunpack.c.h.b16 %v2774
    %v3066 = vunpack.c.l.b16 %v2775
    %v3067 = vunpack.c.h.b16 %v2775
    %v3068 = vunpack.c.l.b16 %v2776
    %v3069 = vunpack.c.h.b16 %v2776
    %v3070 = vunpack.c.l.b16 %v2777
    %v3071 = vunpack.c.h.b16 %v2777
    %v3072 = vunpack.c.l.b16 %v2778
    %v3073 = vunpack.c.h.b16 %v2778
    %v3074 = vunpack.c.l.b16 %v2779
    %v3075 = vunpack.c.h.b16 %v2779
    %v3076 = vunpack.c.l.b16 %v2780
    %v3077 = vunpack.c.h.b16 %v2780
    %v3078 = vunpack.c.l.b16 %v2781
    %v3079 = vunpack.c.h.b16 %v2781
    %v3080 = vunpack.c.l.b16 %v2782
    %v3081 = vunpack.c.h.b16 %v2782
    %v3082 = vunpack.c.l.b16 %v2783
    %v3083 = vunpack.c.h.b16 %v2783
    %v3084 = vunpack.c.l.b16 %v2784
    %v3085 = vunpack.c.h.b16 %v2784
    %v3086 = vunpack.c.l.b16 %v2785
    %v3087 = vunpack.c.h.b16 %v2785
    %v3088 = vunpack.c.l.b16 %v2786
    %v3089 = vunpack.c.h.b16 %v2786
    %v3090 = vunpack.c.l.b16 %v2787
    %v3091 = vunpack.c.h.b16 %v2787
    %v3092 = vunpack.c.l.b16 %v2788
    %v3093 = vunpack.c.h.b16 %v2788
    %v3094 = vunpack.c.l.b16 %v2789
    %v3095 = vunpack.c.h.b16 %v2789
    %v3096 = vunpack.c.l.b16 %v2790
    %v3097 = vunpack.c.h.b16 %v2790
    %v3098 = vunpack.c.l.b16 %v2791
    %v3099 = vunpack.c.h.b16 %v2791
    %v3100 = vunpack.c.l.b16 %v2792
    %v3101 = vunpack.c.h.b16 %v2792
    %v3102 = vunpack.c.l.b16 %v2793
    %v3103 = vunpack.c.h.b16 %v2793
    %v3104 = vunpack.c.l.b16 %v2794
    %v3105 = vunpack.c.h.b16 %v2794
    %v3106 = vunpack.c.l.b16 %v2795
    %v3107 = vunpack.c.h.b16 %v2795
    %v3108 = vunpack.c.l.b16 %v2796
    %v3109 = vunpack.c.h.b16 %v2796
    %v3110 = vunpack.c.l.b16 %v2797
    %v3111 = vunpack.c.h.b16 %v2797
    %v3112 = vunpack.c.l.b16 %v2798
    %v3113 = vunpack.c.h.b16 %v2798
    %v3114 = vunpack.c.l.b16 %v2799
    %v3115 = vunpack.c.h.b16 %v2799
    %v3116 = vunpack.c.l.b16 %v2800
    %v3117 = vunpack.c.h.b16 %v2800
    %v3118 = vunpack.c.l.b16 %v2801
    %v3119 = vunpack.c.h.b16 %v2801
    %v3120 = vunpack.c.l.b16 %v2802
    %v3121 = vunpack.c.h.b16 %v2802
    %v3122 = vunpack.c.l.b16 %v2803
    %v3123 = vunpack.c.h.b16 %v2803
    %v3124 = vunpack.c.l.b16 %v2804
    %v3125 = vunpack.c.h.b16 %v2804
    %v3126 = vunpack.c.l.b16 %v2805
    %v3127 = vunpack.c.h.b16 %v2805
    %v3128 = vunpack.c.l.b16 %v2806
    %v3129 = vunpack.c.h.b16 %v2806
    %v3130 = vunpack.c.l.b16 %v2807
    %v3131 = vunpack.c.h.b16 %v2807
    %v3132 = vunpack.c.l.b16 %v2808
    %v3133 = vunpack.c.h.b16 %v2808
    %v3134 = vunpack.c.l.b16 %v2809
    %v3135 = vunpack.c.h.b16 %v2809
    %v3136 = vunpack.c.l.b16 %v2810
    %v3137 = vunpack.c.h.b16 %v2810
    %v3138 = vunpack.c.l.b16 %v2811
    %v3139 = vunpack.c.h.b16 %v2811
    %v3140 = vunpack.c.l.b16 %v2812
    %v3141 = vunpack.c.h.b16 %v2812
    %v3142 = vunpack.c.l.b16 %v2813
    %v3143 = vunpack.c.h.b16 %v2813
    %v3144 = vunpack.c.l.b16 %v2814
    %v3145 = vunpack.c.h.b16 %v2814
    %v3146 = vunpack.c.l.b16 %v2815
    %v3147 = vunpack.c.h.b16 %v2815
    %v3148 = vunpack.c.l.b16 %v2816
    %v3149 = vunpack.c.h.b16 %v2816
    %v3150 = vunpack.c.l.b16 %v2817
    %v3151 = vunpack.c.h.b16 %v2817
    %v3152 = vunpack.c.l.b16 %v2818
    %v3153 = vunpack.c.h.b16 %v2818
    %v3154 = vunpack.c.l.b16 %v2819
    %v3155 = vunpack.c.h.b16 %v2819
    %v3156 = vunpack.c.l.b16 %v2820
    %v3157 = vunpack.c.h.b16 %v2820
    %v3158 = vunpack.c.l.b16 %v2821
    %v3159 = vunpack.c.h.b16 %v2821
    %v3160 = vunpack.c.l.b16 %v2822
    %v3161 = vunpack.c.h.b16 %v2822
    %v3162 = vunpack.c.l.b16 %v2823
    %v3163 = vunpack.c.h.b16 %v2823
    %v3164 = vunpack.c.l.b16 %v2824
    %v3165 = vunpack.c.h.b16 %v2824
    %v3166 = vunpack.c.l.b16 %v2825
    %v3167 = vunpack.c.h.b16 %v2825
    %v3168 = vunpack.c.l.b16 %v2826
    %v3169 = vunpack.c.h.b16 %v2826
    %v3170 = vunpack.c.l.b16 %v2827
    %v3171 = vunpack.c.h.b16 %v2827
    %v3172 = vunpack.c.l.b16 %v2828
    %v3173 = vunpack.c.h.b16 %v2828
    %v3174 = vunpack.c.l.b16 %v2829
    %v3175 = vunpack.c.h.b16 %v2829
    %v3176 = vunpack.c.l.b16 %v2830
    %v3177 = vunpack.c.h.b16 %v2830
    %v3178 = vunpack.c.l.b16 %v2831
    %v3179 = vunpack.c.h.b16 %v2831
    %v3180 = vunpack.c.l.b16 %v2832
    %v3181 = vunpack.c.h.b16 %v2832
    %v3182 = vunpack.c.l.b16 %v2833
    %v3183 = vunpack.c.h.b16 %v2833
    %v3184 = vunpack.c.l.b16 %v2834
    %v3185 = vunpack.c.h.b16 %v2834
    %v3186 = vunpack.c.l.b16 %v2835
    %v3187 = vunpack.c.h.b16 %v2835
    %v3188 = vunpack.c.l.b16 %v2836
    %v3189 = vunpack.c.h.b16 %v2836
    %v3190 = vunpack.c.l.b16 %v2837
    %v3191 = vunpack.c.h.b16 %v2837
    %v3192 = vunpack.c.l.b16 %v2838
    %v3193 = vunpack.c.h.b16 %v2838
    %v3194 = vunpack.c.l.b16 %v2839
    %v3195 = vunpack.c.h.b16 %v2839
    %v3196 = vunpack.c.l.b16 %v2840
    %v3197 = vunpack.c.h.b16 %v2840
    %v3198 = vunpack.c.l.b16 %v2841
    %v3199 = vunpack.c.h.b16 %v2841
    %v3200 = vunpack.c.l.b16 %v2842
    %v3201 = vunpack.c.h.b16 %v2842
    %v3202 = vunpack.c.l.b16 %v2843
    %v3203 = vunpack.c.h.b16 %v2843
    %v3204 = vunpack.c.l.b16 %v2844
    %v3205 = vunpack.c.h.b16 %v2844
    %v3206 = vunpack.c.l.b16 %v2845
    %v3207 = vunpack.c.h.b16 %v2845
    %v3208 = vunpack.c.l.b16 %v2846
    %v3209 = vunpack.c.h.b16 %v2846
    %v3210 = vunpack.c.l.b16 %v2847
    %v3211 = vunpack.c.h.b16 %v2847
    %v3212 = vunpack.c.l.b16 %v2848
    %v3213 = vunpack.c.h.b16 %v2848
    %v3214 = vunpack.c.l.b16 %v2849
    %v3215 = vunpack.c.h.b16 %v2849
    %v3216 = vunpack.c.l.b16 %v2850
    %v3217 = vunpack.c.h.b16 %v2850
    %v3218 = vunpack.c.l.b16 %v2851
    %v3219 = vunpack.c.h.b16 %v2851
    %v3220 = vunpack.c.l.b16 %v2852
    %v3221 = vunpack.c.h.b16 %v2852
    %v3222 = vunpack.c.l.b16 %v2853
    %v3223 = vunpack.c.h.b16 %v2853
    %v3224 = vunpack.c.l.b16 %v2854
    %v3225 = vunpack.c.h.b16 %v2854
    %v3226 = vunpack.c.l.b16 %v2855
    %v3227 = vunpack.c.h.b16 %v2855
    %v3228 = vunpack.c.l.b16 %v2856
    %v3229 = vunpack.c.h.b16 %v2856
    %v3230 = vunpack.c.l.b16 %v2857
    %v3231 = vunpack.c.h.b16 %v2857
    %v3232 = vunpack.c.l.b16 %v2858
    %v3233 = vunpack.c.h.b16 %v2858
    %v3234 = vunpack.c.l.b16 %v2859
    %v3235 = vunpack.c.h.b16 %v2859
    %v3236 = vunpack.c.l.b16 %v2860
    %v3237 = vunpack.c.h.b16 %v2860
    %v3238 = vunpack.c.l.b16 %v2861
    %v3239 = vunpack.c.h.b16 %v2861
    %v3240 = vunpack.c.l.b16 %v2862
    %v3241 = vunpack.c.h.b16 %v2862
    %v3242 = vunpack.c.l.b16 %v2863
    %v3243 = vunpack.c.h.b16 %v2863
    %v3244 = vunpack.c.l.b16 %v2864
    %v3245 = vunpack.c.h.b16 %v2864
    %v3246 = vunpack.c.l.b16 %v2865
    %v3247 = vunpack.c.h.b16 %v2865
    %v3248 = vunpack.c.l.b16 %v2866
    %v3249 = vunpack.c.h.b16 %v2866
    %v3250 = vunpack.c.l.b16 %v2867
    %v3251 = vunpack.c.h.b16 %v2867
    %v3252 = vunpack.c.l.b16 %v2868
    %v3253 = vunpack.c.h.b16 %v2868
    %v3254 = vunpack.c.l.b16 %v2869
    %v3255 = vunpack.c.h.b16 %v2869
    %v3256 = vunpack.c.l.b16 %v2870
    %v3257 = vunpack.c.h.b16 %v2870
    %v3258 = vunpack.c.l.b16 %v2871
    %v3259 = vunpack.c.h.b16 %v2871
    %v3260 = vunpack.c.l.b16 %v2872
    %v3261 = vunpack.c.h.b16 %v2872
    %v3262 = vunpack.c.l.b16 %v2873
    %v3263 = vunpack.c.h.b16 %v2873
    %v3264 = vunpack.c.l.b16 %v2874
    %v3265 = vunpack.c.h.b16 %v2874
    %v3266 = vunpack.c.l.b16 %v2875
    %v3267 = vunpack.c.h.b16 %v2875
    %v3268 = vunpack.c.l.b16 %v2876
    %v3269 = vunpack.c.h.b16 %v2876
    %v3270 = vunpack.c.l.b16 %v2877
    %v3271 = vunpack.c.h.b16 %v2877
    %v3272 = vunpack.c.l.b16 %v2878
    %v3273 = vunpack.c.h.b16 %v2878
    %v3274 = vunpack.c.l.b16 %v2879
    %v3275 = vunpack.c.h.b16 %v2879
    %v3276 = vunpack.c.l.b16 %v2880
    %v3277 = vunpack.c.h.b16 %v2880
    %v3278 = vunpack.c.l.b16 %v2881
    %v3279 = vunpack.c.h.b16 %v2881
    %v3280 = vunpack.c.l.b16 %v2882
    %v3281 = vunpack.c.h.b16 %v2882
    %v3282 = vunpack.c.l.b16 %v2883
    %v3283 = vunpack.c.h.b16 %v2883
    %v3284 = vunpack.c.l.b16 %v2884
    %v3285 = vunpack.c.h.b16 %v2884
    %v3286 = vunpack.c.l.b16 %v2885
    %v3287 = vunpack.c.h.b16 %v2885
    %v3288 = vunpack.c.l.b16 %v2886
    %v3289 = vunpack.c.h.b16 %v2886
    %v3290 = vunpack.c.l.b16 %v2887
    %v3291 = vunpack.c.h.b16 %v2887
    %v3292 = vunpack.c.l.b16 %v2888
    %v3293 = vunpack.c.h.b16 %v2888
    %v3294 = vunpack.c.l.b16 %v2889
    %v3295 = vunpack.c.h.b16 %v2889
    %v3296 = vunpack.c.l.b16 %v2890
    %v3297 = vunpack.c.h.b16 %v2890
    %v3298 = vpack.c.b16 %v3046, %v3042
    %v3299 = vpack.c.b16 %v3047, %v3043
    %v3300 = vpack.c.b16 %v3048, %v3044
    %v3301 = vpack.c.b16 %v3049, %v3045
    %v3302 = vpack.c.b16 %v3054, %v3050
    %v3303 = vpack.c.b16 %v3055, %v3051
    %v3304 = vpack.c.b16 %v3056, %v3052
    %v3305 = vpack.c.b16 %v3057, %v3053
    %v3306 = vpack.c.b16 %v3062, %v3058
    %v3307 = vpack.c.b16 %v3063, %v3059
    %v3308 = vpack.c.b16 %v3064, %v3060
    %v3309 = vpack.c.b16 %v3065, %v3061
    %v3310 = vpack.c.b16 %v3070, %v3066
    %v3311 = vpack.c.b16 %v3071, %v3067
    %v3312 = vpack.c.b16 %v3072, %v3068
    %v3313 = vpack.c.b16 %v3073, %v3069
    %v3314 = vpack.c.b16 %v3078, %v3074
    %v3315 = vpack.c.b16 %v3079, %v3075
    %v3316 = vpack.c.b16 %v3080, %v3076
    %v3317 = vpack.c.b16 %v3081, %v3077
    %v3318 = vpack.c.b16 %v3086, %v3082
    %v3319 = vpack.c.b16 %v3087, %v3083
    %v3320 = vpack.c.b16 %v3088, %v3084
    %v3321 = vpack.c.b16 %v3089, %v3085
    %v3322 = vpack.c.b16 %v3094, %v3090
    %v3323 = vpack.c.b16 %v3095, %v3091
    %v3324 = vpack.c.b16 %v3096, %v3092
    %v3325 = vpack.c.b16 %v3097, %v3093
    %v3326 = vpack.c.b16 %v3102, %v3098
    %v3327 = vpack.c.b16 %v3103, %v3099
    %v3328 = vpack.c.b16 %v3104, %v3100
    %v3329 = vpack.c.b16 %v3105, %v3101
    %v3330 = vpack.c.b16 %v3110, %v3106
    %v3331 = vpack.c.b16 %v3111, %v3107
    %v3332 = vpack.c.b16 %v3112, %v3108
    %v3333 = vpack.c.b16 %v3113, %v3109
    %v3334 = vpack.c.b16 %v3118, %v3114
    %v3335 = vpack.c.b16 %v3119, %v3115
    %v3336 = vpack.c.b16 %v3120, %v3116
    %v3337 = vpack.c.b16 %v3121, %v3117
    %v3338 = vpack.c.b16 %v3126, %v3122
    %v3339 = vpack.c.b16 %v3127, %v3123
    %v3340 = vpack.c.b16 %v3128, %v3124
    %v3341 = vpack.c.b16 %v3129, %v3125
    %v3342 = vpack.c.b16 %v3134, %v3130
    %v3343 = vpack.c.b16 %v3135, %v3131
    %v3344 = vpack.c.b16 %v3136, %v3132
    %v3345 = vpack.c.b16 %v3137, %v3133
    %v3346 = vpack.c.b16 %v3142, %v3138
    %v3347 = vpack.c.b16 %v3143, %v3139
    %v3348 = vpack.c.b16 %v3144, %v3140
    %v3349 = vpack.c.b16 %v3145, %v3141
    %v3350 = vpack.c.b16 %v3150, %v3146
    %v3351 = vpack.c.b16 %v3151, %v3147
    %v3352 = vpack.c.b16 %v3152, %v3148
    %v3353 = vpack.c.b16 %v3153, %v3149
    %v3354 = vpack.c.b16 %v3158, %v3154
    %v3355 = vpack.c.b16 %v3159, %v3155
    %v3356 = vpack.c.b16 %v3160, %v3156
    %v3357 = vpack.c.b16 %v3161, %v3157
    %v3358 = vpack.c.b16 %v3166, %v3162
    %v3359 = vpack.c.b16 %v3167, %v3163
    %v3360 = vpack.c.b16 %v3168, %v3164
    %v3361 = vpack.c.b16 %v3169, %v3165
    %v3362 = vpack.c.b16 %v3174, %v3170
    %v3363 = vpack.c.b16 %v3175, %v3171
    %v3364 = vpack.c.b16 %v3176, %v3172
    %v3365 = vpack.c.b16 %v3177, %v3173
    %v3366 = vpack.c.b16 %v3182, %v3178
    %v3367 = vpack.c.b16 %v3183, %v3179
    %v3368 = vpack.c.b16 %v3184, %v3180
    %v3369 = vpack.c.b16 %v3185, %v3181
    %v3370 = vpack.c.b16 %v3190, %v3186
    %v3371 = vpack.c.b16 %v3191, %v3187
    %v3372 = vpack.c.b16 %v3192, %v3188
    %v3373 = vpack.c.b16 %v3193, %v3189
    %v3374 = vpack.c.b16 %v3198, %v3194
    %v3375 = vpack.c.b16 %v3199, %v3195
    %v3376 = vpack.c.b16 %v3200, %v3196
    %v3377 = vpack.c.b16 %v3201, %v3197
    %v3378 = vpack.c.b16 %v3206, %v3202
    %v3379 = vpack.c.b16 %v3207, %v3203
    %v3380 = vpack.c.b16 %v3208, %v3204
    %v3381 = vpack.c.b16 %v3209, %v3205
    %v3382 = vpack.c.b16 %v3214, %v3210
    %v3383 = vpack.c.b16 %v3215, %v3211
    %v3384 = vpack.c.b16 %v3216, %v3212
    %v3385 = vpack.c.b16 %v3217, %v3213
    %v3386 = vpack.c.b16 %v3222, %v3218
    %v3387 = vpack.c.b16 %v3223, %v3219
    %v3388 = vpack.c.b16 %v3224, %v3220
    %v3389 = vpack.c.b16 %v3225, %v3221
    %v3390 = vpack.c.b16 %v3230, %v3226
    %v3391 = vpack.c.b16 %v3231, %v3227
    %v3392 = vpack.c.b16 %v3232, %v3228
    %v3393 = vpack.c.b16 %v3233, %v3229
    %v3394 = vpack.c.b16 %v3238, %v3234
    %v3395 = vpack.c.b16 %v3239, %v3235
    %v3396 = vpack.c.b16 %v3240, %v3236
    %v3397 = vpack.c.b16 %v3241, %v3237
    %v3398 = vpack.c.b16 %v3246, %v3242
    %v3399 = vpack.c.b16 %v3247, %v3243
    %v3400 = vpack.c.b16 %v3248, %v3244
    %v3401 = vpack.c.b16 %v3249, %v3245
    %v3402 = vpack.c.b16 %v3254, %v3250
    %v3403 = vpack.c.b16 %v3255, %v3251
    %v3404 = vpack.c.b16 %v3256, %v3252
    %v3405 = vpack.c.b16 %v3257, %v3253
    %v3406 = vpack.c.b16 %v3262, %v3258
    %v3407 = vpack.c.b16 %v3263, %v3259
    %v3408 = vpack.c.b16 %v3264, %v3260
    %v3409 = vpack.c.b16 %v3265, %v3261
    %v3410 = vpack.c.b16 %v3270, %v3266
    %v3411 = vpack.c.b16 %v3271, %v3267
    %v3412 = vpack.c.b16 %v3272, %v3268
    %v3413 = vpack.c.b16 %v3273, %v3269
    %v3414 = vpack.c.b16 %v3278, %v3274
    %v3415 = vpack.c.b16 %v3279, %v3275
    %v3416 = vpack.c.b16 %v3280, %v3276
    %v3417 = vpack.c.b16 %v3281, %v3277
    %v3418 = vpack.c.b16 %v3286, %v3282
    %v3419 = vpack.c.b16 %v3287, %v3283
    %v3420 = vpack.c.b16 %v3288, %v3284
    %v3421 = vpack.c.b16 %v3289, %v3285
    %v3422 = vpack.c.b16 %v3294, %v3290
    %v3423 = vpack.c.b16 %v3295, %v3291
    %v3424 = vpack.c.b16 %v3296, %v3292
    %v3425 = vpack.c.b16 %v3297, %v3293
    %3554 = vmatprep.subr.bf16.mxu0 %v3299
    %3555 = vmatpush1.bf16.msra.mxu0 %v3298
    %3556 = vmatprep.subr.bf16.mxu0 %v3303
    %3557 = vmatpush1.bf16.msra.mxu0 %v3302
    %3558 = vmatprep.subr.bf16.mxu0 %v3307
    %3559 = vmatpush1.bf16.msra.mxu0 %v3306
    %3560 = vmatprep.subr.bf16.mxu0 %v3311
    %3561 = vmatpush1.bf16.msra.mxu0 %v3310
    %3562 = vmatprep.subr.bf16.mxu0 %v3315
    %3563 = vmatpush1.bf16.msra.mxu0 %v3314
    %3564 = vmatprep.subr.bf16.mxu0 %v3319
    %3565 = vmatpush1.bf16.msra.mxu0 %v3318
    %3566 = vmatprep.subr.bf16.mxu0 %v3323
    %3567 = vmatpush1.bf16.msra.mxu0 %v3322
    %3568 = vmatprep.subr.bf16.mxu0 %v3327
    %3569 = vmatpush1.bf16.msra.mxu0 %v3326
    %3570 = vmatprep.subr.bf16.mxu0 %v3331
    %3571 = vmatpush1.bf16.msra.mxu0 %v3330
    %3572 = vmatprep.subr.bf16.mxu0 %v3335
    %3573 = vmatpush1.bf16.msra.mxu0 %v3334
    %3574 = vmatprep.subr.bf16.mxu0 %v3339
    %3575 = vmatpush1.bf16.msra.mxu0 %v3338
    %3576 = vmatprep.subr.bf16.mxu0 %v3343
    %3577 = vmatpush1.bf16.msra.mxu0 %v3342
    %3578 = vmatprep.subr.bf16.mxu0 %v3347
    %3579 = vmatpush1.bf16.msra.mxu0 %v3346
    %3580 = vmatprep.subr.bf16.mxu0 %v3351
    %3581 = vmatpush1.bf16.msra.mxu0 %v3350
    %3582 = vmatprep.subr.bf16.mxu0 %v3355
    %3583 = vmatpush1.bf16.msra.mxu0 %v3354
    %3584 = vmatprep.subr.bf16.mxu0 %v3359
    %3585 = vmatpush1.bf16.msra.mxu0 %v3358
    %3586 = vmatprep.mubr.bf16.mxu0 %v1439
    %3587 = vmatmul.mubr.bf16.gmra.mrb[0].mxu0 %v1438
    %v3588 = vpop.f32.mrb[0].mxu0
    %v3589 = vadd.f32 %v2897, %v3588
    %v3590 = vpop.f32.mrb[0].mxu0
    %v3591 = vadd.f32 %v2901, %v3590
    %v3592 = vpop.f32.mrb[0].mxu0
    %v3593 = vadd.f32 %v2897, %v3592
    %v3594 = vpop.f32.mrb[0].mxu0
    %v3595 = vadd.f32 %v2901, %v3594
    %3596 = vdwg.mxu0
    %3597 = vmatprep.subr.bf16.mxu0 %v3363
    %3598 = vmatpush1.bf16.msra.mxu0 %v3362
    %3599 = vmatprep.subr.bf16.mxu0 %v3367
    %3600 = vmatpush1.bf16.msra.mxu0 %v3366
    %3601 = vmatprep.subr.bf16.mxu0 %v3371
    %3602 = vmatpush1.bf16.msra.mxu0 %v3370
    %3603 = vmatprep.subr.bf16.mxu0 %v3375
    %3604 = vmatpush1.bf16.msra.mxu0 %v3374
    %3605 = vmatprep.subr.bf16.mxu0 %v3379
    %3606 = vmatpush1.bf16.msra.mxu0 %v3378
    %3607 = vmatprep.subr.bf16.mxu0 %v3383
    %3608 = vmatpush1.bf16.msra.mxu0 %v3382
    %3609 = vmatprep.subr.bf16.mxu0 %v3387
    %3610 = vmatpush1.bf16.msra.mxu0 %v3386
    %3611 = vmatprep.subr.bf16.mxu0 %v3391
    %3612 = vmatpush1.bf16.msra.mxu0 %v3390
    %3613 = vmatprep.subr.bf16.mxu0 %v3395
    %3614 = vmatpush1.bf16.msra.mxu0 %v3394
    %3615 = vmatprep.subr.bf16.mxu0 %v3399
    %3616 = vmatpush1.bf16.msra.mxu0 %v3398
    %3617 = vmatprep.subr.bf16.mxu0 %v3403
    %3618 = vmatpush1.bf16.msra.mxu0 %v3402
    %3619 = vmatprep.subr.bf16.mxu0 %v3407
    %3620 = vmatpush1.bf16.msra.mxu0 %v3406
    %3621 = vmatprep.subr.bf16.mxu0 %v3411
    %3622 = vmatpush1.bf16.msra.mxu0 %v3410
    %3623 = vmatprep.subr.bf16.mxu0 %v3415
    %3624 = vmatpush1.bf16.msra.mxu0 %v3414
    %3625 = vmatprep.subr.bf16.mxu0 %v3419
    %3626 = vmatpush1.bf16.msra.mxu0 %v3418
    %3627 = vmatprep.subr.bf16.mxu0 %v3423
    %3628 = vmatpush1.bf16.msra.mxu0 %v3422
    %3629 = vmatprep.mubr.bf16.mxu0 %v1441
    %3630 = vmatmul.mubr.bf16.gmra.mrb[0].mxu0 %v1440
    %v3631 = vpop.f32.mrb[0].mxu0
    %v3632 = vadd.f32 %v3589, %v3631
    %v3633 = vpop.f32.mrb[0].mxu0
    %v3634 = vadd.f32 %v3591, %v3633
    %v3635 = vpop.f32.mrb[0].mxu0
    %v3636 = vadd.f32 %v3593, %v3635
    %v3637 = vpop.f32.mrb[0].mxu0
    %v3638 = vadd.f32 %v3595, %v3637
    %3639 = vdwg.mxu0
    %3640 = vmatprep.subr.bf16.mxu0 %v3301
    %3641 = vmatpush1.bf16.msra.mxu0 %v3300
    %3642 = vmatprep.subr.bf16.mxu0 %v3305
    %3643 = vmatpush1.bf16.msra.mxu0 %v3304
    %3644 = vmatprep.subr.bf16.mxu0 %v3309
    %3645 = vmatpush1.bf16.msra.mxu0 %v3308
    %3646 = vmatprep.subr.bf16.mxu0 %v3313
    %3647 = vmatpush1.bf16.msra.mxu0 %v3312
    %3648 = vmatprep.subr.bf16.mxu0 %v3317
    %3649 = vmatpush1.bf16.msra.mxu0 %v3316
    %3650 = vmatprep.subr.bf16.mxu0 %v3321
    %3651 = vmatpush1.bf16.msra.mxu0 %v3320
    %3652 = vmatprep.subr.bf16.mxu0 %v3325
    %3653 = vmatpush1.bf16.msra.mxu0 %v3324
    %3654 = vmatprep.subr.bf16.mxu0 %v3329
    %3655 = vmatpush1.bf16.msra.mxu0 %v3328
    %3656 = vmatprep.subr.bf16.mxu0 %v3333
    %3657 = vmatpush1.bf16.msra.mxu0 %v3332
    %3658 = vmatprep.subr.bf16.mxu0 %v3337
    %3659 = vmatpush1.bf16.msra.mxu0 %v3336
    %3660 = vmatprep.subr.bf16.mxu0 %v3341
    %3661 = vmatpush1.bf16.msra.mxu0 %v3340
    %3662 = vmatprep.subr.bf16.mxu0 %v3345
    %3663 = vmatpush1.bf16.msra.mxu0 %v3344
    %3664 = vmatprep.subr.bf16.mxu0 %v3349
    %3665 = vmatpush1.bf16.msra.mxu0 %v3348
    %3666 = vmatprep.subr.bf16.mxu0 %v3353
    %3667 = vmatpush1.bf16.msra.mxu0 %v3352
    %3668 = vmatprep.subr.bf16.mxu0 %v3357
    %3669 = vmatpush1.bf16.msra.mxu0 %v3356
    %3670 = vmatprep.subr.bf16.mxu0 %v3361
    %3671 = vmatpush1.bf16.msra.mxu0 %v3360
    %3672 = vmatprep.mubr.bf16.mxu0 %v1439
    %3673 = vmatmul.mubr.bf16.gmra.mrb[0].mxu0 %v1438
    %v3674 = vpop.f32.mrb[0].mxu0
    %v3675 = vadd.f32 %v2905, %v3674
    %v3676 = vpop.f32.mrb[0].mxu0
    %v3677 = vadd.f32 %v2909, %v3676
    %v3678 = vpop.f32.mrb[0].mxu0
    %v3679 = vadd.f32 %v2905, %v3678
    %v3680 = vpop.f32.mrb[0].mxu0
    %v3681 = vadd.f32 %v2909, %v3680
    %3682 = vdwg.mxu0
    %3683 = vmatprep.subr.bf16.mxu0 %v3365
    %3684 = vmatpush1.bf16.msra.mxu0 %v3364
    %3685 = vmatprep.subr.bf16.mxu0 %v3369
    %3686 = vmatpush1.bf16.msra.mxu0 %v3368
    %3687 = vmatprep.subr.bf16.mxu0 %v3373
    %3688 = vmatpush1.bf16.msra.mxu0 %v3372
    %3689 = vmatprep.subr.bf16.mxu0 %v3377
    %3690 = vmatpush1.bf16.msra.mxu0 %v3376
    %3691 = vmatprep.subr.bf16.mxu0 %v3381
    %3692 = vmatpush1.bf16.msra.mxu0 %v3380
    %3693 = vmatprep.subr.bf16.mxu0 %v3385
    %3694 = vmatpush1.bf16.msra.mxu0 %v3384
    %3695 = vmatprep.subr.bf16.mxu0 %v3389
    %3696 = vmatpush1.bf16.msra.mxu0 %v3388
    %3697 = vmatprep.subr.bf16.mxu0 %v3393
    %3698 = vmatpush1.bf16.msra.mxu0 %v3392
    %3699 = vmatprep.subr.bf16.mxu0 %v3397
    %3700 = vmatpush1.bf16.msra.mxu0 %v3396
    %3701 = vmatprep.subr.bf16.mxu0 %v3401
    %3702 = vmatpush1.bf16.msra.mxu0 %v3400
    %3703 = vmatprep.subr.bf16.mxu0 %v3405
    %3704 = vmatpush1.bf16.msra.mxu0 %v3404
    %3705 = vmatprep.subr.bf16.mxu0 %v3409
    %3706 = vmatpush1.bf16.msra.mxu0 %v3408
    %3707 = vmatprep.subr.bf16.mxu0 %v3413
    %3708 = vmatpush1.bf16.msra.mxu0 %v3412
    %3709 = vmatprep.subr.bf16.mxu0 %v3417
    %3710 = vmatpush1.bf16.msra.mxu0 %v3416
    %3711 = vmatprep.subr.bf16.mxu0 %v3421
    %3712 = vmatpush1.bf16.msra.mxu0 %v3420
    %3713 = vmatprep.subr.bf16.mxu0 %v3425
    %3714 = vmatpush1.bf16.msra.mxu0 %v3424
    %3715 = vmatprep.mubr.bf16.mxu0 %v1441
    %3716 = vmatmul.mubr.bf16.gmra.mrb[0].mxu0 %v1440
    %v3717 = vpop.f32.mrb[0].mxu0
    %v3718 = vadd.f32 %v3675, %v3717
    %v3719 = vpop.f32.mrb[0].mxu0
    %v3720 = vadd.f32 %v3677, %v3719
    %v3721 = vpop.f32.mrb[0].mxu0
    %v3722 = vadd.f32 %v3679, %v3721
    %v3723 = vpop.f32.mrb[0].mxu0
    %v3724 = vadd.f32 %v3681, %v3723
    %3725 = vdwg.mxu0
    %v3726 = vmax.f32 %v3632, 0.0
    %v3727 = vmax.f32 %v3634, 0.0
    %v3728 = vmax.f32 %v3718, 0.0
    %v3729 = vmax.f32 %v3720, 0.0
    %v3730 = vmax.f32 %v3636, 0.0
    %v3731 = vmax.f32 %v3638, 0.0
    %v3732 = vmax.f32 %v3722, 0.0
    %v3733 = vmax.f32 %v3724, 0.0
    %v3734 = vpack.c.bf16 %v3730, %v3726
    %v3735 = vpack.c.bf16 %v3731, %v3727
    %v3736 = vpack.c.bf16 %v3732, %v3728
    %v3737 = vpack.c.bf16 %v3733, %v3729
    %v3738 = vld [vmem:[#allocation2] sm:$0xff]
    %v3739 = vld [vmem:[#allocation2 + $0x8] sm:$0xff]
    %s3740 = scalar_lea.vmem [#allocation15], 256
    %v3741 = vld [vmem:[%s3740] sm:$0xf]
    %v3742 = vld [vmem:[%s3740 + $0x4] sm:$0xf]
    %v3743 = vld [vmem:[%s3740 + $0x8] sm:$0xf]
    %v3744 = vld [vmem:[%s3740 + $0xc] sm:$0xf]
    %v3745 = vld [vmem:[%s3740 + $0x10] sm:$0xf]
    %v3746 = vld [vmem:[%s3740 + $0x14] sm:$0xf]
    %v3747 = vld [vmem:[%s3740 + $0x18] sm:$0xf]
    %v3748 = vld [vmem:[%s3740 + $0x1c] sm:$0xf]
    %v3749 = vld [vmem:[%s3740 + $0x20] sm:$0xf]
    %v3750 = vld [vmem:[%s3740 + $0x24] sm:$0xf]
    %v3751 = vld [vmem:[%s3740 + $0x28] sm:$0xf]
    %v3752 = vld [vmem:[%s3740 + $0x2c] sm:$0xf]
    %v3753 = vld [vmem:[%s3740 + $0x30] sm:$0xf]
    %v3754 = vld [vmem:[%s3740 + $0x34] sm:$0xf]
    %v3755 = vld [vmem:[%s3740 + $0x38] sm:$0xf]
    %v3756 = vld [vmem:[%s3740 + $0x3c] sm:$0xf]
    %v3757 = vld [vmem:[%s3740 + $0x40] sm:$0xf]
    %v3758 = vld [vmem:[%s3740 + $0x44] sm:$0xf]
    %v3759 = vld [vmem:[%s3740 + $0x48] sm:$0xf]
    %v3760 = vld [vmem:[%s3740 + $0x4c] sm:$0xf]
    %v3761 = vld [vmem:[%s3740 + $0x50] sm:$0xf]
    %v3762 = vld [vmem:[%s3740 + $0x54] sm:$0xf]
    %v3763 = vld [vmem:[%s3740 + $0x58] sm:$0xf]
    %v3764 = vld [vmem:[%s3740 + $0x5c] sm:$0xf]
    %v3765 = vld [vmem:[%s3740 + $0x60] sm:$0xf]
    %v3766 = vld [vmem:[%s3740 + $0x64] sm:$0xf]
    %v3767 = vld [vmem:[%s3740 + $0x68] sm:$0xf]
    %v3768 = vld [vmem:[%s3740 + $0x6c] sm:$0xf]
    %v3769 = vld [vmem:[%s3740 + $0x70] sm:$0xf]
    %v3770 = vld [vmem:[%s3740 + $0x74] sm:$0xf]
    %v3771 = vld [vmem:[%s3740 + $0x78] sm:$0xf]
    %v3772 = vld [vmem:[%s3740 + $0x7c] sm:$0xf]
    %v3773 = vld [vmem:[%s3740 + $0x80] sm:$0xf]
    %v3774 = vld [vmem:[%s3740 + $0x84] sm:$0xf]
    %v3775 = vld [vmem:[%s3740 + $0x88] sm:$0xf]
    %v3776 = vld [vmem:[%s3740 + $0x8c] sm:$0xf]
    %v3777 = vld [vmem:[%s3740 + $0x90] sm:$0xf]
    %v3778 = vld [vmem:[%s3740 + $0x94] sm:$0xf]
    %v3779 = vld [vmem:[%s3740 + $0x98] sm:$0xf]
    %v3780 = vld [vmem:[%s3740 + $0x9c] sm:$0xf]
    %v3781 = vld [vmem:[%s3740 + $0xa0] sm:$0xf]
    %v3782 = vld [vmem:[%s3740 + $0xa4] sm:$0xf]
    %v3783 = vld [vmem:[%s3740 + $0xa8] sm:$0xf]
    %v3784 = vld [vmem:[%s3740 + $0xac] sm:$0xf]
    %v3785 = vld [vmem:[%s3740 + $0xb0] sm:$0xf]
    %v3786 = vld [vmem:[%s3740 + $0xb4] sm:$0xf]
    %v3787 = vld [vmem:[%s3740 + $0xb8] sm:$0xf]
    %v3788 = vld [vmem:[%s3740 + $0xbc] sm:$0xf]
    %v3789 = vld [vmem:[%s3740 + $0xc0] sm:$0xf]
    %v3790 = vld [vmem:[%s3740 + $0xc4] sm:$0xf]
    %v3791 = vld [vmem:[%s3740 + $0xc8] sm:$0xf]
    %v3792 = vld [vmem:[%s3740 + $0xcc] sm:$0xf]
    %v3793 = vld [vmem:[%s3740 + $0xd0] sm:$0xf]
    %v3794 = vld [vmem:[%s3740 + $0xd4] sm:$0xf]
    %v3795 = vld [vmem:[%s3740 + $0xd8] sm:$0xf]
    %v3796 = vld [vmem:[%s3740 + $0xdc] sm:$0xf]
    %v3797 = vld [vmem:[%s3740 + $0xe0] sm:$0xf]
    %v3798 = vld [vmem:[%s3740 + $0xe4] sm:$0xf]
    %v3799 = vld [vmem:[%s3740 + $0xe8] sm:$0xf]
    %v3800 = vld [vmem:[%s3740 + $0xec] sm:$0xf]
    %v3801 = vld [vmem:[%s3740 + $0xf0] sm:$0xf]
    %v3802 = vld [vmem:[%s3740 + $0xf4] sm:$0xf]
    %v3803 = vld [vmem:[%s3740 + $0xf8] sm:$0xf]
    %v3804 = vld [vmem:[%s3740 + $0xfc] sm:$0xf]
    %v3869 = vunpack.c.l.b16 %v3741
    %v3870 = vunpack.c.l.b16 %v3742
    %v3871 = vunpack.c.l.b16 %v3743
    %v3872 = vunpack.c.l.b16 %v3744
    %v3873 = vunpack.c.l.b16 %v3745
    %v3874 = vunpack.c.l.b16 %v3746
    %v3875 = vunpack.c.l.b16 %v3747
    %v3876 = vunpack.c.l.b16 %v3748
    %v3877 = vunpack.c.l.b16 %v3749
    %v3878 = vunpack.c.l.b16 %v3750
    %v3879 = vunpack.c.l.b16 %v3751
    %v3880 = vunpack.c.l.b16 %v3752
    %v3881 = vunpack.c.l.b16 %v3753
    %v3882 = vunpack.c.l.b16 %v3754
    %v3883 = vunpack.c.l.b16 %v3755
    %v3884 = vunpack.c.l.b16 %v3756
    %v3885 = vunpack.c.l.b16 %v3757
    %v3886 = vunpack.c.l.b16 %v3758
    %v3887 = vunpack.c.l.b16 %v3759
    %v3888 = vunpack.c.l.b16 %v3760
    %v3889 = vunpack.c.l.b16 %v3761
    %v3890 = vunpack.c.l.b16 %v3762
    %v3891 = vunpack.c.l.b16 %v3763
    %v3892 = vunpack.c.l.b16 %v3764
    %v3893 = vunpack.c.l.b16 %v3765
    %v3894 = vunpack.c.l.b16 %v3766
    %v3895 = vunpack.c.l.b16 %v3767
    %v3896 = vunpack.c.l.b16 %v3768
    %v3897 = vunpack.c.l.b16 %v3769
    %v3898 = vunpack.c.l.b16 %v3770
    %v3899 = vunpack.c.l.b16 %v3771
    %v3900 = vunpack.c.l.b16 %v3772
    %v3901 = vunpack.c.l.b16 %v3773
    %v3902 = vunpack.c.l.b16 %v3774
    %v3903 = vunpack.c.l.b16 %v3775
    %v3904 = vunpack.c.l.b16 %v3776
    %v3905 = vunpack.c.l.b16 %v3777
    %v3906 = vunpack.c.l.b16 %v3778
    %v3907 = vunpack.c.l.b16 %v3779
    %v3908 = vunpack.c.l.b16 %v3780
    %v3909 = vunpack.c.l.b16 %v3781
    %v3910 = vunpack.c.l.b16 %v3782
    %v3911 = vunpack.c.l.b16 %v3783
    %v3912 = vunpack.c.l.b16 %v3784
    %v3913 = vunpack.c.l.b16 %v3785
    %v3914 = vunpack.c.l.b16 %v3786
    %v3915 = vunpack.c.l.b16 %v3787
    %v3916 = vunpack.c.l.b16 %v3788
    %v3917 = vunpack.c.l.b16 %v3789
    %v3918 = vunpack.c.l.b16 %v3790
    %v3919 = vunpack.c.l.b16 %v3791
    %v3920 = vunpack.c.l.b16 %v3792
    %v3921 = vunpack.c.l.b16 %v3793
    %v3922 = vunpack.c.l.b16 %v3794
    %v3923 = vunpack.c.l.b16 %v3795
    %v3924 = vunpack.c.l.b16 %v3796
    %v3925 = vunpack.c.l.b16 %v3797
    %v3926 = vunpack.c.l.b16 %v3798
    %v3927 = vunpack.c.l.b16 %v3799
    %v3928 = vunpack.c.l.b16 %v3800
    %v3929 = vunpack.c.l.b16 %v3801
    %v3930 = vunpack.c.l.b16 %v3802
    %v3931 = vunpack.c.l.b16 %v3803
    %v3932 = vunpack.c.l.b16 %v3804
    %v3933 = vpack.c.b16 %v3870, %v3869
    %v3934 = vpack.c.b16 %v3872, %v3871
    %v3935 = vpack.c.b16 %v3874, %v3873
    %v3936 = vpack.c.b16 %v3876, %v3875
    %v3937 = vpack.c.b16 %v3878, %v3877
    %v3938 = vpack.c.b16 %v3880, %v3879
    %v3939 = vpack.c.b16 %v3882, %v3881
    %v3940 = vpack.c.b16 %v3884, %v3883
    %v3941 = vpack.c.b16 %v3886, %v3885
    %v3942 = vpack.c.b16 %v3888, %v3887
    %v3943 = vpack.c.b16 %v3890, %v3889
    %v3944 = vpack.c.b16 %v3892, %v3891
    %v3945 = vpack.c.b16 %v3894, %v3893
    %v3946 = vpack.c.b16 %v3896, %v3895
    %v3947 = vpack.c.b16 %v3898, %v3897
    %v3948 = vpack.c.b16 %v3900, %v3899
    %v3949 = vpack.c.b16 %v3902, %v3901
    %v3950 = vpack.c.b16 %v3904, %v3903
    %v3951 = vpack.c.b16 %v3906, %v3905
    %v3952 = vpack.c.b16 %v3908, %v3907
    %v3953 = vpack.c.b16 %v3910, %v3909
    %v3954 = vpack.c.b16 %v3912, %v3911
    %v3955 = vpack.c.b16 %v3914, %v3913
    %v3956 = vpack.c.b16 %v3916, %v3915
    %v3957 = vpack.c.b16 %v3918, %v3917
    %v3958 = vpack.c.b16 %v3920, %v3919
    %v3959 = vpack.c.b16 %v3922, %v3921
    %v3960 = vpack.c.b16 %v3924, %v3923
    %v3961 = vpack.c.b16 %v3926, %v3925
    %v3962 = vpack.c.b16 %v3928, %v3927
    %v3963 = vpack.c.b16 %v3930, %v3929
    %v3964 = vpack.c.b16 %v3932, %v3931
    %3997 = vmatprep.subr.bf16.mxu0 0
    %3998 = vmatpush1.bf16.msra.mxu0 %v3933
    %3999 = vmatprep.subr.bf16.mxu0 0
    %4000 = vmatpush1.bf16.msra.mxu0 %v3934
    %4001 = vmatprep.subr.bf16.mxu0 0
    %4002 = vmatpush1.bf16.msra.mxu0 %v3935
    %4003 = vmatprep.subr.bf16.mxu0 0
    %4004 = vmatpush1.bf16.msra.mxu0 %v3936
    %4005 = vmatprep.subr.bf16.mxu0 0
    %4006 = vmatpush1.bf16.msra.mxu0 %v3937
    %4007 = vmatprep.subr.bf16.mxu0 0
    %4008 = vmatpush1.bf16.msra.mxu0 %v3938
    %4009 = vmatprep.subr.bf16.mxu0 0
    %4010 = vmatpush1.bf16.msra.mxu0 %v3939
    %4011 = vmatprep.subr.bf16.mxu0 0
    %4012 = vmatpush1.bf16.msra.mxu0 %v3940
    %4013 = vmatprep.subr.bf16.mxu0 0
    %4014 = vmatpush1.bf16.msra.mxu0 %v3941
    %4015 = vmatprep.subr.bf16.mxu0 0
    %4016 = vmatpush1.bf16.msra.mxu0 %v3942
    %4017 = vmatprep.subr.bf16.mxu0 0
    %4018 = vmatpush1.bf16.msra.mxu0 %v3943
    %4019 = vmatprep.subr.bf16.mxu0 0
    %4020 = vmatpush1.bf16.msra.mxu0 %v3944
    %4021 = vmatprep.subr.bf16.mxu0 0
    %4022 = vmatpush1.bf16.msra.mxu0 %v3945
    %4023 = vmatprep.subr.bf16.mxu0 0
    %4024 = vmatpush1.bf16.msra.mxu0 %v3946
    %4025 = vmatprep.subr.bf16.mxu0 0
    %4026 = vmatpush1.bf16.msra.mxu0 %v3947
    %4027 = vmatprep.subr.bf16.mxu0 0
    %4028 = vmatpush1.bf16.msra.mxu0 %v3948
    %4029 = vmatprep.mubr.bf16.mxu0 %v3735
    %4030 = vmatmul.mubr.bf16.gmra.mrb[0].mxu0 %v3734
    %v4031 = vpop.f32.mrb[0].mxu0
    %v4032 = vadd.f32 0.0, %v4031
    %v4033 = vpop.f32.mrb[0].mxu0
    %v4034 = vpop.f32.mrb[0].mxu0
    %v4035 = vadd.f32 0.0, %v4034
    %v4036 = vpop.f32.mrb[0].mxu0
    %4037 = vdwg.mxu0
    %4038 = vmatprep.subr.bf16.mxu0 0
    %4039 = vmatpush1.bf16.msra.mxu0 %v3949
    %4040 = vmatprep.subr.bf16.mxu0 0
    %4041 = vmatpush1.bf16.msra.mxu0 %v3950
    %4042 = vmatprep.subr.bf16.mxu0 0
    %4043 = vmatpush1.bf16.msra.mxu0 %v3951
    %4044 = vmatprep.subr.bf16.mxu0 0
    %4045 = vmatpush1.bf16.msra.mxu0 %v3952
    %4046 = vmatprep.subr.bf16.mxu0 0
    %4047 = vmatpush1.bf16.msra.mxu0 %v3953
    %4048 = vmatprep.subr.bf16.mxu0 0
    %4049 = vmatpush1.bf16.msra.mxu0 %v3954
    %4050 = vmatprep.subr.bf16.mxu0 0
    %4051 = vmatpush1.bf16.msra.mxu0 %v3955
    %4052 = vmatprep.subr.bf16.mxu0 0
    %4053 = vmatpush1.bf16.msra.mxu0 %v3956
    %4054 = vmatprep.subr.bf16.mxu0 0
    %4055 = vmatpush1.bf16.msra.mxu0 %v3957
    %4056 = vmatprep.subr.bf16.mxu0 0
    %4057 = vmatpush1.bf16.msra.mxu0 %v3958
    %4058 = vmatprep.subr.bf16.mxu0 0
    %4059 = vmatpush1.bf16.msra.mxu0 %v3959
    %4060 = vmatprep.subr.bf16.mxu0 0
    %4061 = vmatpush1.bf16.msra.mxu0 %v3960
    %4062 = vmatprep.subr.bf16.mxu0 0
    %4063 = vmatpush1.bf16.msra.mxu0 %v3961
    %4064 = vmatprep.subr.bf16.mxu0 0
    %4065 = vmatpush1.bf16.msra.mxu0 %v3962
    %4066 = vmatprep.subr.bf16.mxu0 0
    %4067 = vmatpush1.bf16.msra.mxu0 %v3963
    %4068 = vmatprep.subr.bf16.mxu0 0
    %4069 = vmatpush1.bf16.msra.mxu0 %v3964
    %4070 = vmatprep.mubr.bf16.mxu0 %v3737
    %4071 = vmatmul.mubr.bf16.gmra.mrb[0].mxu0 %v3736
    %v4072 = vpop.f32.mrb[0].mxu0
    %v4073 = vadd.f32 %v4032, %v4072
    %v4074 = vpop.f32.mrb[0].mxu0
    %v4075 = vpop.f32.mrb[0].mxu0
    %v4076 = vadd.f32 %v4035, %v4075
    %v4077 = vpop.f32.mrb[0].mxu0
    %4078 = vdwg.mxu0
    %v4079 = vadd.f32 %v3738, %v4073
    %v4080 = vadd.f32 %v3739, %v4076
    %4081 = vst [vmem:[#allocation2] sm:$0xff] %v4079
    %4082 = vst [vmem:[#allocation2 + $0x8] sm:$0xff] %v4080
    %s4083 = scalar_lea.vmem [#allocation12], 32
    %v4084 = vld [vmem:[%s4083] sm:$0xff]
    %v4085 = vld [vmem:[%s4083 + $0x8] sm:$0xff]
    %v4086 = vld [vmem:[%s4083 + $0x40] sm:$0xff]
    %v4087 = vld [vmem:[%s4083 + $0x48] sm:$0xff]
    %v4088 = vld [vmem:[%s4083 + $0x80] sm:$0xff]
    %v4089 = vld [vmem:[%s4083 + $0x88] sm:$0xff]
    %v4090 = vld [vmem:[%s4083 + $0xc0] sm:$0xff]
    %v4091 = vld [vmem:[%s4083 + $0xc8] sm:$0xff]
    %v4092 = vld [vmem:[%s4083 + $0x100] sm:$0xff]
    %v4093 = vld [vmem:[%s4083 + $0x108] sm:$0xff]
    %v4094 = vld [vmem:[%s4083 + $0x140] sm:$0xff]
    %v4095 = vld [vmem:[%s4083 + $0x148] sm:$0xff]
    %v4096 = vld [vmem:[%s4083 + $0x180] sm:$0xff]
    %v4097 = vld [vmem:[%s4083 + $0x188] sm:$0xff]
    %v4098 = vld [vmem:[%s4083 + $0x1c0] sm:$0xff]
    %v4099 = vld [vmem:[%s4083 + $0x1c8] sm:$0xff]
    %v4100 = vld [vmem:[%s4083 + $0x200] sm:$0xff]
    %v4101 = vld [vmem:[%s4083 + $0x208] sm:$0xff]
    %v4102 = vld [vmem:[%s4083 + $0x240] sm:$0xff]
    %v4103 = vld [vmem:[%s4083 + $0x248] sm:$0xff]
    %v4104 = vld [vmem:[%s4083 + $0x280] sm:$0xff]
    %v4105 = vld [vmem:[%s4083 + $0x288] sm:$0xff]
    %v4106 = vld [vmem:[%s4083 + $0x2c0] sm:$0xff]
    %v4107 = vld [vmem:[%s4083 + $0x2c8] sm:$0xff]
    %v4108 = vld [vmem:[%s4083 + $0x300] sm:$0xff]
    %v4109 = vld [vmem:[%s4083 + $0x308] sm:$0xff]
    %v4110 = vld [vmem:[%s4083 + $0x340] sm:$0xff]
    %v4111 = vld [vmem:[%s4083 + $0x348] sm:$0xff]
    %v4112 = vld [vmem:[%s4083 + $0x380] sm:$0xff]
    %v4113 = vld [vmem:[%s4083 + $0x388] sm:$0xff]
    %v4114 = vld [vmem:[%s4083 + $0x3c0] sm:$0xff]
    %v4115 = vld [vmem:[%s4083 + $0x3c8] sm:$0xff]
    %v4116 = vld [vmem:[%s4083 + $0x400] sm:$0xff]
    %v4117 = vld [vmem:[%s4083 + $0x408] sm:$0xff]
    %v4118 = vld [vmem:[%s4083 + $0x440] sm:$0xff]
    %v4119 = vld [vmem:[%s4083 + $0x448] sm:$0xff]
    %v4120 = vld [vmem:[%s4083 + $0x480] sm:$0xff]
    %v4121 = vld [vmem:[%s4083 + $0x488] sm:$0xff]
    %v4122 = vld [vmem:[%s4083 + $0x4c0] sm:$0xff]
    %v4123 = vld [vmem:[%s4083 + $0x4c8] sm:$0xff]
    %v4124 = vld [vmem:[%s4083 + $0x500] sm:$0xff]
    %v4125 = vld [vmem:[%s4083 + $0x508] sm:$0xff]
    %v4126 = vld [vmem:[%s4083 + $0x540] sm:$0xff]
    %v4127 = vld [vmem:[%s4083 + $0x548] sm:$0xff]
    %v4128 = vld [vmem:[%s4083 + $0x580] sm:$0xff]
    %v4129 = vld [vmem:[%s4083 + $0x588] sm:$0xff]
    %v4130 = vld [vmem:[%s4083 + $0x5c0] sm:$0xff]
    %v4131 = vld [vmem:[%s4083 + $0x5c8] sm:$0xff]
    %v4132 = vld [vmem:[%s4083 + $0x600] sm:$0xff]
    %v4133 = vld [vmem:[%s4083 + $0x608] sm:$0xff]
    %v4134 = vld [vmem:[%s4083 + $0x640] sm:$0xff]
    %v4135 = vld [vmem:[%s4083 + $0x648] sm:$0xff]
    %v4136 = vld [vmem:[%s4083 + $0x680] sm:$0xff]
    %v4137 = vld [vmem:[%s4083 + $0x688] sm:$0xff]
    %v4138 = vld [vmem:[%s4083 + $0x6c0] sm:$0xff]
    %v4139 = vld [vmem:[%s4083 + $0x6c8] sm:$0xff]
    %v4140 = vld [vmem:[%s4083 + $0x700] sm:$0xff]
    %v4141 = vld [vmem:[%s4083 + $0x708] sm:$0xff]
    %v4142 = vld [vmem:[%s4083 + $0x740] sm:$0xff]
    %v4143 = vld [vmem:[%s4083 + $0x748] sm:$0xff]
    %v4144 = vld [vmem:[%s4083 + $0x780] sm:$0xff]
    %v4145 = vld [vmem:[%s4083 + $0x788] sm:$0xff]
    %v4146 = vld [vmem:[%s4083 + $0x7c0] sm:$0xff]
    %v4147 = vld [vmem:[%s4083 + $0x7c8] sm:$0xff]
    %v4148 = vld [vmem:[%s4083 + $0x800] sm:$0xff]
    %v4149 = vld [vmem:[%s4083 + $0x808] sm:$0xff]
    %v4150 = vld [vmem:[%s4083 + $0x840] sm:$0xff]
    %v4151 = vld [vmem:[%s4083 + $0x848] sm:$0xff]
    %v4152 = vld [vmem:[%s4083 + $0x880] sm:$0xff]
    %v4153 = vld [vmem:[%s4083 + $0x888] sm:$0xff]
    %v4154 = vld [vmem:[%s4083 + $0x8c0] sm:$0xff]
    %v4155 = vld [vmem:[%s4083 + $0x8c8] sm:$0xff]
    %v4156 = vld [vmem:[%s4083 + $0x900] sm:$0xff]
    %v4157 = vld [vmem:[%s4083 + $0x908] sm:$0xff]
    %v4158 = vld [vmem:[%s4083 + $0x940] sm:$0xff]
    %v4159 = vld [vmem:[%s4083 + $0x948] sm:$0xff]
    %v4160 = vld [vmem:[%s4083 + $0x980] sm:$0xff]
    %v4161 = vld [vmem:[%s4083 + $0x988] sm:$0xff]
    %v4162 = vld [vmem:[%s4083 + $0x9c0] sm:$0xff]
    %v4163 = vld [vmem:[%s4083 + $0x9c8] sm:$0xff]
    %v4164 = vld [vmem:[%s4083 + $0xa00] sm:$0xff]
    %v4165 = vld [vmem:[%s4083 + $0xa08] sm:$0xff]
    %v4166 = vld [vmem:[%s4083 + $0xa40] sm:$0xff]
    %v4167 = vld [vmem:[%s4083 + $0xa48] sm:$0xff]
    %v4168 = vld [vmem:[%s4083 + $0xa80] sm:$0xff]
    %v4169 = vld [vmem:[%s4083 + $0xa88] sm:$0xff]
    %v4170 = vld [vmem:[%s4083 + $0xac0] sm:$0xff]
    %v4171 = vld [vmem:[%s4083 + $0xac8] sm:$0xff]
    %v4172 = vld [vmem:[%s4083 + $0xb00] sm:$0xff]
    %v4173 = vld [vmem:[%s4083 + $0xb08] sm:$0xff]
    %v4174 = vld [vmem:[%s4083 + $0xb40] sm:$0xff]
    %v4175 = vld [vmem:[%s4083 + $0xb48] sm:$0xff]
    %v4176 = vld [vmem:[%s4083 + $0xb80] sm:$0xff]
    %v4177 = vld [vmem:[%s4083 + $0xb88] sm:$0xff]
    %v4178 = vld [vmem:[%s4083 + $0xbc0] sm:$0xff]
    %v4179 = vld [vmem:[%s4083 + $0xbc8] sm:$0xff]
    %v4180 = vld [vmem:[%s4083 + $0xc00] sm:$0xff]
    %v4181 = vld [vmem:[%s4083 + $0xc08] sm:$0xff]
    %v4182 = vld [vmem:[%s4083 + $0xc40] sm:$0xff]
    %v4183 = vld [vmem:[%s4083 + $0xc48] sm:$0xff]
    %v4184 = vld [vmem:[%s4083 + $0xc80] sm:$0xff]
    %v4185 = vld [vmem:[%s4083 + $0xc88] sm:$0xff]
    %v4186 = vld [vmem:[%s4083 + $0xcc0] sm:$0xff]
    %v4187 = vld [vmem:[%s4083 + $0xcc8] sm:$0xff]
    %v4188 = vld [vmem:[%s4083 + $0xd00] sm:$0xff]
    %v4189 = vld [vmem:[%s4083 + $0xd08] sm:$0xff]
    %v4190 = vld [vmem:[%s4083 + $0xd40] sm:$0xff]
    %v4191 = vld [vmem:[%s4083 + $0xd48] sm:$0xff]
    %v4192 = vld [vmem:[%s4083 + $0xd80] sm:$0xff]
    %v4193 = vld [vmem:[%s4083 + $0xd88] sm:$0xff]
    %v4194 = vld [vmem:[%s4083 + $0xdc0] sm:$0xff]
    %v4195 = vld [vmem:[%s4083 + $0xdc8] sm:$0xff]
    %v4196 = vld [vmem:[%s4083 + $0xe00] sm:$0xff]
    %v4197 = vld [vmem:[%s4083 + $0xe08] sm:$0xff]
    %v4198 = vld [vmem:[%s4083 + $0xe40] sm:$0xff]
    %v4199 = vld [vmem:[%s4083 + $0xe48] sm:$0xff]
    %v4200 = vld [vmem:[%s4083 + $0xe80] sm:$0xff]
    %v4201 = vld [vmem:[%s4083 + $0xe88] sm:$0xff]
    %v4202 = vld [vmem:[%s4083 + $0xec0] sm:$0xff]
    %v4203 = vld [vmem:[%s4083 + $0xec8] sm:$0xff]
    %v4204 = vld [vmem:[%s4083 + $0xf00] sm:$0xff]
    %v4205 = vld [vmem:[%s4083 + $0xf08] sm:$0xff]
    %v4206 = vld [vmem:[%s4083 + $0xf40] sm:$0xff]
    %v4207 = vld [vmem:[%s4083 + $0xf48] sm:$0xff]
    %v4208 = vld [vmem:[%s4083 + $0xf80] sm:$0xff]
    %v4209 = vld [vmem:[%s4083 + $0xf88] sm:$0xff]
    %v4210 = vld [vmem:[%s4083 + $0xfc0] sm:$0xff]
    %v4211 = vld [vmem:[%s4083 + $0xfc8] sm:$0xff]
    %s4212 = scalar_lea.vmem [#allocation14], 8
    %v4213 = vld [vmem:[%s4212] sm:$0xf]
    %v4215 = vlaneseq
    %v4216 = vshrl.u32 %v4215, 7
    %v4217 = vsub.s32 0, %v4216
    %v4218 = vrot.slane %v4213, %v4217
    %v4219 = vlaneseq
    %v4220 = vshrl.u32 %v4219, 7
    %v4221 = vsub.s32 1, %v4220
    %v4222 = vrot.slane %v4213, %v4221
    %v4223 = vlaneseq
    %v4224 = vshrl.u32 %v4223, 7
    %v4225 = vsub.s32 2, %v4224
    %v4226 = vrot.slane %v4213, %v4225
    %v4227 = vlaneseq
    %v4228 = vshrl.u32 %v4227, 7
    %v4229 = vsub.s32 3, %v4228
    %v4230 = vrot.slane %v4213, %v4229
    %v4363 = vunpack.c.l.b16 %v4084
    %v4364 = vunpack.c.h.b16 %v4084
    %v4365 = vunpack.c.l.b16 %v4085
    %v4366 = vunpack.c.h.b16 %v4085
    %v4367 = vunpack.c.l.b16 %v4086
    %v4368 = vunpack.c.h.b16 %v4086
    %v4369 = vunpack.c.l.b16 %v4087
    %v4370 = vunpack.c.h.b16 %v4087
    %v4371 = vunpack.c.l.b16 %v4088
    %v4372 = vunpack.c.h.b16 %v4088
    %v4373 = vunpack.c.l.b16 %v4089
    %v4374 = vunpack.c.h.b16 %v4089
    %v4375 = vunpack.c.l.b16 %v4090
    %v4376 = vunpack.c.h.b16 %v4090
    %v4377 = vunpack.c.l.b16 %v4091
    %v4378 = vunpack.c.h.b16 %v4091
    %v4379 = vunpack.c.l.b16 %v4092
    %v4380 = vunpack.c.h.b16 %v4092
    %v4381 = vunpack.c.l.b16 %v4093
    %v4382 = vunpack.c.h.b16 %v4093
    %v4383 = vunpack.c.l.b16 %v4094
    %v4384 = vunpack.c.h.b16 %v4094
    %v4385 = vunpack.c.l.b16 %v4095
    %v4386 = vunpack.c.h.b16 %v4095
    %v4387 = vunpack.c.l.b16 %v4096
    %v4388 = vunpack.c.h.b16 %v4096
    %v4389 = vunpack.c.l.b16 %v4097
    %v4390 = vunpack.c.h.b16 %v4097
    %v4391 = vunpack.c.l.b16 %v4098
    %v4392 = vunpack.c.h.b16 %v4098
    %v4393 = vunpack.c.l.b16 %v4099
    %v4394 = vunpack.c.h.b16 %v4099
    %v4395 = vunpack.c.l.b16 %v4100
    %v4396 = vunpack.c.h.b16 %v4100
    %v4397 = vunpack.c.l.b16 %v4101
    %v4398 = vunpack.c.h.b16 %v4101
    %v4399 = vunpack.c.l.b16 %v4102
    %v4400 = vunpack.c.h.b16 %v4102
    %v4401 = vunpack.c.l.b16 %v4103
    %v4402 = vunpack.c.h.b16 %v4103
    %v4403 = vunpack.c.l.b16 %v4104
    %v4404 = vunpack.c.h.b16 %v4104
    %v4405 = vunpack.c.l.b16 %v4105
    %v4406 = vunpack.c.h.b16 %v4105
    %v4407 = vunpack.c.l.b16 %v4106
    %v4408 = vunpack.c.h.b16 %v4106
    %v4409 = vunpack.c.l.b16 %v4107
    %v4410 = vunpack.c.h.b16 %v4107
    %v4411 = vunpack.c.l.b16 %v4108
    %v4412 = vunpack.c.h.b16 %v4108
    %v4413 = vunpack.c.l.b16 %v4109
    %v4414 = vunpack.c.h.b16 %v4109
    %v4415 = vunpack.c.l.b16 %v4110
    %v4416 = vunpack.c.h.b16 %v4110
    %v4417 = vunpack.c.l.b16 %v4111
    %v4418 = vunpack.c.h.b16 %v4111
    %v4419 = vunpack.c.l.b16 %v4112
    %v4420 = vunpack.c.h.b16 %v4112
    %v4421 = vunpack.c.l.b16 %v4113
    %v4422 = vunpack.c.h.b16 %v4113
    %v4423 = vunpack.c.l.b16 %v4114
    %v4424 = vunpack.c.h.b16 %v4114
    %v4425 = vunpack.c.l.b16 %v4115
    %v4426 = vunpack.c.h.b16 %v4115
    %v4427 = vunpack.c.l.b16 %v4116
    %v4428 = vunpack.c.h.b16 %v4116
    %v4429 = vunpack.c.l.b16 %v4117
    %v4430 = vunpack.c.h.b16 %v4117
    %v4431 = vunpack.c.l.b16 %v4118
    %v4432 = vunpack.c.h.b16 %v4118
    %v4433 = vunpack.c.l.b16 %v4119
    %v4434 = vunpack.c.h.b16 %v4119
    %v4435 = vunpack.c.l.b16 %v4120
    %v4436 = vunpack.c.h.b16 %v4120
    %v4437 = vunpack.c.l.b16 %v4121
    %v4438 = vunpack.c.h.b16 %v4121
    %v4439 = vunpack.c.l.b16 %v4122
    %v4440 = vunpack.c.h.b16 %v4122
    %v4441 = vunpack.c.l.b16 %v4123
    %v4442 = vunpack.c.h.b16 %v4123
    %v4443 = vunpack.c.l.b16 %v4124
    %v4444 = vunpack.c.h.b16 %v4124
    %v4445 = vunpack.c.l.b16 %v4125
    %v4446 = vunpack.c.h.b16 %v4125
    %v4447 = vunpack.c.l.b16 %v4126
    %v4448 = vunpack.c.h.b16 %v4126
    %v4449 = vunpack.c.l.b16 %v4127
    %v4450 = vunpack.c.h.b16 %v4127
    %v4451 = vunpack.c.l.b16 %v4128
    %v4452 = vunpack.c.h.b16 %v4128
    %v4453 = vunpack.c.l.b16 %v4129
    %v4454 = vunpack.c.h.b16 %v4129
    %v4455 = vunpack.c.l.b16 %v4130
    %v4456 = vunpack.c.h.b16 %v4130
    %v4457 = vunpack.c.l.b16 %v4131
    %v4458 = vunpack.c.h.b16 %v4131
    %v4459 = vunpack.c.l.b16 %v4132
    %v4460 = vunpack.c.h.b16 %v4132
    %v4461 = vunpack.c.l.b16 %v4133
    %v4462 = vunpack.c.h.b16 %v4133
    %v4463 = vunpack.c.l.b16 %v4134
    %v4464 = vunpack.c.h.b16 %v4134
    %v4465 = vunpack.c.l.b16 %v4135
    %v4466 = vunpack.c.h.b16 %v4135
    %v4467 = vunpack.c.l.b16 %v4136
    %v4468 = vunpack.c.h.b16 %v4136
    %v4469 = vunpack.c.l.b16 %v4137
    %v4470 = vunpack.c.h.b16 %v4137
    %v4471 = vunpack.c.l.b16 %v4138
    %v4472 = vunpack.c.h.b16 %v4138
    %v4473 = vunpack.c.l.b16 %v4139
    %v4474 = vunpack.c.h.b16 %v4139
    %v4475 = vunpack.c.l.b16 %v4140
    %v4476 = vunpack.c.h.b16 %v4140
    %v4477 = vunpack.c.l.b16 %v4141
    %v4478 = vunpack.c.h.b16 %v4141
    %v4479 = vunpack.c.l.b16 %v4142
    %v4480 = vunpack.c.h.b16 %v4142
    %v4481 = vunpack.c.l.b16 %v4143
    %v4482 = vunpack.c.h.b16 %v4143
    %v4483 = vunpack.c.l.b16 %v4144
    %v4484 = vunpack.c.h.b16 %v4144
    %v4485 = vunpack.c.l.b16 %v4145
    %v4486 = vunpack.c.h.b16 %v4145
    %v4487 = vunpack.c.l.b16 %v4146
    %v4488 = vunpack.c.h.b16 %v4146
    %v4489 = vunpack.c.l.b16 %v4147
    %v4490 = vunpack.c.h.b16 %v4147
    %v4491 = vunpack.c.l.b16 %v4148
    %v4492 = vunpack.c.h.b16 %v4148
    %v4493 = vunpack.c.l.b16 %v4149
    %v4494 = vunpack.c.h.b16 %v4149
    %v4495 = vunpack.c.l.b16 %v4150
    %v4496 = vunpack.c.h.b16 %v4150
    %v4497 = vunpack.c.l.b16 %v4151
    %v4498 = vunpack.c.h.b16 %v4151
    %v4499 = vunpack.c.l.b16 %v4152
    %v4500 = vunpack.c.h.b16 %v4152
    %v4501 = vunpack.c.l.b16 %v4153
    %v4502 = vunpack.c.h.b16 %v4153
    %v4503 = vunpack.c.l.b16 %v4154
    %v4504 = vunpack.c.h.b16 %v4154
    %v4505 = vunpack.c.l.b16 %v4155
    %v4506 = vunpack.c.h.b16 %v4155
    %v4507 = vunpack.c.l.b16 %v4156
    %v4508 = vunpack.c.h.b16 %v4156
    %v4509 = vunpack.c.l.b16 %v4157
    %v4510 = vunpack.c.h.b16 %v4157
    %v4511 = vunpack.c.l.b16 %v4158
    %v4512 = vunpack.c.h.b16 %v4158
    %v4513 = vunpack.c.l.b16 %v4159
    %v4514 = vunpack.c.h.b16 %v4159
    %v4515 = vunpack.c.l.b16 %v4160
    %v4516 = vunpack.c.h.b16 %v4160
    %v4517 = vunpack.c.l.b16 %v4161
    %v4518 = vunpack.c.h.b16 %v4161
    %v4519 = vunpack.c.l.b16 %v4162
    %v4520 = vunpack.c.h.b16 %v4162
    %v4521 = vunpack.c.l.b16 %v4163
    %v4522 = vunpack.c.h.b16 %v4163
    %v4523 = vunpack.c.l.b16 %v4164
    %v4524 = vunpack.c.h.b16 %v4164
    %v4525 = vunpack.c.l.b16 %v4165
    %v4526 = vunpack.c.h.b16 %v4165
    %v4527 = vunpack.c.l.b16 %v4166
    %v4528 = vunpack.c.h.b16 %v4166
    %v4529 = vunpack.c.l.b16 %v4167
    %v4530 = vunpack.c.h.b16 %v4167
    %v4531 = vunpack.c.l.b16 %v4168
    %v4532 = vunpack.c.h.b16 %v4168
    %v4533 = vunpack.c.l.b16 %v4169
    %v4534 = vunpack.c.h.b16 %v4169
    %v4535 = vunpack.c.l.b16 %v4170
    %v4536 = vunpack.c.h.b16 %v4170
    %v4537 = vunpack.c.l.b16 %v4171
    %v4538 = vunpack.c.h.b16 %v4171
    %v4539 = vunpack.c.l.b16 %v4172
    %v4540 = vunpack.c.h.b16 %v4172
    %v4541 = vunpack.c.l.b16 %v4173
    %v4542 = vunpack.c.h.b16 %v4173
    %v4543 = vunpack.c.l.b16 %v4174
    %v4544 = vunpack.c.h.b16 %v4174
    %v4545 = vunpack.c.l.b16 %v4175
    %v4546 = vunpack.c.h.b16 %v4175
    %v4547 = vunpack.c.l.b16 %v4176
    %v4548 = vunpack.c.h.b16 %v4176
    %v4549 = vunpack.c.l.b16 %v4177
    %v4550 = vunpack.c.h.b16 %v4177
    %v4551 = vunpack.c.l.b16 %v4178
    %v4552 = vunpack.c.h.b16 %v4178
    %v4553 = vunpack.c.l.b16 %v4179
    %v4554 = vunpack.c.h.b16 %v4179
    %v4555 = vunpack.c.l.b16 %v4180
    %v4556 = vunpack.c.h.b16 %v4180
    %v4557 = vunpack.c.l.b16 %v4181
    %v4558 = vunpack.c.h.b16 %v4181
    %v4559 = vunpack.c.l.b16 %v4182
    %v4560 = vunpack.c.h.b16 %v4182
    %v4561 = vunpack.c.l.b16 %v4183
    %v4562 = vunpack.c.h.b16 %v4183
    %v4563 = vunpack.c.l.b16 %v4184
    %v4564 = vunpack.c.h.b16 %v4184
    %v4565 = vunpack.c.l.b16 %v4185
    %v4566 = vunpack.c.h.b16 %v4185
    %v4567 = vunpack.c.l.b16 %v4186
    %v4568 = vunpack.c.h.b16 %v4186
    %v4569 = vunpack.c.l.b16 %v4187
    %v4570 = vunpack.c.h.b16 %v4187
    %v4571 = vunpack.c.l.b16 %v4188
    %v4572 = vunpack.c.h.b16 %v4188
    %v4573 = vunpack.c.l.b16 %v4189
    %v4574 = vunpack.c.h.b16 %v4189
    %v4575 = vunpack.c.l.b16 %v4190
    %v4576 = vunpack.c.h.b16 %v4190
    %v4577 = vunpack.c.l.b16 %v4191
    %v4578 = vunpack.c.h.b16 %v4191
    %v4579 = vunpack.c.l.b16 %v4192
    %v4580 = vunpack.c.h.b16 %v4192
    %v4581 = vunpack.c.l.b16 %v4193
    %v4582 = vunpack.c.h.b16 %v4193
    %v4583 = vunpack.c.l.b16 %v4194
    %v4584 = vunpack.c.h.b16 %v4194
    %v4585 = vunpack.c.l.b16 %v4195
    %v4586 = vunpack.c.h.b16 %v4195
    %v4587 = vunpack.c.l.b16 %v4196
    %v4588 = vunpack.c.h.b16 %v4196
    %v4589 = vunpack.c.l.b16 %v4197
    %v4590 = vunpack.c.h.b16 %v4197
    %v4591 = vunpack.c.l.b16 %v4198
    %v4592 = vunpack.c.h.b16 %v4198
    %v4593 = vunpack.c.l.b16 %v4199
    %v4594 = vunpack.c.h.b16 %v4199
    %v4595 = vunpack.c.l.b16 %v4200
    %v4596 = vunpack.c.h.b16 %v4200
    %v4597 = vunpack.c.l.b16 %v4201
    %v4598 = vunpack.c.h.b16 %v4201
    %v4599 = vunpack.c.l.b16 %v4202
    %v4600 = vunpack.c.h.b16 %v4202
    %v4601 = vunpack.c.l.b16 %v4203
    %v4602 = vunpack.c.h.b16 %v4203
    %v4603 = vunpack.c.l.b16 %v4204
    %v4604 = vunpack.c.h.b16 %v4204
    %v4605 = vunpack.c.l.b16 %v4205
    %v4606 = vunpack.c.h.b16 %v4205
    %v4607 = vunpack.c.l.b16 %v4206
    %v4608 = vunpack.c.h.b16 %v4206
    %v4609 = vunpack.c.l.b16 %v4207
    %v4610 = vunpack.c.h.b16 %v4207
    %v4611 = vunpack.c.l.b16 %v4208
    %v4612 = vunpack.c.h.b16 %v4208
    %v4613 = vunpack.c.l.b16 %v4209
    %v4614 = vunpack.c.h.b16 %v4209
    %v4615 = vunpack.c.l.b16 %v4210
    %v4616 = vunpack.c.h.b16 %v4210
    %v4617 = vunpack.c.l.b16 %v4211
    %v4618 = vunpack.c.h.b16 %v4211
    %v4619 = vpack.c.b16 %v4367, %v4363
    %v4620 = vpack.c.b16 %v4368, %v4364
    %v4621 = vpack.c.b16 %v4369, %v4365
    %v4622 = vpack.c.b16 %v4370, %v4366
    %v4623 = vpack.c.b16 %v4375, %v4371
    %v4624 = vpack.c.b16 %v4376, %v4372
    %v4625 = vpack.c.b16 %v4377, %v4373
    %v4626 = vpack.c.b16 %v4378, %v4374
    %v4627 = vpack.c.b16 %v4383, %v4379
    %v4628 = vpack.c.b16 %v4384, %v4380
    %v4629 = vpack.c.b16 %v4385, %v4381
    %v4630 = vpack.c.b16 %v4386, %v4382
    %v4631 = vpack.c.b16 %v4391, %v4387
    %v4632 = vpack.c.b16 %v4392, %v4388
    %v4633 = vpack.c.b16 %v4393, %v4389
    %v4634 = vpack.c.b16 %v4394, %v4390
    %v4635 = vpack.c.b16 %v4399, %v4395
    %v4636 = vpack.c.b16 %v4400, %v4396
    %v4637 = vpack.c.b16 %v4401, %v4397
    %v4638 = vpack.c.b16 %v4402, %v4398
    %v4639 = vpack.c.b16 %v4407, %v4403
    %v4640 = vpack.c.b16 %v4408, %v4404
    %v4641 = vpack.c.b16 %v4409, %v4405
    %v4642 = vpack.c.b16 %v4410, %v4406
    %v4643 = vpack.c.b16 %v4415, %v4411
    %v4644 = vpack.c.b16 %v4416, %v4412
    %v4645 = vpack.c.b16 %v4417, %v4413
    %v4646 = vpack.c.b16 %v4418, %v4414
    %v4647 = vpack.c.b16 %v4423, %v4419
    %v4648 = vpack.c.b16 %v4424, %v4420
    %v4649 = vpack.c.b16 %v4425, %v4421
    %v4650 = vpack.c.b16 %v4426, %v4422
    %v4651 = vpack.c.b16 %v4431, %v4427
    %v4652 = vpack.c.b16 %v4432, %v4428
    %v4653 = vpack.c.b16 %v4433, %v4429
    %v4654 = vpack.c.b16 %v4434, %v4430
    %v4655 = vpack.c.b16 %v4439, %v4435
    %v4656 = vpack.c.b16 %v4440, %v4436
    %v4657 = vpack.c.b16 %v4441, %v4437
    %v4658 = vpack.c.b16 %v4442, %v4438
    %v4659 = vpack.c.b16 %v4447, %v4443
    %v4660 = vpack.c.b16 %v4448, %v4444
    %v4661 = vpack.c.b16 %v4449, %v4445
    %v4662 = vpack.c.b16 %v4450, %v4446
    %v4663 = vpack.c.b16 %v4455, %v4451
    %v4664 = vpack.c.b16 %v4456, %v4452
    %v4665 = vpack.c.b16 %v4457, %v4453
    %v4666 = vpack.c.b16 %v4458, %v4454
    %v4667 = vpack.c.b16 %v4463, %v4459
    %v4668 = vpack.c.b16 %v4464, %v4460
    %v4669 = vpack.c.b16 %v4465, %v4461
    %v4670 = vpack.c.b16 %v4466, %v4462
    %v4671 = vpack.c.b16 %v4471, %v4467
    %v4672 = vpack.c.b16 %v4472, %v4468
    %v4673 = vpack.c.b16 %v4473, %v4469
    %v4674 = vpack.c.b16 %v4474, %v4470
    %v4675 = vpack.c.b16 %v4479, %v4475
    %v4676 = vpack.c.b16 %v4480, %v4476
    %v4677 = vpack.c.b16 %v4481, %v4477
    %v4678 = vpack.c.b16 %v4482, %v4478
    %v4679 = vpack.c.b16 %v4487, %v4483
    %v4680 = vpack.c.b16 %v4488, %v4484
    %v4681 = vpack.c.b16 %v4489, %v4485
    %v4682 = vpack.c.b16 %v4490, %v4486
    %v4683 = vpack.c.b16 %v4495, %v4491
    %v4684 = vpack.c.b16 %v4496, %v4492
    %v4685 = vpack.c.b16 %v4497, %v4493
    %v4686 = vpack.c.b16 %v4498, %v4494
    %v4687 = vpack.c.b16 %v4503, %v4499
    %v4688 = vpack.c.b16 %v4504, %v4500
    %v4689 = vpack.c.b16 %v4505, %v4501
    %v4690 = vpack.c.b16 %v4506, %v4502
    %v4691 = vpack.c.b16 %v4511, %v4507
    %v4692 = vpack.c.b16 %v4512, %v4508
    %v4693 = vpack.c.b16 %v4513, %v4509
    %v4694 = vpack.c.b16 %v4514, %v4510
    %v4695 = vpack.c.b16 %v4519, %v4515
    %v4696 = vpack.c.b16 %v4520, %v4516
    %v4697 = vpack.c.b16 %v4521, %v4517
    %v4698 = vpack.c.b16 %v4522, %v4518
    %v4699 = vpack.c.b16 %v4527, %v4523
    %v4700 = vpack.c.b16 %v4528, %v4524
    %v4701 = vpack.c.b16 %v4529, %v4525
    %v4702 = vpack.c.b16 %v4530, %v4526
    %v4703 = vpack.c.b16 %v4535, %v4531
    %v4704 = vpack.c.b16 %v4536, %v4532
    %v4705 = vpack.c.b16 %v4537, %v4533
    %v4706 = vpack.c.b16 %v4538, %v4534
    %v4707 = vpack.c.b16 %v4543, %v4539
    %v4708 = vpack.c.b16 %v4544, %v4540
    %v4709 = vpack.c.b16 %v4545, %v4541
    %v4710 = vpack.c.b16 %v4546, %v4542
    %v4711 = vpack.c.b16 %v4551, %v4547
    %v4712 = vpack.c.b16 %v4552, %v4548
    %v4713 = vpack.c.b16 %v4553, %v4549
    %v4714 = vpack.c.b16 %v4554, %v4550
    %v4715 = vpack.c.b16 %v4559, %v4555
    %v4716 = vpack.c.b16 %v4560, %v4556
    %v4717 = vpack.c.b16 %v4561, %v4557
    %v4718 = vpack.c.b16 %v4562, %v4558
    %v4719 = vpack.c.b16 %v4567, %v4563
    %v4720 = vpack.c.b16 %v4568, %v4564
    %v4721 = vpack.c.b16 %v4569, %v4565
    %v4722 = vpack.c.b16 %v4570, %v4566
    %v4723 = vpack.c.b16 %v4575, %v4571
    %v4724 = vpack.c.b16 %v4576, %v4572
    %v4725 = vpack.c.b16 %v4577, %v4573
    %v4726 = vpack.c.b16 %v4578, %v4574
    %v4727 = vpack.c.b16 %v4583, %v4579
    %v4728 = vpack.c.b16 %v4584, %v4580
    %v4729 = vpack.c.b16 %v4585, %v4581
    %v4730 = vpack.c.b16 %v4586, %v4582
    %v4731 = vpack.c.b16 %v4591, %v4587
    %v4732 = vpack.c.b16 %v4592, %v4588
    %v4733 = vpack.c.b16 %v4593, %v4589
    %v4734 = vpack.c.b16 %v4594, %v4590
    %v4735 = vpack.c.b16 %v4599, %v4595
    %v4736 = vpack.c.b16 %v4600, %v4596
    %v4737 = vpack.c.b16 %v4601, %v4597
    %v4738 = vpack.c.b16 %v4602, %v4598
    %v4739 = vpack.c.b16 %v4607, %v4603
    %v4740 = vpack.c.b16 %v4608, %v4604
    %v4741 = vpack.c.b16 %v4609, %v4605
    %v4742 = vpack.c.b16 %v4610, %v4606
    %v4743 = vpack.c.b16 %v4615, %v4611
    %v4744 = vpack.c.b16 %v4616, %v4612
    %v4745 = vpack.c.b16 %v4617, %v4613
    %v4746 = vpack.c.b16 %v4618, %v4614
    %4875 = vmatprep.subr.bf16.mxu0 %v4620
    %4876 = vmatpush1.bf16.msra.mxu0 %v4619
    %4877 = vmatprep.subr.bf16.mxu0 %v4624
    %4878 = vmatpush1.bf16.msra.mxu0 %v4623
    %4879 = vmatprep.subr.bf16.mxu0 %v4628
    %4880 = vmatpush1.bf16.msra.mxu0 %v4627
    %4881 = vmatprep.subr.bf16.mxu0 %v4632
    %4882 = vmatpush1.bf16.msra.mxu0 %v4631
    %4883 = vmatprep.subr.bf16.mxu0 %v4636
    %4884 = vmatpush1.bf16.msra.mxu0 %v4635
    %4885 = vmatprep.subr.bf16.mxu0 %v4640
    %4886 = vmatpush1.bf16.msra.mxu0 %v4639
    %4887 = vmatprep.subr.bf16.mxu0 %v4644
    %4888 = vmatpush1.bf16.msra.mxu0 %v4643
    %4889 = vmatprep.subr.bf16.mxu0 %v4648
    %4890 = vmatpush1.bf16.msra.mxu0 %v4647
    %4891 = vmatprep.subr.bf16.mxu0 %v4652
    %4892 = vmatpush1.bf16.msra.mxu0 %v4651
    %4893 = vmatprep.subr.bf16.mxu0 %v4656
    %4894 = vmatpush1.bf16.msra.mxu0 %v4655
    %4895 = vmatprep.subr.bf16.mxu0 %v4660
    %4896 = vmatpush1.bf16.msra.mxu0 %v4659
    %4897 = vmatprep.subr.bf16.mxu0 %v4664
    %4898 = vmatpush1.bf16.msra.mxu0 %v4663
    %4899 = vmatprep.subr.bf16.mxu0 %v4668
    %4900 = vmatpush1.bf16.msra.mxu0 %v4667
    %4901 = vmatprep.subr.bf16.mxu0 %v4672
    %4902 = vmatpush1.bf16.msra.mxu0 %v4671
    %4903 = vmatprep.subr.bf16.mxu0 %v4676
    %4904 = vmatpush1.bf16.msra.mxu0 %v4675
    %4905 = vmatprep.subr.bf16.mxu0 %v4680
    %4906 = vmatpush1.bf16.msra.mxu0 %v4679
    %4907 = vmatprep.mubr.bf16.mxu0 %v1439
    %4908 = vmatmul.mubr.bf16.gmra.mrb[0].mxu0 %v1438
    %v4909 = vpop.f32.mrb[0].mxu0
    %v4910 = vadd.f32 %v4218, %v4909
    %v4911 = vpop.f32.mrb[0].mxu0
    %v4912 = vadd.f32 %v4222, %v4911
    %v4913 = vpop.f32.mrb[0].mxu0
    %v4914 = vadd.f32 %v4218, %v4913
    %v4915 = vpop.f32.mrb[0].mxu0
    %v4916 = vadd.f32 %v4222, %v4915
    %4917 = vdwg.mxu0
    %4918 = vmatprep.subr.bf16.mxu0 %v4684
    %4919 = vmatpush1.bf16.msra.mxu0 %v4683
    %4920 = vmatprep.subr.bf16.mxu0 %v4688
    %4921 = vmatpush1.bf16.msra.mxu0 %v4687
    %4922 = vmatprep.subr.bf16.mxu0 %v4692
    %4923 = vmatpush1.bf16.msra.mxu0 %v4691
    %4924 = vmatprep.subr.bf16.mxu0 %v4696
    %4925 = vmatpush1.bf16.msra.mxu0 %v4695
    %4926 = vmatprep.subr.bf16.mxu0 %v4700
    %4927 = vmatpush1.bf16.msra.mxu0 %v4699
    %4928 = vmatprep.subr.bf16.mxu0 %v4704
    %4929 = vmatpush1.bf16.msra.mxu0 %v4703
    %4930 = vmatprep.subr.bf16.mxu0 %v4708
    %4931 = vmatpush1.bf16.msra.mxu0 %v4707
    %4932 = vmatprep.subr.bf16.mxu0 %v4712
    %4933 = vmatpush1.bf16.msra.mxu0 %v4711
    %4934 = vmatprep.subr.bf16.mxu0 %v4716
    %4935 = vmatpush1.bf16.msra.mxu0 %v4715
    %4936 = vmatprep.subr.bf16.mxu0 %v4720
    %4937 = vmatpush1.bf16.msra.mxu0 %v4719
    %4938 = vmatprep.subr.bf16.mxu0 %v4724
    %4939 = vmatpush1.bf16.msra.mxu0 %v4723
    %4940 = vmatprep.subr.bf16.mxu0 %v4728
    %4941 = vmatpush1.bf16.msra.mxu0 %v4727
    %4942 = vmatprep.subr.bf16.mxu0 %v4732
    %4943 = vmatpush1.bf16.msra.mxu0 %v4731
    %4944 = vmatprep.subr.bf16.mxu0 %v4736
    %4945 = vmatpush1.bf16.msra.mxu0 %v4735
    %4946 = vmatprep.subr.bf16.mxu0 %v4740
    %4947 = vmatpush1.bf16.msra.mxu0 %v4739
    %4948 = vmatprep.subr.bf16.mxu0 %v4744
    %4949 = vmatpush1.bf16.msra.mxu0 %v4743
    %4950 = vmatprep.mubr.bf16.mxu0 %v1441
    %4951 = vmatmul.mubr.bf16.gmra.mrb[0].mxu0 %v1440
    %v4952 = vpop.f32.mrb[0].mxu0
    %v4953 = vadd.f32 %v4910, %v4952
    %v4954 = vpop.f32.mrb[0].mxu0
    %v4955 = vadd.f32 %v4912, %v4954
    %v4956 = vpop.f32.mrb[0].mxu0
    %v4957 = vadd.f32 %v4914, %v4956
    %v4958 = vpop.f32.mrb[0].mxu0
    %v4959 = vadd.f32 %v4916, %v4958
    %4960 = vdwg.mxu0
    %4961 = vmatprep.subr.bf16.mxu0 %v4622
    %4962 = vmatpush1.bf16.msra.mxu0 %v4621
    %4963 = vmatprep.subr.bf16.mxu0 %v4626
    %4964 = vmatpush1.bf16.msra.mxu0 %v4625
    %4965 = vmatprep.subr.bf16.mxu0 %v4630
    %4966 = vmatpush1.bf16.msra.mxu0 %v4629
    %4967 = vmatprep.subr.bf16.mxu0 %v4634
    %4968 = vmatpush1.bf16.msra.mxu0 %v4633
    %4969 = vmatprep.subr.bf16.mxu0 %v4638
    %4970 = vmatpush1.bf16.msra.mxu0 %v4637
    %4971 = vmatprep.subr.bf16.mxu0 %v4642
    %4972 = vmatpush1.bf16.msra.mxu0 %v4641
    %4973 = vmatprep.subr.bf16.mxu0 %v4646
    %4974 = vmatpush1.bf16.msra.mxu0 %v4645
    %4975 = vmatprep.subr.bf16.mxu0 %v4650
    %4976 = vmatpush1.bf16.msra.mxu0 %v4649
    %4977 = vmatprep.subr.bf16.mxu0 %v4654
    %4978 = vmatpush1.bf16.msra.mxu0 %v4653
    %4979 = vmatprep.subr.bf16.mxu0 %v4658
    %4980 = vmatpush1.bf16.msra.mxu0 %v4657
    %4981 = vmatprep.subr.bf16.mxu0 %v4662
    %4982 = vmatpush1.bf16.msra.mxu0 %v4661
    %4983 = vmatprep.subr.bf16.mxu0 %v4666
    %4984 = vmatpush1.bf16.msra.mxu0 %v4665
    %4985 = vmatprep.subr.bf16.mxu0 %v4670
    %4986 = vmatpush1.bf16.msra.mxu0 %v4669
    %4987 = vmatprep.subr.bf16.mxu0 %v4674
    %4988 = vmatpush1.bf16.msra.mxu0 %v4673
    %4989 = vmatprep.subr.bf16.mxu0 %v4678
    %4990 = vmatpush1.bf16.msra.mxu0 %v4677
    %4991 = vmatprep.subr.bf16.mxu0 %v4682
    %4992 = vmatpush1.bf16.msra.mxu0 %v4681
    %4993 = vmatprep.mubr.bf16.mxu0 %v1439
    %4994 = vmatmul.mubr.bf16.gmra.mrb[0].mxu0 %v1438
    %v4995 = vpop.f32.mrb[0].mxu0
    %v4996 = vadd.f32 %v4226, %v4995
    %v4997 = vpop.f32.mrb[0].mxu0
    %v4998 = vadd.f32 %v4230, %v4997
    %v4999 = vpop.f32.mrb[0].mxu0
    %v5000 = vadd.f32 %v4226, %v4999
    %v5001 = vpop.f32.mrb[0].mxu0
    %v5002 = vadd.f32 %v4230, %v5001
    %5003 = vdwg.mxu0
    %5004 = vmatprep.subr.bf16.mxu0 %v4686
    %5005 = vmatpush1.bf16.msra.mxu0 %v4685
    %5006 = vmatprep.subr.bf16.mxu0 %v4690
    %5007 = vmatpush1.bf16.msra.mxu0 %v4689
    %5008 = vmatprep.subr.bf16.mxu0 %v4694
    %5009 = vmatpush1.bf16.msra.mxu0 %v4693
    %5010 = vmatprep.subr.bf16.mxu0 %v4698
    %5011 = vmatpush1.bf16.msra.mxu0 %v4697
    %5012 = vmatprep.subr.bf16.mxu0 %v4702
    %5013 = vmatpush1.bf16.msra.mxu0 %v4701
    %5014 = vmatprep.subr.bf16.mxu0 %v4706
    %5015 = vmatpush1.bf16.msra.mxu0 %v4705
    %5016 = vmatprep.subr.bf16.mxu0 %v4710
    %5017 = vmatpush1.bf16.msra.mxu0 %v4709
    %5018 = vmatprep.subr.bf16.mxu0 %v4714
    %5019 = vmatpush1.bf16.msra.mxu0 %v4713
    %5020 = vmatprep.subr.bf16.mxu0 %v4718
    %5021 = vmatpush1.bf16.msra.mxu0 %v4717
    %5022 = vmatprep.subr.bf16.mxu0 %v4722
    %5023 = vmatpush1.bf16.msra.mxu0 %v4721
    %5024 = vmatprep.subr.bf16.mxu0 %v4726
    %5025 = vmatpush1.bf16.msra.mxu0 %v4725
    %5026 = vmatprep.subr.bf16.mxu0 %v4730
    %5027 = vmatpush1.bf16.msra.mxu0 %v4729
    %5028 = vmatprep.subr.bf16.mxu0 %v4734
    %5029 = vmatpush1.bf16.msra.mxu0 %v4733
    %5030 = vmatprep.subr.bf16.mxu0 %v4738
    %5031 = vmatpush1.bf16.msra.mxu0 %v4737
    %5032 = vmatprep.subr.bf16.mxu0 %v4742
    %5033 = vmatpush1.bf16.msra.mxu0 %v4741
    %5034 = vmatprep.subr.bf16.mxu0 %v4746
    %5035 = vmatpush1.bf16.msra.mxu0 %v4745
    %5036 = vmatprep.mubr.bf16.mxu0 %v1441
    %5037 = vmatmul.mubr.bf16.gmra.mrb[0].mxu0 %v1440
    %v5038 = vpop.f32.mrb[0].mxu0
    %v5039 = vadd.f32 %v4996, %v5038
    %v5040 = vpop.f32.mrb[0].mxu0
    %v5041 = vadd.f32 %v4998, %v5040
    %v5042 = vpop.f32.mrb[0].mxu0
    %v5043 = vadd.f32 %v5000, %v5042
    %v5044 = vpop.f32.mrb[0].mxu0
    %v5045 = vadd.f32 %v5002, %v5044
    %5046 = vdwg.mxu0
    %v5047 = vmax.f32 %v4953, 0.0
    %v5048 = vmax.f32 %v4955, 0.0
    %v5049 = vmax.f32 %v5039, 0.0
    %v5050 = vmax.f32 %v5041, 0.0
    %v5051 = vmax.f32 %v4957, 0.0
    %v5052 = vmax.f32 %v4959, 0.0
    %v5053 = vmax.f32 %v5043, 0.0
    %v5054 = vmax.f32 %v5045, 0.0
    %v5055 = vpack.c.bf16 %v5051, %v5047
    %v5056 = vpack.c.bf16 %v5052, %v5048
    %v5057 = vpack.c.bf16 %v5053, %v5049
    %v5058 = vpack.c.bf16 %v5054, %v5050
    %v5059 = vld [vmem:[#allocation2] sm:$0xff]
    %v5060 = vld [vmem:[#allocation2 + $0x8] sm:$0xff]
    %s5061 = scalar_lea.vmem [#allocation15], 512
    %v5062 = vld [vmem:[%s5061] sm:$0xf]
    %v5063 = vld [vmem:[%s5061 + $0x4] sm:$0xf]
    %v5064 = vld [vmem:[%s5061 + $0x8] sm:$0xf]
    %v5065 = vld [vmem:[%s5061 + $0xc] sm:$0xf]
    %v5066 = vld [vmem:[%s5061 + $0x10] sm:$0xf]
    %v5067 = vld [vmem:[%s5061 + $0x14] sm:$0xf]
    %v5068 = vld [vmem:[%s5061 + $0x18] sm:$0xf]
    %v5069 = vld [vmem:[%s5061 + $0x1c] sm:$0xf]
    %v5070 = vld [vmem:[%s5061 + $0x20] sm:$0xf]
    %v5071 = vld [vmem:[%s5061 + $0x24] sm:$0xf]
    %v5072 = vld [vmem:[%s5061 + $0x28] sm:$0xf]
    %v5073 = vld [vmem:[%s5061 + $0x2c] sm:$0xf]
    %v5074 = vld [vmem:[%s5061 + $0x30] sm:$0xf]
    %v5075 = vld [vmem:[%s5061 + $0x34] sm:$0xf]
    %v5076 = vld [vmem:[%s5061 + $0x38] sm:$0xf]
    %v5077 = vld [vmem:[%s5061 + $0x3c] sm:$0xf]
    %v5078 = vld [vmem:[%s5061 + $0x40] sm:$0xf]
    %v5079 = vld [vmem:[%s5061 + $0x44] sm:$0xf]
    %v5080 = vld [vmem:[%s5061 + $0x48] sm:$0xf]
    %v5081 = vld [vmem:[%s5061 + $0x4c] sm:$0xf]
    %v5082 = vld [vmem:[%s5061 + $0x50] sm:$0xf]
    %v5083 = vld [vmem:[%s5061 + $0x54] sm:$0xf]
    %v5084 = vld [vmem:[%s5061 + $0x58] sm:$0xf]
    %v5085 = vld [vmem:[%s5061 + $0x5c] sm:$0xf]
    %v5086 = vld [vmem:[%s5061 + $0x60] sm:$0xf]
    %v5087 = vld [vmem:[%s5061 + $0x64] sm:$0xf]
    %v5088 = vld [vmem:[%s5061 + $0x68] sm:$0xf]
    %v5089 = vld [vmem:[%s5061 + $0x6c] sm:$0xf]
    %v5090 = vld [vmem:[%s5061 + $0x70] sm:$0xf]
    %v5091 = vld [vmem:[%s5061 + $0x74] sm:$0xf]
    %v5092 = vld [vmem:[%s5061 + $0x78] sm:$0xf]
    %v5093 = vld [vmem:[%s5061 + $0x7c] sm:$0xf]
    %v5094 = vld [vmem:[%s5061 + $0x80] sm:$0xf]
    %v5095 = vld [vmem:[%s5061 + $0x84] sm:$0xf]
    %v5096 = vld [vmem:[%s5061 + $0x88] sm:$0xf]
    %v5097 = vld [vmem:[%s5061 + $0x8c] sm:$0xf]
    %v5098 = vld [vmem:[%s5061 + $0x90] sm:$0xf]
    %v5099 = vld [vmem:[%s5061 + $0x94] sm:$0xf]
    %v5100 = vld [vmem:[%s5061 + $0x98] sm:$0xf]
    %v5101 = vld [vmem:[%s5061 + $0x9c] sm:$0xf]
    %v5102 = vld [vmem:[%s5061 + $0xa0] sm:$0xf]
    %v5103 = vld [vmem:[%s5061 + $0xa4] sm:$0xf]
    %v5104 = vld [vmem:[%s5061 + $0xa8] sm:$0xf]
    %v5105 = vld [vmem:[%s5061 + $0xac] sm:$0xf]
    %v5106 = vld [vmem:[%s5061 + $0xb0] sm:$0xf]
    %v5107 = vld [vmem:[%s5061 + $0xb4] sm:$0xf]
    %v5108 = vld [vmem:[%s5061 + $0xb8] sm:$0xf]
    %v5109 = vld [vmem:[%s5061 + $0xbc] sm:$0xf]
    %v5110 = vld [vmem:[%s5061 + $0xc0] sm:$0xf]
    %v5111 = vld [vmem:[%s5061 + $0xc4] sm:$0xf]
    %v5112 = vld [vmem:[%s5061 + $0xc8] sm:$0xf]
    %v5113 = vld [vmem:[%s5061 + $0xcc] sm:$0xf]
    %v5114 = vld [vmem:[%s5061 + $0xd0] sm:$0xf]
    %v5115 = vld [vmem:[%s5061 + $0xd4] sm:$0xf]
    %v5116 = vld [vmem:[%s5061 + $0xd8] sm:$0xf]
    %v5117 = vld [vmem:[%s5061 + $0xdc] sm:$0xf]
    %v5118 = vld [vmem:[%s5061 + $0xe0] sm:$0xf]
    %v5119 = vld [vmem:[%s5061 + $0xe4] sm:$0xf]
    %v5120 = vld [vmem:[%s5061 + $0xe8] sm:$0xf]
    %v5121 = vld [vmem:[%s5061 + $0xec] sm:$0xf]
    %v5122 = vld [vmem:[%s5061 + $0xf0] sm:$0xf]
    %v5123 = vld [vmem:[%s5061 + $0xf4] sm:$0xf]
    %v5124 = vld [vmem:[%s5061 + $0xf8] sm:$0xf]
    %v5125 = vld [vmem:[%s5061 + $0xfc] sm:$0xf]
    %v5190 = vunpack.c.l.b16 %v5062
    %v5191 = vunpack.c.l.b16 %v5063
    %v5192 = vunpack.c.l.b16 %v5064
    %v5193 = vunpack.c.l.b16 %v5065
    %v5194 = vunpack.c.l.b16 %v5066
    %v5195 = vunpack.c.l.b16 %v5067
    %v5196 = vunpack.c.l.b16 %v5068
    %v5197 = vunpack.c.l.b16 %v5069
    %v5198 = vunpack.c.l.b16 %v5070
    %v5199 = vunpack.c.l.b16 %v5071
    %v5200 = vunpack.c.l.b16 %v5072
    %v5201 = vunpack.c.l.b16 %v5073
    %v5202 = vunpack.c.l.b16 %v5074
    %v5203 = vunpack.c.l.b16 %v5075
    %v5204 = vunpack.c.l.b16 %v5076
    %v5205 = vunpack.c.l.b16 %v5077
    %v5206 = vunpack.c.l.b16 %v5078
    %v5207 = vunpack.c.l.b16 %v5079
    %v5208 = vunpack.c.l.b16 %v5080
    %v5209 = vunpack.c.l.b16 %v5081
    %v5210 = vunpack.c.l.b16 %v5082
    %v5211 = vunpack.c.l.b16 %v5083
    %v5212 = vunpack.c.l.b16 %v5084
    %v5213 = vunpack.c.l.b16 %v5085
    %v5214 = vunpack.c.l.b16 %v5086
    %v5215 = vunpack.c.l.b16 %v5087
    %v5216 = vunpack.c.l.b16 %v5088
    %v5217 = vunpack.c.l.b16 %v5089
    %v5218 = vunpack.c.l.b16 %v5090
    %v5219 = vunpack.c.l.b16 %v5091
    %v5220 = vunpack.c.l.b16 %v5092
    %v5221 = vunpack.c.l.b16 %v5093
    %v5222 = vunpack.c.l.b16 %v5094
    %v5223 = vunpack.c.l.b16 %v5095
    %v5224 = vunpack.c.l.b16 %v5096
    %v5225 = vunpack.c.l.b16 %v5097
    %v5226 = vunpack.c.l.b16 %v5098
    %v5227 = vunpack.c.l.b16 %v5099
    %v5228 = vunpack.c.l.b16 %v5100
    %v5229 = vunpack.c.l.b16 %v5101
    %v5230 = vunpack.c.l.b16 %v5102
    %v5231 = vunpack.c.l.b16 %v5103
    %v5232 = vunpack.c.l.b16 %v5104
    %v5233 = vunpack.c.l.b16 %v5105
    %v5234 = vunpack.c.l.b16 %v5106
    %v5235 = vunpack.c.l.b16 %v5107
    %v5236 = vunpack.c.l.b16 %v5108
    %v5237 = vunpack.c.l.b16 %v5109
    %v5238 = vunpack.c.l.b16 %v5110
    %v5239 = vunpack.c.l.b16 %v5111
    %v5240 = vunpack.c.l.b16 %v5112
    %v5241 = vunpack.c.l.b16 %v5113
    %v5242 = vunpack.c.l.b16 %v5114
    %v5243 = vunpack.c.l.b16 %v5115
    %v5244 = vunpack.c.l.b16 %v5116
    %v5245 = vunpack.c.l.b16 %v5117
    %v5246 = vunpack.c.l.b16 %v5118
    %v5247 = vunpack.c.l.b16 %v5119
    %v5248 = vunpack.c.l.b16 %v5120
    %v5249 = vunpack.c.l.b16 %v5121
    %v5250 = vunpack.c.l.b16 %v5122
    %v5251 = vunpack.c.l.b16 %v5123
    %v5252 = vunpack.c.l.b16 %v5124
    %v5253 = vunpack.c.l.b16 %v5125
    %v5254 = vpack.c.b16 %v5191, %v5190
    %v5255 = vpack.c.b16 %v5193, %v5192
    %v5256 = vpack.c.b16 %v5195, %v5194
    %v5257 = vpack.c.b16 %v5197, %v5196
    %v5258 = vpack.c.b16 %v5199, %v5198
    %v5259 = vpack.c.b16 %v5201, %v5200
    %v5260 = vpack.c.b16 %v5203, %v5202
    %v5261 = vpack.c.b16 %v5205, %v5204
    %v5262 = vpack.c.b16 %v5207, %v5206
    %v5263 = vpack.c.b16 %v5209, %v5208
    %v5264 = vpack.c.b16 %v5211, %v5210
    %v5265 = vpack.c.b16 %v5213, %v5212
    %v5266 = vpack.c.b16 %v5215, %v5214
    %v5267 = vpack.c.b16 %v5217, %v5216
    %v5268 = vpack.c.b16 %v5219, %v5218
    %v5269 = vpack.c.b16 %v5221, %v5220
    %v5270 = vpack.c.b16 %v5223, %v5222
    %v5271 = vpack.c.b16 %v5225, %v5224
    %v5272 = vpack.c.b16 %v5227, %v5226
    %v5273 = vpack.c.b16 %v5229, %v5228
    %v5274 = vpack.c.b16 %v5231, %v5230
    %v5275 = vpack.c.b16 %v5233, %v5232
    %v5276 = vpack.c.b16 %v5235, %v5234
    %v5277 = vpack.c.b16 %v5237, %v5236
    %v5278 = vpack.c.b16 %v5239, %v5238
    %v5279 = vpack.c.b16 %v5241, %v5240
    %v5280 = vpack.c.b16 %v5243, %v5242
    %v5281 = vpack.c.b16 %v5245, %v5244
    %v5282 = vpack.c.b16 %v5247, %v5246
    %v5283 = vpack.c.b16 %v5249, %v5248
    %v5284 = vpack.c.b16 %v5251, %v5250
    %v5285 = vpack.c.b16 %v5253, %v5252
    %5318 = vmatprep.subr.bf16.mxu0 0
    %5319 = vmatpush1.bf16.msra.mxu0 %v5254
    %5320 = vmatprep.subr.bf16.mxu0 0
    %5321 = vmatpush1.bf16.msra.mxu0 %v5255
    %5322 = vmatprep.subr.bf16.mxu0 0
    %5323 = vmatpush1.bf16.msra.mxu0 %v5256
    %5324 = vmatprep.subr.bf16.mxu0 0
    %5325 = vmatpush1.bf16.msra.mxu0 %v5257
    %5326 = vmatprep.subr.bf16.mxu0 0
    %5327 = vmatpush1.bf16.msra.mxu0 %v5258
    %5328 = vmatprep.subr.bf16.mxu0 0
    %5329 = vmatpush1.bf16.msra.mxu0 %v5259
    %5330 = vmatprep.subr.bf16.mxu0 0
    %5331 = vmatpush1.bf16.msra.mxu0 %v5260
    %5332 = vmatprep.subr.bf16.mxu0 0
    %5333 = vmatpush1.bf16.msra.mxu0 %v5261
    %5334 = vmatprep.subr.bf16.mxu0 0
    %5335 = vmatpush1.bf16.msra.mxu0 %v5262
    %5336 = vmatprep.subr.bf16.mxu0 0
    %5337 = vmatpush1.bf16.msra.mxu0 %v5263
    %5338 = vmatprep.subr.bf16.mxu0 0
    %5339 = vmatpush1.bf16.msra.mxu0 %v5264
    %5340 = vmatprep.subr.bf16.mxu0 0
    %5341 = vmatpush1.bf16.msra.mxu0 %v5265
    %5342 = vmatprep.subr.bf16.mxu0 0
    %5343 = vmatpush1.bf16.msra.mxu0 %v5266
    %5344 = vmatprep.subr.bf16.mxu0 0
    %5345 = vmatpush1.bf16.msra.mxu0 %v5267
    %5346 = vmatprep.subr.bf16.mxu0 0
    %5347 = vmatpush1.bf16.msra.mxu0 %v5268
    %5348 = vmatprep.subr.bf16.mxu0 0
    %5349 = vmatpush1.bf16.msra.mxu0 %v5269
    %5350 = vmatprep.mubr.bf16.mxu0 %v5056
    %5351 = vmatmul.mubr.bf16.gmra.mrb[0].mxu0 %v5055
    %v5352 = vpop.f32.mrb[0].mxu0
    %v5353 = vadd.f32 0.0, %v5352
    %v5354 = vpop.f32.mrb[0].mxu0
    %v5355 = vpop.f32.mrb[0].mxu0
    %v5356 = vadd.f32 0.0, %v5355
    %v5357 = vpop.f32.mrb[0].mxu0
    %5358 = vdwg.mxu0
    %5359 = vmatprep.subr.bf16.mxu0 0
    %5360 = vmatpush1.bf16.msra.mxu0 %v5270
    %5361 = vmatprep.subr.bf16.mxu0 0
    %5362 = vmatpush1.bf16.msra.mxu0 %v5271
    %5363 = vmatprep.subr.bf16.mxu0 0
    %5364 = vmatpush1.bf16.msra.mxu0 %v5272
    %5365 = vmatprep.subr.bf16.mxu0 0
    %5366 = vmatpush1.bf16.msra.mxu0 %v5273
    %5367 = vmatprep.subr.bf16.mxu0 0
    %5368 = vmatpush1.bf16.msra.mxu0 %v5274
    %5369 = vmatprep.subr.bf16.mxu0 0
    %5370 = vmatpush1.bf16.msra.mxu0 %v5275
    %5371 = vmatprep.subr.bf16.mxu0 0
    %5372 = vmatpush1.bf16.msra.mxu0 %v5276
    %5373 = vmatprep.subr.bf16.mxu0 0
    %5374 = vmatpush1.bf16.msra.mxu0 %v5277
    %5375 = vmatprep.subr.bf16.mxu0 0
    %5376 = vmatpush1.bf16.msra.mxu0 %v5278
    %5377 = vmatprep.subr.bf16.mxu0 0
    %5378 = vmatpush1.bf16.msra.mxu0 %v5279
    %5379 = vmatprep.subr.bf16.mxu0 0
    %5380 = vmatpush1.bf16.msra.mxu0 %v5280
    %5381 = vmatprep.subr.bf16.mxu0 0
    %5382 = vmatpush1.bf16.msra.mxu0 %v5281
    %5383 = vmatprep.subr.bf16.mxu0 0
    %5384 = vmatpush1.bf16.msra.mxu0 %v5282
    %5385 = vmatprep.subr.bf16.mxu0 0
    %5386 = vmatpush1.bf16.msra.mxu0 %v5283
    %5387 = vmatprep.subr.bf16.mxu0 0
    %5388 = vmatpush1.bf16.msra.mxu0 %v5284
    %5389 = vmatprep.subr.bf16.mxu0 0
    %5390 = vmatpush1.bf16.msra.mxu0 %v5285
    %5391 = vmatprep.mubr.bf16.mxu0 %v5058
    %5392 = vmatmul.mubr.bf16.gmra.mrb[0].mxu0 %v5057
    %v5393 = vpop.f32.mrb[0].mxu0
    %v5394 = vadd.f32 %v5353, %v5393
    %v5395 = vpop.f32.mrb[0].mxu0
    %v5396 = vpop.f32.mrb[0].mxu0
    %v5397 = vadd.f32 %v5356, %v5396
    %v5398 = vpop.f32.mrb[0].mxu0
    %5399 = vdwg.mxu0
    %v5400 = vadd.f32 %v5059, %v5394
    %v5401 = vadd.f32 %v5060, %v5397
    %5402 = vst [vmem:[#allocation2] sm:$0xff] %v5400
    %5403 = vst [vmem:[#allocation2 + $0x8] sm:$0xff] %v5401
    %s5404 = scalar_lea.vmem [#allocation12], 48
    %v5405 = vld [vmem:[%s5404] sm:$0xff]
    %v5406 = vld [vmem:[%s5404 + $0x8] sm:$0xff]
    %v5407 = vld [vmem:[%s5404 + $0x40] sm:$0xff]
    %v5408 = vld [vmem:[%s5404 + $0x48] sm:$0xff]
    %v5409 = vld [vmem:[%s5404 + $0x80] sm:$0xff]
    %v5410 = vld [vmem:[%s5404 + $0x88] sm:$0xff]
    %v5411 = vld [vmem:[%s5404 + $0xc0] sm:$0xff]
    %v5412 = vld [vmem:[%s5404 + $0xc8] sm:$0xff]
    %v5413 = vld [vmem:[%s5404 + $0x100] sm:$0xff]
    %v5414 = vld [vmem:[%s5404 + $0x108] sm:$0xff]
    %v5415 = vld [vmem:[%s5404 + $0x140] sm:$0xff]
    %v5416 = vld [vmem:[%s5404 + $0x148] sm:$0xff]
    %v5417 = vld [vmem:[%s5404 + $0x180] sm:$0xff]
    %v5418 = vld [vmem:[%s5404 + $0x188] sm:$0xff]
    %v5419 = vld [vmem:[%s5404 + $0x1c0] sm:$0xff]
    %v5420 = vld [vmem:[%s5404 + $0x1c8] sm:$0xff]
    %v5421 = vld [vmem:[%s5404 + $0x200] sm:$0xff]
    %v5422 = vld [vmem:[%s5404 + $0x208] sm:$0xff]
    %v5423 = vld [vmem:[%s5404 + $0x240] sm:$0xff]
    %v5424 = vld [vmem:[%s5404 + $0x248] sm:$0xff]
    %v5425 = vld [vmem:[%s5404 + $0x280] sm:$0xff]
    %v5426 = vld [vmem:[%s5404 + $0x288] sm:$0xff]
    %v5427 = vld [vmem:[%s5404 + $0x2c0] sm:$0xff]
    %v5428 = vld [vmem:[%s5404 + $0x2c8] sm:$0xff]
    %v5429 = vld [vmem:[%s5404 + $0x300] sm:$0xff]
    %v5430 = vld [vmem:[%s5404 + $0x308] sm:$0xff]
    %v5431 = vld [vmem:[%s5404 + $0x340] sm:$0xff]
    %v5432 = vld [vmem:[%s5404 + $0x348] sm:$0xff]
    %v5433 = vld [vmem:[%s5404 + $0x380] sm:$0xff]
    %v5434 = vld [vmem:[%s5404 + $0x388] sm:$0xff]
    %v5435 = vld [vmem:[%s5404 + $0x3c0] sm:$0xff]
    %v5436 = vld [vmem:[%s5404 + $0x3c8] sm:$0xff]
    %v5437 = vld [vmem:[%s5404 + $0x400] sm:$0xff]
    %v5438 = vld [vmem:[%s5404 + $0x408] sm:$0xff]
    %v5439 = vld [vmem:[%s5404 + $0x440] sm:$0xff]
    %v5440 = vld [vmem:[%s5404 + $0x448] sm:$0xff]
    %v5441 = vld [vmem:[%s5404 + $0x480] sm:$0xff]
    %v5442 = vld [vmem:[%s5404 + $0x488] sm:$0xff]
    %v5443 = vld [vmem:[%s5404 + $0x4c0] sm:$0xff]
    %v5444 = vld [vmem:[%s5404 + $0x4c8] sm:$0xff]
    %v5445 = vld [vmem:[%s5404 + $0x500] sm:$0xff]
    %v5446 = vld [vmem:[%s5404 + $0x508] sm:$0xff]
    %v5447 = vld [vmem:[%s5404 + $0x540] sm:$0xff]
    %v5448 = vld [vmem:[%s5404 + $0x548] sm:$0xff]
    %v5449 = vld [vmem:[%s5404 + $0x580] sm:$0xff]
    %v5450 = vld [vmem:[%s5404 + $0x588] sm:$0xff]
    %v5451 = vld [vmem:[%s5404 + $0x5c0] sm:$0xff]
    %v5452 = vld [vmem:[%s5404 + $0x5c8] sm:$0xff]
    %v5453 = vld [vmem:[%s5404 + $0x600] sm:$0xff]
    %v5454 = vld [vmem:[%s5404 + $0x608] sm:$0xff]
    %v5455 = vld [vmem:[%s5404 + $0x640] sm:$0xff]
    %v5456 = vld [vmem:[%s5404 + $0x648] sm:$0xff]
    %v5457 = vld [vmem:[%s5404 + $0x680] sm:$0xff]
    %v5458 = vld [vmem:[%s5404 + $0x688] sm:$0xff]
    %v5459 = vld [vmem:[%s5404 + $0x6c0] sm:$0xff]
    %v5460 = vld [vmem:[%s5404 + $0x6c8] sm:$0xff]
    %v5461 = vld [vmem:[%s5404 + $0x700] sm:$0xff]
    %v5462 = vld [vmem:[%s5404 + $0x708] sm:$0xff]
    %v5463 = vld [vmem:[%s5404 + $0x740] sm:$0xff]
    %v5464 = vld [vmem:[%s5404 + $0x748] sm:$0xff]
    %v5465 = vld [vmem:[%s5404 + $0x780] sm:$0xff]
    %v5466 = vld [vmem:[%s5404 + $0x788] sm:$0xff]
    %v5467 = vld [vmem:[%s5404 + $0x7c0] sm:$0xff]
    %v5468 = vld [vmem:[%s5404 + $0x7c8] sm:$0xff]
    %v5469 = vld [vmem:[%s5404 + $0x800] sm:$0xff]
    %v5470 = vld [vmem:[%s5404 + $0x808] sm:$0xff]
    %v5471 = vld [vmem:[%s5404 + $0x840] sm:$0xff]
    %v5472 = vld [vmem:[%s5404 + $0x848] sm:$0xff]
    %v5473 = vld [vmem:[%s5404 + $0x880] sm:$0xff]
    %v5474 = vld [vmem:[%s5404 + $0x888] sm:$0xff]
    %v5475 = vld [vmem:[%s5404 + $0x8c0] sm:$0xff]
    %v5476 = vld [vmem:[%s5404 + $0x8c8] sm:$0xff]
    %v5477 = vld [vmem:[%s5404 + $0x900] sm:$0xff]
    %v5478 = vld [vmem:[%s5404 + $0x908] sm:$0xff]
    %v5479 = vld [vmem:[%s5404 + $0x940] sm:$0xff]
    %v5480 = vld [vmem:[%s5404 + $0x948] sm:$0xff]
    %v5481 = vld [vmem:[%s5404 + $0x980] sm:$0xff]
    %v5482 = vld [vmem:[%s5404 + $0x988] sm:$0xff]
    %v5483 = vld [vmem:[%s5404 + $0x9c0] sm:$0xff]
    %v5484 = vld [vmem:[%s5404 + $0x9c8] sm:$0xff]
    %v5485 = vld [vmem:[%s5404 + $0xa00] sm:$0xff]
    %v5486 = vld [vmem:[%s5404 + $0xa08] sm:$0xff]
    %v5487 = vld [vmem:[%s5404 + $0xa40] sm:$0xff]
    %v5488 = vld [vmem:[%s5404 + $0xa48] sm:$0xff]
    %v5489 = vld [vmem:[%s5404 + $0xa80] sm:$0xff]
    %v5490 = vld [vmem:[%s5404 + $0xa88] sm:$0xff]
    %v5491 = vld [vmem:[%s5404 + $0xac0] sm:$0xff]
    %v5492 = vld [vmem:[%s5404 + $0xac8] sm:$0xff]
    %v5493 = vld [vmem:[%s5404 + $0xb00] sm:$0xff]
    %v5494 = vld [vmem:[%s5404 + $0xb08] sm:$0xff]
    %v5495 = vld [vmem:[%s5404 + $0xb40] sm:$0xff]
    %v5496 = vld [vmem:[%s5404 + $0xb48] sm:$0xff]
    %v5497 = vld [vmem:[%s5404 + $0xb80] sm:$0xff]
    %v5498 = vld [vmem:[%s5404 + $0xb88] sm:$0xff]
    %v5499 = vld [vmem:[%s5404 + $0xbc0] sm:$0xff]
    %v5500 = vld [vmem:[%s5404 + $0xbc8] sm:$0xff]
    %v5501 = vld [vmem:[%s5404 + $0xc00] sm:$0xff]
    %v5502 = vld [vmem:[%s5404 + $0xc08] sm:$0xff]
    %v5503 = vld [vmem:[%s5404 + $0xc40] sm:$0xff]
    %v5504 = vld [vmem:[%s5404 + $0xc48] sm:$0xff]
    %v5505 = vld [vmem:[%s5404 + $0xc80] sm:$0xff]
    %v5506 = vld [vmem:[%s5404 + $0xc88] sm:$0xff]
    %v5507 = vld [vmem:[%s5404 + $0xcc0] sm:$0xff]
    %v5508 = vld [vmem:[%s5404 + $0xcc8] sm:$0xff]
    %v5509 = vld [vmem:[%s5404 + $0xd00] sm:$0xff]
    %v5510 = vld [vmem:[%s5404 + $0xd08] sm:$0xff]
    %v5511 = vld [vmem:[%s5404 + $0xd40] sm:$0xff]
    %v5512 = vld [vmem:[%s5404 + $0xd48] sm:$0xff]
    %v5513 = vld [vmem:[%s5404 + $0xd80] sm:$0xff]
    %v5514 = vld [vmem:[%s5404 + $0xd88] sm:$0xff]
    %v5515 = vld [vmem:[%s5404 + $0xdc0] sm:$0xff]
    %v5516 = vld [vmem:[%s5404 + $0xdc8] sm:$0xff]
    %v5517 = vld [vmem:[%s5404 + $0xe00] sm:$0xff]
    %v5518 = vld [vmem:[%s5404 + $0xe08] sm:$0xff]
    %v5519 = vld [vmem:[%s5404 + $0xe40] sm:$0xff]
    %v5520 = vld [vmem:[%s5404 + $0xe48] sm:$0xff]
    %v5521 = vld [vmem:[%s5404 + $0xe80] sm:$0xff]
    %v5522 = vld [vmem:[%s5404 + $0xe88] sm:$0xff]
    %v5523 = vld [vmem:[%s5404 + $0xec0] sm:$0xff]
    %v5524 = vld [vmem:[%s5404 + $0xec8] sm:$0xff]
    %v5525 = vld [vmem:[%s5404 + $0xf00] sm:$0xff]
    %v5526 = vld [vmem:[%s5404 + $0xf08] sm:$0xff]
    %v5527 = vld [vmem:[%s5404 + $0xf40] sm:$0xff]
    %v5528 = vld [vmem:[%s5404 + $0xf48] sm:$0xff]
    %v5529 = vld [vmem:[%s5404 + $0xf80] sm:$0xff]
    %v5530 = vld [vmem:[%s5404 + $0xf88] sm:$0xff]
    %v5531 = vld [vmem:[%s5404 + $0xfc0] sm:$0xff]
    %v5532 = vld [vmem:[%s5404 + $0xfc8] sm:$0xff]
    %s5533 = scalar_lea.vmem [#allocation14], 12
    %v5534 = vld [vmem:[%s5533] sm:$0xf]
    %v5536 = vlaneseq
    %v5537 = vshrl.u32 %v5536, 7
    %v5538 = vsub.s32 0, %v5537
    %v5539 = vrot.slane %v5534, %v5538
    %v5540 = vlaneseq
    %v5541 = vshrl.u32 %v5540, 7
    %v5542 = vsub.s32 1, %v5541
    %v5543 = vrot.slane %v5534, %v5542
    %v5544 = vlaneseq
    %v5545 = vshrl.u32 %v5544, 7
    %v5546 = vsub.s32 2, %v5545
    %v5547 = vrot.slane %v5534, %v5546
    %v5548 = vlaneseq
    %v5549 = vshrl.u32 %v5548, 7
    %v5550 = vsub.s32 3, %v5549
    %v5551 = vrot.slane %v5534, %v5550
    %v5684 = vunpack.c.l.b16 %v5405
    %v5685 = vunpack.c.h.b16 %v5405
    %v5686 = vunpack.c.l.b16 %v5406
    %v5687 = vunpack.c.h.b16 %v5406
    %v5688 = vunpack.c.l.b16 %v5407
    %v5689 = vunpack.c.h.b16 %v5407
    %v5690 = vunpack.c.l.b16 %v5408
    %v5691 = vunpack.c.h.b16 %v5408
    %v5692 = vunpack.c.l.b16 %v5409
    %v5693 = vunpack.c.h.b16 %v5409
    %v5694 = vunpack.c.l.b16 %v5410
    %v5695 = vunpack.c.h.b16 %v5410
    %v5696 = vunpack.c.l.b16 %v5411
    %v5697 = vunpack.c.h.b16 %v5411
    %v5698 = vunpack.c.l.b16 %v5412
    %v5699 = vunpack.c.h.b16 %v5412
    %v5700 = vunpack.c.l.b16 %v5413
    %v5701 = vunpack.c.h.b16 %v5413
    %v5702 = vunpack.c.l.b16 %v5414
    %v5703 = vunpack.c.h.b16 %v5414
    %v5704 = vunpack.c.l.b16 %v5415
    %v5705 = vunpack.c.h.b16 %v5415
    %v5706 = vunpack.c.l.b16 %v5416
    %v5707 = vunpack.c.h.b16 %v5416
    %v5708 = vunpack.c.l.b16 %v5417
    %v5709 = vunpack.c.h.b16 %v5417
    %v5710 = vunpack.c.l.b16 %v5418
    %v5711 = vunpack.c.h.b16 %v5418
    %v5712 = vunpack.c.l.b16 %v5419
    %v5713 = vunpack.c.h.b16 %v5419
    %v5714 = vunpack.c.l.b16 %v5420
    %v5715 = vunpack.c.h.b16 %v5420
    %v5716 = vunpack.c.l.b16 %v5421
    %v5717 = vunpack.c.h.b16 %v5421
    %v5718 = vunpack.c.l.b16 %v5422
    %v5719 = vunpack.c.h.b16 %v5422
    %v5720 = vunpack.c.l.b16 %v5423
    %v5721 = vunpack.c.h.b16 %v5423
    %v5722 = vunpack.c.l.b16 %v5424
    %v5723 = vunpack.c.h.b16 %v5424
    %v5724 = vunpack.c.l.b16 %v5425
    %v5725 = vunpack.c.h.b16 %v5425
    %v5726 = vunpack.c.l.b16 %v5426
    %v5727 = vunpack.c.h.b16 %v5426
    %v5728 = vunpack.c.l.b16 %v5427
    %v5729 = vunpack.c.h.b16 %v5427
    %v5730 = vunpack.c.l.b16 %v5428
    %v5731 = vunpack.c.h.b16 %v5428
    %v5732 = vunpack.c.l.b16 %v5429
    %v5733 = vunpack.c.h.b16 %v5429
    %v5734 = vunpack.c.l.b16 %v5430
    %v5735 = vunpack.c.h.b16 %v5430
    %v5736 = vunpack.c.l.b16 %v5431
    %v5737 = vunpack.c.h.b16 %v5431
    %v5738 = vunpack.c.l.b16 %v5432
    %v5739 = vunpack.c.h.b16 %v5432
    %v5740 = vunpack.c.l.b16 %v5433
    %v5741 = vunpack.c.h.b16 %v5433
    %v5742 = vunpack.c.l.b16 %v5434
    %v5743 = vunpack.c.h.b16 %v5434
    %v5744 = vunpack.c.l.b16 %v5435
    %v5745 = vunpack.c.h.b16 %v5435
    %v5746 = vunpack.c.l.b16 %v5436
    %v5747 = vunpack.c.h.b16 %v5436
    %v5748 = vunpack.c.l.b16 %v5437
    %v5749 = vunpack.c.h.b16 %v5437
    %v5750 = vunpack.c.l.b16 %v5438
    %v5751 = vunpack.c.h.b16 %v5438
    %v5752 = vunpack.c.l.b16 %v5439
    %v5753 = vunpack.c.h.b16 %v5439
    %v5754 = vunpack.c.l.b16 %v5440
    %v5755 = vunpack.c.h.b16 %v5440
    %v5756 = vunpack.c.l.b16 %v5441
    %v5757 = vunpack.c.h.b16 %v5441
    %v5758 = vunpack.c.l.b16 %v5442
    %v5759 = vunpack.c.h.b16 %v5442
    %v5760 = vunpack.c.l.b16 %v5443
    %v5761 = vunpack.c.h.b16 %v5443
    %v5762 = vunpack.c.l.b16 %v5444
    %v5763 = vunpack.c.h.b16 %v5444
    %v5764 = vunpack.c.l.b16 %v5445
    %v5765 = vunpack.c.h.b16 %v5445
    %v5766 = vunpack.c.l.b16 %v5446
    %v5767 = vunpack.c.h.b16 %v5446
    %v5768 = vunpack.c.l.b16 %v5447
    %v5769 = vunpack.c.h.b16 %v5447
    %v5770 = vunpack.c.l.b16 %v5448
    %v5771 = vunpack.c.h.b16 %v5448
    %v5772 = vunpack.c.l.b16 %v5449
    %v5773 = vunpack.c.h.b16 %v5449
    %v5774 = vunpack.c.l.b16 %v5450
    %v5775 = vunpack.c.h.b16 %v5450
    %v5776 = vunpack.c.l.b16 %v5451
    %v5777 = vunpack.c.h.b16 %v5451
    %v5778 = vunpack.c.l.b16 %v5452
    %v5779 = vunpack.c.h.b16 %v5452
    %v5780 = vunpack.c.l.b16 %v5453
    %v5781 = vunpack.c.h.b16 %v5453
    %v5782 = vunpack.c.l.b16 %v5454
    %v5783 = vunpack.c.h.b16 %v5454
    %v5784 = vunpack.c.l.b16 %v5455
    %v5785 = vunpack.c.h.b16 %v5455
    %v5786 = vunpack.c.l.b16 %v5456
    %v5787 = vunpack.c.h.b16 %v5456
    %v5788 = vunpack.c.l.b16 %v5457
    %v5789 = vunpack.c.h.b16 %v5457
    %v5790 = vunpack.c.l.b16 %v5458
    %v5791 = vunpack.c.h.b16 %v5458
    %v5792 = vunpack.c.l.b16 %v5459
    %v5793 = vunpack.c.h.b16 %v5459
    %v5794 = vunpack.c.l.b16 %v5460
    %v5795 = vunpack.c.h.b16 %v5460
    %v5796 = vunpack.c.l.b16 %v5461
    %v5797 = vunpack.c.h.b16 %v5461
    %v5798 = vunpack.c.l.b16 %v5462
    %v5799 = vunpack.c.h.b16 %v5462
    %v5800 = vunpack.c.l.b16 %v5463
    %v5801 = vunpack.c.h.b16 %v5463
    %v5802 = vunpack.c.l.b16 %v5464
    %v5803 = vunpack.c.h.b16 %v5464
    %v5804 = vunpack.c.l.b16 %v5465
    %v5805 = vunpack.c.h.b16 %v5465
    %v5806 = vunpack.c.l.b16 %v5466
    %v5807 = vunpack.c.h.b16 %v5466
    %v5808 = vunpack.c.l.b16 %v5467
    %v5809 = vunpack.c.h.b16 %v5467
    %v5810 = vunpack.c.l.b16 %v5468
    %v5811 = vunpack.c.h.b16 %v5468
    %v5812 = vunpack.c.l.b16 %v5469
    %v5813 = vunpack.c.h.b16 %v5469
    %v5814 = vunpack.c.l.b16 %v5470
    %v5815 = vunpack.c.h.b16 %v5470
    %v5816 = vunpack.c.l.b16 %v5471
    %v5817 = vunpack.c.h.b16 %v5471
    %v5818 = vunpack.c.l.b16 %v5472
    %v5819 = vunpack.c.h.b16 %v5472
    %v5820 = vunpack.c.l.b16 %v5473
    %v5821 = vunpack.c.h.b16 %v5473
    %v5822 = vunpack.c.l.b16 %v5474
    %v5823 = vunpack.c.h.b16 %v5474
    %v5824 = vunpack.c.l.b16 %v5475
    %v5825 = vunpack.c.h.b16 %v5475
    %v5826 = vunpack.c.l.b16 %v5476
    %v5827 = vunpack.c.h.b16 %v5476
    %v5828 = vunpack.c.l.b16 %v5477
    %v5829 = vunpack.c.h.b16 %v5477
    %v5830 = vunpack.c.l.b16 %v5478
    %v5831 = vunpack.c.h.b16 %v5478
    %v5832 = vunpack.c.l.b16 %v5479
    %v5833 = vunpack.c.h.b16 %v5479
    %v5834 = vunpack.c.l.b16 %v5480
    %v5835 = vunpack.c.h.b16 %v5480
    %v5836 = vunpack.c.l.b16 %v5481
    %v5837 = vunpack.c.h.b16 %v5481
    %v5838 = vunpack.c.l.b16 %v5482
    %v5839 = vunpack.c.h.b16 %v5482
    %v5840 = vunpack.c.l.b16 %v5483
    %v5841 = vunpack.c.h.b16 %v5483
    %v5842 = vunpack.c.l.b16 %v5484
    %v5843 = vunpack.c.h.b16 %v5484
    %v5844 = vunpack.c.l.b16 %v5485
    %v5845 = vunpack.c.h.b16 %v5485
    %v5846 = vunpack.c.l.b16 %v5486
    %v5847 = vunpack.c.h.b16 %v5486
    %v5848 = vunpack.c.l.b16 %v5487
    %v5849 = vunpack.c.h.b16 %v5487
    %v5850 = vunpack.c.l.b16 %v5488
    %v5851 = vunpack.c.h.b16 %v5488
    %v5852 = vunpack.c.l.b16 %v5489
    %v5853 = vunpack.c.h.b16 %v5489
    %v5854 = vunpack.c.l.b16 %v5490
    %v5855 = vunpack.c.h.b16 %v5490
    %v5856 = vunpack.c.l.b16 %v5491
    %v5857 = vunpack.c.h.b16 %v5491
    %v5858 = vunpack.c.l.b16 %v5492
    %v5859 = vunpack.c.h.b16 %v5492
    %v5860 = vunpack.c.l.b16 %v5493
    %v5861 = vunpack.c.h.b16 %v5493
    %v5862 = vunpack.c.l.b16 %v5494
    %v5863 = vunpack.c.h.b16 %v5494
    %v5864 = vunpack.c.l.b16 %v5495
    %v5865 = vunpack.c.h.b16 %v5495
    %v5866 = vunpack.c.l.b16 %v5496
    %v5867 = vunpack.c.h.b16 %v5496
    %v5868 = vunpack.c.l.b16 %v5497
    %v5869 = vunpack.c.h.b16 %v5497
    %v5870 = vunpack.c.l.b16 %v5498
    %v5871 = vunpack.c.h.b16 %v5498
    %v5872 = vunpack.c.l.b16 %v5499
    %v5873 = vunpack.c.h.b16 %v5499
    %v5874 = vunpack.c.l.b16 %v5500
    %v5875 = vunpack.c.h.b16 %v5500
    %v5876 = vunpack.c.l.b16 %v5501
    %v5877 = vunpack.c.h.b16 %v5501
    %v5878 = vunpack.c.l.b16 %v5502
    %v5879 = vunpack.c.h.b16 %v5502
    %v5880 = vunpack.c.l.b16 %v5503
    %v5881 = vunpack.c.h.b16 %v5503
    %v5882 = vunpack.c.l.b16 %v5504
    %v5883 = vunpack.c.h.b16 %v5504
    %v5884 = vunpack.c.l.b16 %v5505
    %v5885 = vunpack.c.h.b16 %v5505
    %v5886 = vunpack.c.l.b16 %v5506
    %v5887 = vunpack.c.h.b16 %v5506
    %v5888 = vunpack.c.l.b16 %v5507
    %v5889 = vunpack.c.h.b16 %v5507
    %v5890 = vunpack.c.l.b16 %v5508
    %v5891 = vunpack.c.h.b16 %v5508
    %v5892 = vunpack.c.l.b16 %v5509
    %v5893 = vunpack.c.h.b16 %v5509
    %v5894 = vunpack.c.l.b16 %v5510
    %v5895 = vunpack.c.h.b16 %v5510
    %v5896 = vunpack.c.l.b16 %v5511
    %v5897 = vunpack.c.h.b16 %v5511
    %v5898 = vunpack.c.l.b16 %v5512
    %v5899 = vunpack.c.h.b16 %v5512
    %v5900 = vunpack.c.l.b16 %v5513
    %v5901 = vunpack.c.h.b16 %v5513
    %v5902 = vunpack.c.l.b16 %v5514
    %v5903 = vunpack.c.h.b16 %v5514
    %v5904 = vunpack.c.l.b16 %v5515
    %v5905 = vunpack.c.h.b16 %v5515
    %v5906 = vunpack.c.l.b16 %v5516
    %v5907 = vunpack.c.h.b16 %v5516
    %v5908 = vunpack.c.l.b16 %v5517
    %v5909 = vunpack.c.h.b16 %v5517
    %v5910 = vunpack.c.l.b16 %v5518
    %v5911 = vunpack.c.h.b16 %v5518
    %v5912 = vunpack.c.l.b16 %v5519
    %v5913 = vunpack.c.h.b16 %v5519
    %v5914 = vunpack.c.l.b16 %v5520
    %v5915 = vunpack.c.h.b16 %v5520
    %v5916 = vunpack.c.l.b16 %v5521
    %v5917 = vunpack.c.h.b16 %v5521
    %v5918 = vunpack.c.l.b16 %v5522
    %v5919 = vunpack.c.h.b16 %v5522
    %v5920 = vunpack.c.l.b16 %v5523
    %v5921 = vunpack.c.h.b16 %v5523
    %v5922 = vunpack.c.l.b16 %v5524
    %v5923 = vunpack.c.h.b16 %v5524
    %v5924 = vunpack.c.l.b16 %v5525
    %v5925 = vunpack.c.h.b16 %v5525
    %v5926 = vunpack.c.l.b16 %v5526
    %v5927 = vunpack.c.h.b16 %v5526
    %v5928 = vunpack.c.l.b16 %v5527
    %v5929 = vunpack.c.h.b16 %v5527
    %v5930 = vunpack.c.l.b16 %v5528
    %v5931 = vunpack.c.h.b16 %v5528
    %v5932 = vunpack.c.l.b16 %v5529
    %v5933 = vunpack.c.h.b16 %v5529
    %v5934 = vunpack.c.l.b16 %v5530
    %v5935 = vunpack.c.h.b16 %v5530
    %v5936 = vunpack.c.l.b16 %v5531
    %v5937 = vunpack.c.h.b16 %v5531
    %v5938 = vunpack.c.l.b16 %v5532
    %v5939 = vunpack.c.h.b16 %v5532
    %v5940 = vpack.c.b16 %v5688, %v5684
    %v5941 = vpack.c.b16 %v5689, %v5685
    %v5942 = vpack.c.b16 %v5690, %v5686
    %v5943 = vpack.c.b16 %v5691, %v5687
    %v5944 = vpack.c.b16 %v5696, %v5692
    %v5945 = vpack.c.b16 %v5697, %v5693
    %v5946 = vpack.c.b16 %v5698, %v5694
    %v5947 = vpack.c.b16 %v5699, %v5695
    %v5948 = vpack.c.b16 %v5704, %v5700
    %v5949 = vpack.c.b16 %v5705, %v5701
    %v5950 = vpack.c.b16 %v5706, %v5702
    %v5951 = vpack.c.b16 %v5707, %v5703
    %v5952 = vpack.c.b16 %v5712, %v5708
    %v5953 = vpack.c.b16 %v5713, %v5709
    %v5954 = vpack.c.b16 %v5714, %v5710
    %v5955 = vpack.c.b16 %v5715, %v5711
    %v5956 = vpack.c.b16 %v5720, %v5716
    %v5957 = vpack.c.b16 %v5721, %v5717
    %v5958 = vpack.c.b16 %v5722, %v5718
    %v5959 = vpack.c.b16 %v5723, %v5719
    %v5960 = vpack.c.b16 %v5728, %v5724
    %v5961 = vpack.c.b16 %v5729, %v5725
    %v5962 = vpack.c.b16 %v5730, %v5726
    %v5963 = vpack.c.b16 %v5731, %v5727
    %v5964 = vpack.c.b16 %v5736, %v5732
    %v5965 = vpack.c.b16 %v5737, %v5733
    %v5966 = vpack.c.b16 %v5738, %v5734
    %v5967 = vpack.c.b16 %v5739, %v5735
    %v5968 = vpack.c.b16 %v5744, %v5740
    %v5969 = vpack.c.b16 %v5745, %v5741
    %v5970 = vpack.c.b16 %v5746, %v5742
    %v5971 = vpack.c.b16 %v5747, %v5743
    %v5972 = vpack.c.b16 %v5752, %v5748
    %v5973 = vpack.c.b16 %v5753, %v5749
    %v5974 = vpack.c.b16 %v5754, %v5750
    %v5975 = vpack.c.b16 %v5755, %v5751
    %v5976 = vpack.c.b16 %v5760, %v5756
    %v5977 = vpack.c.b16 %v5761, %v5757
    %v5978 = vpack.c.b16 %v5762, %v5758
    %v5979 = vpack.c.b16 %v5763, %v5759
    %v5980 = vpack.c.b16 %v5768, %v5764
    %v5981 = vpack.c.b16 %v5769, %v5765
    %v5982 = vpack.c.b16 %v5770, %v5766
    %v5983 = vpack.c.b16 %v5771, %v5767
    %v5984 = vpack.c.b16 %v5776, %v5772
    %v5985 = vpack.c.b16 %v5777, %v5773
    %v5986 = vpack.c.b16 %v5778, %v5774
    %v5987 = vpack.c.b16 %v5779, %v5775
    %v5988 = vpack.c.b16 %v5784, %v5780
    %v5989 = vpack.c.b16 %v5785, %v5781
    %v5990 = vpack.c.b16 %v5786, %v5782
    %v5991 = vpack.c.b16 %v5787, %v5783
    %v5992 = vpack.c.b16 %v5792, %v5788
    %v5993 = vpack.c.b16 %v5793, %v5789
    %v5994 = vpack.c.b16 %v5794, %v5790
    %v5995 = vpack.c.b16 %v5795, %v5791
    %v5996 = vpack.c.b16 %v5800, %v5796
    %v5997 = vpack.c.b16 %v5801, %v5797
    %v5998 = vpack.c.b16 %v5802, %v5798
    %v5999 = vpack.c.b16 %v5803, %v5799
    %v6000 = vpack.c.b16 %v5808, %v5804
    %v6001 = vpack.c.b16 %v5809, %v5805
    %v6002 = vpack.c.b16 %v5810, %v5806
    %v6003 = vpack.c.b16 %v5811, %v5807
    %v6004 = vpack.c.b16 %v5816, %v5812
    %v6005 = vpack.c.b16 %v5817, %v5813
    %v6006 = vpack.c.b16 %v5818, %v5814
    %v6007 = vpack.c.b16 %v5819, %v5815
    %v6008 = vpack.c.b16 %v5824, %v5820
    %v6009 = vpack.c.b16 %v5825, %v5821
    %v6010 = vpack.c.b16 %v5826, %v5822
    %v6011 = vpack.c.b16 %v5827, %v5823
    %v6012 = vpack.c.b16 %v5832, %v5828
    %v6013 = vpack.c.b16 %v5833, %v5829
    %v6014 = vpack.c.b16 %v5834, %v5830
    %v6015 = vpack.c.b16 %v5835, %v5831
    %v6016 = vpack.c.b16 %v5840, %v5836
    %v6017 = vpack.c.b16 %v5841, %v5837
    %v6018 = vpack.c.b16 %v5842, %v5838
    %v6019 = vpack.c.b16 %v5843, %v5839
    %v6020 = vpack.c.b16 %v5848, %v5844
    %v6021 = vpack.c.b16 %v5849, %v5845
    %v6022 = vpack.c.b16 %v5850, %v5846
    %v6023 = vpack.c.b16 %v5851, %v5847
    %v6024 = vpack.c.b16 %v5856, %v5852
    %v6025 = vpack.c.b16 %v5857, %v5853
    %v6026 = vpack.c.b16 %v5858, %v5854
    %v6027 = vpack.c.b16 %v5859, %v5855
    %v6028 = vpack.c.b16 %v5864, %v5860
    %v6029 = vpack.c.b16 %v5865, %v5861
    %v6030 = vpack.c.b16 %v5866, %v5862
    %v6031 = vpack.c.b16 %v5867, %v5863
    %v6032 = vpack.c.b16 %v5872, %v5868
    %v6033 = vpack.c.b16 %v5873, %v5869
    %v6034 = vpack.c.b16 %v5874, %v5870
    %v6035 = vpack.c.b16 %v5875, %v5871
    %v6036 = vpack.c.b16 %v5880, %v5876
    %v6037 = vpack.c.b16 %v5881, %v5877
    %v6038 = vpack.c.b16 %v5882, %v5878
    %v6039 = vpack.c.b16 %v5883, %v5879
    %v6040 = vpack.c.b16 %v5888, %v5884
    %v6041 = vpack.c.b16 %v5889, %v5885
    %v6042 = vpack.c.b16 %v5890, %v5886
    %v6043 = vpack.c.b16 %v5891, %v5887
    %v6044 = vpack.c.b16 %v5896, %v5892
    %v6045 = vpack.c.b16 %v5897, %v5893
    %v6046 = vpack.c.b16 %v5898, %v5894
    %v6047 = vpack.c.b16 %v5899, %v5895
    %v6048 = vpack.c.b16 %v5904, %v5900
    %v6049 = vpack.c.b16 %v5905, %v5901
    %v6050 = vpack.c.b16 %v5906, %v5902
    %v6051 = vpack.c.b16 %v5907, %v5903
    %v6052 = vpack.c.b16 %v5912, %v5908
    %v6053 = vpack.c.b16 %v5913, %v5909
    %v6054 = vpack.c.b16 %v5914, %v5910
    %v6055 = vpack.c.b16 %v5915, %v5911
    %v6056 = vpack.c.b16 %v5920, %v5916
    %v6057 = vpack.c.b16 %v5921, %v5917
    %v6058 = vpack.c.b16 %v5922, %v5918
    %v6059 = vpack.c.b16 %v5923, %v5919
    %v6060 = vpack.c.b16 %v5928, %v5924
    %v6061 = vpack.c.b16 %v5929, %v5925
    %v6062 = vpack.c.b16 %v5930, %v5926
    %v6063 = vpack.c.b16 %v5931, %v5927
    %v6064 = vpack.c.b16 %v5936, %v5932
    %v6065 = vpack.c.b16 %v5937, %v5933
    %v6066 = vpack.c.b16 %v5938, %v5934
    %v6067 = vpack.c.b16 %v5939, %v5935
    %6196 = vmatprep.subr.bf16.mxu0 %v5941
    %6197 = vmatpush1.bf16.msra.mxu0 %v5940
    %6198 = vmatprep.subr.bf16.mxu0 %v5945
    %6199 = vmatpush1.bf16.msra.mxu0 %v5944
    %6200 = vmatprep.subr.bf16.mxu0 %v5949
    %6201 = vmatpush1.bf16.msra.mxu0 %v5948
    %6202 = vmatprep.subr.bf16.mxu0 %v5953
    %6203 = vmatpush1.bf16.msra.mxu0 %v5952
    %6204 = vmatprep.subr.bf16.mxu0 %v5957
    %6205 = vmatpush1.bf16.msra.mxu0 %v5956
    %6206 = vmatprep.subr.bf16.mxu0 %v5961
    %6207 = vmatpush1.bf16.msra.mxu0 %v5960
    %6208 = vmatprep.subr.bf16.mxu0 %v5965
    %6209 = vmatpush1.bf16.msra.mxu0 %v5964
    %6210 = vmatprep.subr.bf16.mxu0 %v5969
    %6211 = vmatpush1.bf16.msra.mxu0 %v5968
    %6212 = vmatprep.subr.bf16.mxu0 %v5973
    %6213 = vmatpush1.bf16.msra.mxu0 %v5972
    %6214 = vmatprep.subr.bf16.mxu0 %v5977
    %6215 = vmatpush1.bf16.msra.mxu0 %v5976
    %6216 = vmatprep.subr.bf16.mxu0 %v5981
    %6217 = vmatpush1.bf16.msra.mxu0 %v5980
    %6218 = vmatprep.subr.bf16.mxu0 %v5985
    %6219 = vmatpush1.bf16.msra.mxu0 %v5984
    %6220 = vmatprep.subr.bf16.mxu0 %v5989
    %6221 = vmatpush1.bf16.msra.mxu0 %v5988
    %6222 = vmatprep.subr.bf16.mxu0 %v5993
    %6223 = vmatpush1.bf16.msra.mxu0 %v5992
    %6224 = vmatprep.subr.bf16.mxu0 %v5997
    %6225 = vmatpush1.bf16.msra.mxu0 %v5996
    %6226 = vmatprep.subr.bf16.mxu0 %v6001
    %6227 = vmatpush1.bf16.msra.mxu0 %v6000
    %6228 = vmatprep.mubr.bf16.mxu0 %v1439
    %6229 = vmatmul.mubr.bf16.gmra.mrb[0].mxu0 %v1438
    %v6230 = vpop.f32.mrb[0].mxu0
    %v6231 = vadd.f32 %v5539, %v6230
    %v6232 = vpop.f32.mrb[0].mxu0
    %v6233 = vadd.f32 %v5543, %v6232
    %v6234 = vpop.f32.mrb[0].mxu0
    %v6235 = vadd.f32 %v5539, %v6234
    %v6236 = vpop.f32.mrb[0].mxu0
    %v6237 = vadd.f32 %v5543, %v6236
    %6238 = vdwg.mxu0
    %6239 = vmatprep.subr.bf16.mxu0 %v6005
    %6240 = vmatpush1.bf16.msra.mxu0 %v6004
    %6241 = vmatprep.subr.bf16.mxu0 %v6009
    %6242 = vmatpush1.bf16.msra.mxu0 %v6008
    %6243 = vmatprep.subr.bf16.mxu0 %v6013
    %6244 = vmatpush1.bf16.msra.mxu0 %v6012
    %6245 = vmatprep.subr.bf16.mxu0 %v6017
    %6246 = vmatpush1.bf16.msra.mxu0 %v6016
    %6247 = vmatprep.subr.bf16.mxu0 %v6021
    %6248 = vmatpush1.bf16.msra.mxu0 %v6020
    %6249 = vmatprep.subr.bf16.mxu0 %v6025
    %6250 = vmatpush1.bf16.msra.mxu0 %v6024
    %6251 = vmatprep.subr.bf16.mxu0 %v6029
    %6252 = vmatpush1.bf16.msra.mxu0 %v6028
    %6253 = vmatprep.subr.bf16.mxu0 %v6033
    %6254 = vmatpush1.bf16.msra.mxu0 %v6032
    %6255 = vmatprep.subr.bf16.mxu0 %v6037
    %6256 = vmatpush1.bf16.msra.mxu0 %v6036
    %6257 = vmatprep.subr.bf16.mxu0 %v6041
    %6258 = vmatpush1.bf16.msra.mxu0 %v6040
    %6259 = vmatprep.subr.bf16.mxu0 %v6045
    %6260 = vmatpush1.bf16.msra.mxu0 %v6044
    %6261 = vmatprep.subr.bf16.mxu0 %v6049
    %6262 = vmatpush1.bf16.msra.mxu0 %v6048
    %6263 = vmatprep.subr.bf16.mxu0 %v6053
    %6264 = vmatpush1.bf16.msra.mxu0 %v6052
    %6265 = vmatprep.subr.bf16.mxu0 %v6057
    %6266 = vmatpush1.bf16.msra.mxu0 %v6056
    %6267 = vmatprep.subr.bf16.mxu0 %v6061
    %6268 = vmatpush1.bf16.msra.mxu0 %v6060
    %6269 = vmatprep.subr.bf16.mxu0 %v6065
    %6270 = vmatpush1.bf16.msra.mxu0 %v6064
    %6271 = vmatprep.mubr.bf16.mxu0 %v1441
    %6272 = vmatmul.mubr.bf16.gmra.mrb[0].mxu0 %v1440
    %v6273 = vpop.f32.mrb[0].mxu0
    %v6274 = vadd.f32 %v6231, %v6273
    %v6275 = vpop.f32.mrb[0].mxu0
    %v6276 = vadd.f32 %v6233, %v6275
    %v6277 = vpop.f32.mrb[0].mxu0
    %v6278 = vadd.f32 %v6235, %v6277
    %v6279 = vpop.f32.mrb[0].mxu0
    %v6280 = vadd.f32 %v6237, %v6279
    %6281 = vdwg.mxu0
    %6282 = vmatprep.subr.bf16.mxu0 %v5943
    %6283 = vmatpush1.bf16.msra.mxu0 %v5942
    %6284 = vmatprep.subr.bf16.mxu0 %v5947
    %6285 = vmatpush1.bf16.msra.mxu0 %v5946
    %6286 = vmatprep.subr.bf16.mxu0 %v5951
    %6287 = vmatpush1.bf16.msra.mxu0 %v5950
    %6288 = vmatprep.subr.bf16.mxu0 %v5955
    %6289 = vmatpush1.bf16.msra.mxu0 %v5954
    %6290 = vmatprep.subr.bf16.mxu0 %v5959
    %6291 = vmatpush1.bf16.msra.mxu0 %v5958
    %6292 = vmatprep.subr.bf16.mxu0 %v5963
    %6293 = vmatpush1.bf16.msra.mxu0 %v5962
    %6294 = vmatprep.subr.bf16.mxu0 %v5967
    %6295 = vmatpush1.bf16.msra.mxu0 %v5966
    %6296 = vmatprep.subr.bf16.mxu0 %v5971
    %6297 = vmatpush1.bf16.msra.mxu0 %v5970
    %6298 = vmatprep.subr.bf16.mxu0 %v5975
    %6299 = vmatpush1.bf16.msra.mxu0 %v5974
    %6300 = vmatprep.subr.bf16.mxu0 %v5979
    %6301 = vmatpush1.bf16.msra.mxu0 %v5978
    %6302 = vmatprep.subr.bf16.mxu0 %v5983
    %6303 = vmatpush1.bf16.msra.mxu0 %v5982
    %6304 = vmatprep.subr.bf16.mxu0 %v5987
    %6305 = vmatpush1.bf16.msra.mxu0 %v5986
    %6306 = vmatprep.subr.bf16.mxu0 %v5991
    %6307 = vmatpush1.bf16.msra.mxu0 %v5990
    %6308 = vmatprep.subr.bf16.mxu0 %v5995
    %6309 = vmatpush1.bf16.msra.mxu0 %v5994
    %6310 = vmatprep.subr.bf16.mxu0 %v5999
    %6311 = vmatpush1.bf16.msra.mxu0 %v5998
    %6312 = vmatprep.subr.bf16.mxu0 %v6003
    %6313 = vmatpush1.bf16.msra.mxu0 %v6002
    %6314 = vmatprep.mubr.bf16.mxu0 %v1439
    %6315 = vmatmul.mubr.bf16.gmra.mrb[0].mxu0 %v1438
    %v6316 = vpop.f32.mrb[0].mxu0
    %v6317 = vadd.f32 %v5547, %v6316
    %v6318 = vpop.f32.mrb[0].mxu0
    %v6319 = vadd.f32 %v5551, %v6318
    %v6320 = vpop.f32.mrb[0].mxu0
    %v6321 = vadd.f32 %v5547, %v6320
    %v6322 = vpop.f32.mrb[0].mxu0
    %v6323 = vadd.f32 %v5551, %v6322
    %6324 = vdwg.mxu0
    %6325 = vmatprep.subr.bf16.mxu0 %v6007
    %6326 = vmatpush1.bf16.msra.mxu0 %v6006
    %6327 = vmatprep.subr.bf16.mxu0 %v6011
    %6328 = vmatpush1.bf16.msra.mxu0 %v6010
    %6329 = vmatprep.subr.bf16.mxu0 %v6015
    %6330 = vmatpush1.bf16.msra.mxu0 %v6014
    %6331 = vmatprep.subr.bf16.mxu0 %v6019
    %6332 = vmatpush1.bf16.msra.mxu0 %v6018
    %6333 = vmatprep.subr.bf16.mxu0 %v6023
    %6334 = vmatpush1.bf16.msra.mxu0 %v6022
    %6335 = vmatprep.subr.bf16.mxu0 %v6027
    %6336 = vmatpush1.bf16.msra.mxu0 %v6026
    %6337 = vmatprep.subr.bf16.mxu0 %v6031
    %6338 = vmatpush1.bf16.msra.mxu0 %v6030
    %6339 = vmatprep.subr.bf16.mxu0 %v6035
    %6340 = vmatpush1.bf16.msra.mxu0 %v6034
    %6341 = vmatprep.subr.bf16.mxu0 %v6039
    %6342 = vmatpush1.bf16.msra.mxu0 %v6038
    %6343 = vmatprep.subr.bf16.mxu0 %v6043
    %6344 = vmatpush1.bf16.msra.mxu0 %v6042
    %6345 = vmatprep.subr.bf16.mxu0 %v6047
    %6346 = vmatpush1.bf16.msra.mxu0 %v6046
    %6347 = vmatprep.subr.bf16.mxu0 %v6051
    %6348 = vmatpush1.bf16.msra.mxu0 %v6050
    %6349 = vmatprep.subr.bf16.mxu0 %v6055
    %6350 = vmatpush1.bf16.msra.mxu0 %v6054
    %6351 = vmatprep.subr.bf16.mxu0 %v6059
    %6352 = vmatpush1.bf16.msra.mxu0 %v6058
    %6353 = vmatprep.subr.bf16.mxu0 %v6063
    %6354 = vmatpush1.bf16.msra.mxu0 %v6062
    %6355 = vmatprep.subr.bf16.mxu0 %v6067
    %6356 = vmatpush1.bf16.msra.mxu0 %v6066
    %6357 = vmatprep.mubr.bf16.mxu0 %v1441
    %6358 = vmatmul.mubr.bf16.gmra.mrb[0].mxu0 %v1440
    %v6359 = vpop.f32.mrb[0].mxu0
    %v6360 = vadd.f32 %v6317, %v6359
    %v6361 = vpop.f32.mrb[0].mxu0
    %v6362 = vadd.f32 %v6319, %v6361
    %v6363 = vpop.f32.mrb[0].mxu0
    %v6364 = vadd.f32 %v6321, %v6363
    %v6365 = vpop.f32.mrb[0].mxu0
    %v6366 = vadd.f32 %v6323, %v6365
    %6367 = vdwg.mxu0
    %v6368 = vmax.f32 %v6274, 0.0
    %v6369 = vmax.f32 %v6276, 0.0
    %v6370 = vmax.f32 %v6360, 0.0
    %v6371 = vmax.f32 %v6362, 0.0
    %v6372 = vmax.f32 %v6278, 0.0
    %v6373 = vmax.f32 %v6280, 0.0
    %v6374 = vmax.f32 %v6364, 0.0
    %v6375 = vmax.f32 %v6366, 0.0
    %v6376 = vpack.c.bf16 %v6372, %v6368
    %v6377 = vpack.c.bf16 %v6373, %v6369
    %v6378 = vpack.c.bf16 %v6374, %v6370
    %v6379 = vpack.c.bf16 %v6375, %v6371
    %v6380 = vld [vmem:[#allocation2] sm:$0xff]
    %v6381 = vld [vmem:[#allocation2 + $0x8] sm:$0xff]
    %s6382 = scalar_lea.vmem [#allocation15], 768
    %v6383 = vld [vmem:[%s6382] sm:$0xf]
    %v6384 = vld [vmem:[%s6382 + $0x4] sm:$0xf]
    %v6385 = vld [vmem:[%s6382 + $0x8] sm:$0xf]
    %v6386 = vld [vmem:[%s6382 + $0xc] sm:$0xf]
    %v6387 = vld [vmem:[%s6382 + $0x10] sm:$0xf]
    %v6388 = vld [vmem:[%s6382 + $0x14] sm:$0xf]
    %v6389 = vld [vmem:[%s6382 + $0x18] sm:$0xf]
    %v6390 = vld [vmem:[%s6382 + $0x1c] sm:$0xf]
    %v6391 = vld [vmem:[%s6382 + $0x20] sm:$0xf]
    %v6392 = vld [vmem:[%s6382 + $0x24] sm:$0xf]
    %v6393 = vld [vmem:[%s6382 + $0x28] sm:$0xf]
    %v6394 = vld [vmem:[%s6382 + $0x2c] sm:$0xf]
    %v6395 = vld [vmem:[%s6382 + $0x30] sm:$0xf]
    %v6396 = vld [vmem:[%s6382 + $0x34] sm:$0xf]
    %v6397 = vld [vmem:[%s6382 + $0x38] sm:$0xf]
    %v6398 = vld [vmem:[%s6382 + $0x3c] sm:$0xf]
    %v6399 = vld [vmem:[%s6382 + $0x40] sm:$0xf]
    %v6400 = vld [vmem:[%s6382 + $0x44] sm:$0xf]
    %v6401 = vld [vmem:[%s6382 + $0x48] sm:$0xf]
    %v6402 = vld [vmem:[%s6382 + $0x4c] sm:$0xf]
    %v6403 = vld [vmem:[%s6382 + $0x50] sm:$0xf]
    %v6404 = vld [vmem:[%s6382 + $0x54] sm:$0xf]
    %v6405 = vld [vmem:[%s6382 + $0x58] sm:$0xf]
    %v6406 = vld [vmem:[%s6382 + $0x5c] sm:$0xf]
    %v6407 = vld [vmem:[%s6382 + $0x60] sm:$0xf]
    %v6408 = vld [vmem:[%s6382 + $0x64] sm:$0xf]
    %v6409 = vld [vmem:[%s6382 + $0x68] sm:$0xf]
    %v6410 = vld [vmem:[%s6382 + $0x6c] sm:$0xf]
    %v6411 = vld [vmem:[%s6382 + $0x70] sm:$0xf]
    %v6412 = vld [vmem:[%s6382 + $0x74] sm:$0xf]
    %v6413 = vld [vmem:[%s6382 + $0x78] sm:$0xf]
    %v6414 = vld [vmem:[%s6382 + $0x7c] sm:$0xf]
    %v6415 = vld [vmem:[%s6382 + $0x80] sm:$0xf]
    %v6416 = vld [vmem:[%s6382 + $0x84] sm:$0xf]
    %v6417 = vld [vmem:[%s6382 + $0x88] sm:$0xf]
    %v6418 = vld [vmem:[%s6382 + $0x8c] sm:$0xf]
    %v6419 = vld [vmem:[%s6382 + $0x90] sm:$0xf]
    %v6420 = vld [vmem:[%s6382 + $0x94] sm:$0xf]
    %v6421 = vld [vmem:[%s6382 + $0x98] sm:$0xf]
    %v6422 = vld [vmem:[%s6382 + $0x9c] sm:$0xf]
    %v6423 = vld [vmem:[%s6382 + $0xa0] sm:$0xf]
    %v6424 = vld [vmem:[%s6382 + $0xa4] sm:$0xf]
    %v6425 = vld [vmem:[%s6382 + $0xa8] sm:$0xf]
    %v6426 = vld [vmem:[%s6382 + $0xac] sm:$0xf]
    %v6427 = vld [vmem:[%s6382 + $0xb0] sm:$0xf]
    %v6428 = vld [vmem:[%s6382 + $0xb4] sm:$0xf]
    %v6429 = vld [vmem:[%s6382 + $0xb8] sm:$0xf]
    %v6430 = vld [vmem:[%s6382 + $0xbc] sm:$0xf]
    %v6431 = vld [vmem:[%s6382 + $0xc0] sm:$0xf]
    %v6432 = vld [vmem:[%s6382 + $0xc4] sm:$0xf]
    %v6433 = vld [vmem:[%s6382 + $0xc8] sm:$0xf]
    %v6434 = vld [vmem:[%s6382 + $0xcc] sm:$0xf]
    %v6435 = vld [vmem:[%s6382 + $0xd0] sm:$0xf]
    %v6436 = vld [vmem:[%s6382 + $0xd4] sm:$0xf]
    %v6437 = vld [vmem:[%s6382 + $0xd8] sm:$0xf]
    %v6438 = vld [vmem:[%s6382 + $0xdc] sm:$0xf]
    %v6439 = vld [vmem:[%s6382 + $0xe0] sm:$0xf]
    %v6440 = vld [vmem:[%s6382 + $0xe4] sm:$0xf]
    %v6441 = vld [vmem:[%s6382 + $0xe8] sm:$0xf]
    %v6442 = vld [vmem:[%s6382 + $0xec] sm:$0xf]
    %v6443 = vld [vmem:[%s6382 + $0xf0] sm:$0xf]
    %v6444 = vld [vmem:[%s6382 + $0xf4] sm:$0xf]
    %v6445 = vld [vmem:[%s6382 + $0xf8] sm:$0xf]
    %v6446 = vld [vmem:[%s6382 + $0xfc] sm:$0xf]
    %v6511 = vunpack.c.l.b16 %v6383
    %v6512 = vunpack.c.l.b16 %v6384
    %v6513 = vunpack.c.l.b16 %v6385
    %v6514 = vunpack.c.l.b16 %v6386
    %v6515 = vunpack.c.l.b16 %v6387
    %v6516 = vunpack.c.l.b16 %v6388
    %v6517 = vunpack.c.l.b16 %v6389
    %v6518 = vunpack.c.l.b16 %v6390
    %v6519 = vunpack.c.l.b16 %v6391
    %v6520 = vunpack.c.l.b16 %v6392
    %v6521 = vunpack.c.l.b16 %v6393
    %v6522 = vunpack.c.l.b16 %v6394
    %v6523 = vunpack.c.l.b16 %v6395
    %v6524 = vunpack.c.l.b16 %v6396
    %v6525 = vunpack.c.l.b16 %v6397
    %v6526 = vunpack.c.l.b16 %v6398
    %v6527 = vunpack.c.l.b16 %v6399
    %v6528 = vunpack.c.l.b16 %v6400
    %v6529 = vunpack.c.l.b16 %v6401
    %v6530 = vunpack.c.l.b16 %v6402
    %v6531 = vunpack.c.l.b16 %v6403
    %v6532 = vunpack.c.l.b16 %v6404
    %v6533 = vunpack.c.l.b16 %v6405
    %v6534 = vunpack.c.l.b16 %v6406
    %v6535 = vunpack.c.l.b16 %v6407
    %v6536 = vunpack.c.l.b16 %v6408
    %v6537 = vunpack.c.l.b16 %v6409
    %v6538 = vunpack.c.l.b16 %v6410
    %v6539 = vunpack.c.l.b16 %v6411
    %v6540 = vunpack.c.l.b16 %v6412
    %v6541 = vunpack.c.l.b16 %v6413
    %v6542 = vunpack.c.l.b16 %v6414
    %v6543 = vunpack.c.l.b16 %v6415
    %v6544 = vunpack.c.l.b16 %v6416
    %v6545 = vunpack.c.l.b16 %v6417
    %v6546 = vunpack.c.l.b16 %v6418
    %v6547 = vunpack.c.l.b16 %v6419
    %v6548 = vunpack.c.l.b16 %v6420
    %v6549 = vunpack.c.l.b16 %v6421
    %v6550 = vunpack.c.l.b16 %v6422
    %v6551 = vunpack.c.l.b16 %v6423
    %v6552 = vunpack.c.l.b16 %v6424
    %v6553 = vunpack.c.l.b16 %v6425
    %v6554 = vunpack.c.l.b16 %v6426
    %v6555 = vunpack.c.l.b16 %v6427
    %v6556 = vunpack.c.l.b16 %v6428
    %v6557 = vunpack.c.l.b16 %v6429
    %v6558 = vunpack.c.l.b16 %v6430
    %v6559 = vunpack.c.l.b16 %v6431
    %v6560 = vunpack.c.l.b16 %v6432
    %v6561 = vunpack.c.l.b16 %v6433
    %v6562 = vunpack.c.l.b16 %v6434
    %v6563 = vunpack.c.l.b16 %v6435
    %v6564 = vunpack.c.l.b16 %v6436
    %v6565 = vunpack.c.l.b16 %v6437
    %v6566 = vunpack.c.l.b16 %v6438
    %v6567 = vunpack.c.l.b16 %v6439
    %v6568 = vunpack.c.l.b16 %v6440
    %v6569 = vunpack.c.l.b16 %v6441
    %v6570 = vunpack.c.l.b16 %v6442
    %v6571 = vunpack.c.l.b16 %v6443
    %v6572 = vunpack.c.l.b16 %v6444
    %v6573 = vunpack.c.l.b16 %v6445
    %v6574 = vunpack.c.l.b16 %v6446
    %v6575 = vpack.c.b16 %v6512, %v6511
    %v6576 = vpack.c.b16 %v6514, %v6513
    %v6577 = vpack.c.b16 %v6516, %v6515
    %v6578 = vpack.c.b16 %v6518, %v6517
    %v6579 = vpack.c.b16 %v6520, %v6519
    %v6580 = vpack.c.b16 %v6522, %v6521
    %v6581 = vpack.c.b16 %v6524, %v6523
    %v6582 = vpack.c.b16 %v6526, %v6525
    %v6583 = vpack.c.b16 %v6528, %v6527
    %v6584 = vpack.c.b16 %v6530, %v6529
    %v6585 = vpack.c.b16 %v6532, %v6531
    %v6586 = vpack.c.b16 %v6534, %v6533
    %v6587 = vpack.c.b16 %v6536, %v6535
    %v6588 = vpack.c.b16 %v6538, %v6537
    %v6589 = vpack.c.b16 %v6540, %v6539
    %v6590 = vpack.c.b16 %v6542, %v6541
    %v6591 = vpack.c.b16 %v6544, %v6543
    %v6592 = vpack.c.b16 %v6546, %v6545
    %v6593 = vpack.c.b16 %v6548, %v6547
    %v6594 = vpack.c.b16 %v6550, %v6549
    %v6595 = vpack.c.b16 %v6552, %v6551
    %v6596 = vpack.c.b16 %v6554, %v6553
    %v6597 = vpack.c.b16 %v6556, %v6555
    %v6598 = vpack.c.b16 %v6558, %v6557
    %v6599 = vpack.c.b16 %v6560, %v6559
    %v6600 = vpack.c.b16 %v6562, %v6561
    %v6601 = vpack.c.b16 %v6564, %v6563
    %v6602 = vpack.c.b16 %v6566, %v6565
    %v6603 = vpack.c.b16 %v6568, %v6567
    %v6604 = vpack.c.b16 %v6570, %v6569
    %v6605 = vpack.c.b16 %v6572, %v6571
    %v6606 = vpack.c.b16 %v6574, %v6573
    %6639 = vmatprep.subr.bf16.mxu0 0
    %6640 = vmatpush1.bf16.msra.mxu0 %v6575
    %6641 = vmatprep.subr.bf16.mxu0 0
    %6642 = vmatpush1.bf16.msra.mxu0 %v6576
    %6643 = vmatprep.subr.bf16.mxu0 0
    %6644 = vmatpush1.bf16.msra.mxu0 %v6577
    %6645 = vmatprep.subr.bf16.mxu0 0
    %6646 = vmatpush1.bf16.msra.mxu0 %v6578
    %6647 = vmatprep.subr.bf16.mxu0 0
    %6648 = vmatpush1.bf16.msra.mxu0 %v6579
    %6649 = vmatprep.subr.bf16.mxu0 0
    %6650 = vmatpush1.bf16.msra.mxu0 %v6580
    %6651 = vmatprep.subr.bf16.mxu0 0
    %6652 = vmatpush1.bf16.msra.mxu0 %v6581
    %6653 = vmatprep.subr.bf16.mxu0 0
    %6654 = vmatpush1.bf16.msra.mxu0 %v6582
    %6655 = vmatprep.subr.bf16.mxu0 0
    %6656 = vmatpush1.bf16.msra.mxu0 %v6583
    %6657 = vmatprep.subr.bf16.mxu0 0
    %6658 = vmatpush1.bf16.msra.mxu0 %v6584
    %6659 = vmatprep.subr.bf16.mxu0 0
    %6660 = vmatpush1.bf16.msra.mxu0 %v6585
    %6661 = vmatprep.subr.bf16.mxu0 0
    %6662 = vmatpush1.bf16.msra.mxu0 %v6586
    %6663 = vmatprep.subr.bf16.mxu0 0
    %6664 = vmatpush1.bf16.msra.mxu0 %v6587
    %6665 = vmatprep.subr.bf16.mxu0 0
    %6666 = vmatpush1.bf16.msra.mxu0 %v6588
    %6667 = vmatprep.subr.bf16.mxu0 0
    %6668 = vmatpush1.bf16.msra.mxu0 %v6589
    %6669 = vmatprep.subr.bf16.mxu0 0
    %6670 = vmatpush1.bf16.msra.mxu0 %v6590
    %6671 = vmatprep.mubr.bf16.mxu0 %v6377
    %6672 = vmatmul.mubr.bf16.gmra.mrb[0].mxu0 %v6376
    %v6673 = vpop.f32.mrb[0].mxu0
    %v6674 = vadd.f32 0.0, %v6673
    %v6675 = vpop.f32.mrb[0].mxu0
    %v6676 = vpop.f32.mrb[0].mxu0
    %v6677 = vadd.f32 0.0, %v6676
    %v6678 = vpop.f32.mrb[0].mxu0
    %6679 = vdwg.mxu0
    %6680 = vmatprep.subr.bf16.mxu0 0
    %6681 = vmatpush1.bf16.msra.mxu0 %v6591
    %6682 = vmatprep.subr.bf16.mxu0 0
    %6683 = vmatpush1.bf16.msra.mxu0 %v6592
    %6684 = vmatprep.subr.bf16.mxu0 0
    %6685 = vmatpush1.bf16.msra.mxu0 %v6593
    %6686 = vmatprep.subr.bf16.mxu0 0
    %6687 = vmatpush1.bf16.msra.mxu0 %v6594
    %6688 = vmatprep.subr.bf16.mxu0 0
    %6689 = vmatpush1.bf16.msra.mxu0 %v6595
    %6690 = vmatprep.subr.bf16.mxu0 0
    %6691 = vmatpush1.bf16.msra.mxu0 %v6596
    %6692 = vmatprep.subr.bf16.mxu0 0
    %6693 = vmatpush1.bf16.msra.mxu0 %v6597
    %6694 = vmatprep.subr.bf16.mxu0 0
    %6695 = vmatpush1.bf16.msra.mxu0 %v6598
    %6696 = vmatprep.subr.bf16.mxu0 0
    %6697 = vmatpush1.bf16.msra.mxu0 %v6599
    %6698 = vmatprep.subr.bf16.mxu0 0
    %6699 = vmatpush1.bf16.msra.mxu0 %v6600
    %6700 = vmatprep.subr.bf16.mxu0 0
    %6701 = vmatpush1.bf16.msra.mxu0 %v6601
    %6702 = vmatprep.subr.bf16.mxu0 0
    %6703 = vmatpush1.bf16.msra.mxu0 %v6602
    %6704 = vmatprep.subr.bf16.mxu0 0
    %6705 = vmatpush1.bf16.msra.mxu0 %v6603
    %6706 = vmatprep.subr.bf16.mxu0 0
    %6707 = vmatpush1.bf16.msra.mxu0 %v6604
    %6708 = vmatprep.subr.bf16.mxu0 0
    %6709 = vmatpush1.bf16.msra.mxu0 %v6605
    %6710 = vmatprep.subr.bf16.mxu0 0
    %6711 = vmatpush1.bf16.msra.mxu0 %v6606
    %6712 = vmatprep.mubr.bf16.mxu0 %v6379
    %6713 = vmatmul.mubr.bf16.gmra.mrb[0].mxu0 %v6378
    %v6714 = vpop.f32.mrb[0].mxu0
    %v6715 = vadd.f32 %v6674, %v6714
    %v6716 = vpop.f32.mrb[0].mxu0
    %v6717 = vpop.f32.mrb[0].mxu0
    %v6718 = vadd.f32 %v6677, %v6717
    %v6719 = vpop.f32.mrb[0].mxu0
    %6720 = vdwg.mxu0
    %v6721 = vadd.f32 %v6380, %v6715
    %v6722 = vadd.f32 %v6381, %v6718
    %6723 = vst [vmem:[#allocation2] sm:$0xff] %v6721
    %6724 = vst [vmem:[#allocation2 + $0x8] sm:$0xff] %v6722
    %v6725 = vld [vmem:[#allocation2] sm:$0xff]
    %v6726 = vld [vmem:[#allocation2 + $0x8] sm:$0xff]
    %v6727 = vld [vmem:[#allocation17] sm:$0x1]
    %v6729 = vlaneseq
    %v6730 = vshrl.u32 %v6729, 7
    %v6731 = vsub.s32 0, %v6730
    %v6732 = vrot.slane %v6727, %v6731
    %v6734 = vadd.f32 %v6725, %v6732
    %v6735 = vadd.f32 %v6726, %v6732
    %6736 = vst [vmem:[#allocation18] sm:$0xff] %v6734
    %6737 = vst [vmem:[#allocation18 + $0x8] sm:$0xff] %v6735
    // Predicated region
    $region74: #{tpu_custom_call.1} parent=1 // pred_check
      _
    $region75: #{tpu_custom_call.1} parent=1 // pred_check_branch
      %6739 = sbr.rel (0) target = $region77
    $region76: #{tpu_custom_call.1} parent=1 // pred_region
      %s6741 = ssub.s32 256, 256
      %6742 = vsyncadd [#allocation5], %s6741
      %s6743 = sshll.u32 [#allocation18], 4
      %s6744 = int_to_ptr.vmem [resolvable:$true] %s6743
      %6749 = dma.vmem_to_hbm [thread:$0]  %s6744, 256, %s9, [#allocation5], 128, 128, 8
    $region77: #{tpu_custom_call.1} parent=1 // pred_fallthru
      _
    // Predicated region
    $region78: #{tpu_custom_call.1} parent=1 // pred_check
      _
    $region79: #{tpu_custom_call.1} parent=1 // pred_check_branch
      %6751 = sbr.rel (0) target = $region81
    $region80: #{tpu_custom_call.1} parent=1 // pred_region
      %6752 = dma.done [#allocation5], 256
    $region81: #{tpu_custom_call.1} parent=1 // pred_fallthru
      _
    %6753 = vsyncpa [#allocation4], 1
    %6754 = vsyncpa [#allocation7], 1
    %6755 = vsyncpa [#allocation10], 1
    %6756 = vsyncpa [#allocation13], 1
    %6757 = vsyncpa [#allocation16], 1
    %6758 = vsyncpa [#allocation5], 1

</llo_original>
